<compile_context>
chip_gen: v6e
topology: v6e:2x2x1
jax: 0.10.0
libtpu: 0.0.40
codegen_flags: <defaults>
</compile_context>

<pallas_src>
import jax
import jax.numpy as jnp
from jax.experimental import pallas as pl
from jax.experimental.pallas import tpu as pltpu


def _round_up(x, m):
    return ((x + m - 1) // m) * m


# -------- grouped matmul with fused BN-stat / tanh epilogue (MXU kernel) ---- #

def _make_bmm_kernel(activation, with_stats):
    def _epilogue(o_ref, st_ref, acc_ref):
        r = acc_ref[...]
        if activation == "tanh":
            o_ref[0] = jnp.tanh(r).astype(o_ref.dtype)   # EUP; fused epilogue
        else:
            o_ref[0] = r.astype(o_ref.dtype)
        if with_stats:
            # Per-column partial sums for BatchNorm batch statistics, computed
            # from the f32 accumulator (full precision) before the bf16 store.
            s1 = jnp.sum(r, axis=0, keepdims=True)
            s2 = jnp.sum(r * r, axis=0, keepdims=True)
            row = jax.lax.broadcasted_iota(jnp.int32, (8, r.shape[1]), 0)
            st_ref[0, 0] = jnp.where(row == 0, s1,
                                     jnp.where(row == 1, s2, 0.0))

    if with_stats:
        def kernel(a_ref, b_ref, o_ref, st_ref, acc_ref):
            @pl.when(pl.program_id(3) == 0)
            def _():
                acc_ref[...] = jnp.zeros_like(acc_ref)

            acc_ref[...] += jnp.dot(a_ref[0], b_ref[0],
                                    preferred_element_type=jnp.float32)

            @pl.when(pl.program_id(3) == pl.num_programs(3) - 1)
            def _():
                _epilogue(o_ref, st_ref, acc_ref)
    else:
        def kernel(a_ref, b_ref, o_ref, acc_ref):
            @pl.when(pl.program_id(3) == 0)
            def _():
                acc_ref[...] = jnp.zeros_like(acc_ref)

            acc_ref[...] += jnp.dot(a_ref[0], b_ref[0],
                                    preferred_element_type=jnp.float32)

            @pl.when(pl.program_id(3) == pl.num_programs(3) - 1)
            def _():
                _epilogue(o_ref, None, acc_ref)
    return kernel


def pallas_bmm(a, b, activation=None, with_stats=False,
               out_dtype=jnp.bfloat16):
    """Grouped matmul: [G, M, K] @ [G, K, N] -> [G, M, N] (bf16 in, f32 acc).

    When `with_stats`, also returns per-(group, M-tile) partial column sums /
    sums-of-squares of the f32 accumulator, shape [G, Mtiles, 8, N]
    (sublane 0 = sum, sublane 1 = sum of squares)."""
    g, m, k = a.shape
    gb, kb, nc = b.shape
    assert g == gb and k == kb

    tm = min(256, _round_up(m, 8))
    mp = _round_up(m, tm)
    kp = _round_up(k, 128)
    tk = min(2048, kp)                     # single K step for all layers here
    kp = _round_up(kp, tk)
    np_ = _round_up(nc, 128)
    tn = min(512, np_)
    np_ = _round_up(np_, tn)

    if a.dtype != jnp.bfloat16:
        a = a.astype(jnp.bfloat16)
    if b.dtype != jnp.bfloat16:
        b = b.astype(jnp.bfloat16)
    if (mp, kp) != (m, k):
        a = jnp.pad(a, ((0, 0), (0, mp - m), (0, kp - k)))   # zero rows: stats ok
    if (kp, np_) != (k, nc):
        b = jnp.pad(b, ((0, 0), (0, kp - k), (0, np_ - nc)))

    m_tiles = mp // tm
    if with_stats:
        out_shape = (jax.ShapeDtypeStruct((g, mp, np_), out_dtype),
                     jax.ShapeDtypeStruct((g, m_tiles, 8, np_), jnp.float32))
        out_specs = (pl.BlockSpec((1, tm, tn), lambda gi, i, j, kk: (gi, i, j)),
                     pl.BlockSpec((1, 1, 8, tn),
                                  lambda gi, i, j, kk: (gi, i, 0, j)))
    else:
        out_shape = jax.ShapeDtypeStruct((g, mp, np_), out_dtype)
        out_specs = pl.BlockSpec((1, tm, tn), lambda gi, i, j, kk: (gi, i, j))

    res = pl.pallas_call(
        _make_bmm_kernel(activation, with_stats),
        out_shape=out_shape,
        grid_spec=pltpu.PrefetchScalarGridSpec(
            num_scalar_prefetch=0,
            grid=(g, m_tiles, np_ // tn, kp // tk),
            in_specs=[
                pl.BlockSpec((1, tm, tk), lambda gi, i, j, kk: (gi, i, kk)),
                pl.BlockSpec((1, tk, tn), lambda gi, i, j, kk: (gi, kk, j)),
            ],
            out_specs=out_specs,
            scratch_shapes=[pltpu.VMEM((tm, tn), jnp.float32)]),
        compiler_params=pltpu.CompilerParams(
            dimension_semantics=("parallel", "parallel", "parallel",
                                 "arbitrary")),
    )(a, b)

    if with_stats:
        out, stats = res
    else:
        out, stats = res, None
    if mp != m or np_ != nc:
        out = out[:, :m, :nc]
    return (out, stats) if with_stats else out


# ------------------------- BatchNorm apply + ReLU --------------------------- #

def _bn_apply_kernel(x_ref, scale_ref, shift_ref, o_ref):
    x = x_ref[...].astype(jnp.float32)
    o_ref[...] = jnp.maximum(x * scale_ref[...] + shift_ref[...],
                             0.0).astype(o_ref.dtype)


def pallas_bn_apply(y, scale, shift, out_dtype=jnp.bfloat16, tm=1024):
    """Fused affine (precomputed BN scale/shift) + ReLU over a [M, C] matrix."""
    m, c = y.shape
    tm = min(tm, _round_up(m, 8))
    mp = _round_up(m, tm)
    if mp != m:
        y = jnp.pad(y, ((0, mp - m), (0, 0)))
    out = pl.pallas_call(
        _bn_apply_kernel,
        out_shape=jax.ShapeDtypeStruct((mp, c), out_dtype),
        grid=(mp // tm,),
        in_specs=[pl.BlockSpec((tm, c), lambda i: (i, 0)),
                  pl.BlockSpec((1, c), lambda i: (0, 0)),
                  pl.BlockSpec((1, c), lambda i: (0, 0))],
        out_specs=pl.BlockSpec((tm, c), lambda i: (i, 0)),
        compiler_params=pltpu.CompilerParams(
            dimension_semantics=("parallel",)),
    )(y, scale, shift)
    return out[:m] if mp != m else out


def _bn_scale_shift(s1, s2, count, gamma, beta, eps=1e-5):
    """Tiny per-channel math: stats -> affine scale/shift (runs in XLA)."""
    mean = s1 / count
    var = s2 / count - mean * mean          # biased batch variance (training)
    scale = gamma * jax.lax.rsqrt(var + eps)
    shift = beta - mean * scale
    return scale, shift


# ------------------ ConvTranspose2d(4, 2, 1) phase decomposition ------------ #
# out[2j+py, 2i+px] = sum over 2x2 taps of a 1-padded input window; the tap
# indices per output parity are given by _TAP (derived from oy = 2*iy - 1 + ky).

_TAP = ((3, 1), (2, 0))   # _TAP[parity][window_offset] -> kernel tap index


def _phase_weight(w, cin_pad, cout_pad):
    """w: [Cin, Cout, 4, 4] (PyTorch ConvTranspose2d) -> [4, 4*cin_pad, cout_pad]."""
    cin, cout = w.shape[0], w.shape[1]
    mats = []
    for py in range(2):
        for px in range(2):
            taps = jnp.stack(
                [jnp.stack([w[:, :, _TAP[py][dy], _TAP[px][dx]]
                            for dx in range(2)], axis=0)
                 for dy in range(2)], axis=0)                  # [2,2,Cin,Cout]
            taps = jnp.pad(taps, ((0, 0), (0, 0),
                                  (0, cin_pad - cin), (0, cout_pad - cout)))
            mats.append(taps.reshape(4 * cin_pad, cout_pad))
    return jnp.stack(mats, axis=0).astype(jnp.bfloat16)


def _phase_patches(x):
    """x: [N, H, W, C] -> per-phase 2x2 im2col patches [4, N*H*W, 4*C].

    Single (1,1)-pad of x, then 4 shifted slices per phase.  For phase (py,px)
    and window offset (dy,dx), the contributing input pixel is
    x[j + dy + py - 1] = xpad[j + dy + py]."""
    n, h, w, c = x.shape
    xp = jnp.pad(x, ((0, 0), (1, 1), (1, 1), (0, 0)))
    phases = []
    for py in range(2):
        for px in range(2):
            wins = jnp.stack(
                [xp[:, py + dy:py + dy + h, px + dx:px + dx + w, :]
                 for dy in range(2) for dx in range(2)], axis=3)
            phases.append(wins.reshape(n * h * w, 4 * c))
    return jnp.stack(phases, axis=0)


def _interleave_phases(y, n, h, w):
    """y: [4, n*h*w, C] (phase = py*2+px) -> [n, 2h, 2w, C]."""
    c = y.shape[-1]
    y = y.reshape(2, 2, n, h, w, c)
    y = jnp.transpose(y, (2, 3, 0, 4, 1, 5))
    return y.reshape(n, 2 * h, 2 * w, c)


# ----------------------------- parameters ----------------------------------- #

_CIN_PAD = (512, 256, 128, 128)    # layers 2..5 input-channel pad
_COUT_PAD = (256, 128, 128, 128)   # layers 2..5 output-channel pad (lane-dense)
_BN_C_PAD = (512, 256, 128, 128)   # BN channel pad for BN layers 1..4


def init_params(seed=0):
    key = jax.random.PRNGKey(seed)
    ks = jax.random.split(key, 5)
    wshapes = [(100, 512, 4, 4), (512, 256, 4, 4), (256, 128, 4, 4),
               (128, 64, 4, 4), (64, 3, 4, 4)]
    ws = [0.02 * jax.random.normal(k, s, dtype=jnp.float32)
          for k, s in zip(ks, wshapes)]
    # PyTorch BatchNorm2d default init: weight=1, bias=0 (deterministic).
    gammas = [jnp.ones((c,), jnp.float32) for c in (512, 256, 128, 64)]
    betas = [jnp.zeros((c,), jnp.float32) for c in (512, 256, 128, 64)]
    return ws, gammas, betas


def prepare_params(ws, gammas, betas):
    """Hoisted (one-time) weight layout prep: done outside the jitted forward."""
    # Layer 1: ConvTranspose2d(100, 512, 4, 1, 0) on 1x1 input == plain matmul.
    # Columns are (kh, kw, cout) -> spatial-major, channel-minor.
    w1 = jnp.transpose(ws[0], (0, 2, 3, 1)).reshape(100, 4 * 4 * 512)
    w1 = jnp.pad(w1, ((0, 28), (0, 0))).astype(jnp.bfloat16)[None]  # [1,128,8192]
    w_phase = [_phase_weight(ws[li + 1], _CIN_PAD[li], _COUT_PAD[li])
               for li in range(4)]
    gs, bs = [], []
    for gvec, bvec, cp in zip(gammas, betas, _BN_C_PAD):
        cpad = cp - gvec.shape[0]
        gs.append(jnp.pad(gvec.astype(jnp.float32).reshape(1, -1),
                          ((0, 0), (0, cpad))))   # padded gamma=0 -> scale 0
        bs.append(jnp.pad(bvec.astype(jnp.float32).reshape(1, -1),
                          ((0, 0), (0, cpad))))
    return {"w1": w1, "w_phase": w_phase, "gamma": gs, "beta": bs}


# ------------------------------- forward ------------------------------------ #

def storygan_generator(x_nchw, prep):
    n = x_nchw.shape[0]
    x = x_nchw.reshape(n, 100).astype(jnp.bfloat16)
    x = jnp.pad(x, ((0, 0), (0, 28)))[None]                    # [1, n, 128]

    # Layer 1: ConvTranspose2d(100,512,4,1,0) (== matmul) with fused BN stats.
    y, st = pallas_bmm(x, prep["w1"], with_stats=True)         # [1,n,8192] bf16
    # Matmul columns are (spatial 16, channel 512); reduce stats to per-channel.
    s1 = st[:, :, 0, :].sum(axis=(0, 1)).reshape(16, 512).sum(axis=0,
                                                              keepdims=True)
    s2 = st[:, :, 1, :].sum(axis=(0, 1)).reshape(16, 512).sum(axis=0,
                                                              keepdims=True)
    scale, shift = _bn_scale_shift(s1, s2, n * 16,
                                   prep["gamma"][0], prep["beta"][0])
    ya = pallas_bn_apply(y.reshape(n * 16, 512), scale, shift)  # bf16
    x = ya.reshape(n, 4, 4, 512)
    h = w = 4

    # Layers 2-4: phase-decomposed ConvTranspose2d(4,2,1) + BN + ReLU.
    for li in range(3):
        patches = _phase_patches(x)                            # [4, M, 4*Cin_pad]
        y, st = pallas_bmm(patches, prep["w_phase"][li], with_stats=True)
        gph, mrows, cp = y.shape
        s1 = st[:, :, 0, :].sum(axis=(0, 1)).reshape(1, cp)
        s2 = st[:, :, 1, :].sum(axis=(0, 1)).reshape(1, cp)
        scale, shift = _bn_scale_shift(s1, s2, gph * mrows,
                                       prep["gamma"][li + 1],
                                       prep["beta"][li + 1])
        ya = pallas_bn_apply(y.reshape(gph * mrows, cp), scale, shift)
        x = _interleave_phases(ya.reshape(gph, mrows, cp), n, h, w)
        h, w = 2 * h, 2 * w

    # Layer 5: phase-decomposed ConvTranspose2d(64,3,4,2,1) with fused Tanh.
    patches = _phase_patches(x)
    y5 = pallas_bmm(patches, prep["w_phase"][3], activation="tanh",
                    out_dtype=jnp.float32)
    out = _interleave_phases(y5, n, h, w)[..., :3]             # [n, 64, 64, 3]
    return jnp.transpose(out, (0, 3, 1, 2))                    # NCHW


if __name__ == "__main__":
    ws, gammas, betas = init_params(0)
    prep = prepare_params(ws, gammas, betas)
    x = jax.random.normal(jax.random.PRNGKey(0), (2, 100, 1, 1),
                          dtype=jnp.float32)
    fwd = jax.jit(lambda inp: storygan_generator(inp, prep))
    out = jax.block_until_ready(fwd(x))
    assert out.shape == (2, 3, 64, 64), out.shape
    assert bool(jnp.all(jnp.isfinite(out)))
    assert bool(jnp.all(jnp.abs(out) <= 1.0))  # tanh range
    print("KERNEL_OK")
</pallas_src>

<mosaic_0001>
module attributes {stable_mosaic.version = 11 : i64} {
  func.func @kernel(%arg0: i32, %arg1: i32, %arg2: i32, %arg3: i32, %arg4: memref<1x8x128xbf16, #tpu.memory_space<vmem>>, %arg5: memref<1x128x512xbf16, #tpu.memory_space<vmem>>, %arg6: memref<1x8x512xbf16, #tpu.memory_space<vmem>>, %arg7: memref<1x1x8x512xf32, #tpu.memory_space<vmem>>, %arg8: memref<8x512xf32, #tpu.memory_space<vmem>>) attributes {dimension_semantics = [#tpu.dimension_semantics<parallel>, #tpu.dimension_semantics<parallel>, #tpu.dimension_semantics<parallel>, #tpu.dimension_semantics<arbitrary>], iteration_bounds = array<i64: 1, 1, 16, 1>, scalar_prefetch = 0 : i64, scratch_operands = 1 : i64, tpu.core_type = #tpu.core_type<tc>, window_params = [{transform_indices = @transform_0, window_bounds = array<i64: 1, 8, 128>}, {transform_indices = @transform_1, window_bounds = array<i64: 1, 128, 512>}, {transform_indices = @transform_2, window_bounds = array<i64: 1, 8, 512>}, {transform_indices = @transform_3, window_bounds = array<i64: 1, 1, 8, 512>}]} {
    %c0_i32 = arith.constant 0 : i32
    %0 = arith.cmpi eq, %arg3, %c0_i32 : i32
    %1 = arith.extui %0 : i1 to i32
    %c0_i32_0 = arith.constant 0 : i32
    %2 = arith.cmpi ne, %1, %c0_i32_0 : i32
    scf.if %2 {
      %cst_12 = arith.constant 0.000000e+00 : f32
      %14 = vector.broadcast %cst_12 : f32 to vector<8x512xf32>
      %c0_13 = arith.constant 0 : index
      %c0_14 = arith.constant 0 : index
      %15 = vector.load %arg8[%c0_13, %c0_14] : memref<8x512xf32, #tpu.memory_space<vmem>>, vector<8x512xf32>
      tpu.vector_store %arg8[%c0_13, %c0_14], %14 {strides = array<i32>} : memref<8x512xf32, #tpu.memory_space<vmem>>, vector<8x512xf32>,
    } else {
    }
    %c0 = arith.constant 0 : index
    %c0_1 = arith.constant 0 : index
    %3 = vector.load %arg8[%c0, %c0_1] : memref<8x512xf32, #tpu.memory_space<vmem>>, vector<8x512xf32>
    %c0_2 = arith.constant 0 : index
    %c0_3 = arith.constant 0 : index
    %c0_4 = arith.constant 0 : index
    %4 = vector.load %arg4[%c0_2, %c0_3, %c0_4] : memref<1x8x128xbf16, #tpu.memory_space<vmem>>, vector<1x8x128xbf16>
    %5 = vector.shape_cast %4 : vector<1x8x128xbf16> to vector<8x128xbf16>
    %c0_5 = arith.constant 0 : index
    %c0_6 = arith.constant 0 : index
    %c0_7 = arith.constant 0 : index
    %6 = vector.load %arg5[%c0_5, %c0_6, %c0_7] : memref<1x128x512xbf16, #tpu.memory_space<vmem>>, vector<1x128x512xbf16>
    %7 = vector.shape_cast %6 : vector<1x128x512xbf16> to vector<128x512xbf16>
    %cst = arith.constant dense<0.000000e+00> : vector<8x512xf32>
    %8 = tpu.matmul %5, %7, %cst {dimension_numbers = #tpu.dot_dimension_numbers<[1], [0], [0], [1], [0, 0, 1, 1], [], []>} : vector<8x128xbf16>, vector<128x512xbf16>, vector<8x512xf32> -> vector<8x512xf32>
    %9 = arith.addf %3, %8 : vector<8x512xf32>
    %c0_8 = arith.constant 0 : index
    %c0_9 = arith.constant 0 : index
    %10 = vector.load %arg8[%c0_8, %c0_9] : memref<8x512xf32, #tpu.memory_space<vmem>>, vector<8x512xf32>
    tpu.vector_store %arg8[%c0_8, %c0_9], %9 {strides = array<i32>} : memref<8x512xf32, #tpu.memory_space<vmem>>, vector<8x512xf32>,
    %c0_i32_10 = arith.constant 0 : i32
    %11 = arith.cmpi eq, %arg3, %c0_i32_10 : i32
    %12 = arith.extui %11 : i1 to i32
    %c0_i32_11 = arith.constant 0 : i32
    %13 = arith.cmpi ne, %12, %c0_i32_11 : i32
    scf.if %13 {
      %c0_12 = arith.constant 0 : index
      %c0_13 = arith.constant 0 : index
      %14 = vector.load %arg8[%c0_12, %c0_13] : memref<8x512xf32, #tpu.memory_space<vmem>>, vector<8x512xf32>
      %15 = arith.truncf %14 : vector<8x512xf32> to vector<8x512xbf16>
      %c0_14 = arith.constant 0 : index
      %c0_15 = arith.constant 0 : index
      %c0_16 = arith.constant 0 : index
      %16 = vector.load %arg6[%c0_14, %c0_15, %c0_16] : memref<1x8x512xbf16, #tpu.memory_space<vmem>>, vector<1x8x512xbf16>
      %17 = vector.shape_cast %16 : vector<1x8x512xbf16> to vector<8x512xbf16>
      %18 = vector.shape_cast %15 : vector<8x512xbf16> to vector<1x8x512xbf16>
      tpu.vector_store %arg6[%c0_14, %c0_15, %c0_16], %18 {strides = array<i32>} : memref<1x8x512xbf16, #tpu.memory_space<vmem>>, vector<1x8x512xbf16>,
      %cst_17 = arith.constant dense<0.000000e+00> : vector<512xf32>
      %19 = vector.multi_reduction <add>, %14, %cst_17 [0] : vector<8x512xf32> to vector<512xf32>
      %20 = vector.shape_cast %19 : vector<512xf32> to vector<1x512xf32>
      %21 = arith.mulf %14, %14 : vector<8x512xf32>
      %cst_18 = arith.constant dense<0.000000e+00> : vector<512xf32>
      %22 = vector.multi_reduction <add>, %21, %cst_18 [0] : vector<8x512xf32> to vector<512xf32>
      %23 = vector.shape_cast %22 : vector<512xf32> to vector<1x512xf32>
      %24 = tpu.iota {dimensions = array<i32: 0>} : vector<8x512xi32>
      %c0_i32_19 = arith.constant 0 : i32
      %25 = vector.broadcast %c0_i32_19 : i32 to vector<8x512xi32>
      %26 = arith.cmpi eq, %24, %25 : vector<8x512xi32>
      %c1_i32 = arith.constant 1 : i32
      %27 = vector.broadcast %c1_i32 : i32 to vector<8x512xi32>
      %28 = arith.cmpi eq, %24, %27 : vector<8x512xi32>
      %cst_20 = arith.constant 0.000000e+00 : f32
      %29 = vector.shape_cast %23 : vector<1x512xf32> to vector<1x512xf32>
      %30 = vector.broadcast %29 : vector<1x512xf32> to vector<8x512xf32>
      %31 = vector.broadcast %cst_20 : f32 to vector<8x512xf32>
      %32 = arith.select %28, %30, %31 : vector<8x512xi1>, vector<8x512xf32>
      %33 = vector.shape_cast %20 : vector<1x512xf32> to vector<1x512xf32>
      %34 = vector.broadcast %33 : vector<1x512xf32> to vector<8x512xf32>
      %35 = arith.select %26, %34, %32 : vector<8x512xi1>, vector<8x512xf32>
      %c0_21 = arith.constant 0 : index
      %c0_22 = arith.constant 0 : index
      %c0_23 = arith.constant 0 : index
      %c0_24 = arith.constant 0 : index
      %36 = vector.load %arg7[%c0_21, %c0_22, %c0_23, %c0_24] : memref<1x1x8x512xf32, #tpu.memory_space<vmem>>, vector<1x1x8x512xf32>
      %37 = vector.shape_cast %36 : vector<1x1x8x512xf32> to vector<8x512xf32>
      %38 = vector.shape_cast %35 : vector<8x512xf32> to vector<1x1x8x512xf32>
      tpu.vector_store %arg7[%c0_21, %c0_22, %c0_23, %c0_24], %38 {strides = array<i32>} : memref<1x1x8x512xf32, #tpu.memory_space<vmem>>, vector<1x1x8x512xf32>,
    } else {
    }
    return
  }
  func.func @transform_0(%arg0: i32, %arg1: i32, %arg2: i32, %arg3: i32) -> (i32, i32, i32) {
    %c0_i32 = arith.constant 0 : i32
    return %arg0, %arg1, %arg3 : i32, i32, i32
  }
  func.func @transform_1(%arg0: i32, %arg1: i32, %arg2: i32, %arg3: i32) -> (i32, i32, i32) {
    %c0_i32 = arith.constant 0 : i32
    return %arg0, %arg3, %arg2 : i32, i32, i32
  }
  func.func @transform_2(%arg0: i32, %arg1: i32, %arg2: i32, %arg3: i32) -> (i32, i32, i32) {
    %c0_i32 = arith.constant 0 : i32
    return %arg0, %arg1, %arg2 : i32, i32, i32
  }
  func.func @transform_3(%arg0: i32, %arg1: i32, %arg2: i32, %arg3: i32) -> (i32, i32, i32, i32) {
    %c0_i32 = arith.constant 0 : i32
    %c0_i32_0 = arith.constant 0 : i32
    return %arg0, %arg1, %c0_i32, %arg2 : i32, i32, i32, i32
  }
}

module attributes {stable_mosaic.version = 11 : i64} {
  func.func @_bn_apply_kernel(%arg0: i32, %arg1: memref<32x512xbf16, #tpu.memory_space<vmem>>, %arg2: memref<1x512xf32, #tpu.memory_space<vmem>>, %arg3: memref<1x512xf32, #tpu.memory_space<vmem>>, %arg4: memref<32x512xbf16, #tpu.memory_space<vmem>>) attributes {dimension_semantics = [#tpu.dimension_semantics<parallel>], iteration_bounds = array<i64: 1>, scalar_prefetch = 0 : i64, scratch_operands = 0 : i64, tpu.core_type = #tpu.core_type<tc>, window_params = [{transform_indices = @transform_0, window_bounds = array<i64: 32, 512>}, {pipeline_mode = #tpu.pipeline_mode<synchronous>, transform_indices = @transform_1, window_bounds = array<i64: 1, 512>}, {pipeline_mode = #tpu.pipeline_mode<synchronous>, transform_indices = @transform_2, window_bounds = array<i64: 1, 512>}, {transform_indices = @transform_3, window_bounds = array<i64: 32, 512>}]} {
    %c0 = arith.constant 0 : index
    %c0_0 = arith.constant 0 : index
    %0 = vector.load %arg1[%c0, %c0_0] : memref<32x512xbf16, #tpu.memory_space<vmem>>, vector<32x512xbf16>
    %1 = arith.extf %0 : vector<32x512xbf16> to vector<32x512xf32>
    %c0_1 = arith.constant 0 : index
    %c0_2 = arith.constant 0 : index
    %2 = vector.load %arg2[%c0_1, %c0_2] : memref<1x512xf32, #tpu.memory_space<vmem>>, vector<1x512xf32>
    %3 = vector.broadcast %2 : vector<1x512xf32> to vector<32x512xf32>
    %4 = arith.mulf %1, %3 : vector<32x512xf32>
    %c0_3 = arith.constant 0 : index
    %c0_4 = arith.constant 0 : index
    %5 = vector.load %arg3[%c0_3, %c0_4] : memref<1x512xf32, #tpu.memory_space<vmem>>, vector<1x512xf32>
    %6 = vector.broadcast %5 : vector<1x512xf32> to vector<32x512xf32>
    %7 = arith.addf %4, %6 : vector<32x512xf32>
    %cst = arith.constant 0.000000e+00 : f32
    %8 = vector.broadcast %cst : f32 to vector<32x512xf32>
    %9 = arith.maximumf %7, %8 : vector<32x512xf32>
    %10 = arith.truncf %9 : vector<32x512xf32> to vector<32x512xbf16>
    %c0_5 = arith.constant 0 : index
    %c0_6 = arith.constant 0 : index
    %11 = vector.load %arg4[%c0_5, %c0_6] : memref<32x512xbf16, #tpu.memory_space<vmem>>, vector<32x512xbf16>
    tpu.vector_store %arg4[%c0_5, %c0_6], %10 {strides = array<i32>} : memref<32x512xbf16, #tpu.memory_space<vmem>>, vector<32x512xbf16>,
    return
  }
  func.func @transform_0(%arg0: i32) -> (i32, i32) {
    %c0_i32 = arith.constant 0 : i32
    %c0_i32_0 = arith.constant 0 : i32
    return %arg0, %c0_i32 : i32, i32
  }
  func.func @transform_1(%arg0: i32) -> (i32, i32) {
    %c0_i32 = arith.constant 0 : i32
    %c0_i32_0 = arith.constant 0 : i32
    %c0_i32_1 = arith.constant 0 : i32
    return %c0_i32, %c0_i32_0 : i32, i32
  }
  func.func @transform_2(%arg0: i32) -> (i32, i32) {
    %c0_i32 = arith.constant 0 : i32
    %c0_i32_0 = arith.constant 0 : i32
    %c0_i32_1 = arith.constant 0 : i32
    return %c0_i32, %c0_i32_0 : i32, i32
  }
  func.func @transform_3(%arg0: i32) -> (i32, i32) {
    %c0_i32 = arith.constant 0 : i32
    %c0_i32_0 = arith.constant 0 : i32
    return %arg0, %c0_i32 : i32, i32
  }
}

module attributes {stable_mosaic.version = 11 : i64} {
  func.func @kernel(%arg0: i32, %arg1: i32, %arg2: i32, %arg3: i32, %arg4: memref<1x32x2048xbf16, #tpu.memory_space<vmem>>, %arg5: memref<1x2048x256xbf16, #tpu.memory_space<vmem>>, %arg6: memref<1x32x256xbf16, #tpu.memory_space<vmem>>, %arg7: memref<1x1x8x256xf32, #tpu.memory_space<vmem>>, %arg8: memref<32x256xf32, #tpu.memory_space<vmem>>) attributes {dimension_semantics = [#tpu.dimension_semantics<parallel>, #tpu.dimension_semantics<parallel>, #tpu.dimension_semantics<parallel>, #tpu.dimension_semantics<arbitrary>], iteration_bounds = array<i64: 4, 1, 1, 1>, scalar_prefetch = 0 : i64, scratch_operands = 1 : i64, tpu.core_type = #tpu.core_type<tc>, window_params = [{transform_indices = @transform_0, window_bounds = array<i64: 1, 32, 2048>}, {transform_indices = @transform_1, window_bounds = array<i64: 1, 2048, 256>}, {transform_indices = @transform_2, window_bounds = array<i64: 1, 32, 256>}, {transform_indices = @transform_3, window_bounds = array<i64: 1, 1, 8, 256>}]} {
    %c0_i32 = arith.constant 0 : i32
    %0 = arith.cmpi eq, %arg3, %c0_i32 : i32
    %1 = arith.extui %0 : i1 to i32
    %c0_i32_0 = arith.constant 0 : i32
    %2 = arith.cmpi ne, %1, %c0_i32_0 : i32
    scf.if %2 {
      %cst_12 = arith.constant 0.000000e+00 : f32
      %14 = vector.broadcast %cst_12 : f32 to vector<32x256xf32>
      %c0_13 = arith.constant 0 : index
      %c0_14 = arith.constant 0 : index
      %15 = vector.load %arg8[%c0_13, %c0_14] : memref<32x256xf32, #tpu.memory_space<vmem>>, vector<32x256xf32>
      tpu.vector_store %arg8[%c0_13, %c0_14], %14 {strides = array<i32>} : memref<32x256xf32, #tpu.memory_space<vmem>>, vector<32x256xf32>,
    } else {
    }
    %c0 = arith.constant 0 : index
    %c0_1 = arith.constant 0 : index
    %3 = vector.load %arg8[%c0, %c0_1] : memref<32x256xf32, #tpu.memory_space<vmem>>, vector<32x256xf32>
    %c0_2 = arith.constant 0 : index
    %c0_3 = arith.constant 0 : index
    %c0_4 = arith.constant 0 : index
    %4 = vector.load %arg4[%c0_2, %c0_3, %c0_4] : memref<1x32x2048xbf16, #tpu.memory_space<vmem>>, vector<1x32x2048xbf16>
    %5 = vector.shape_cast %4 : vector<1x32x2048xbf16> to vector<32x2048xbf16>
    %c0_5 = arith.constant 0 : index
    %c0_6 = arith.constant 0 : index
    %c0_7 = arith.constant 0 : index
    %6 = vector.load %arg5[%c0_5, %c0_6, %c0_7] : memref<1x2048x256xbf16, #tpu.memory_space<vmem>>, vector<1x2048x256xbf16>
    %7 = vector.shape_cast %6 : vector<1x2048x256xbf16> to vector<2048x256xbf16>
    %cst = arith.constant dense<0.000000e+00> : vector<32x256xf32>
    %8 = tpu.matmul %5, %7, %cst {dimension_numbers = #tpu.dot_dimension_numbers<[1], [0], [0], [1], [0, 0, 1, 1], [], []>} : vector<32x2048xbf16>, vector<2048x256xbf16>, vector<32x256xf32> -> vector<32x256xf32>
    %9 = arith.addf %3, %8 : vector<32x256xf32>
    %c0_8 = arith.constant 0 : index
    %c0_9 = arith.constant 0 : index
    %10 = vector.load %arg8[%c0_8, %c0_9] : memref<32x256xf32, #tpu.memory_space<vmem>>, vector<32x256xf32>
    tpu.vector_store %arg8[%c0_8, %c0_9], %9 {strides = array<i32>} : memref<32x256xf32, #tpu.memory_space<vmem>>, vector<32x256xf32>,
    %c0_i32_10 = arith.constant 0 : i32
    %11 = arith.cmpi eq, %arg3, %c0_i32_10 : i32
    %12 = arith.extui %11 : i1 to i32
    %c0_i32_11 = arith.constant 0 : i32
    %13 = arith.cmpi ne, %12, %c0_i32_11 : i32
    scf.if %13 {
      %c0_12 = arith.constant 0 : index
      %c0_13 = arith.constant 0 : index
      %14 = vector.load %arg8[%c0_12, %c0_13] : memref<32x256xf32, #tpu.memory_space<vmem>>, vector<32x256xf32>
      %15 = arith.truncf %14 : vector<32x256xf32> to vector<32x256xbf16>
      %c0_14 = arith.constant 0 : index
      %c0_15 = arith.constant 0 : index
      %c0_16 = arith.constant 0 : index
      %16 = vector.load %arg6[%c0_14, %c0_15, %c0_16] : memref<1x32x256xbf16, #tpu.memory_space<vmem>>, vector<1x32x256xbf16>
      %17 = vector.shape_cast %16 : vector<1x32x256xbf16> to vector<32x256xbf16>
      %18 = vector.shape_cast %15 : vector<32x256xbf16> to vector<1x32x256xbf16>
      tpu.vector_store %arg6[%c0_14, %c0_15, %c0_16], %18 {strides = array<i32>} : memref<1x32x256xbf16, #tpu.memory_space<vmem>>, vector<1x32x256xbf16>,
      %cst_17 = arith.constant dense<0.000000e+00> : vector<256xf32>
      %19 = vector.multi_reduction <add>, %14, %cst_17 [0] : vector<32x256xf32> to vector<256xf32>
      %20 = vector.shape_cast %19 : vector<256xf32> to vector<1x256xf32>
      %21 = arith.mulf %14, %14 : vector<32x256xf32>
      %cst_18 = arith.constant dense<0.000000e+00> : vector<256xf32>
      %22 = vector.multi_reduction <add>, %21, %cst_18 [0] : vector<32x256xf32> to vector<256xf32>
      %23 = vector.shape_cast %22 : vector<256xf32> to vector<1x256xf32>
      %24 = tpu.iota {dimensions = array<i32: 0>} : vector<8x256xi32>
      %c0_i32_19 = arith.constant 0 : i32
      %25 = vector.broadcast %c0_i32_19 : i32 to vector<8x256xi32>
      %26 = arith.cmpi eq, %24, %25 : vector<8x256xi32>
      %c1_i32 = arith.constant 1 : i32
      %27 = vector.broadcast %c1_i32 : i32 to vector<8x256xi32>
      %28 = arith.cmpi eq, %24, %27 : vector<8x256xi32>
      %cst_20 = arith.constant 0.000000e+00 : f32
      %29 = vector.shape_cast %23 : vector<1x256xf32> to vector<1x256xf32>
      %30 = vector.broadcast %29 : vector<1x256xf32> to vector<8x256xf32>
      %31 = vector.broadcast %cst_20 : f32 to vector<8x256xf32>
      %32 = arith.select %28, %30, %31 : vector<8x256xi1>, vector<8x256xf32>
      %33 = vector.shape_cast %20 : vector<1x256xf32> to vector<1x256xf32>
      %34 = vector.broadcast %33 : vector<1x256xf32> to vector<8x256xf32>
      %35 = arith.select %26, %34, %32 : vector<8x256xi1>, vector<8x256xf32>
      %c0_21 = arith.constant 0 : index
      %c0_22 = arith.constant 0 : index
      %c0_23 = arith.constant 0 : index
      %c0_24 = arith.constant 0 : index
      %36 = vector.load %arg7[%c0_21, %c0_22, %c0_23, %c0_24] : memref<1x1x8x256xf32, #tpu.memory_space<vmem>>, vector<1x1x8x256xf32>
      %37 = vector.shape_cast %36 : vector<1x1x8x256xf32> to vector<8x256xf32>
      %38 = vector.shape_cast %35 : vector<8x256xf32> to vector<1x1x8x256xf32>
      tpu.vector_store %arg7[%c0_21, %c0_22, %c0_23, %c0_24], %38 {strides = array<i32>} : memref<1x1x8x256xf32, #tpu.memory_space<vmem>>, vector<1x1x8x256xf32>,
    } else {
    }
    return
  }
  func.func @transform_0(%arg0: i32, %arg1: i32, %arg2: i32, %arg3: i32) -> (i32, i32, i32) {
    %c0_i32 = arith.constant 0 : i32
    return %arg0, %arg1, %arg3 : i32, i32, i32
  }
  func.func @transform_1(%arg0: i32, %arg1: i32, %arg2: i32, %arg3: i32) -> (i32, i32, i32) {
    %c0_i32 = arith.constant 0 : i32
    return %arg0, %arg3, %arg2 : i32, i32, i32
  }
  func.func @transform_2(%arg0: i32, %arg1: i32, %arg2: i32, %arg3: i32) -> (i32, i32, i32) {
    %c0_i32 = arith.constant 0 : i32
    return %arg0, %arg1, %arg2 : i32, i32, i32
  }
  func.func @transform_3(%arg0: i32, %arg1: i32, %arg2: i32, %arg3: i32) -> (i32, i32, i32, i32) {
    %c0_i32 = arith.constant 0 : i32
    %c0_i32_0 = arith.constant 0 : i32
    return %arg0, %arg1, %c0_i32, %arg2 : i32, i32, i32, i32
  }
}

module attributes {stable_mosaic.version = 11 : i64} {
  func.func @_bn_apply_kernel(%arg0: i32, %arg1: memref<128x256xbf16, #tpu.memory_space<vmem>>, %arg2: memref<1x256xf32, #tpu.memory_space<vmem>>, %arg3: memref<1x256xf32, #tpu.memory_space<vmem>>, %arg4: memref<128x256xbf16, #tpu.memory_space<vmem>>) attributes {dimension_semantics = [#tpu.dimension_semantics<parallel>], iteration_bounds = array<i64: 1>, scalar_prefetch = 0 : i64, scratch_operands = 0 : i64, tpu.core_type = #tpu.core_type<tc>, window_params = [{transform_indices = @transform_0, window_bounds = array<i64: 128, 256>}, {pipeline_mode = #tpu.pipeline_mode<synchronous>, transform_indices = @transform_1, window_bounds = array<i64: 1, 256>}, {pipeline_mode = #tpu.pipeline_mode<synchronous>, transform_indices = @transform_2, window_bounds = array<i64: 1, 256>}, {transform_indices = @transform_3, window_bounds = array<i64: 128, 256>}]} {
    %c0 = arith.constant 0 : index
    %c0_0 = arith.constant 0 : index
    %0 = vector.load %arg1[%c0, %c0_0] : memref<128x256xbf16, #tpu.memory_space<vmem>>, vector<128x256xbf16>
    %1 = arith.extf %0 : vector<128x256xbf16> to vector<128x256xf32>
    %c0_1 = arith.constant 0 : index
    %c0_2 = arith.constant 0 : index
    %2 = vector.load %arg2[%c0_1, %c0_2] : memref<1x256xf32, #tpu.memory_space<vmem>>, vector<1x256xf32>
    %3 = vector.broadcast %2 : vector<1x256xf32> to vector<128x256xf32>
    %4 = arith.mulf %1, %3 : vector<128x256xf32>
    %c0_3 = arith.constant 0 : index
    %c0_4 = arith.constant 0 : index
    %5 = vector.load %arg3[%c0_3, %c0_4] : memref<1x256xf32, #tpu.memory_space<vmem>>, vector<1x256xf32>
    %6 = vector.broadcast %5 : vector<1x256xf32> to vector<128x256xf32>
    %7 = arith.addf %4, %6 : vector<128x256xf32>
    %cst = arith.constant 0.000000e+00 : f32
    %8 = vector.broadcast %cst : f32 to vector<128x256xf32>
    %9 = arith.maximumf %7, %8 : vector<128x256xf32>
    %10 = arith.truncf %9 : vector<128x256xf32> to vector<128x256xbf16>
    %c0_5 = arith.constant 0 : index
    %c0_6 = arith.constant 0 : index
    %11 = vector.load %arg4[%c0_5, %c0_6] : memref<128x256xbf16, #tpu.memory_space<vmem>>, vector<128x256xbf16>
    tpu.vector_store %arg4[%c0_5, %c0_6], %10 {strides = array<i32>} : memref<128x256xbf16, #tpu.memory_space<vmem>>, vector<128x256xbf16>,
    return
  }
  func.func @transform_0(%arg0: i32) -> (i32, i32) {
    %c0_i32 = arith.constant 0 : i32
    %c0_i32_0 = arith.constant 0 : i32
    return %arg0, %c0_i32 : i32, i32
  }
  func.func @transform_1(%arg0: i32) -> (i32, i32) {
    %c0_i32 = arith.constant 0 : i32
    %c0_i32_0 = arith.constant 0 : i32
    %c0_i32_1 = arith.constant 0 : i32
    return %c0_i32, %c0_i32_0 : i32, i32
  }
  func.func @transform_2(%arg0: i32) -> (i32, i32) {
    %c0_i32 = arith.constant 0 : i32
    %c0_i32_0 = arith.constant 0 : i32
    %c0_i32_1 = arith.constant 0 : i32
    return %c0_i32, %c0_i32_0 : i32, i32
  }
  func.func @transform_3(%arg0: i32) -> (i32, i32) {
    %c0_i32 = arith.constant 0 : i32
    %c0_i32_0 = arith.constant 0 : i32
    return %arg0, %c0_i32 : i32, i32
  }
}

module attributes {stable_mosaic.version = 11 : i64} {
  func.func @kernel(%arg0: i32, %arg1: i32, %arg2: i32, %arg3: i32, %arg4: memref<1x128x1024xbf16, #tpu.memory_space<vmem>>, %arg5: memref<1x1024x128xbf16, #tpu.memory_space<vmem>>, %arg6: memref<1x128x128xbf16, #tpu.memory_space<vmem>>, %arg7: memref<1x1x8x128xf32, #tpu.memory_space<vmem>>, %arg8: memref<128x128xf32, #tpu.memory_space<vmem>>) attributes {dimension_semantics = [#tpu.dimension_semantics<parallel>, #tpu.dimension_semantics<parallel>, #tpu.dimension_semantics<parallel>, #tpu.dimension_semantics<arbitrary>], iteration_bounds = array<i64: 4, 1, 1, 1>, scalar_prefetch = 0 : i64, scratch_operands = 1 : i64, tpu.core_type = #tpu.core_type<tc>, window_params = [{transform_indices = @transform_0, window_bounds = array<i64: 1, 128, 1024>}, {transform_indices = @transform_1, window_bounds = array<i64: 1, 1024, 128>}, {transform_indices = @transform_2, window_bounds = array<i64: 1, 128, 128>}, {transform_indices = @transform_3, window_bounds = array<i64: 1, 1, 8, 128>}]} {
    %c0_i32 = arith.constant 0 : i32
    %0 = arith.cmpi eq, %arg3, %c0_i32 : i32
    %1 = arith.extui %0 : i1 to i32
    %c0_i32_0 = arith.constant 0 : i32
    %2 = arith.cmpi ne, %1, %c0_i32_0 : i32
    scf.if %2 {
      %cst_12 = arith.constant 0.000000e+00 : f32
      %14 = vector.broadcast %cst_12 : f32 to vector<128x128xf32>
      %c0_13 = arith.constant 0 : index
      %c0_14 = arith.constant 0 : index
      %15 = vector.load %arg8[%c0_13, %c0_14] : memref<128x128xf32, #tpu.memory_space<vmem>>, vector<128x128xf32>
      tpu.vector_store %arg8[%c0_13, %c0_14], %14 {strides = array<i32>} : memref<128x128xf32, #tpu.memory_space<vmem>>, vector<128x128xf32>,
    } else {
    }
    %c0 = arith.constant 0 : index
    %c0_1 = arith.constant 0 : index
    %3 = vector.load %arg8[%c0, %c0_1] : memref<128x128xf32, #tpu.memory_space<vmem>>, vector<128x128xf32>
    %c0_2 = arith.constant 0 : index
    %c0_3 = arith.constant 0 : index
    %c0_4 = arith.constant 0 : index
    %4 = vector.load %arg4[%c0_2, %c0_3, %c0_4] : memref<1x128x1024xbf16, #tpu.memory_space<vmem>>, vector<1x128x1024xbf16>
    %5 = vector.shape_cast %4 : vector<1x128x1024xbf16> to vector<128x1024xbf16>
    %c0_5 = arith.constant 0 : index
    %c0_6 = arith.constant 0 : index
    %c0_7 = arith.constant 0 : index
    %6 = vector.load %arg5[%c0_5, %c0_6, %c0_7] : memref<1x1024x128xbf16, #tpu.memory_space<vmem>>, vector<1x1024x128xbf16>
    %7 = vector.shape_cast %6 : vector<1x1024x128xbf16> to vector<1024x128xbf16>
    %cst = arith.constant dense<0.000000e+00> : vector<128x128xf32>
    %8 = tpu.matmul %5, %7, %cst {dimension_numbers = #tpu.dot_dimension_numbers<[1], [0], [0], [1], [0, 0, 1, 1], [], []>} : vector<128x1024xbf16>, vector<1024x128xbf16>, vector<128x128xf32> -> vector<128x128xf32>
    %9 = arith.addf %3, %8 : vector<128x128xf32>
    %c0_8 = arith.constant 0 : index
    %c0_9 = arith.constant 0 : index
    %10 = vector.load %arg8[%c0_8, %c0_9] : memref<128x128xf32, #tpu.memory_space<vmem>>, vector<128x128xf32>
    tpu.vector_store %arg8[%c0_8, %c0_9], %9 {strides = array<i32>} : memref<128x128xf32, #tpu.memory_space<vmem>>, vector<128x128xf32>,
    %c0_i32_10 = arith.constant 0 : i32
    %11 = arith.cmpi eq, %arg3, %c0_i32_10 : i32
    %12 = arith.extui %11 : i1 to i32
    %c0_i32_11 = arith.constant 0 : i32
    %13 = arith.cmpi ne, %12, %c0_i32_11 : i32
    scf.if %13 {
      %c0_12 = arith.constant 0 : index
      %c0_13 = arith.constant 0 : index
      %14 = vector.load %arg8[%c0_12, %c0_13] : memref<128x128xf32, #tpu.memory_space<vmem>>, vector<128x128xf32>
      %15 = arith.truncf %14 : vector<128x128xf32> to vector<128x128xbf16>
      %c0_14 = arith.constant 0 : index
      %c0_15 = arith.constant 0 : index
      %c0_16 = arith.constant 0 : index
      %16 = vector.load %arg6[%c0_14, %c0_15, %c0_16] : memref<1x128x128xbf16, #tpu.memory_space<vmem>>, vector<1x128x128xbf16>
      %17 = vector.shape_cast %16 : vector<1x128x128xbf16> to vector<128x128xbf16>
      %18 = vector.shape_cast %15 : vector<128x128xbf16> to vector<1x128x128xbf16>
      tpu.vector_store %arg6[%c0_14, %c0_15, %c0_16], %18 {strides = array<i32>} : memref<1x128x128xbf16, #tpu.memory_space<vmem>>, vector<1x128x128xbf16>,
      %cst_17 = arith.constant dense<0.000000e+00> : vector<128xf32>
      %19 = vector.multi_reduction <add>, %14, %cst_17 [0] : vector<128x128xf32> to vector<128xf32>
      %20 = vector.shape_cast %19 : vector<128xf32> to vector<1x128xf32>
      %21 = arith.mulf %14, %14 : vector<128x128xf32>
      %cst_18 = arith.constant dense<0.000000e+00> : vector<128xf32>
      %22 = vector.multi_reduction <add>, %21, %cst_18 [0] : vector<128x128xf32> to vector<128xf32>
      %23 = vector.shape_cast %22 : vector<128xf32> to vector<1x128xf32>
      %24 = tpu.iota {dimensions = array<i32: 0>} : vector<8x128xi32>
      %c0_i32_19 = arith.constant 0 : i32
      %25 = vector.broadcast %c0_i32_19 : i32 to vector<8x128xi32>
      %26 = arith.cmpi eq, %24, %25 : vector<8x128xi32>
      %c1_i32 = arith.constant 1 : i32
      %27 = vector.broadcast %c1_i32 : i32 to vector<8x128xi32>
      %28 = arith.cmpi eq, %24, %27 : vector<8x128xi32>
      %cst_20 = arith.constant 0.000000e+00 : f32
      %29 = vector.shape_cast %23 : vector<1x128xf32> to vector<1x128xf32>
      %30 = vector.broadcast %29 : vector<1x128xf32> to vector<8x128xf32>
      %31 = vector.broadcast %cst_20 : f32 to vector<8x128xf32>
      %32 = arith.select %28, %30, %31 : vector<8x128xi1>, vector<8x128xf32>
      %33 = vector.shape_cast %20 : vector<1x128xf32> to vector<1x128xf32>
      %34 = vector.broadcast %33 : vector<1x128xf32> to vector<8x128xf32>
      %35 = arith.select %26, %34, %32 : vector<8x128xi1>, vector<8x128xf32>
      %c0_21 = arith.constant 0 : index
      %c0_22 = arith.constant 0 : index
      %c0_23 = arith.constant 0 : index
      %c0_24 = arith.constant 0 : index
      %36 = vector.load %arg7[%c0_21, %c0_22, %c0_23, %c0_24] : memref<1x1x8x128xf32, #tpu.memory_space<vmem>>, vector<1x1x8x128xf32>
      %37 = vector.shape_cast %36 : vector<1x1x8x128xf32> to vector<8x128xf32>
      %38 = vector.shape_cast %35 : vector<8x128xf32> to vector<1x1x8x128xf32>
      tpu.vector_store %arg7[%c0_21, %c0_22, %c0_23, %c0_24], %38 {strides = array<i32>} : memref<1x1x8x128xf32, #tpu.memory_space<vmem>>, vector<1x1x8x128xf32>,
    } else {
    }
    return
  }
  func.func @transform_0(%arg0: i32, %arg1: i32, %arg2: i32, %arg3: i32) -> (i32, i32, i32) {
    %c0_i32 = arith.constant 0 : i32
    return %arg0, %arg1, %arg3 : i32, i32, i32
  }
  func.func @transform_1(%arg0: i32, %arg1: i32, %arg2: i32, %arg3: i32) -> (i32, i32, i32) {
    %c0_i32 = arith.constant 0 : i32
    return %arg0, %arg3, %arg2 : i32, i32, i32
  }
  func.func @transform_2(%arg0: i32, %arg1: i32, %arg2: i32, %arg3: i32) -> (i32, i32, i32) {
    %c0_i32 = arith.constant 0 : i32
    return %arg0, %arg1, %arg2 : i32, i32, i32
  }
  func.func @transform_3(%arg0: i32, %arg1: i32, %arg2: i32, %arg3: i32) -> (i32, i32, i32, i32) {
    %c0_i32 = arith.constant 0 : i32
    %c0_i32_0 = arith.constant 0 : i32
    return %arg0, %arg1, %c0_i32, %arg2 : i32, i32, i32, i32
  }
}

module attributes {stable_mosaic.version = 11 : i64} {
  func.func @_bn_apply_kernel(%arg0: i32, %arg1: memref<512x128xbf16, #tpu.memory_space<vmem>>, %arg2: memref<1x128xf32, #tpu.memory_space<vmem>>, %arg3: memref<1x128xf32, #tpu.memory_space<vmem>>, %arg4: memref<512x128xbf16, #tpu.memory_space<vmem>>) attributes {dimension_semantics = [#tpu.dimension_semantics<parallel>], iteration_bounds = array<i64: 1>, scalar_prefetch = 0 : i64, scratch_operands = 0 : i64, tpu.core_type = #tpu.core_type<tc>, window_params = [{transform_indices = @transform_0, window_bounds = array<i64: 512, 128>}, {pipeline_mode = #tpu.pipeline_mode<synchronous>, transform_indices = @transform_1, window_bounds = array<i64: 1, 128>}, {pipeline_mode = #tpu.pipeline_mode<synchronous>, transform_indices = @transform_2, window_bounds = array<i64: 1, 128>}, {transform_indices = @transform_3, window_bounds = array<i64: 512, 128>}]} {
    %c0 = arith.constant 0 : index
    %c0_0 = arith.constant 0 : index
    %0 = vector.load %arg1[%c0, %c0_0] : memref<512x128xbf16, #tpu.memory_space<vmem>>, vector<512x128xbf16>
    %1 = arith.extf %0 : vector<512x128xbf16> to vector<512x128xf32>
    %c0_1 = arith.constant 0 : index
    %c0_2 = arith.constant 0 : index
    %2 = vector.load %arg2[%c0_1, %c0_2] : memref<1x128xf32, #tpu.memory_space<vmem>>, vector<1x128xf32>
    %3 = vector.broadcast %2 : vector<1x128xf32> to vector<512x128xf32>
    %4 = arith.mulf %1, %3 : vector<512x128xf32>
    %c0_3 = arith.constant 0 : index
    %c0_4 = arith.constant 0 : index
    %5 = vector.load %arg3[%c0_3, %c0_4] : memref<1x128xf32, #tpu.memory_space<vmem>>, vector<1x128xf32>
    %6 = vector.broadcast %5 : vector<1x128xf32> to vector<512x128xf32>
    %7 = arith.addf %4, %6 : vector<512x128xf32>
    %cst = arith.constant 0.000000e+00 : f32
    %8 = vector.broadcast %cst : f32 to vector<512x128xf32>
    %9 = arith.maximumf %7, %8 : vector<512x128xf32>
    %10 = arith.truncf %9 : vector<512x128xf32> to vector<512x128xbf16>
    %c0_5 = arith.constant 0 : index
    %c0_6 = arith.constant 0 : index
    %11 = vector.load %arg4[%c0_5, %c0_6] : memref<512x128xbf16, #tpu.memory_space<vmem>>, vector<512x128xbf16>
    tpu.vector_store %arg4[%c0_5, %c0_6], %10 {strides = array<i32>} : memref<512x128xbf16, #tpu.memory_space<vmem>>, vector<512x128xbf16>,
    return
  }
  func.func @transform_0(%arg0: i32) -> (i32, i32) {
    %c0_i32 = arith.constant 0 : i32
    %c0_i32_0 = arith.constant 0 : i32
    return %arg0, %c0_i32 : i32, i32
  }
  func.func @transform_1(%arg0: i32) -> (i32, i32) {
    %c0_i32 = arith.constant 0 : i32
    %c0_i32_0 = arith.constant 0 : i32
    %c0_i32_1 = arith.constant 0 : i32
    return %c0_i32, %c0_i32_0 : i32, i32
  }
  func.func @transform_2(%arg0: i32) -> (i32, i32) {
    %c0_i32 = arith.constant 0 : i32
    %c0_i32_0 = arith.constant 0 : i32
    %c0_i32_1 = arith.constant 0 : i32
    return %c0_i32, %c0_i32_0 : i32, i32
  }
  func.func @transform_3(%arg0: i32) -> (i32, i32) {
    %c0_i32 = arith.constant 0 : i32
    %c0_i32_0 = arith.constant 0 : i32
    return %arg0, %c0_i32 : i32, i32
  }
}

module attributes {stable_mosaic.version = 11 : i64} {
  func.func @kernel(%arg0: i32, %arg1: i32, %arg2: i32, %arg3: i32, %arg4: memref<1x256x512xbf16, #tpu.memory_space<vmem>>, %arg5: memref<1x512x128xbf16, #tpu.memory_space<vmem>>, %arg6: memref<1x256x128xbf16, #tpu.memory_space<vmem>>, %arg7: memref<1x1x8x128xf32, #tpu.memory_space<vmem>>, %arg8: memref<256x128xf32, #tpu.memory_space<vmem>>) attributes {dimension_semantics = [#tpu.dimension_semantics<parallel>, #tpu.dimension_semantics<parallel>, #tpu.dimension_semantics<parallel>, #tpu.dimension_semantics<arbitrary>], iteration_bounds = array<i64: 4, 2, 1, 1>, scalar_prefetch = 0 : i64, scratch_operands = 1 : i64, tpu.core_type = #tpu.core_type<tc>, window_params = [{transform_indices = @transform_0, window_bounds = array<i64: 1, 256, 512>}, {transform_indices = @transform_1, window_bounds = array<i64: 1, 512, 128>}, {transform_indices = @transform_2, window_bounds = array<i64: 1, 256, 128>}, {transform_indices = @transform_3, window_bounds = array<i64: 1, 1, 8, 128>}]} {
    %c0_i32 = arith.constant 0 : i32
    %0 = arith.cmpi eq, %arg3, %c0_i32 : i32
    %1 = arith.extui %0 : i1 to i32
    %c0_i32_0 = arith.constant 0 : i32
    %2 = arith.cmpi ne, %1, %c0_i32_0 : i32
    scf.if %2 {
      %cst_12 = arith.constant 0.000000e+00 : f32
      %14 = vector.broadcast %cst_12 : f32 to vector<256x128xf32>
      %c0_13 = arith.constant 0 : index
      %c0_14 = arith.constant 0 : index
      %15 = vector.load %arg8[%c0_13, %c0_14] : memref<256x128xf32, #tpu.memory_space<vmem>>, vector<256x128xf32>
      tpu.vector_store %arg8[%c0_13, %c0_14], %14 {strides = array<i32>} : memref<256x128xf32, #tpu.memory_space<vmem>>, vector<256x128xf32>,
    } else {
    }
    %c0 = arith.constant 0 : index
    %c0_1 = arith.constant 0 : index
    %3 = vector.load %arg8[%c0, %c0_1] : memref<256x128xf32, #tpu.memory_space<vmem>>, vector<256x128xf32>
    %c0_2 = arith.constant 0 : index
    %c0_3 = arith.constant 0 : index
    %c0_4 = arith.constant 0 : index
    %4 = vector.load %arg4[%c0_2, %c0_3, %c0_4] : memref<1x256x512xbf16, #tpu.memory_space<vmem>>, vector<1x256x512xbf16>
    %5 = vector.shape_cast %4 : vector<1x256x512xbf16> to vector<256x512xbf16>
    %c0_5 = arith.constant 0 : index
    %c0_6 = arith.constant 0 : index
    %c0_7 = arith.constant 0 : index
    %6 = vector.load %arg5[%c0_5, %c0_6, %c0_7] : memref<1x512x128xbf16, #tpu.memory_space<vmem>>, vector<1x512x128xbf16>
    %7 = vector.shape_cast %6 : vector<1x512x128xbf16> to vector<512x128xbf16>
    %cst = arith.constant dense<0.000000e+00> : vector<256x128xf32>
    %8 = tpu.matmul %5, %7, %cst {dimension_numbers = #tpu.dot_dimension_numbers<[1], [0], [0], [1], [0, 0, 1, 1], [], []>} : vector<256x512xbf16>, vector<512x128xbf16>, vector<256x128xf32> -> vector<256x128xf32>
    %9 = arith.addf %3, %8 : vector<256x128xf32>
    %c0_8 = arith.constant 0 : index
    %c0_9 = arith.constant 0 : index
    %10 = vector.load %arg8[%c0_8, %c0_9] : memref<256x128xf32, #tpu.memory_space<vmem>>, vector<256x128xf32>
    tpu.vector_store %arg8[%c0_8, %c0_9], %9 {strides = array<i32>} : memref<256x128xf32, #tpu.memory_space<vmem>>, vector<256x128xf32>,
    %c0_i32_10 = arith.constant 0 : i32
    %11 = arith.cmpi eq, %arg3, %c0_i32_10 : i32
    %12 = arith.extui %11 : i1 to i32
    %c0_i32_11 = arith.constant 0 : i32
    %13 = arith.cmpi ne, %12, %c0_i32_11 : i32
    scf.if %13 {
      %c0_12 = arith.constant 0 : index
      %c0_13 = arith.constant 0 : index
      %14 = vector.load %arg8[%c0_12, %c0_13] : memref<256x128xf32, #tpu.memory_space<vmem>>, vector<256x128xf32>
      %15 = arith.truncf %14 : vector<256x128xf32> to vector<256x128xbf16>
      %c0_14 = arith.constant 0 : index
      %c0_15 = arith.constant 0 : index
      %c0_16 = arith.constant 0 : index
      %16 = vector.load %arg6[%c0_14, %c0_15, %c0_16] : memref<1x256x128xbf16, #tpu.memory_space<vmem>>, vector<1x256x128xbf16>
      %17 = vector.shape_cast %16 : vector<1x256x128xbf16> to vector<256x128xbf16>
      %18 = vector.shape_cast %15 : vector<256x128xbf16> to vector<1x256x128xbf16>
      tpu.vector_store %arg6[%c0_14, %c0_15, %c0_16], %18 {strides = array<i32>} : memref<1x256x128xbf16, #tpu.memory_space<vmem>>, vector<1x256x128xbf16>,
      %cst_17 = arith.constant dense<0.000000e+00> : vector<128xf32>
      %19 = vector.multi_reduction <add>, %14, %cst_17 [0] : vector<256x128xf32> to vector<128xf32>
      %20 = vector.shape_cast %19 : vector<128xf32> to vector<1x128xf32>
      %21 = arith.mulf %14, %14 : vector<256x128xf32>
      %cst_18 = arith.constant dense<0.000000e+00> : vector<128xf32>
      %22 = vector.multi_reduction <add>, %21, %cst_18 [0] : vector<256x128xf32> to vector<128xf32>
      %23 = vector.shape_cast %22 : vector<128xf32> to vector<1x128xf32>
      %24 = tpu.iota {dimensions = array<i32: 0>} : vector<8x128xi32>
      %c0_i32_19 = arith.constant 0 : i32
      %25 = vector.broadcast %c0_i32_19 : i32 to vector<8x128xi32>
      %26 = arith.cmpi eq, %24, %25 : vector<8x128xi32>
      %c1_i32 = arith.constant 1 : i32
      %27 = vector.broadcast %c1_i32 : i32 to vector<8x128xi32>
      %28 = arith.cmpi eq, %24, %27 : vector<8x128xi32>
      %cst_20 = arith.constant 0.000000e+00 : f32
      %29 = vector.shape_cast %23 : vector<1x128xf32> to vector<1x128xf32>
      %30 = vector.broadcast %29 : vector<1x128xf32> to vector<8x128xf32>
      %31 = vector.broadcast %cst_20 : f32 to vector<8x128xf32>
      %32 = arith.select %28, %30, %31 : vector<8x128xi1>, vector<8x128xf32>
      %33 = vector.shape_cast %20 : vector<1x128xf32> to vector<1x128xf32>
      %34 = vector.broadcast %33 : vector<1x128xf32> to vector<8x128xf32>
      %35 = arith.select %26, %34, %32 : vector<8x128xi1>, vector<8x128xf32>
      %c0_21 = arith.constant 0 : index
      %c0_22 = arith.constant 0 : index
      %c0_23 = arith.constant 0 : index
      %c0_24 = arith.constant 0 : index
      %36 = vector.load %arg7[%c0_21, %c0_22, %c0_23, %c0_24] : memref<1x1x8x128xf32, #tpu.memory_space<vmem>>, vector<1x1x8x128xf32>
      %37 = vector.shape_cast %36 : vector<1x1x8x128xf32> to vector<8x128xf32>
      %38 = vector.shape_cast %35 : vector<8x128xf32> to vector<1x1x8x128xf32>
      tpu.vector_store %arg7[%c0_21, %c0_22, %c0_23, %c0_24], %38 {strides = array<i32>} : memref<1x1x8x128xf32, #tpu.memory_space<vmem>>, vector<1x1x8x128xf32>,
    } else {
    }
    return
  }
  func.func @transform_0(%arg0: i32, %arg1: i32, %arg2: i32, %arg3: i32) -> (i32, i32, i32) {
    %c0_i32 = arith.constant 0 : i32
    return %arg0, %arg1, %arg3 : i32, i32, i32
  }
  func.func @transform_1(%arg0: i32, %arg1: i32, %arg2: i32, %arg3: i32) -> (i32, i32, i32) {
    %c0_i32 = arith.constant 0 : i32
    return %arg0, %arg3, %arg2 : i32, i32, i32
  }
  func.func @transform_2(%arg0: i32, %arg1: i32, %arg2: i32, %arg3: i32) -> (i32, i32, i32) {
    %c0_i32 = arith.constant 0 : i32
    return %arg0, %arg1, %arg2 : i32, i32, i32
  }
  func.func @transform_3(%arg0: i32, %arg1: i32, %arg2: i32, %arg3: i32) -> (i32, i32, i32, i32) {
    %c0_i32 = arith.constant 0 : i32
    %c0_i32_0 = arith.constant 0 : i32
    return %arg0, %arg1, %c0_i32, %arg2 : i32, i32, i32, i32
  }
}

module attributes {stable_mosaic.version = 11 : i64} {
  func.func @_bn_apply_kernel(%arg0: i32, %arg1: memref<1024x128xbf16, #tpu.memory_space<vmem>>, %arg2: memref<1x128xf32, #tpu.memory_space<vmem>>, %arg3: memref<1x128xf32, #tpu.memory_space<vmem>>, %arg4: memref<1024x128xbf16, #tpu.memory_space<vmem>>) attributes {dimension_semantics = [#tpu.dimension_semantics<parallel>], iteration_bounds = array<i64: 2>, scalar_prefetch = 0 : i64, scratch_operands = 0 : i64, tpu.core_type = #tpu.core_type<tc>, window_params = [{transform_indices = @transform_0, window_bounds = array<i64: 1024, 128>}, {pipeline_mode = #tpu.pipeline_mode<synchronous>, transform_indices = @transform_1, window_bounds = array<i64: 1, 128>}, {pipeline_mode = #tpu.pipeline_mode<synchronous>, transform_indices = @transform_2, window_bounds = array<i64: 1, 128>}, {transform_indices = @transform_3, window_bounds = array<i64: 1024, 128>}]} {
    %c0 = arith.constant 0 : index
    %c0_0 = arith.constant 0 : index
    %0 = vector.load %arg1[%c0, %c0_0] : memref<1024x128xbf16, #tpu.memory_space<vmem>>, vector<1024x128xbf16>
    %1 = arith.extf %0 : vector<1024x128xbf16> to vector<1024x128xf32>
    %c0_1 = arith.constant 0 : index
    %c0_2 = arith.constant 0 : index
    %2 = vector.load %arg2[%c0_1, %c0_2] : memref<1x128xf32, #tpu.memory_space<vmem>>, vector<1x128xf32>
    %3 = vector.broadcast %2 : vector<1x128xf32> to vector<1024x128xf32>
    %4 = arith.mulf %1, %3 : vector<1024x128xf32>
    %c0_3 = arith.constant 0 : index
    %c0_4 = arith.constant 0 : index
    %5 = vector.load %arg3[%c0_3, %c0_4] : memref<1x128xf32, #tpu.memory_space<vmem>>, vector<1x128xf32>
    %6 = vector.broadcast %5 : vector<1x128xf32> to vector<1024x128xf32>
    %7 = arith.addf %4, %6 : vector<1024x128xf32>
    %cst = arith.constant 0.000000e+00 : f32
    %8 = vector.broadcast %cst : f32 to vector<1024x128xf32>
    %9 = arith.maximumf %7, %8 : vector<1024x128xf32>
    %10 = arith.truncf %9 : vector<1024x128xf32> to vector<1024x128xbf16>
    %c0_5 = arith.constant 0 : index
    %c0_6 = arith.constant 0 : index
    %11 = vector.load %arg4[%c0_5, %c0_6] : memref<1024x128xbf16, #tpu.memory_space<vmem>>, vector<1024x128xbf16>
    tpu.vector_store %arg4[%c0_5, %c0_6], %10 {strides = array<i32>} : memref<1024x128xbf16, #tpu.memory_space<vmem>>, vector<1024x128xbf16>,
    return
  }
  func.func @transform_0(%arg0: i32) -> (i32, i32) {
    %c0_i32 = arith.constant 0 : i32
    %c0_i32_0 = arith.constant 0 : i32
    return %arg0, %c0_i32 : i32, i32
  }
  func.func @transform_1(%arg0: i32) -> (i32, i32) {
    %c0_i32 = arith.constant 0 : i32
    %c0_i32_0 = arith.constant 0 : i32
    %c0_i32_1 = arith.constant 0 : i32
    return %c0_i32, %c0_i32_0 : i32, i32
  }
  func.func @transform_2(%arg0: i32) -> (i32, i32) {
    %c0_i32 = arith.constant 0 : i32
    %c0_i32_0 = arith.constant 0 : i32
    %c0_i32_1 = arith.constant 0 : i32
    return %c0_i32, %c0_i32_0 : i32, i32
  }
  func.func @transform_3(%arg0: i32) -> (i32, i32) {
    %c0_i32 = arith.constant 0 : i32
    %c0_i32_0 = arith.constant 0 : i32
    return %arg0, %c0_i32 : i32, i32
  }
}

module attributes {stable_mosaic.version = 11 : i64} {
  func.func @kernel(%arg0: i32, %arg1: i32, %arg2: i32, %arg3: i32, %arg4: memref<1x256x512xbf16, #tpu.memory_space<vmem>>, %arg5: memref<1x512x128xbf16, #tpu.memory_space<vmem>>, %arg6: memref<1x256x128xf32, #tpu.memory_space<vmem>>, %arg7: memref<256x128xf32, #tpu.memory_space<vmem>>) attributes {dimension_semantics = [#tpu.dimension_semantics<parallel>, #tpu.dimension_semantics<parallel>, #tpu.dimension_semantics<parallel>, #tpu.dimension_semantics<arbitrary>], iteration_bounds = array<i64: 4, 8, 1, 1>, scalar_prefetch = 0 : i64, scratch_operands = 1 : i64, tpu.core_type = #tpu.core_type<tc>, window_params = [{transform_indices = @transform_0, window_bounds = array<i64: 1, 256, 512>}, {transform_indices = @transform_1, window_bounds = array<i64: 1, 512, 128>}, {transform_indices = @transform_2, window_bounds = array<i64: 1, 256, 128>}]} {
    %c0_i32 = arith.constant 0 : i32
    %0 = arith.cmpi eq, %arg3, %c0_i32 : i32
    %1 = arith.extui %0 : i1 to i32
    %c0_i32_0 = arith.constant 0 : i32
    %2 = arith.cmpi ne, %1, %c0_i32_0 : i32
    scf.if %2 {
      %cst_12 = arith.constant 0.000000e+00 : f32
      %14 = vector.broadcast %cst_12 : f32 to vector<256x128xf32>
      %c0_13 = arith.constant 0 : index
      %c0_14 = arith.constant 0 : index
      %15 = vector.load %arg7[%c0_13, %c0_14] : memref<256x128xf32, #tpu.memory_space<vmem>>, vector<256x128xf32>
      tpu.vector_store %arg7[%c0_13, %c0_14], %14 {strides = array<i32>} : memref<256x128xf32, #tpu.memory_space<vmem>>, vector<256x128xf32>,
    } else {
    }
    %c0 = arith.constant 0 : index
    %c0_1 = arith.constant 0 : index
    %3 = vector.load %arg7[%c0, %c0_1] : memref<256x128xf32, #tpu.memory_space<vmem>>, vector<256x128xf32>
    %c0_2 = arith.constant 0 : index
    %c0_3 = arith.constant 0 : index
    %c0_4 = arith.constant 0 : index
    %4 = vector.load %arg4[%c0_2, %c0_3, %c0_4] : memref<1x256x512xbf16, #tpu.memory_space<vmem>>, vector<1x256x512xbf16>
    %5 = vector.shape_cast %4 : vector<1x256x512xbf16> to vector<256x512xbf16>
    %c0_5 = arith.constant 0 : index
    %c0_6 = arith.constant 0 : index
    %c0_7 = arith.constant 0 : index
    %6 = vector.load %arg5[%c0_5, %c0_6, %c0_7] : memref<1x512x128xbf16, #tpu.memory_space<vmem>>, vector<1x512x128xbf16>
    %7 = vector.shape_cast %6 : vector<1x512x128xbf16> to vector<512x128xbf16>
    %cst = arith.constant dense<0.000000e+00> : vector<256x128xf32>
    %8 = tpu.matmul %5, %7, %cst {dimension_numbers = #tpu.dot_dimension_numbers<[1], [0], [0], [1], [0, 0, 1, 1], [], []>} : vector<256x512xbf16>, vector<512x128xbf16>, vector<256x128xf32> -> vector<256x128xf32>
    %9 = arith.addf %3, %8 : vector<256x128xf32>
    %c0_8 = arith.constant 0 : index
    %c0_9 = arith.constant 0 : index
    %10 = vector.load %arg7[%c0_8, %c0_9] : memref<256x128xf32, #tpu.memory_space<vmem>>, vector<256x128xf32>
    tpu.vector_store %arg7[%c0_8, %c0_9], %9 {strides = array<i32>} : memref<256x128xf32, #tpu.memory_space<vmem>>, vector<256x128xf32>,
    %c0_i32_10 = arith.constant 0 : i32
    %11 = arith.cmpi eq, %arg3, %c0_i32_10 : i32
    %12 = arith.extui %11 : i1 to i32
    %c0_i32_11 = arith.constant 0 : i32
    %13 = arith.cmpi ne, %12, %c0_i32_11 : i32
    scf.if %13 {
      %c0_12 = arith.constant 0 : index
      %c0_13 = arith.constant 0 : index
      %14 = vector.load %arg7[%c0_12, %c0_13] : memref<256x128xf32, #tpu.memory_space<vmem>>, vector<256x128xf32>
      %15 = math.tanh %14 : vector<256x128xf32>
      %c0_14 = arith.constant 0 : index
      %c0_15 = arith.constant 0 : index
      %c0_16 = arith.constant 0 : index
      %16 = vector.load %arg6[%c0_14, %c0_15, %c0_16] : memref<1x256x128xf32, #tpu.memory_space<vmem>>, vector<1x256x128xf32>
      %17 = vector.shape_cast %16 : vector<1x256x128xf32> to vector<256x128xf32>
      %18 = vector.shape_cast %15 : vector<256x128xf32> to vector<1x256x128xf32>
      tpu.vector_store %arg6[%c0_14, %c0_15, %c0_16], %18 {strides = array<i32>} : memref<1x256x128xf32, #tpu.memory_space<vmem>>, vector<1x256x128xf32>,
    } else {
    }
    return
  }
  func.func @transform_0(%arg0: i32, %arg1: i32, %arg2: i32, %arg3: i32) -> (i32, i32, i32) {
    %c0_i32 = arith.constant 0 : i32
    return %arg0, %arg1, %arg3 : i32, i32, i32
  }
  func.func @transform_1(%arg0: i32, %arg1: i32, %arg2: i32, %arg3: i32) -> (i32, i32, i32) {
    %c0_i32 = arith.constant 0 : i32
    return %arg0, %arg3, %arg2 : i32, i32, i32
  }
  func.func @transform_2(%arg0: i32, %arg1: i32, %arg2: i32, %arg3: i32) -> (i32, i32, i32) {
    %c0_i32 = arith.constant 0 : i32
    return %arg0, %arg1, %arg2 : i32, i32, i32
  }
}

</mosaic_0001>

<llo_original>
// kernel: _lambda_.9
$region0: #{_lambda_.9}
  #allocation0 [shape = 'u32[]', space=smem, size = 0x4, offset = 0x4, fixed_abs, tag = 'smem constant byte address 0x4 - core index']
  #allocation1 [shape = 'u32[144,128]{1,0:T(1,128)}', space=vmem, size = 0x12000, scoped, tag = 'internal scratch']
  #allocation2 [shape = 'f32[8,512]{1,0:T(8,128)}', space=vmem, size = 0x4000, scoped, tag = 'scratch operand']
  %s0 = inlined_call_operand.vmem [shape: bf16[1,8,128], index: 0, kind: input, shape index: {}]
  %s1 = inlined_call_operand.hbm [shape: bf16[1,128,8192], index: 1, kind: input, shape index: {}]
  %s2 = inlined_call_operand.vmem [shape: bf16[1,8,8192], index: 2, kind: output, shape index: {0}]
  %s3 = inlined_call_operand.vmem [shape: f32[1,1,8,8192], index: 3, kind: output, shape index: {1}]
  %4 = xla_tuple %s2, %s3
  %s5 = sld [smem:[#allocation0]]
  $region61: #{_lambda_.9} parent=0
    _
  %s7 = ssub.s32 1, %s5
  %s8 = scalar_select 0, %s7, %s5
  $region1: #{_lambda_.9} parent=0
    #allocation3 [shape = 'u8[262144]{0}', space=vmem, size = 0x40000, scoped, tag = 'input window, operand 1']
    #allocation4 [shape = 's32[2]{0}', space=sflag, size = 0x8, scoped, tag = 'scoped memory for _lambda_.9']
    %9 = vsyncpa [#allocation4], 0
    %s10 = scalar_lea.sflag [#allocation4], 1
    %11 = vsyncpa %s10, 0
    loop: start=0, step=1, limit=18
    $region2: #{_lambda_.9} parent=1 // loop_pre_header
      _
    $region3: #{_lambda_.9} parent=1 // loop_header
      %s13 = sphi 0, %s17
      %p14 = scmp.ge.s32.totalorder %s13, 18
      %s20 = sphi 0, %s46
      %s21 = sphi 0, %s42
      %s22 = sphi 0, %s38
      %s23 = sphi 0, %s34
      %s24 = sphi 0, %s20
      %s25 = sphi 0, %s21
      %s26 = sphi 0, %s22
      %s27 = sphi 0, %s23
      %s28 = sphi 0, %s24
      %s29 = sphi 0, %s25
      %s30 = sphi 0, %s26
      %s31 = sphi 0, %s27
      %s53 = sphi 0, %s55
      %s56 = sphi 0, %s53
      %s57 = sphi 0, %s56
      %s73 = sphi 0, %s57
      %s83 = sphi 0, %s85
      %s86 = sphi 0, %s83
      %s87 = sphi 0, %s86
      %s103 = sphi 0, %s87
      %s113 = sphi 0, %s115
      %s116 = sphi 0, %s113
      %s117 = sphi 0, %s116
      %s133 = sphi 0, %s117
      %s143 = sphi 0, %s145
      %s146 = sphi 0, %s143
      %s147 = sphi 0, %s146
      %s163 = sphi 0, %s147
    $region4: #{_lambda_.9} parent=1 // loop_header_branch
      %16 = sbr.rel (%p14) target = $region8
    $region5: #{_lambda_.9} parent=1 // loop_body
      %s18 = ssub.s32 %s13, 1
      %s19 = ssub.s32 %s13, 2
      %s32 = sadd.s32 1, %s23
      %p33 = scmp.ge.s32.totalorder %s32, 1
      %s34 = scalar_select %p33, 0, %s32
      %s35 = sadd.s32 1, %s22
      %s36 = scalar_select %p33, %s35, %s22
      %p37 = scmp.ge.s32.totalorder %s36, 16
      %s38 = scalar_select %p37, 0, %s36
      %s39 = sadd.s32 1, %s21
      %s40 = scalar_select %p37, %s39, %s21
      %p41 = scmp.ge.s32.totalorder %s40, 1
      %s42 = scalar_select %p41, 0, %s40
      %s43 = sadd.s32 1, %s20
      %s44 = scalar_select %p41, %s43, %s20
      %p45 = scmp.ge.s32.totalorder %s44, 1
      %s46 = scalar_select %p45, 0, %s44
      %s47 = ssub.s32 %s20, %s46
      %s48 = ssub.s32 %s21, %s42
      %s49 = sor.u32 %s47, %s48
      %s50 = ssub.s32 %s23, %s34
      %s51 = sor.u32 %s49, %s50
      %p52 = scmp.eq.s32.totalorder %s51, 0
      %s54 = sadd.s32 %s53, 1
      %s55 = scalar_select %p52, %s53, %s54
      %p58 = pneg %p52
      %p59 = scmp.eq.s32.totalorder %s13, 15
      %p60 = por %p58, %p59
      %p61 = scmp.ne.s32.totalorder %s53, %s56
      %p62 = scmp.eq.s32.totalorder %s13, 0
      %p63 = por %p61, %p62
      %p64 = scmp.ne.s32.totalorder %s53, %s56
      %p65 = scmp.eq.s32.totalorder %s18, 15
      %p66 = por %p64, %p65
      %p67 = scmp.ne.s32.totalorder %s56, %s57
      %p68 = scmp.eq.s32.totalorder %s18, 0
      %p69 = por %p67, %p68
      %p70 = scmp.ne.s32.totalorder %s56, %s57
      %p71 = scmp.eq.s32.totalorder %s19, 15
      %p72 = por %p70, %p71
      %p74 = scmp.ne.s32.totalorder %s57, %s73
      %p75 = scmp.eq.s32.totalorder %s19, 0
      %p76 = por %p74, %p75
      %s77 = ssub.s32 %s20, %s46
      %s78 = ssub.s32 %s23, %s34
      %s79 = sor.u32 %s77, %s78
      %s80 = ssub.s32 %s22, %s38
      %s81 = sor.u32 %s79, %s80
      %p82 = scmp.eq.s32.totalorder %s81, 0
      %s84 = sadd.s32 %s83, 1
      %s85 = scalar_select %p82, %s83, %s84
      %p88 = pneg %p82
      %p89 = scmp.eq.s32.totalorder %s13, 15
      %p90 = por %p88, %p89
      %p91 = scmp.ne.s32.totalorder %s83, %s86
      %p92 = scmp.eq.s32.totalorder %s13, 0
      %p93 = por %p91, %p92
      %p94 = scmp.ne.s32.totalorder %s83, %s86
      %p95 = scmp.eq.s32.totalorder %s18, 15
      %p96 = por %p94, %p95
      %p97 = scmp.ne.s32.totalorder %s86, %s87
      %p98 = scmp.eq.s32.totalorder %s18, 0
      %p99 = por %p97, %p98
      %p100 = scmp.ne.s32.totalorder %s86, %s87
      %p101 = scmp.eq.s32.totalorder %s19, 15
      %p102 = por %p100, %p101
      %p104 = scmp.ne.s32.totalorder %s87, %s103
      %p105 = scmp.eq.s32.totalorder %s19, 0
      %p106 = por %p104, %p105
      %s107 = ssub.s32 %s20, %s46
      %s108 = ssub.s32 %s21, %s42
      %s109 = sor.u32 %s107, %s108
      %s110 = ssub.s32 %s22, %s38
      %s111 = sor.u32 %s109, %s110
      %p112 = scmp.eq.s32.totalorder %s111, 0
      %s114 = sadd.s32 %s113, 1
      %s115 = scalar_select %p112, %s113, %s114
      %p118 = pneg %p112
      %p119 = scmp.eq.s32.totalorder %s13, 15
      %p120 = por %p118, %p119
      %p121 = scmp.ne.s32.totalorder %s113, %s116
      %p122 = scmp.eq.s32.totalorder %s13, 0
      %p123 = por %p121, %p122
      %p124 = scmp.ne.s32.totalorder %s113, %s116
      %p125 = scmp.eq.s32.totalorder %s18, 15
      %p126 = por %p124, %p125
      %p127 = scmp.ne.s32.totalorder %s116, %s117
      %p128 = scmp.eq.s32.totalorder %s18, 0
      %p129 = por %p127, %p128
      %p130 = scmp.ne.s32.totalorder %s116, %s117
      %p131 = scmp.eq.s32.totalorder %s19, 15
      %p132 = por %p130, %p131
      %p134 = scmp.ne.s32.totalorder %s117, %s133
      %p135 = scmp.eq.s32.totalorder %s19, 0
      %p136 = por %p134, %p135
      %s137 = ssub.s32 %s20, %s46
      %s138 = ssub.s32 %s21, %s42
      %s139 = sor.u32 %s137, %s138
      %s140 = ssub.s32 %s22, %s38
      %s141 = sor.u32 %s139, %s140
      %p142 = scmp.eq.s32.totalorder %s141, 0
      %s144 = sadd.s32 %s143, 1
      %s145 = scalar_select %p142, %s143, %s144
      %p148 = pneg %p142
      %p149 = scmp.eq.s32.totalorder %s13, 15
      %p150 = por %p148, %p149
      %p151 = scmp.ne.s32.totalorder %s143, %s146
      %p152 = scmp.eq.s32.totalorder %s13, 0
      %p153 = por %p151, %p152
      %p154 = scmp.ne.s32.totalorder %s143, %s146
      %p155 = scmp.eq.s32.totalorder %s18, 15
      %p156 = por %p154, %p155
      %p157 = scmp.ne.s32.totalorder %s146, %s147
      %p158 = scmp.eq.s32.totalorder %s18, 0
      %p159 = por %p157, %p158
      %p160 = scmp.ne.s32.totalorder %s146, %s147
      %p161 = scmp.eq.s32.totalorder %s19, 15
      %p162 = por %p160, %p161
      %p164 = scmp.ne.s32.totalorder %s147, %s163
      %p165 = scmp.eq.s32.totalorder %s19, 0
      %p166 = por %p164, %p165
      %p167 = scmp.le.s32.totalorder 1, %s13
      %p168 = scmp.lt.s32.totalorder %s13, 17
      %p169 = pnand %p167, %p168
      %p170 = pneg %p169
      // Predicated region
      $region9: #{_lambda_.9} parent=5 // pred_check
        _
      $region10: #{_lambda_.9} parent=5 // pred_check_branch
        %172 = sbr.rel (%p169) target = $region12
      $region11: #{_lambda_.9} parent=5 // pred_region
        %s173 = ssub.s32 %s13, 1
        // Predicated region
        $region13: #{_lambda_.9} parent=11 // pred_check
          %p174 = pneg %p69
        $region14: #{_lambda_.9} parent=11 // pred_check_branch
          %176 = sbr.rel (%p174) target = $region16
        $region15: #{_lambda_.9} parent=11 // pred_region
          %p177 = scmp.lt.s32.totalorder %s24, 0
          %s178 = scalar_select %p177, %s24, 0
          %p179 = scmp.lt.s32.totalorder %s25, 0
          %s180 = scalar_select %p179, %s25, 0
          %p181 = scmp.lt.s32.totalorder %s27, 0
          %s182 = scalar_select %p181, %s27, 0
          %s183 = sadd.s32 %s182, %s180
          %s184 = sadd.s32 %s183, %s178
          %s185 = smul.addr %s184, 4
          %s186 = scalar_lea.vmem %s0, %s185
        $region16: #{_lambda_.9} parent=11 // pred_fallthru
          _
      $region12: #{_lambda_.9} parent=5 // pred_fallthru
        _
      %p187 = scmp.lt.s32.totalorder %s13, 16
      // Predicated region
      $region17: #{_lambda_.9} parent=5 // pred_check
        %p188 = pneg %p187
      $region18: #{_lambda_.9} parent=5 // pred_check_branch
        %190 = sbr.rel (%p188) target = $region20
      $region19: #{_lambda_.9} parent=5 // pred_region
        // Predicated region
        $region21: #{_lambda_.9} parent=19 // pred_check
          %p191 = pneg %p93
        $region22: #{_lambda_.9} parent=19 // pred_check_branch
          %193 = sbr.rel (%p191) target = $region24
        $region23: #{_lambda_.9} parent=19 // pred_region
          %s194 = sand.u32 %s83, 1
          %s195 = scalar_lea.sflag [#allocation4], %s194
          %s196 = sand.u32 %s83, 1
          %s197 = smul.addr %s196, 256
          %s198 = scalar_lea.vmem [#allocation3], %s197
          %s199 = smul.u32 16, %s23
          %s200 = smul.u32 4, %s22
          %s202 = ssub.s32 4096, 4096
          %203 = vsyncadd %s195, %s202
          %s204 = smul.addr %s199, 64
          %s205 = sadd.s32 %s200, %s204
          %s206 = smul.addr %s20, 1024
          %s207 = sadd.s32 %s205, %s206
          %s208 = smul.addr %s207, 64
          %s209 = scalar_lea.hbm %s1, %s208
          %s210 = sshll.u32 %s198, 4
          %s211 = int_to_ptr.vmem [resolvable:$true] %s210
          %216 = dma.hbm_to_vmem [thread:$0]  %s209, 4096, %s211, %s195, 4096, 256, 16
        $region24: #{_lambda_.9} parent=19 // pred_fallthru
          _
      $region20: #{_lambda_.9} parent=5 // pred_fallthru
        _
      %p217 = scmp.le.s32.totalorder 1, %s13
      %p218 = scmp.lt.s32.totalorder %s13, 17
      %p219 = pnand %p217, %p218
      %p220 = pneg %p219
      // Predicated region
      $region25: #{_lambda_.9} parent=5 // pred_check
        _
      $region26: #{_lambda_.9} parent=5 // pred_check_branch
        %222 = sbr.rel (%p219) target = $region28
      $region27: #{_lambda_.9} parent=5 // pred_region
        %s223 = ssub.s32 %s13, 1
        %s224 = sand.u32 %s86, 1
        %s225 = scalar_lea.sflag [#allocation4], %s224
        %s226 = sand.u32 %s86, 1
        %s227 = smul.addr %s226, 256
        %s228 = scalar_lea.vmem [#allocation3], %s227
        // Predicated region
        $region29: #{_lambda_.9} parent=27 // pred_check
          %p229 = pneg %p99
        $region30: #{_lambda_.9} parent=27 // pred_check_branch
          %231 = sbr.rel (%p229) target = $region32
        $region31: #{_lambda_.9} parent=27 // pred_region
          %232 = dma.done %s225, 4096
        $region32: #{_lambda_.9} parent=27 // pred_fallthru
          _
        %p233 = scmp.lt.s32.totalorder %s24, 0
        %s234 = scalar_select %p233, %s24, 0
        %p235 = scmp.lt.s32.totalorder %s25, 0
        %s236 = scalar_select %p235, %s25, 0
        %p237 = scmp.lt.s32.totalorder %s27, 0
        %s238 = scalar_select %p237, %s27, 0
        %s239 = sadd.s32 %s238, %s236
        %s240 = sadd.s32 %s239, %s234
        %s241 = smul.addr %s240, 4
        %s242 = scalar_lea.vmem %s0, %s241
        %p243 = pneg %p69
        %p244 = pneg %p66
        %s245 = sand.u32 %s86, 1
        %s246 = scalar_lea.sflag [#allocation4], %s245
        %s247 = sand.u32 %s86, 1
        %s248 = smul.addr %s247, 256
        %s249 = scalar_lea.vmem [#allocation3], %s248
        %p250 = pneg %p99
        %p251 = pneg %p96
        %p252 = pneg %p129
        %p253 = pneg %p126
        %s254 = smul.u32 4, %s26
        %p255 = scmp.lt.s32.totalorder %s24, 0
        %s256 = scalar_select %p255, %s24, 0
        %p257 = scmp.lt.s32.totalorder %s25, 0
        %s258 = scalar_select %p257, %s25, 0
        %p259 = scmp.lt.s32.totalorder %s254, 63
        %s260 = scalar_select %p259, %s254, 63
        %s261 = smul.addr %s258, 64
        %s262 = sadd.s32 %s260, %s261
        %s263 = smul.addr %s256, 64
        %s264 = sadd.s32 %s262, %s263
        %s265 = smul.addr %s264, 4
        %s266 = scalar_lea.vmem %s2, %s265
        %p267 = pneg %p159
        %p268 = pneg %p156
        %s269 = smul.u32 4, %s26
        %p270 = scmp.lt.s32.totalorder %s24, 0
        %s271 = scalar_select %p270, %s24, 0
        %p272 = scmp.lt.s32.totalorder %s25, 0
        %s273 = scalar_select %p272, %s25, 0
        %p274 = scmp.lt.s32.totalorder %s269, 63
        %s275 = scalar_select %p274, %s269, 63
        %s276 = smul.addr %s273, 64
        %s277 = sadd.s32 %s275, %s276
        %s278 = smul.addr %s271, 64
        %s279 = sadd.s32 %s277, %s278
        %s280 = smul.addr %s279, 8
        %s281 = scalar_lea.vmem %s3, %s280
        %p282 = scmp.lt.s32.totalorder %s24, 0
        %s283 = scalar_select %p282, %s24, 0
        %p284 = scmp.lt.s32.totalorder %s25, 0
        %s285 = scalar_select %p284, %s25, 0
        %p286 = scmp.lt.s32.totalorder %s27, 0
        %s287 = scalar_select %p286, %s27, 0
        %s288 = sadd.s32 %s287, %s285
        %s289 = sadd.s32 %s288, %s283
        %s290 = smul.addr %s289, 4
        %s291 = scalar_lea.vmem %s0, %s290
        %s292 = smul.u32 16, %s27
        %s293 = smul.u32 4, %s26
        %s294 = smul.u32 4, %s26
        %p295 = scmp.lt.s32.totalorder %s24, 0
        %s296 = scalar_select %p295, %s24, 0
        %p297 = scmp.lt.s32.totalorder %s25, 0
        %s298 = scalar_select %p297, %s25, 0
        %p299 = scmp.lt.s32.totalorder %s294, 63
        %s300 = scalar_select %p299, %s294, 63
        %s301 = smul.addr %s298, 64
        %s302 = sadd.s32 %s300, %s301
        %s303 = smul.addr %s296, 64
        %s304 = sadd.s32 %s302, %s303
        %s305 = smul.addr %s304, 4
        %s306 = scalar_lea.vmem %s2, %s305
        %s307 = smul.u32 4, %s26
        %s308 = smul.u32 4, %s26
        %p309 = scmp.lt.s32.totalorder %s24, 0
        %s310 = scalar_select %p309, %s24, 0
        %p311 = scmp.lt.s32.totalorder %s25, 0
        %s312 = scalar_select %p311, %s25, 0
        %p313 = scmp.lt.s32.totalorder %s308, 63
        %s314 = scalar_select %p313, %s308, 63
        %s315 = smul.addr %s312, 64
        %s316 = sadd.s32 %s314, %s315
        %s317 = smul.addr %s310, 64
        %s318 = sadd.s32 %s316, %s317
        %s319 = smul.addr %s318, 8
        %s320 = scalar_lea.vmem %s3, %s319
        %s321 = smul.u32 4, %s26
        %p323 = scmp.eq.s32.totalorder %s27, 0
        // Predicated region
        $region33: #{_lambda_.9} parent=27 // pred_check
          %p324 = pneg %p323
        $region34: #{_lambda_.9} parent=27 // pred_check_branch
          %326 = sbr.rel (%p324) target = $region36
        $region35: #{_lambda_.9} parent=27 // pred_region
          %327 = vst [vmem:[#allocation2] sm:$0xff] 0.0
          %328 = vst [vmem:[#allocation2 + $0x8] sm:$0xff] 0.0
          %329 = vst [vmem:[#allocation2 + $0x10] sm:$0xff] 0.0
          %330 = vst [vmem:[#allocation2 + $0x18] sm:$0xff] 0.0
        $region36: #{_lambda_.9} parent=27 // pred_fallthru
          _
        %v331 = vld [vmem:[#allocation2] sm:$0xff]
        %v332 = vld [vmem:[#allocation2 + $0x8] sm:$0xff]
        %v333 = vld [vmem:[#allocation2 + $0x10] sm:$0xff]
        %v334 = vld [vmem:[#allocation2 + $0x18] sm:$0xff]
        %v335 = vld [vmem:[%s291] sm:$0xf]
        %v336 = vld [vmem:[%s228] sm:$0xff]
        %v337 = vld [vmem:[%s228 + $0x8] sm:$0xff]
        %v338 = vld [vmem:[%s228 + $0x10] sm:$0xff]
        %v339 = vld [vmem:[%s228 + $0x18] sm:$0xff]
        %v340 = vld [vmem:[%s228 + $0x20] sm:$0xff]
        %v341 = vld [vmem:[%s228 + $0x28] sm:$0xff]
        %v342 = vld [vmem:[%s228 + $0x30] sm:$0xff]
        %v343 = vld [vmem:[%s228 + $0x38] sm:$0xff]
        %v344 = vld [vmem:[%s228 + $0x40] sm:$0xff]
        %v345 = vld [vmem:[%s228 + $0x48] sm:$0xff]
        %v346 = vld [vmem:[%s228 + $0x50] sm:$0xff]
        %v347 = vld [vmem:[%s228 + $0x58] sm:$0xff]
        %v348 = vld [vmem:[%s228 + $0x60] sm:$0xff]
        %v349 = vld [vmem:[%s228 + $0x68] sm:$0xff]
        %v350 = vld [vmem:[%s228 + $0x70] sm:$0xff]
        %v351 = vld [vmem:[%s228 + $0x78] sm:$0xff]
        %v352 = vld [vmem:[%s228 + $0x80] sm:$0xff]
        %v353 = vld [vmem:[%s228 + $0x88] sm:$0xff]
        %v354 = vld [vmem:[%s228 + $0x90] sm:$0xff]
        %v355 = vld [vmem:[%s228 + $0x98] sm:$0xff]
        %v356 = vld [vmem:[%s228 + $0xa0] sm:$0xff]
        %v357 = vld [vmem:[%s228 + $0xa8] sm:$0xff]
        %v358 = vld [vmem:[%s228 + $0xb0] sm:$0xff]
        %v359 = vld [vmem:[%s228 + $0xb8] sm:$0xff]
        %v360 = vld [vmem:[%s228 + $0xc0] sm:$0xff]
        %v361 = vld [vmem:[%s228 + $0xc8] sm:$0xff]
        %v362 = vld [vmem:[%s228 + $0xd0] sm:$0xff]
        %v363 = vld [vmem:[%s228 + $0xd8] sm:$0xff]
        %v364 = vld [vmem:[%s228 + $0xe0] sm:$0xff]
        %v365 = vld [vmem:[%s228 + $0xe8] sm:$0xff]
        %v366 = vld [vmem:[%s228 + $0xf0] sm:$0xff]
        %v367 = vld [vmem:[%s228 + $0xf8] sm:$0xff]
        %v400 = vunpack.c.l.b16 %v336
        %v401 = vunpack.c.h.b16 %v336
        %v402 = vunpack.c.l.b16 %v337
        %v403 = vunpack.c.h.b16 %v337
        %v404 = vunpack.c.l.b16 %v338
        %v405 = vunpack.c.h.b16 %v338
        %v406 = vunpack.c.l.b16 %v339
        %v407 = vunpack.c.h.b16 %v339
        %v408 = vunpack.c.l.b16 %v340
        %v409 = vunpack.c.h.b16 %v340
        %v410 = vunpack.c.l.b16 %v341
        %v411 = vunpack.c.h.b16 %v341
        %v412 = vunpack.c.l.b16 %v342
        %v413 = vunpack.c.h.b16 %v342
        %v414 = vunpack.c.l.b16 %v343
        %v415 = vunpack.c.h.b16 %v343
        %v416 = vunpack.c.l.b16 %v344
        %v417 = vunpack.c.h.b16 %v344
        %v418 = vunpack.c.l.b16 %v345
        %v419 = vunpack.c.h.b16 %v345
        %v420 = vunpack.c.l.b16 %v346
        %v421 = vunpack.c.h.b16 %v346
        %v422 = vunpack.c.l.b16 %v347
        %v423 = vunpack.c.h.b16 %v347
        %v424 = vunpack.c.l.b16 %v348
        %v425 = vunpack.c.h.b16 %v348
        %v426 = vunpack.c.l.b16 %v349
        %v427 = vunpack.c.h.b16 %v349
        %v428 = vunpack.c.l.b16 %v350
        %v429 = vunpack.c.h.b16 %v350
        %v430 = vunpack.c.l.b16 %v351
        %v431 = vunpack.c.h.b16 %v351
        %v432 = vunpack.c.l.b16 %v352
        %v433 = vunpack.c.h.b16 %v352
        %v434 = vunpack.c.l.b16 %v353
        %v435 = vunpack.c.h.b16 %v353
        %v436 = vunpack.c.l.b16 %v354
        %v437 = vunpack.c.h.b16 %v354
        %v438 = vunpack.c.l.b16 %v355
        %v439 = vunpack.c.h.b16 %v355
        %v440 = vunpack.c.l.b16 %v356
        %v441 = vunpack.c.h.b16 %v356
        %v442 = vunpack.c.l.b16 %v357
        %v443 = vunpack.c.h.b16 %v357
        %v444 = vunpack.c.l.b16 %v358
        %v445 = vunpack.c.h.b16 %v358
        %v446 = vunpack.c.l.b16 %v359
        %v447 = vunpack.c.h.b16 %v359
        %v448 = vunpack.c.l.b16 %v360
        %v449 = vunpack.c.h.b16 %v360
        %v450 = vunpack.c.l.b16 %v361
        %v451 = vunpack.c.h.b16 %v361
        %v452 = vunpack.c.l.b16 %v362
        %v453 = vunpack.c.h.b16 %v362
        %v454 = vunpack.c.l.b16 %v363
        %v455 = vunpack.c.h.b16 %v363
        %v456 = vunpack.c.l.b16 %v364
        %v457 = vunpack.c.h.b16 %v364
        %v458 = vunpack.c.l.b16 %v365
        %v459 = vunpack.c.h.b16 %v365
        %v460 = vunpack.c.l.b16 %v366
        %v461 = vunpack.c.h.b16 %v366
        %v462 = vunpack.c.l.b16 %v367
        %v463 = vunpack.c.h.b16 %v367
        %v464 = vpack.c.b16 %v404, %v400
        %v465 = vpack.c.b16 %v405, %v401
        %v466 = vpack.c.b16 %v406, %v402
        %v467 = vpack.c.b16 %v407, %v403
        %v468 = vpack.c.b16 %v412, %v408
        %v469 = vpack.c.b16 %v413, %v409
        %v470 = vpack.c.b16 %v414, %v410
        %v471 = vpack.c.b16 %v415, %v411
        %v472 = vpack.c.b16 %v420, %v416
        %v473 = vpack.c.b16 %v421, %v417
        %v474 = vpack.c.b16 %v422, %v418
        %v475 = vpack.c.b16 %v423, %v419
        %v476 = vpack.c.b16 %v428, %v424
        %v477 = vpack.c.b16 %v429, %v425
        %v478 = vpack.c.b16 %v430, %v426
        %v479 = vpack.c.b16 %v431, %v427
        %v480 = vpack.c.b16 %v436, %v432
        %v481 = vpack.c.b16 %v437, %v433
        %v482 = vpack.c.b16 %v438, %v434
        %v483 = vpack.c.b16 %v439, %v435
        %v484 = vpack.c.b16 %v444, %v440
        %v485 = vpack.c.b16 %v445, %v441
        %v486 = vpack.c.b16 %v446, %v442
        %v487 = vpack.c.b16 %v447, %v443
        %v488 = vpack.c.b16 %v452, %v448
        %v489 = vpack.c.b16 %v453, %v449
        %v490 = vpack.c.b16 %v454, %v450
        %v491 = vpack.c.b16 %v455, %v451
        %v492 = vpack.c.b16 %v460, %v456
        %v493 = vpack.c.b16 %v461, %v457
        %v494 = vpack.c.b16 %v462, %v458
        %v495 = vpack.c.b16 %v463, %v459
        %528 = vmatprep.subr.bf16.mxu0 %v493
        %529 = vmatpush1.bf16.msra.mxu0 %v492
        %530 = vmatprep.subr.bf16.mxu0 %v489
        %531 = vmatpush1.bf16.msra.mxu0 %v488
        %532 = vmatprep.subr.bf16.mxu0 %v485
        %533 = vmatpush1.bf16.msra.mxu0 %v484
        %534 = vmatprep.subr.bf16.mxu0 %v481
        %535 = vmatpush1.bf16.msra.mxu0 %v480
        %536 = vmatprep.subr.bf16.mxu0 %v477
        %537 = vmatpush1.bf16.msra.mxu0 %v476
        %538 = vmatprep.subr.bf16.mxu0 %v473
        %539 = vmatpush1.bf16.msra.mxu0 %v472
        %540 = vmatprep.subr.bf16.mxu0 %v469
        %541 = vmatpush1.bf16.msra.mxu0 %v468
        %542 = vmatprep.subr.bf16.mxu0 %v465
        %543 = vmatpush1.bf16.msra.mxu0 %v464
        %544 = vmatprep.subr.bf16.mxu0 0
        %545 = vmatpush2.bf16.msra.mxu0 0
        %546 = vmatprep.subr.bf16.mxu0 0
        %547 = vmatpush2.bf16.msra.mxu0 0
        %548 = vmatprep.subr.bf16.mxu0 0
        %549 = vmatpush2.bf16.msra.mxu0 0
        %550 = vmatprep.subr.bf16.mxu0 0
        %551 = vmatpush2.bf16.msra.mxu0 0
        %552 = vmatprep.subr.bf16.mxu0 0
        %553 = vmatpush2.bf16.msra.mxu0 0
        %554 = vmatprep.subr.bf16.mxu0 0
        %555 = vmatpush2.bf16.msra.mxu0 0
        %556 = vmatprep.subr.bf16.mxu0 0
        %557 = vmatpush2.bf16.msra.mxu0 0
        %558 = vmatprep.subr.bf16.mxu0 0
        %559 = vmatpush2.bf16.msra.mxu0 0
        %560 = vmatprep.mubr.bf16.mxu0 0
        %561 = vmatmul.mubr.bf16.gmra.mxu0 %v335
        %v562 = vpop.f32.mrf.mxu0
        %v563 = vadd.f32 0.0, %v562
        %v564 = vpop.f32.mrf.mxu0
        %v565 = vadd.f32 0.0, %v564
        %v566 = vpop.f32.mrf.mxu0
        %v567 = vpop.f32.mrf.mxu0
        %568 = vdwg.mxu0
        %569 = vmatprep.subr.bf16.mxu0 %v495
        %570 = vmatpush1.bf16.msra.mxu0 %v494
        %571 = vmatprep.subr.bf16.mxu0 %v491
        %572 = vmatpush1.bf16.msra.mxu0 %v490
        %573 = vmatprep.subr.bf16.mxu0 %v487
        %574 = vmatpush1.bf16.msra.mxu0 %v486
        %575 = vmatprep.subr.bf16.mxu0 %v483
        %576 = vmatpush1.bf16.msra.mxu0 %v482
        %577 = vmatprep.subr.bf16.mxu0 %v479
        %578 = vmatpush1.bf16.msra.mxu0 %v478
        %579 = vmatprep.subr.bf16.mxu0 %v475
        %580 = vmatpush1.bf16.msra.mxu0 %v474
        %581 = vmatprep.subr.bf16.mxu0 %v471
        %582 = vmatpush1.bf16.msra.mxu0 %v470
        %583 = vmatprep.subr.bf16.mxu0 %v467
        %584 = vmatpush1.bf16.msra.mxu0 %v466
        %585 = vmatprep.subr.bf16.mxu0 0
        %586 = vmatpush2.bf16.msra.mxu0 0
        %587 = vmatprep.subr.bf16.mxu0 0
        %588 = vmatpush2.bf16.msra.mxu0 0
        %589 = vmatprep.subr.bf16.mxu0 0
        %590 = vmatpush2.bf16.msra.mxu0 0
        %591 = vmatprep.subr.bf16.mxu0 0
        %592 = vmatpush2.bf16.msra.mxu0 0
        %593 = vmatprep.subr.bf16.mxu0 0
        %594 = vmatpush2.bf16.msra.mxu0 0
        %595 = vmatprep.subr.bf16.mxu0 0
        %596 = vmatpush2.bf16.msra.mxu0 0
        %597 = vmatprep.subr.bf16.mxu0 0
        %598 = vmatpush2.bf16.msra.mxu0 0
        %599 = vmatprep.subr.bf16.mxu0 0
        %600 = vmatpush2.bf16.msra.mxu0 0
        %601 = vmatprep.mubr.bf16.mxu0 0
        %602 = vmatmul.mubr.bf16.gmra.mxu0 %v335
        %v603 = vpop.f32.mrf.mxu0
        %v604 = vadd.f32 0.0, %v603
        %v605 = vpop.f32.mrf.mxu0
        %v606 = vadd.f32 0.0, %v605
        %v607 = vpop.f32.mrf.mxu0
        %v608 = vpop.f32.mrf.mxu0
        %609 = vdwg.mxu0
        %v610 = vadd.f32 %v331, %v563
        %v611 = vadd.f32 %v332, %v565
        %v612 = vadd.f32 %v333, %v604
        %v613 = vadd.f32 %v334, %v606
        %614 = vst [vmem:[#allocation2] sm:$0xff] %v610
        %615 = vst [vmem:[#allocation2 + $0x8] sm:$0xff] %v611
        %616 = vst [vmem:[#allocation2 + $0x10] sm:$0xff] %v612
        %617 = vst [vmem:[#allocation2 + $0x18] sm:$0xff] %v613
        // Predicated region
        $region37: #{_lambda_.9} parent=27 // pred_check
          %p618 = pneg %p323
        $region38: #{_lambda_.9} parent=27 // pred_check_branch
          %620 = sbr.rel (%p618) target = $region40
        $region39: #{_lambda_.9} parent=27 // pred_region
          %v621 = vld [vmem:[#allocation2] sm:$0xff]
          %v622 = vld [vmem:[#allocation2 + $0x8] sm:$0xff]
          %v623 = vld [vmem:[#allocation2 + $0x10] sm:$0xff]
          %v624 = vld [vmem:[#allocation2 + $0x18] sm:$0xff]
          %v625 = vpack.c.bf16 %v621, %v621
          %v626 = vpack.c.bf16 %v622, %v622
          %v627 = vpack.c.bf16 %v623, %v623
          %v628 = vpack.c.bf16 %v624, %v624
          %v633 = vunpack.c.l.b16 %v625
          %v634 = vunpack.c.l.b16 %v626
          %v635 = vunpack.c.l.b16 %v627
          %v636 = vunpack.c.l.b16 %v628
          %v637 = vpack.c.b16 %v634, %v633
          %v638 = vpack.c.b16 %v636, %v635
          %641 = vst [vmem:[%s306] sm:$0xff] %v637
          %642 = vst [vmem:[%s306 + $0x8] sm:$0xff] %v638
          %v643 = vrot.slane %v621, 4
          %v644 = vadd.f32 %v621, %v643
          %v645 = vrot.slane %v644, 2
          %v646 = vadd.f32 %v644, %v645
          %v647 = vrot.slane %v646, 1
          %v648 = vadd.f32 %v646, %v647
          %v649 = vrot.slane %v622, 4
          %v650 = vadd.f32 %v622, %v649
          %v651 = vrot.slane %v650, 2
          %v652 = vadd.f32 %v650, %v651
          %v653 = vrot.slane %v652, 1
          %v654 = vadd.f32 %v652, %v653
          %v655 = vrot.slane %v623, 4
          %v656 = vadd.f32 %v623, %v655
          %v657 = vrot.slane %v656, 2
          %v658 = vadd.f32 %v656, %v657
          %v659 = vrot.slane %v658, 1
          %v660 = vadd.f32 %v658, %v659
          %v661 = vrot.slane %v624, 4
          %v662 = vadd.f32 %v624, %v661
          %v663 = vrot.slane %v662, 2
          %v664 = vadd.f32 %v662, %v663
          %v665 = vrot.slane %v664, 1
          %v666 = vadd.f32 %v664, %v665
          %v667 = vmul.f32 %v621, %v621
          %v668 = vmul.f32 %v622, %v622
          %v669 = vmul.f32 %v623, %v623
          %v670 = vmul.f32 %v624, %v624
          %v671 = vrot.slane %v667, 4
          %v672 = vadd.f32 %v667, %v671
          %v673 = vrot.slane %v672, 2
          %v674 = vadd.f32 %v672, %v673
          %v675 = vrot.slane %v674, 1
          %v676 = vadd.f32 %v674, %v675
          %v677 = vrot.slane %v668, 4
          %v678 = vadd.f32 %v668, %v677
          %v679 = vrot.slane %v678, 2
          %v680 = vadd.f32 %v678, %v679
          %v681 = vrot.slane %v680, 1
          %v682 = vadd.f32 %v680, %v681
          %v683 = vrot.slane %v669, 4
          %v684 = vadd.f32 %v669, %v683
          %v685 = vrot.slane %v684, 2
          %v686 = vadd.f32 %v684, %v685
          %v687 = vrot.slane %v686, 1
          %v688 = vadd.f32 %v686, %v687
          %v689 = vrot.slane %v670, 4
          %v690 = vadd.f32 %v670, %v689
          %v691 = vrot.slane %v690, 2
          %v692 = vadd.f32 %v690, %v691
          %v693 = vrot.slane %v692, 1
          %v694 = vadd.f32 %v692, %v693
          %v695 = vlaneseq
          %v696 = vshrl.u32 %v695, 7
          %vm697 = vcmp.eq.s32.totalorder %v696, 0
          %vm698 = vcmp.eq.s32.totalorder %v696, 1
          %v699 = vsel %vm698, %v676, 0.0
          %v700 = vsel %vm698, %v682, 0.0
          %v701 = vsel %vm698, %v688, 0.0
          %v702 = vsel %vm698, %v694, 0.0
          %v703 = vsel %vm697, %v648, %v699
          %v704 = vsel %vm697, %v654, %v700
          %v705 = vsel %vm697, %v660, %v701
          %v706 = vsel %vm697, %v666, %v702
          %707 = vst [vmem:[%s320] sm:$0xff] %v703
          %708 = vst [vmem:[%s320 + $0x8] sm:$0xff] %v704
          %709 = vst [vmem:[%s320 + $0x10] sm:$0xff] %v705
          %710 = vst [vmem:[%s320 + $0x18] sm:$0xff] %v706
        $region40: #{_lambda_.9} parent=27 // pred_fallthru
          _
        %s711 = smul.u32 4, %s26
        %p712 = scmp.lt.s32.totalorder %s24, 0
        %s713 = scalar_select %p712, %s24, 0
        %p714 = scmp.lt.s32.totalorder %s25, 0
        %s715 = scalar_select %p714, %s25, 0
        %p716 = scmp.lt.s32.totalorder %s711, 63
        %s717 = scalar_select %p716, %s711, 63
        %s718 = smul.addr %s715, 64
        %s719 = sadd.s32 %s717, %s718
        %s720 = smul.addr %s713, 64
        %s721 = sadd.s32 %s719, %s720
        %s722 = smul.addr %s721, 4
        %s723 = scalar_lea.vmem %s2, %s722
        %s724 = smul.u32 4, %s26
        %p725 = scmp.lt.s32.totalorder %s24, 0
        %s726 = scalar_select %p725, %s24, 0
        %p727 = scmp.lt.s32.totalorder %s25, 0
        %s728 = scalar_select %p727, %s25, 0
        %p729 = scmp.lt.s32.totalorder %s724, 63
        %s730 = scalar_select %p729, %s724, 63
        %s731 = smul.addr %s728, 64
        %s732 = sadd.s32 %s730, %s731
        %s733 = smul.addr %s726, 64
        %s734 = sadd.s32 %s732, %s733
        %s735 = smul.addr %s734, 8
        %s736 = scalar_lea.vmem %s3, %s735
        // Predicated region
        $region41: #{_lambda_.9} parent=27 // pred_check
          %p737 = pneg %p126
        $region42: #{_lambda_.9} parent=27 // pred_check_branch
          %739 = sbr.rel (%p737) target = $region44
        $region43: #{_lambda_.9} parent=27 // pred_region
          %s740 = smul.u32 4, %s26
        $region44: #{_lambda_.9} parent=27 // pred_fallthru
          _
        // Predicated region
        $region45: #{_lambda_.9} parent=27 // pred_check
          %p741 = pneg %p156
        $region46: #{_lambda_.9} parent=27 // pred_check_branch
          %743 = sbr.rel (%p741) target = $region48
        $region47: #{_lambda_.9} parent=27 // pred_region
          %s744 = smul.u32 4, %s26
        $region48: #{_lambda_.9} parent=27 // pred_fallthru
          _
      $region28: #{_lambda_.9} parent=5 // pred_fallthru
        _
      %p745 = scmp.le.s32.totalorder 2, %s13
      // Predicated region
      $region49: #{_lambda_.9} parent=5 // pred_check
        %p746 = pneg %p745
      $region50: #{_lambda_.9} parent=5 // pred_check_branch
        %748 = sbr.rel (%p746) target = $region52
      $region51: #{_lambda_.9} parent=5 // pred_region
        %s749 = ssub.s32 %s13, 2
        // Predicated region
        $region53: #{_lambda_.9} parent=51 // pred_check
          %p750 = pneg %p132
        $region54: #{_lambda_.9} parent=51 // pred_check_branch
          %752 = sbr.rel (%p750) target = $region56
        $region55: #{_lambda_.9} parent=51 // pred_region
          %s753 = smul.u32 4, %s30
          %p754 = scmp.lt.s32.totalorder %s28, 0
          %s755 = scalar_select %p754, %s28, 0
          %p756 = scmp.lt.s32.totalorder %s29, 0
          %s757 = scalar_select %p756, %s29, 0
          %p758 = scmp.lt.s32.totalorder %s753, 63
          %s759 = scalar_select %p758, %s753, 63
          %s760 = smul.addr %s757, 64
          %s761 = sadd.s32 %s759, %s760
          %s762 = smul.addr %s755, 64
          %s763 = sadd.s32 %s761, %s762
          %s764 = smul.addr %s763, 4
          %s765 = scalar_lea.vmem %s2, %s764
        $region56: #{_lambda_.9} parent=51 // pred_fallthru
          _
        // Predicated region
        $region57: #{_lambda_.9} parent=51 // pred_check
          %p766 = pneg %p162
        $region58: #{_lambda_.9} parent=51 // pred_check_branch
          %768 = sbr.rel (%p766) target = $region60
        $region59: #{_lambda_.9} parent=51 // pred_region
          %s769 = smul.u32 4, %s30
          %p770 = scmp.lt.s32.totalorder %s28, 0
          %s771 = scalar_select %p770, %s28, 0
          %p772 = scmp.lt.s32.totalorder %s29, 0
          %s773 = scalar_select %p772, %s29, 0
          %p774 = scmp.lt.s32.totalorder %s769, 63
          %s775 = scalar_select %p774, %s769, 63
          %s776 = smul.addr %s773, 64
          %s777 = sadd.s32 %s775, %s776
          %s778 = smul.addr %s771, 64
          %s779 = sadd.s32 %s777, %s778
          %s780 = smul.addr %s779, 8
          %s781 = scalar_lea.vmem %s3, %s780
        $region60: #{_lambda_.9} parent=51 // pred_fallthru
          _
      $region52: #{_lambda_.9} parent=5 // pred_fallthru
        _
    $region6: #{_lambda_.9} parent=1 // loop_footer
      %s17 = sadd.s32 1, %s13
    $region7: #{_lambda_.9} parent=1 // loop_footer_branch
      %12 = sbr.rel target = $region3
    $region8: #{_lambda_.9} parent=1 // loop_exit
      _
    %782 = vsyncpa [#allocation4], 1
    %s783 = scalar_lea.sflag [#allocation4], 1
    %784 = vsyncpa %s783, 1

// kernel: _lambda_.10
$region0: #{_lambda_.10}
  #allocation0 [shape = 'u32[]', space=smem, size = 0x4, offset = 0x4, fixed_abs, tag = 'smem constant byte address 0x4 - core index']
  #allocation1 [shape = 'u32[144,128]{1,0:T(1,128)}', space=vmem, size = 0x12000, scoped, tag = 'internal scratch']
  %s0 = inlined_call_operand.vmem [shape: bf16[32,512], index: 0, kind: input, shape index: {}]
  %s1 = inlined_call_operand.vmem [shape: f32[1,512], index: 1, kind: input, shape index: {}]
  %s2 = inlined_call_operand.vmem [shape: f32[1,512], index: 2, kind: input, shape index: {}]
  %s3 = inlined_call_operand.vmem [shape: bf16[32,512], index: 3, kind: output, shape index: {}]
  %s4 = sld [smem:[#allocation0]]
  $region22: #{_lambda_.10} parent=0
    _
  %s6 = ssub.s32 1, %s4
  %s7 = scalar_select 0, %s6, %s4
  // Predicated region
  $region2: #{_lambda_.10} parent=0 // pred_check
    _
  $region3: #{_lambda_.10} parent=0 // pred_check_branch
    %9 = sbr.rel (0) target = $region5
  $region4: #{_lambda_.10} parent=0 // pred_region
    _
  $region5: #{_lambda_.10} parent=0 // pred_fallthru
    _
  // Predicated region
  $region6: #{_lambda_.10} parent=0 // pred_check
    _
  $region7: #{_lambda_.10} parent=0 // pred_check_branch
    %11 = sbr.rel (0) target = $region9
  $region8: #{_lambda_.10} parent=0 // pred_region
    _
  $region9: #{_lambda_.10} parent=0 // pred_fallthru
    _
  // Predicated region
  $region10: #{_lambda_.10} parent=0 // pred_check
    _
  $region11: #{_lambda_.10} parent=0 // pred_check_branch
    %13 = sbr.rel (0) target = $region13
  $region12: #{_lambda_.10} parent=0 // pred_region
    _
  $region13: #{_lambda_.10} parent=0 // pred_fallthru
    _
  %v14 = vld [vmem:[%s0] sm:$0xff]
  %v15 = vld [vmem:[%s0 + $0x8] sm:$0xff]
  %v16 = vld [vmem:[%s0 + $0x10] sm:$0xff]
  %v17 = vld [vmem:[%s0 + $0x18] sm:$0xff]
  %v18 = vld [vmem:[%s0 + $0x20] sm:$0xff]
  %v19 = vld [vmem:[%s0 + $0x28] sm:$0xff]
  %v20 = vld [vmem:[%s0 + $0x30] sm:$0xff]
  %v21 = vld [vmem:[%s0 + $0x38] sm:$0xff]
  %v22 = vunpack.c.l.bf16 %v14
  %v23 = vunpack.c.h.bf16 %v14
  %v24 = vunpack.c.l.bf16 %v15
  %v25 = vunpack.c.h.bf16 %v15
  %v26 = vunpack.c.l.bf16 %v16
  %v27 = vunpack.c.h.bf16 %v16
  %v28 = vunpack.c.l.bf16 %v17
  %v29 = vunpack.c.h.bf16 %v17
  %v30 = vunpack.c.l.bf16 %v18
  %v31 = vunpack.c.h.bf16 %v18
  %v32 = vunpack.c.l.bf16 %v19
  %v33 = vunpack.c.h.bf16 %v19
  %v34 = vunpack.c.l.bf16 %v20
  %v35 = vunpack.c.h.bf16 %v20
  %v36 = vunpack.c.l.bf16 %v21
  %v37 = vunpack.c.h.bf16 %v21
  %v38 = vld [vmem:[%s1] sm:$0xf]
  %v40 = vlaneseq
  %v41 = vshrl.u32 %v40, 7
  %v42 = vsub.s32 0, %v41
  %v43 = vrot.slane %v38, %v42
  %v44 = vlaneseq
  %v45 = vshrl.u32 %v44, 7
  %v46 = vsub.s32 1, %v45
  %v47 = vrot.slane %v38, %v46
  %v48 = vlaneseq
  %v49 = vshrl.u32 %v48, 7
  %v50 = vsub.s32 2, %v49
  %v51 = vrot.slane %v38, %v50
  %v52 = vlaneseq
  %v53 = vshrl.u32 %v52, 7
  %v54 = vsub.s32 3, %v53
  %v55 = vrot.slane %v38, %v54
  %v60 = vmul.f32 %v22, %v43
  %v61 = vmul.f32 %v23, %v47
  %v62 = vmul.f32 %v24, %v51
  %v63 = vmul.f32 %v25, %v55
  %v64 = vmul.f32 %v26, %v43
  %v65 = vmul.f32 %v27, %v47
  %v66 = vmul.f32 %v28, %v51
  %v67 = vmul.f32 %v29, %v55
  %v68 = vmul.f32 %v30, %v43
  %v69 = vmul.f32 %v31, %v47
  %v70 = vmul.f32 %v32, %v51
  %v71 = vmul.f32 %v33, %v55
  %v72 = vmul.f32 %v34, %v43
  %v73 = vmul.f32 %v35, %v47
  %v74 = vmul.f32 %v36, %v51
  %v75 = vmul.f32 %v37, %v55
  %v76 = vld [vmem:[%s2] sm:$0xf]
  %v78 = vlaneseq
  %v79 = vshrl.u32 %v78, 7
  %v80 = vsub.s32 0, %v79
  %v81 = vrot.slane %v76, %v80
  %v82 = vlaneseq
  %v83 = vshrl.u32 %v82, 7
  %v84 = vsub.s32 1, %v83
  %v85 = vrot.slane %v76, %v84
  %v86 = vlaneseq
  %v87 = vshrl.u32 %v86, 7
  %v88 = vsub.s32 2, %v87
  %v89 = vrot.slane %v76, %v88
  %v90 = vlaneseq
  %v91 = vshrl.u32 %v90, 7
  %v92 = vsub.s32 3, %v91
  %v93 = vrot.slane %v76, %v92
  %v98 = vadd.f32 %v60, %v81
  %v99 = vadd.f32 %v61, %v85
  %v100 = vadd.f32 %v62, %v89
  %v101 = vadd.f32 %v63, %v93
  %v102 = vadd.f32 %v64, %v81
  %v103 = vadd.f32 %v65, %v85
  %v104 = vadd.f32 %v66, %v89
  %v105 = vadd.f32 %v67, %v93
  %v106 = vadd.f32 %v68, %v81
  %v107 = vadd.f32 %v69, %v85
  %v108 = vadd.f32 %v70, %v89
  %v109 = vadd.f32 %v71, %v93
  %v110 = vadd.f32 %v72, %v81
  %v111 = vadd.f32 %v73, %v85
  %v112 = vadd.f32 %v74, %v89
  %v113 = vadd.f32 %v75, %v93
  %v114 = vmax.f32 %v98, 0.0
  %v115 = vmax.f32 %v99, 0.0
  %v116 = vmax.f32 %v100, 0.0
  %v117 = vmax.f32 %v101, 0.0
  %v118 = vmax.f32 %v102, 0.0
  %v119 = vmax.f32 %v103, 0.0
  %v120 = vmax.f32 %v104, 0.0
  %v121 = vmax.f32 %v105, 0.0
  %v122 = vmax.f32 %v106, 0.0
  %v123 = vmax.f32 %v107, 0.0
  %v124 = vmax.f32 %v108, 0.0
  %v125 = vmax.f32 %v109, 0.0
  %v126 = vmax.f32 %v110, 0.0
  %v127 = vmax.f32 %v111, 0.0
  %v128 = vmax.f32 %v112, 0.0
  %v129 = vmax.f32 %v113, 0.0
  %v130 = vpack.c.bf16 %v118, %v114
  %v131 = vpack.c.bf16 %v119, %v115
  %v132 = vpack.c.bf16 %v120, %v116
  %v133 = vpack.c.bf16 %v121, %v117
  %v134 = vpack.c.bf16 %v126, %v122
  %v135 = vpack.c.bf16 %v127, %v123
  %v136 = vpack.c.bf16 %v128, %v124
  %v137 = vpack.c.bf16 %v129, %v125
  %v146 = vunpack.c.l.b16 %v130
  %v147 = vunpack.c.l.b16 %v131
  %v148 = vunpack.c.l.b16 %v132
  %v149 = vunpack.c.l.b16 %v133
  %v150 = vunpack.c.h.b16 %v130
  %v151 = vunpack.c.h.b16 %v131
  %v152 = vunpack.c.h.b16 %v132
  %v153 = vunpack.c.h.b16 %v133
  %v154 = vunpack.c.l.b16 %v134
  %v155 = vunpack.c.l.b16 %v135
  %v156 = vunpack.c.l.b16 %v136
  %v157 = vunpack.c.l.b16 %v137
  %v158 = vunpack.c.h.b16 %v134
  %v159 = vunpack.c.h.b16 %v135
  %v160 = vunpack.c.h.b16 %v136
  %v161 = vunpack.c.h.b16 %v137
  %v162 = vpack.c.b16 %v147, %v146
  %v163 = vpack.c.b16 %v149, %v148
  %v164 = vpack.c.b16 %v151, %v150
  %v165 = vpack.c.b16 %v153, %v152
  %v166 = vpack.c.b16 %v155, %v154
  %v167 = vpack.c.b16 %v157, %v156
  %v168 = vpack.c.b16 %v159, %v158
  %v169 = vpack.c.b16 %v161, %v160
  %178 = vst [vmem:[%s3] sm:$0xff] %v162
  %179 = vst [vmem:[%s3 + $0x8] sm:$0xff] %v163
  %180 = vst [vmem:[%s3 + $0x10] sm:$0xff] %v164
  %181 = vst [vmem:[%s3 + $0x18] sm:$0xff] %v165
  %182 = vst [vmem:[%s3 + $0x20] sm:$0xff] %v166
  %183 = vst [vmem:[%s3 + $0x28] sm:$0xff] %v167
  %184 = vst [vmem:[%s3 + $0x30] sm:$0xff] %v168
  %185 = vst [vmem:[%s3 + $0x38] sm:$0xff] %v169
  // Predicated region
  $region14: #{_lambda_.10} parent=0 // pred_check
    _
  $region15: #{_lambda_.10} parent=0 // pred_check_branch
    %187 = sbr.rel (0) target = $region17
  $region16: #{_lambda_.10} parent=0 // pred_region
    _
  $region17: #{_lambda_.10} parent=0 // pred_fallthru
    _
  // Predicated region
  $region18: #{_lambda_.10} parent=0 // pred_check
    _
  $region19: #{_lambda_.10} parent=0 // pred_check_branch
    %189 = sbr.rel (0) target = $region21
  $region20: #{_lambda_.10} parent=0 // pred_region
    _
  $region21: #{_lambda_.10} parent=0 // pred_fallthru
    _

// kernel: _lambda_.12
$region0: #{_lambda_.12}
  #allocation0 [shape = 'u32[]', space=smem, size = 0x4, offset = 0x4, fixed_abs, tag = 'smem constant byte address 0x4 - core index']
  #allocation1 [shape = 'u32[144,128]{1,0:T(1,128)}', space=vmem, size = 0x12000, scoped, tag = 'internal scratch']
  %s0 = inlined_call_operand.vmem [shape: bf16[128,256], index: 0, kind: input, shape index: {}]
  %s1 = inlined_call_operand.vmem [shape: f32[1,256], index: 1, kind: input, shape index: {}]
  %s2 = inlined_call_operand.vmem [shape: f32[1,256], index: 2, kind: input, shape index: {}]
  %s3 = inlined_call_operand.vmem [shape: bf16[128,256], index: 3, kind: output, shape index: {}]
  %s4 = sld [smem:[#allocation0]]
  $region22: #{_lambda_.12} parent=0
    _
  %s6 = ssub.s32 1, %s4
  %s7 = scalar_select 0, %s6, %s4
  // Predicated region
  $region2: #{_lambda_.12} parent=0 // pred_check
    _
  $region3: #{_lambda_.12} parent=0 // pred_check_branch
    %9 = sbr.rel (0) target = $region5
  $region4: #{_lambda_.12} parent=0 // pred_region
    _
  $region5: #{_lambda_.12} parent=0 // pred_fallthru
    _
  // Predicated region
  $region6: #{_lambda_.12} parent=0 // pred_check
    _
  $region7: #{_lambda_.12} parent=0 // pred_check_branch
    %11 = sbr.rel (0) target = $region9
  $region8: #{_lambda_.12} parent=0 // pred_region
    _
  $region9: #{_lambda_.12} parent=0 // pred_fallthru
    _
  // Predicated region
  $region10: #{_lambda_.12} parent=0 // pred_check
    _
  $region11: #{_lambda_.12} parent=0 // pred_check_branch
    %13 = sbr.rel (0) target = $region13
  $region12: #{_lambda_.12} parent=0 // pred_region
    _
  $region13: #{_lambda_.12} parent=0 // pred_fallthru
    _
  %v14 = vld [vmem:[%s0] sm:$0xff]
  %v15 = vld [vmem:[%s0 + $0x8] sm:$0xff]
  %v16 = vld [vmem:[%s0 + $0x10] sm:$0xff]
  %v17 = vld [vmem:[%s0 + $0x18] sm:$0xff]
  %v18 = vld [vmem:[%s0 + $0x20] sm:$0xff]
  %v19 = vld [vmem:[%s0 + $0x28] sm:$0xff]
  %v20 = vld [vmem:[%s0 + $0x30] sm:$0xff]
  %v21 = vld [vmem:[%s0 + $0x38] sm:$0xff]
  %v22 = vld [vmem:[%s0 + $0x40] sm:$0xff]
  %v23 = vld [vmem:[%s0 + $0x48] sm:$0xff]
  %v24 = vld [vmem:[%s0 + $0x50] sm:$0xff]
  %v25 = vld [vmem:[%s0 + $0x58] sm:$0xff]
  %v26 = vld [vmem:[%s0 + $0x60] sm:$0xff]
  %v27 = vld [vmem:[%s0 + $0x68] sm:$0xff]
  %v28 = vld [vmem:[%s0 + $0x70] sm:$0xff]
  %v29 = vld [vmem:[%s0 + $0x78] sm:$0xff]
  %v30 = vunpack.c.l.bf16 %v14
  %v31 = vunpack.c.h.bf16 %v14
  %v32 = vunpack.c.l.bf16 %v15
  %v33 = vunpack.c.h.bf16 %v15
  %v34 = vunpack.c.l.bf16 %v16
  %v35 = vunpack.c.h.bf16 %v16
  %v36 = vunpack.c.l.bf16 %v17
  %v37 = vunpack.c.h.bf16 %v17
  %v38 = vunpack.c.l.bf16 %v18
  %v39 = vunpack.c.h.bf16 %v18
  %v40 = vunpack.c.l.bf16 %v19
  %v41 = vunpack.c.h.bf16 %v19
  %v42 = vunpack.c.l.bf16 %v20
  %v43 = vunpack.c.h.bf16 %v20
  %v44 = vunpack.c.l.bf16 %v21
  %v45 = vunpack.c.h.bf16 %v21
  %v46 = vunpack.c.l.bf16 %v22
  %v47 = vunpack.c.h.bf16 %v22
  %v48 = vunpack.c.l.bf16 %v23
  %v49 = vunpack.c.h.bf16 %v23
  %v50 = vunpack.c.l.bf16 %v24
  %v51 = vunpack.c.h.bf16 %v24
  %v52 = vunpack.c.l.bf16 %v25
  %v53 = vunpack.c.h.bf16 %v25
  %v54 = vunpack.c.l.bf16 %v26
  %v55 = vunpack.c.h.bf16 %v26
  %v56 = vunpack.c.l.bf16 %v27
  %v57 = vunpack.c.h.bf16 %v27
  %v58 = vunpack.c.l.bf16 %v28
  %v59 = vunpack.c.h.bf16 %v28
  %v60 = vunpack.c.l.bf16 %v29
  %v61 = vunpack.c.h.bf16 %v29
  %v62 = vld [vmem:[%s1] sm:$0x3]
  %v64 = vlaneseq
  %v65 = vshrl.u32 %v64, 7
  %v66 = vsub.s32 0, %v65
  %v67 = vrot.slane %v62, %v66
  %v68 = vlaneseq
  %v69 = vshrl.u32 %v68, 7
  %v70 = vsub.s32 1, %v69
  %v71 = vrot.slane %v62, %v70
  %v74 = vmul.f32 %v30, %v67
  %v75 = vmul.f32 %v31, %v71
  %v76 = vmul.f32 %v32, %v67
  %v77 = vmul.f32 %v33, %v71
  %v78 = vmul.f32 %v34, %v67
  %v79 = vmul.f32 %v35, %v71
  %v80 = vmul.f32 %v36, %v67
  %v81 = vmul.f32 %v37, %v71
  %v82 = vmul.f32 %v38, %v67
  %v83 = vmul.f32 %v39, %v71
  %v84 = vmul.f32 %v40, %v67
  %v85 = vmul.f32 %v41, %v71
  %v86 = vmul.f32 %v42, %v67
  %v87 = vmul.f32 %v43, %v71
  %v88 = vmul.f32 %v44, %v67
  %v89 = vmul.f32 %v45, %v71
  %v90 = vmul.f32 %v46, %v67
  %v91 = vmul.f32 %v47, %v71
  %v92 = vmul.f32 %v48, %v67
  %v93 = vmul.f32 %v49, %v71
  %v94 = vmul.f32 %v50, %v67
  %v95 = vmul.f32 %v51, %v71
  %v96 = vmul.f32 %v52, %v67
  %v97 = vmul.f32 %v53, %v71
  %v98 = vmul.f32 %v54, %v67
  %v99 = vmul.f32 %v55, %v71
  %v100 = vmul.f32 %v56, %v67
  %v101 = vmul.f32 %v57, %v71
  %v102 = vmul.f32 %v58, %v67
  %v103 = vmul.f32 %v59, %v71
  %v104 = vmul.f32 %v60, %v67
  %v105 = vmul.f32 %v61, %v71
  %v106 = vld [vmem:[%s2] sm:$0x3]
  %v108 = vlaneseq
  %v109 = vshrl.u32 %v108, 7
  %v110 = vsub.s32 0, %v109
  %v111 = vrot.slane %v106, %v110
  %v112 = vlaneseq
  %v113 = vshrl.u32 %v112, 7
  %v114 = vsub.s32 1, %v113
  %v115 = vrot.slane %v106, %v114
  %v118 = vadd.f32 %v74, %v111
  %v119 = vadd.f32 %v75, %v115
  %v120 = vadd.f32 %v76, %v111
  %v121 = vadd.f32 %v77, %v115
  %v122 = vadd.f32 %v78, %v111
  %v123 = vadd.f32 %v79, %v115
  %v124 = vadd.f32 %v80, %v111
  %v125 = vadd.f32 %v81, %v115
  %v126 = vadd.f32 %v82, %v111
  %v127 = vadd.f32 %v83, %v115
  %v128 = vadd.f32 %v84, %v111
  %v129 = vadd.f32 %v85, %v115
  %v130 = vadd.f32 %v86, %v111
  %v131 = vadd.f32 %v87, %v115
  %v132 = vadd.f32 %v88, %v111
  %v133 = vadd.f32 %v89, %v115
  %v134 = vadd.f32 %v90, %v111
  %v135 = vadd.f32 %v91, %v115
  %v136 = vadd.f32 %v92, %v111
  %v137 = vadd.f32 %v93, %v115
  %v138 = vadd.f32 %v94, %v111
  %v139 = vadd.f32 %v95, %v115
  %v140 = vadd.f32 %v96, %v111
  %v141 = vadd.f32 %v97, %v115
  %v142 = vadd.f32 %v98, %v111
  %v143 = vadd.f32 %v99, %v115
  %v144 = vadd.f32 %v100, %v111
  %v145 = vadd.f32 %v101, %v115
  %v146 = vadd.f32 %v102, %v111
  %v147 = vadd.f32 %v103, %v115
  %v148 = vadd.f32 %v104, %v111
  %v149 = vadd.f32 %v105, %v115
  %v150 = vmax.f32 %v118, 0.0
  %v151 = vmax.f32 %v119, 0.0
  %v152 = vmax.f32 %v120, 0.0
  %v153 = vmax.f32 %v121, 0.0
  %v154 = vmax.f32 %v122, 0.0
  %v155 = vmax.f32 %v123, 0.0
  %v156 = vmax.f32 %v124, 0.0
  %v157 = vmax.f32 %v125, 0.0
  %v158 = vmax.f32 %v126, 0.0
  %v159 = vmax.f32 %v127, 0.0
  %v160 = vmax.f32 %v128, 0.0
  %v161 = vmax.f32 %v129, 0.0
  %v162 = vmax.f32 %v130, 0.0
  %v163 = vmax.f32 %v131, 0.0
  %v164 = vmax.f32 %v132, 0.0
  %v165 = vmax.f32 %v133, 0.0
  %v166 = vmax.f32 %v134, 0.0
  %v167 = vmax.f32 %v135, 0.0
  %v168 = vmax.f32 %v136, 0.0
  %v169 = vmax.f32 %v137, 0.0
  %v170 = vmax.f32 %v138, 0.0
  %v171 = vmax.f32 %v139, 0.0
  %v172 = vmax.f32 %v140, 0.0
  %v173 = vmax.f32 %v141, 0.0
  %v174 = vmax.f32 %v142, 0.0
  %v175 = vmax.f32 %v143, 0.0
  %v176 = vmax.f32 %v144, 0.0
  %v177 = vmax.f32 %v145, 0.0
  %v178 = vmax.f32 %v146, 0.0
  %v179 = vmax.f32 %v147, 0.0
  %v180 = vmax.f32 %v148, 0.0
  %v181 = vmax.f32 %v149, 0.0
  %v182 = vpack.c.bf16 %v152, %v150
  %v183 = vpack.c.bf16 %v153, %v151
  %v184 = vpack.c.bf16 %v156, %v154
  %v185 = vpack.c.bf16 %v157, %v155
  %v186 = vpack.c.bf16 %v160, %v158
  %v187 = vpack.c.bf16 %v161, %v159
  %v188 = vpack.c.bf16 %v164, %v162
  %v189 = vpack.c.bf16 %v165, %v163
  %v190 = vpack.c.bf16 %v168, %v166
  %v191 = vpack.c.bf16 %v169, %v167
  %v192 = vpack.c.bf16 %v172, %v170
  %v193 = vpack.c.bf16 %v173, %v171
  %v194 = vpack.c.bf16 %v176, %v174
  %v195 = vpack.c.bf16 %v177, %v175
  %v196 = vpack.c.bf16 %v180, %v178
  %v197 = vpack.c.bf16 %v181, %v179
  %v214 = vunpack.c.l.b16 %v182
  %v215 = vunpack.c.l.b16 %v183
  %v216 = vunpack.c.h.b16 %v182
  %v217 = vunpack.c.h.b16 %v183
  %v218 = vunpack.c.l.b16 %v184
  %v219 = vunpack.c.l.b16 %v185
  %v220 = vunpack.c.h.b16 %v184
  %v221 = vunpack.c.h.b16 %v185
  %v222 = vunpack.c.l.b16 %v186
  %v223 = vunpack.c.l.b16 %v187
  %v224 = vunpack.c.h.b16 %v186
  %v225 = vunpack.c.h.b16 %v187
  %v226 = vunpack.c.l.b16 %v188
  %v227 = vunpack.c.l.b16 %v189
  %v228 = vunpack.c.h.b16 %v188
  %v229 = vunpack.c.h.b16 %v189
  %v230 = vunpack.c.l.b16 %v190
  %v231 = vunpack.c.l.b16 %v191
  %v232 = vunpack.c.h.b16 %v190
  %v233 = vunpack.c.h.b16 %v191
  %v234 = vunpack.c.l.b16 %v192
  %v235 = vunpack.c.l.b16 %v193
  %v236 = vunpack.c.h.b16 %v192
  %v237 = vunpack.c.h.b16 %v193
  %v238 = vunpack.c.l.b16 %v194
  %v239 = vunpack.c.l.b16 %v195
  %v240 = vunpack.c.h.b16 %v194
  %v241 = vunpack.c.h.b16 %v195
  %v242 = vunpack.c.l.b16 %v196
  %v243 = vunpack.c.l.b16 %v197
  %v244 = vunpack.c.h.b16 %v196
  %v245 = vunpack.c.h.b16 %v197
  %v246 = vpack.c.b16 %v215, %v214
  %v247 = vpack.c.b16 %v217, %v216
  %v248 = vpack.c.b16 %v219, %v218
  %v249 = vpack.c.b16 %v221, %v220
  %v250 = vpack.c.b16 %v223, %v222
  %v251 = vpack.c.b16 %v225, %v224
  %v252 = vpack.c.b16 %v227, %v226
  %v253 = vpack.c.b16 %v229, %v228
  %v254 = vpack.c.b16 %v231, %v230
  %v255 = vpack.c.b16 %v233, %v232
  %v256 = vpack.c.b16 %v235, %v234
  %v257 = vpack.c.b16 %v237, %v236
  %v258 = vpack.c.b16 %v239, %v238
  %v259 = vpack.c.b16 %v241, %v240
  %v260 = vpack.c.b16 %v243, %v242
  %v261 = vpack.c.b16 %v245, %v244
  %278 = vst [vmem:[%s3] sm:$0xff] %v246
  %279 = vst [vmem:[%s3 + $0x8] sm:$0xff] %v247
  %280 = vst [vmem:[%s3 + $0x10] sm:$0xff] %v248
  %281 = vst [vmem:[%s3 + $0x18] sm:$0xff] %v249
  %282 = vst [vmem:[%s3 + $0x20] sm:$0xff] %v250
  %283 = vst [vmem:[%s3 + $0x28] sm:$0xff] %v251
  %284 = vst [vmem:[%s3 + $0x30] sm:$0xff] %v252
  %285 = vst [vmem:[%s3 + $0x38] sm:$0xff] %v253
  %286 = vst [vmem:[%s3 + $0x40] sm:$0xff] %v254
  %287 = vst [vmem:[%s3 + $0x48] sm:$0xff] %v255
  %288 = vst [vmem:[%s3 + $0x50] sm:$0xff] %v256
  %289 = vst [vmem:[%s3 + $0x58] sm:$0xff] %v257
  %290 = vst [vmem:[%s3 + $0x60] sm:$0xff] %v258
  %291 = vst [vmem:[%s3 + $0x68] sm:$0xff] %v259
  %292 = vst [vmem:[%s3 + $0x70] sm:$0xff] %v260
  %293 = vst [vmem:[%s3 + $0x78] sm:$0xff] %v261
  // Predicated region
  $region14: #{_lambda_.12} parent=0 // pred_check
    _
  $region15: #{_lambda_.12} parent=0 // pred_check_branch
    %295 = sbr.rel (0) target = $region17
  $region16: #{_lambda_.12} parent=0 // pred_region
    _
  $region17: #{_lambda_.12} parent=0 // pred_fallthru
    _
  // Predicated region
  $region18: #{_lambda_.12} parent=0 // pred_check
    _
  $region19: #{_lambda_.12} parent=0 // pred_check_branch
    %297 = sbr.rel (0) target = $region21
  $region20: #{_lambda_.12} parent=0 // pred_region
    _
  $region21: #{_lambda_.12} parent=0 // pred_fallthru
    _

// kernel: _lambda_.11
$region0: #{_lambda_.11}
  #allocation0 [shape = 'u32[]', space=smem, size = 0x4, offset = 0x4, fixed_abs, tag = 'smem constant byte address 0x4 - core index']
  #allocation1 [shape = 'u32[144,128]{1,0:T(1,128)}', space=vmem, size = 0x12000, scoped, tag = 'internal scratch']
  #allocation2 [shape = 'f32[32,256]{1,0:T(8,128)}', space=vmem, size = 0x8000, scoped, tag = 'scratch operand']
  %s0 = inlined_call_operand.vmem [shape: bf16[4,32,2048], index: 0, kind: input, shape index: {}]
  %s1 = inlined_call_operand.vmem [shape: bf16[4,2048,256], index: 1, kind: input, shape index: {}]
  %s2 = inlined_call_operand.vmem [shape: bf16[4,32,256], index: 2, kind: output, shape index: {0}]
  %s3 = inlined_call_operand.vmem [shape: f32[4,1,8,256], index: 3, kind: output, shape index: {1}]
  %4 = xla_tuple %s2, %s3
  %s5 = sld [smem:[#allocation0]]
  $region57: #{_lambda_.11} parent=0
    _
  %s7 = ssub.s32 1, %s5
  %s8 = scalar_select 0, %s7, %s5
  loop: start=0, step=1, limit=6
  $region2: #{_lambda_.11} parent=0 // loop_pre_header
    _
  $region3: #{_lambda_.11} parent=0 // loop_header
    %s10 = sphi 0, %s14
    %p11 = scmp.ge.s32.totalorder %s10, 6
    %s17 = sphi 0, %s43
    %s18 = sphi 0, %s39
    %s19 = sphi 0, %s35
    %s20 = sphi 0, %s31
    %s21 = sphi 0, %s17
    %s22 = sphi 0, %s18
    %s23 = sphi 0, %s19
    %s24 = sphi 0, %s20
    %s25 = sphi 0, %s21
    %s26 = sphi 0, %s22
    %s27 = sphi 0, %s23
    %s28 = sphi 0, %s24
    %s50 = sphi 0, %s52
    %s53 = sphi 0, %s50
    %s54 = sphi 0, %s53
    %s70 = sphi 0, %s54
    %s80 = sphi 0, %s82
    %s83 = sphi 0, %s80
    %s84 = sphi 0, %s83
    %s100 = sphi 0, %s84
    %s110 = sphi 0, %s112
    %s113 = sphi 0, %s110
    %s114 = sphi 0, %s113
    %s130 = sphi 0, %s114
    %s140 = sphi 0, %s142
    %s143 = sphi 0, %s140
    %s144 = sphi 0, %s143
    %s160 = sphi 0, %s144
  $region4: #{_lambda_.11} parent=0 // loop_header_branch
    %13 = sbr.rel (%p11) target = $region8
  $region5: #{_lambda_.11} parent=0 // loop_body
    %s15 = ssub.s32 %s10, 1
    %s16 = ssub.s32 %s10, 2
    %s29 = sadd.s32 1, %s20
    %p30 = scmp.ge.s32.totalorder %s29, 1
    %s31 = scalar_select %p30, 0, %s29
    %s32 = sadd.s32 1, %s19
    %s33 = scalar_select %p30, %s32, %s19
    %p34 = scmp.ge.s32.totalorder %s33, 1
    %s35 = scalar_select %p34, 0, %s33
    %s36 = sadd.s32 1, %s18
    %s37 = scalar_select %p34, %s36, %s18
    %p38 = scmp.ge.s32.totalorder %s37, 1
    %s39 = scalar_select %p38, 0, %s37
    %s40 = sadd.s32 1, %s17
    %s41 = scalar_select %p38, %s40, %s17
    %p42 = scmp.ge.s32.totalorder %s41, 4
    %s43 = scalar_select %p42, 0, %s41
    %s44 = ssub.s32 %s17, %s43
    %s45 = ssub.s32 %s18, %s39
    %s46 = sor.u32 %s44, %s45
    %s47 = ssub.s32 %s20, %s31
    %s48 = sor.u32 %s46, %s47
    %p49 = scmp.eq.s32.totalorder %s48, 0
    %s51 = sadd.s32 %s50, 1
    %s52 = scalar_select %p49, %s50, %s51
    %p55 = pneg %p49
    %p56 = scmp.eq.s32.totalorder %s10, 3
    %p57 = por %p55, %p56
    %p58 = scmp.ne.s32.totalorder %s50, %s53
    %p59 = scmp.eq.s32.totalorder %s10, 0
    %p60 = por %p58, %p59
    %p61 = scmp.ne.s32.totalorder %s50, %s53
    %p62 = scmp.eq.s32.totalorder %s15, 3
    %p63 = por %p61, %p62
    %p64 = scmp.ne.s32.totalorder %s53, %s54
    %p65 = scmp.eq.s32.totalorder %s15, 0
    %p66 = por %p64, %p65
    %p67 = scmp.ne.s32.totalorder %s53, %s54
    %p68 = scmp.eq.s32.totalorder %s16, 3
    %p69 = por %p67, %p68
    %p71 = scmp.ne.s32.totalorder %s54, %s70
    %p72 = scmp.eq.s32.totalorder %s16, 0
    %p73 = por %p71, %p72
    %s74 = ssub.s32 %s17, %s43
    %s75 = ssub.s32 %s20, %s31
    %s76 = sor.u32 %s74, %s75
    %s77 = ssub.s32 %s19, %s35
    %s78 = sor.u32 %s76, %s77
    %p79 = scmp.eq.s32.totalorder %s78, 0
    %s81 = sadd.s32 %s80, 1
    %s82 = scalar_select %p79, %s80, %s81
    %p85 = pneg %p79
    %p86 = scmp.eq.s32.totalorder %s10, 3
    %p87 = por %p85, %p86
    %p88 = scmp.ne.s32.totalorder %s80, %s83
    %p89 = scmp.eq.s32.totalorder %s10, 0
    %p90 = por %p88, %p89
    %p91 = scmp.ne.s32.totalorder %s80, %s83
    %p92 = scmp.eq.s32.totalorder %s15, 3
    %p93 = por %p91, %p92
    %p94 = scmp.ne.s32.totalorder %s83, %s84
    %p95 = scmp.eq.s32.totalorder %s15, 0
    %p96 = por %p94, %p95
    %p97 = scmp.ne.s32.totalorder %s83, %s84
    %p98 = scmp.eq.s32.totalorder %s16, 3
    %p99 = por %p97, %p98
    %p101 = scmp.ne.s32.totalorder %s84, %s100
    %p102 = scmp.eq.s32.totalorder %s16, 0
    %p103 = por %p101, %p102
    %s104 = ssub.s32 %s17, %s43
    %s105 = ssub.s32 %s18, %s39
    %s106 = sor.u32 %s104, %s105
    %s107 = ssub.s32 %s19, %s35
    %s108 = sor.u32 %s106, %s107
    %p109 = scmp.eq.s32.totalorder %s108, 0
    %s111 = sadd.s32 %s110, 1
    %s112 = scalar_select %p109, %s110, %s111
    %p115 = pneg %p109
    %p116 = scmp.eq.s32.totalorder %s10, 3
    %p117 = por %p115, %p116
    %p118 = scmp.ne.s32.totalorder %s110, %s113
    %p119 = scmp.eq.s32.totalorder %s10, 0
    %p120 = por %p118, %p119
    %p121 = scmp.ne.s32.totalorder %s110, %s113
    %p122 = scmp.eq.s32.totalorder %s15, 3
    %p123 = por %p121, %p122
    %p124 = scmp.ne.s32.totalorder %s113, %s114
    %p125 = scmp.eq.s32.totalorder %s15, 0
    %p126 = por %p124, %p125
    %p127 = scmp.ne.s32.totalorder %s113, %s114
    %p128 = scmp.eq.s32.totalorder %s16, 3
    %p129 = por %p127, %p128
    %p131 = scmp.ne.s32.totalorder %s114, %s130
    %p132 = scmp.eq.s32.totalorder %s16, 0
    %p133 = por %p131, %p132
    %s134 = ssub.s32 %s17, %s43
    %s135 = ssub.s32 %s18, %s39
    %s136 = sor.u32 %s134, %s135
    %s137 = ssub.s32 %s19, %s35
    %s138 = sor.u32 %s136, %s137
    %p139 = scmp.eq.s32.totalorder %s138, 0
    %s141 = sadd.s32 %s140, 1
    %s142 = scalar_select %p139, %s140, %s141
    %p145 = pneg %p139
    %p146 = scmp.eq.s32.totalorder %s10, 3
    %p147 = por %p145, %p146
    %p148 = scmp.ne.s32.totalorder %s140, %s143
    %p149 = scmp.eq.s32.totalorder %s10, 0
    %p150 = por %p148, %p149
    %p151 = scmp.ne.s32.totalorder %s140, %s143
    %p152 = scmp.eq.s32.totalorder %s15, 3
    %p153 = por %p151, %p152
    %p154 = scmp.ne.s32.totalorder %s143, %s144
    %p155 = scmp.eq.s32.totalorder %s15, 0
    %p156 = por %p154, %p155
    %p157 = scmp.ne.s32.totalorder %s143, %s144
    %p158 = scmp.eq.s32.totalorder %s16, 3
    %p159 = por %p157, %p158
    %p161 = scmp.ne.s32.totalorder %s144, %s160
    %p162 = scmp.eq.s32.totalorder %s16, 0
    %p163 = por %p161, %p162
    %p164 = scmp.le.s32.totalorder 1, %s10
    %p165 = scmp.lt.s32.totalorder %s10, 5
    %p166 = pnand %p164, %p165
    %p167 = pneg %p166
    // Predicated region
    $region9: #{_lambda_.11} parent=5 // pred_check
      _
    $region10: #{_lambda_.11} parent=5 // pred_check_branch
      %169 = sbr.rel (%p166) target = $region12
    $region11: #{_lambda_.11} parent=5 // pred_region
      %s170 = ssub.s32 %s10, 1
    $region12: #{_lambda_.11} parent=5 // pred_fallthru
      _
    %p171 = scmp.lt.s32.totalorder %s10, 4
    // Predicated region
    $region13: #{_lambda_.11} parent=5 // pred_check
      %p172 = pneg %p171
    $region14: #{_lambda_.11} parent=5 // pred_check_branch
      %174 = sbr.rel (%p172) target = $region16
    $region15: #{_lambda_.11} parent=5 // pred_region
      // Predicated region
      $region17: #{_lambda_.11} parent=15 // pred_check
        %p175 = pneg %p60
      $region18: #{_lambda_.11} parent=15 // pred_check_branch
        %177 = sbr.rel (%p175) target = $region20
      $region19: #{_lambda_.11} parent=15 // pred_region
        %s178 = smul.u32 4, %s18
        %s179 = smul.u32 16, %s20
        %p180 = scmp.lt.s32.totalorder %s17, 3
        %s181 = scalar_select %p180, %s17, 3
        %p182 = scmp.lt.s32.totalorder %s178, 3
        %s183 = scalar_select %p182, %s178, 3
        %p184 = scmp.lt.s32.totalorder %s179, 15
        %s185 = scalar_select %p184, %s179, 15
        %s186 = smul.addr %s183, 16
        %s187 = sadd.s32 %s185, %s186
        %s188 = smul.addr %s181, 64
        %s189 = sadd.s32 %s187, %s188
        %s190 = smul.addr %s189, 4
        %s191 = scalar_lea.vmem %s0, %s190
        %s192 = smul.u32 4, %s18
        %s193 = smul.u32 16, %s20
      $region20: #{_lambda_.11} parent=15 // pred_fallthru
        _
      // Predicated region
      $region21: #{_lambda_.11} parent=15 // pred_check
        %p194 = pneg %p90
      $region22: #{_lambda_.11} parent=15 // pred_check_branch
        %196 = sbr.rel (%p194) target = $region24
      $region23: #{_lambda_.11} parent=15 // pred_region
        %s197 = smul.u32 256, %s20
        %s198 = smul.u32 2, %s19
        %p199 = scmp.lt.s32.totalorder %s17, 3
        %s200 = scalar_select %p199, %s17, 3
        %p201 = scmp.lt.s32.totalorder %s197, 255
        %s202 = scalar_select %p201, %s197, 255
        %p203 = scmp.lt.s32.totalorder %s198, 1
        %s204 = scalar_select %p203, %s198, 1
        %s205 = smul.addr %s202, 2
        %s206 = sadd.s32 %s204, %s205
        %s207 = smul.addr %s200, 512
        %s208 = sadd.s32 %s206, %s207
        %s209 = smul.addr %s208, 4
        %s210 = scalar_lea.vmem %s1, %s209
        %s211 = smul.u32 256, %s20
        %s212 = smul.u32 2, %s19
      $region24: #{_lambda_.11} parent=15 // pred_fallthru
        _
    $region16: #{_lambda_.11} parent=5 // pred_fallthru
      _
    %p213 = scmp.le.s32.totalorder 1, %s10
    %p214 = scmp.lt.s32.totalorder %s10, 5
    %p215 = pnand %p213, %p214
    %p216 = pneg %p215
    // Predicated region
    $region25: #{_lambda_.11} parent=5 // pred_check
      _
    $region26: #{_lambda_.11} parent=5 // pred_check_branch
      %218 = sbr.rel (%p215) target = $region28
    $region27: #{_lambda_.11} parent=5 // pred_region
      %s219 = ssub.s32 %s10, 1
      %s220 = smul.u32 4, %s22
      %s221 = smul.u32 16, %s24
      %p222 = scmp.lt.s32.totalorder %s21, 3
      %s223 = scalar_select %p222, %s21, 3
      %p224 = scmp.lt.s32.totalorder %s220, 3
      %s225 = scalar_select %p224, %s220, 3
      %p226 = scmp.lt.s32.totalorder %s221, 15
      %s227 = scalar_select %p226, %s221, 15
      %s228 = smul.addr %s225, 16
      %s229 = sadd.s32 %s227, %s228
      %s230 = smul.addr %s223, 64
      %s231 = sadd.s32 %s229, %s230
      %s232 = smul.addr %s231, 4
      %s233 = scalar_lea.vmem %s0, %s232
      %p234 = pneg %p66
      %p235 = pneg %p63
      %s236 = smul.u32 256, %s24
      %s237 = smul.u32 2, %s23
      %p238 = scmp.lt.s32.totalorder %s21, 3
      %s239 = scalar_select %p238, %s21, 3
      %p240 = scmp.lt.s32.totalorder %s236, 255
      %s241 = scalar_select %p240, %s236, 255
      %p242 = scmp.lt.s32.totalorder %s237, 1
      %s243 = scalar_select %p242, %s237, 1
      %s244 = smul.addr %s241, 2
      %s245 = sadd.s32 %s243, %s244
      %s246 = smul.addr %s239, 512
      %s247 = sadd.s32 %s245, %s246
      %s248 = smul.addr %s247, 4
      %s249 = scalar_lea.vmem %s1, %s248
      %p250 = pneg %p96
      %p251 = pneg %p93
      %p252 = pneg %p126
      %p253 = pneg %p123
      %s254 = smul.u32 4, %s22
      %s255 = smul.u32 2, %s23
      %p256 = scmp.lt.s32.totalorder %s21, 3
      %s257 = scalar_select %p256, %s21, 3
      %p258 = scmp.lt.s32.totalorder %s254, 3
      %s259 = scalar_select %p258, %s254, 3
      %p260 = scmp.lt.s32.totalorder %s255, 1
      %s261 = scalar_select %p260, %s255, 1
      %s262 = smul.addr %s259, 2
      %s263 = sadd.s32 %s261, %s262
      %s264 = smul.addr %s257, 8
      %s265 = sadd.s32 %s263, %s264
      %s266 = smul.addr %s265, 4
      %s267 = scalar_lea.vmem %s2, %s266
      %p268 = pneg %p156
      %p269 = pneg %p153
      %s270 = smul.u32 2, %s23
      %p271 = scmp.lt.s32.totalorder %s21, 3
      %s272 = scalar_select %p271, %s21, 3
      %p273 = scmp.lt.s32.totalorder %s22, 0
      %s274 = scalar_select %p273, %s22, 0
      %p275 = scmp.lt.s32.totalorder %s270, 1
      %s276 = scalar_select %p275, %s270, 1
      %s277 = smul.addr %s274, 2
      %s278 = sadd.s32 %s276, %s277
      %s279 = smul.addr %s272, 2
      %s280 = sadd.s32 %s278, %s279
      %s281 = smul.addr %s280, 8
      %s282 = scalar_lea.vmem %s3, %s281
      %s283 = smul.u32 4, %s22
      %s284 = smul.u32 16, %s24
      %p285 = scmp.lt.s32.totalorder %s21, 3
      %s286 = scalar_select %p285, %s21, 3
      %p287 = scmp.lt.s32.totalorder %s283, 3
      %s288 = scalar_select %p287, %s283, 3
      %p289 = scmp.lt.s32.totalorder %s284, 15
      %s290 = scalar_select %p289, %s284, 15
      %s291 = smul.addr %s288, 16
      %s292 = sadd.s32 %s290, %s291
      %s293 = smul.addr %s286, 64
      %s294 = sadd.s32 %s292, %s293
      %s295 = smul.addr %s294, 4
      %s296 = scalar_lea.vmem %s0, %s295
      %s297 = smul.u32 4, %s22
      %s298 = smul.u32 16, %s24
      %s299 = smul.u32 256, %s24
      %s300 = smul.u32 2, %s23
      %p301 = scmp.lt.s32.totalorder %s21, 3
      %s302 = scalar_select %p301, %s21, 3
      %p303 = scmp.lt.s32.totalorder %s299, 255
      %s304 = scalar_select %p303, %s299, 255
      %p305 = scmp.lt.s32.totalorder %s300, 1
      %s306 = scalar_select %p305, %s300, 1
      %s307 = smul.addr %s304, 2
      %s308 = sadd.s32 %s306, %s307
      %s309 = smul.addr %s302, 512
      %s310 = sadd.s32 %s308, %s309
      %s311 = smul.addr %s310, 4
      %s312 = scalar_lea.vmem %s1, %s311
      %s313 = smul.u32 256, %s24
      %s314 = smul.u32 2, %s23
      %s315 = smul.u32 4, %s22
      %s316 = smul.u32 2, %s23
      %p317 = scmp.lt.s32.totalorder %s21, 3
      %s318 = scalar_select %p317, %s21, 3
      %p319 = scmp.lt.s32.totalorder %s315, 3
      %s320 = scalar_select %p319, %s315, 3
      %p321 = scmp.lt.s32.totalorder %s316, 1
      %s322 = scalar_select %p321, %s316, 1
      %s323 = smul.addr %s320, 2
      %s324 = sadd.s32 %s322, %s323
      %s325 = smul.addr %s318, 8
      %s326 = sadd.s32 %s324, %s325
      %s327 = smul.addr %s326, 4
      %s328 = scalar_lea.vmem %s2, %s327
      %s329 = smul.u32 4, %s22
      %s330 = smul.u32 2, %s23
      %s331 = smul.u32 2, %s23
      %p332 = scmp.lt.s32.totalorder %s21, 3
      %s333 = scalar_select %p332, %s21, 3
      %p334 = scmp.lt.s32.totalorder %s22, 0
      %s335 = scalar_select %p334, %s22, 0
      %p336 = scmp.lt.s32.totalorder %s331, 1
      %s337 = scalar_select %p336, %s331, 1
      %s338 = smul.addr %s335, 2
      %s339 = sadd.s32 %s337, %s338
      %s340 = smul.addr %s333, 2
      %s341 = sadd.s32 %s339, %s340
      %s342 = smul.addr %s341, 8
      %s343 = scalar_lea.vmem %s3, %s342
      %s344 = smul.u32 2, %s23
      %p345 = scmp.eq.s32.totalorder %s24, 0
      // Predicated region
      $region29: #{_lambda_.11} parent=27 // pred_check
        %p346 = pneg %p345
      $region30: #{_lambda_.11} parent=27 // pred_check_branch
        %348 = sbr.rel (%p346) target = $region32
      $region31: #{_lambda_.11} parent=27 // pred_region
        %349 = vst [vmem:[#allocation2] sm:$0xff] 0.0
        %350 = vst [vmem:[#allocation2 + $0x8] sm:$0xff] 0.0
        %351 = vst [vmem:[#allocation2 + $0x10] sm:$0xff] 0.0
        %352 = vst [vmem:[#allocation2 + $0x18] sm:$0xff] 0.0
        %353 = vst [vmem:[#allocation2 + $0x20] sm:$0xff] 0.0
        %354 = vst [vmem:[#allocation2 + $0x28] sm:$0xff] 0.0
        %355 = vst [vmem:[#allocation2 + $0x30] sm:$0xff] 0.0
        %356 = vst [vmem:[#allocation2 + $0x38] sm:$0xff] 0.0
      $region32: #{_lambda_.11} parent=27 // pred_fallthru
        _
      %v357 = vld [vmem:[#allocation2] sm:$0xff]
      %v358 = vld [vmem:[#allocation2 + $0x8] sm:$0xff]
      %v359 = vld [vmem:[#allocation2 + $0x10] sm:$0xff]
      %v360 = vld [vmem:[#allocation2 + $0x18] sm:$0xff]
      %v361 = vld [vmem:[#allocation2 + $0x20] sm:$0xff]
      %v362 = vld [vmem:[#allocation2 + $0x28] sm:$0xff]
      %v363 = vld [vmem:[#allocation2 + $0x30] sm:$0xff]
      %v364 = vld [vmem:[#allocation2 + $0x38] sm:$0xff]
      %v365 = vld [vmem:[%s296] sm:$0xff]
      %v366 = vld [vmem:[%s296 + $0x8] sm:$0xff]
      %v367 = vld [vmem:[%s296 + $0x10] sm:$0xff]
      %v368 = vld [vmem:[%s296 + $0x18] sm:$0xff]
      %v369 = vld [vmem:[%s296 + $0x20] sm:$0xff]
      %v370 = vld [vmem:[%s296 + $0x28] sm:$0xff]
      %v371 = vld [vmem:[%s296 + $0x30] sm:$0xff]
      %v372 = vld [vmem:[%s296 + $0x38] sm:$0xff]
      %v373 = vld [vmem:[%s296 + $0x40] sm:$0xff]
      %v374 = vld [vmem:[%s296 + $0x48] sm:$0xff]
      %v375 = vld [vmem:[%s296 + $0x50] sm:$0xff]
      %v376 = vld [vmem:[%s296 + $0x58] sm:$0xff]
      %v377 = vld [vmem:[%s296 + $0x60] sm:$0xff]
      %v378 = vld [vmem:[%s296 + $0x68] sm:$0xff]
      %v379 = vld [vmem:[%s296 + $0x70] sm:$0xff]
      %v380 = vld [vmem:[%s296 + $0x78] sm:$0xff]
      %v381 = vld [vmem:[%s296 + $0x80] sm:$0xff]
      %v382 = vld [vmem:[%s296 + $0x88] sm:$0xff]
      %v383 = vld [vmem:[%s296 + $0x90] sm:$0xff]
      %v384 = vld [vmem:[%s296 + $0x98] sm:$0xff]
      %v385 = vld [vmem:[%s296 + $0xa0] sm:$0xff]
      %v386 = vld [vmem:[%s296 + $0xa8] sm:$0xff]
      %v387 = vld [vmem:[%s296 + $0xb0] sm:$0xff]
      %v388 = vld [vmem:[%s296 + $0xb8] sm:$0xff]
      %v389 = vld [vmem:[%s296 + $0xc0] sm:$0xff]
      %v390 = vld [vmem:[%s296 + $0xc8] sm:$0xff]
      %v391 = vld [vmem:[%s296 + $0xd0] sm:$0xff]
      %v392 = vld [vmem:[%s296 + $0xd8] sm:$0xff]
      %v393 = vld [vmem:[%s296 + $0xe0] sm:$0xff]
      %v394 = vld [vmem:[%s296 + $0xe8] sm:$0xff]
      %v395 = vld [vmem:[%s296 + $0xf0] sm:$0xff]
      %v396 = vld [vmem:[%s296 + $0xf8] sm:$0xff]
      %v397 = vld [vmem:[%s312] sm:$0xff]
      %v398 = vld [vmem:[%s312 + $0x8] sm:$0xff]
      %v399 = vld [vmem:[%s312 + $0x10] sm:$0xff]
      %v400 = vld [vmem:[%s312 + $0x18] sm:$0xff]
      %v401 = vld [vmem:[%s312 + $0x20] sm:$0xff]
      %v402 = vld [vmem:[%s312 + $0x28] sm:$0xff]
      %v403 = vld [vmem:[%s312 + $0x30] sm:$0xff]
      %v404 = vld [vmem:[%s312 + $0x38] sm:$0xff]
      %v405 = vld [vmem:[%s312 + $0x40] sm:$0xff]
      %v406 = vld [vmem:[%s312 + $0x48] sm:$0xff]
      %v407 = vld [vmem:[%s312 + $0x50] sm:$0xff]
      %v408 = vld [vmem:[%s312 + $0x58] sm:$0xff]
      %v409 = vld [vmem:[%s312 + $0x60] sm:$0xff]
      %v410 = vld [vmem:[%s312 + $0x68] sm:$0xff]
      %v411 = vld [vmem:[%s312 + $0x70] sm:$0xff]
      %v412 = vld [vmem:[%s312 + $0x78] sm:$0xff]
      %v413 = vld [vmem:[%s312 + $0x80] sm:$0xff]
      %v414 = vld [vmem:[%s312 + $0x88] sm:$0xff]
      %v415 = vld [vmem:[%s312 + $0x90] sm:$0xff]
      %v416 = vld [vmem:[%s312 + $0x98] sm:$0xff]
      %v417 = vld [vmem:[%s312 + $0xa0] sm:$0xff]
      %v418 = vld [vmem:[%s312 + $0xa8] sm:$0xff]
      %v419 = vld [vmem:[%s312 + $0xb0] sm:$0xff]
      %v420 = vld [vmem:[%s312 + $0xb8] sm:$0xff]
      %v421 = vld [vmem:[%s312 + $0xc0] sm:$0xff]
      %v422 = vld [vmem:[%s312 + $0xc8] sm:$0xff]
      %v423 = vld [vmem:[%s312 + $0xd0] sm:$0xff]
      %v424 = vld [vmem:[%s312 + $0xd8] sm:$0xff]
      %v425 = vld [vmem:[%s312 + $0xe0] sm:$0xff]
      %v426 = vld [vmem:[%s312 + $0xe8] sm:$0xff]
      %v427 = vld [vmem:[%s312 + $0xf0] sm:$0xff]
      %v428 = vld [vmem:[%s312 + $0xf8] sm:$0xff]
      %v429 = vld [vmem:[%s312 + $0x100] sm:$0xff]
      %v430 = vld [vmem:[%s312 + $0x108] sm:$0xff]
      %v431 = vld [vmem:[%s312 + $0x110] sm:$0xff]
      %v432 = vld [vmem:[%s312 + $0x118] sm:$0xff]
      %v433 = vld [vmem:[%s312 + $0x120] sm:$0xff]
      %v434 = vld [vmem:[%s312 + $0x128] sm:$0xff]
      %v435 = vld [vmem:[%s312 + $0x130] sm:$0xff]
      %v436 = vld [vmem:[%s312 + $0x138] sm:$0xff]
      %v437 = vld [vmem:[%s312 + $0x140] sm:$0xff]
      %v438 = vld [vmem:[%s312 + $0x148] sm:$0xff]
      %v439 = vld [vmem:[%s312 + $0x150] sm:$0xff]
      %v440 = vld [vmem:[%s312 + $0x158] sm:$0xff]
      %v441 = vld [vmem:[%s312 + $0x160] sm:$0xff]
      %v442 = vld [vmem:[%s312 + $0x168] sm:$0xff]
      %v443 = vld [vmem:[%s312 + $0x170] sm:$0xff]
      %v444 = vld [vmem:[%s312 + $0x178] sm:$0xff]
      %v445 = vld [vmem:[%s312 + $0x180] sm:$0xff]
      %v446 = vld [vmem:[%s312 + $0x188] sm:$0xff]
      %v447 = vld [vmem:[%s312 + $0x190] sm:$0xff]
      %v448 = vld [vmem:[%s312 + $0x198] sm:$0xff]
      %v449 = vld [vmem:[%s312 + $0x1a0] sm:$0xff]
      %v450 = vld [vmem:[%s312 + $0x1a8] sm:$0xff]
      %v451 = vld [vmem:[%s312 + $0x1b0] sm:$0xff]
      %v452 = vld [vmem:[%s312 + $0x1b8] sm:$0xff]
      %v453 = vld [vmem:[%s312 + $0x1c0] sm:$0xff]
      %v454 = vld [vmem:[%s312 + $0x1c8] sm:$0xff]
      %v455 = vld [vmem:[%s312 + $0x1d0] sm:$0xff]
      %v456 = vld [vmem:[%s312 + $0x1d8] sm:$0xff]
      %v457 = vld [vmem:[%s312 + $0x1e0] sm:$0xff]
      %v458 = vld [vmem:[%s312 + $0x1e8] sm:$0xff]
      %v459 = vld [vmem:[%s312 + $0x1f0] sm:$0xff]
      %v460 = vld [vmem:[%s312 + $0x1f8] sm:$0xff]
      %v461 = vld [vmem:[%s312 + $0x200] sm:$0xff]
      %v462 = vld [vmem:[%s312 + $0x208] sm:$0xff]
      %v463 = vld [vmem:[%s312 + $0x210] sm:$0xff]
      %v464 = vld [vmem:[%s312 + $0x218] sm:$0xff]
      %v465 = vld [vmem:[%s312 + $0x220] sm:$0xff]
      %v466 = vld [vmem:[%s312 + $0x228] sm:$0xff]
      %v467 = vld [vmem:[%s312 + $0x230] sm:$0xff]
      %v468 = vld [vmem:[%s312 + $0x238] sm:$0xff]
      %v469 = vld [vmem:[%s312 + $0x240] sm:$0xff]
      %v470 = vld [vmem:[%s312 + $0x248] sm:$0xff]
      %v471 = vld [vmem:[%s312 + $0x250] sm:$0xff]
      %v472 = vld [vmem:[%s312 + $0x258] sm:$0xff]
      %v473 = vld [vmem:[%s312 + $0x260] sm:$0xff]
      %v474 = vld [vmem:[%s312 + $0x268] sm:$0xff]
      %v475 = vld [vmem:[%s312 + $0x270] sm:$0xff]
      %v476 = vld [vmem:[%s312 + $0x278] sm:$0xff]
      %v477 = vld [vmem:[%s312 + $0x280] sm:$0xff]
      %v478 = vld [vmem:[%s312 + $0x288] sm:$0xff]
      %v479 = vld [vmem:[%s312 + $0x290] sm:$0xff]
      %v480 = vld [vmem:[%s312 + $0x298] sm:$0xff]
      %v481 = vld [vmem:[%s312 + $0x2a0] sm:$0xff]
      %v482 = vld [vmem:[%s312 + $0x2a8] sm:$0xff]
      %v483 = vld [vmem:[%s312 + $0x2b0] sm:$0xff]
      %v484 = vld [vmem:[%s312 + $0x2b8] sm:$0xff]
      %v485 = vld [vmem:[%s312 + $0x2c0] sm:$0xff]
      %v486 = vld [vmem:[%s312 + $0x2c8] sm:$0xff]
      %v487 = vld [vmem:[%s312 + $0x2d0] sm:$0xff]
      %v488 = vld [vmem:[%s312 + $0x2d8] sm:$0xff]
      %v489 = vld [vmem:[%s312 + $0x2e0] sm:$0xff]
      %v490 = vld [vmem:[%s312 + $0x2e8] sm:$0xff]
      %v491 = vld [vmem:[%s312 + $0x2f0] sm:$0xff]
      %v492 = vld [vmem:[%s312 + $0x2f8] sm:$0xff]
      %v493 = vld [vmem:[%s312 + $0x300] sm:$0xff]
      %v494 = vld [vmem:[%s312 + $0x308] sm:$0xff]
      %v495 = vld [vmem:[%s312 + $0x310] sm:$0xff]
      %v496 = vld [vmem:[%s312 + $0x318] sm:$0xff]
      %v497 = vld [vmem:[%s312 + $0x320] sm:$0xff]
      %v498 = vld [vmem:[%s312 + $0x328] sm:$0xff]
      %v499 = vld [vmem:[%s312 + $0x330] sm:$0xff]
      %v500 = vld [vmem:[%s312 + $0x338] sm:$0xff]
      %v501 = vld [vmem:[%s312 + $0x340] sm:$0xff]
      %v502 = vld [vmem:[%s312 + $0x348] sm:$0xff]
      %v503 = vld [vmem:[%s312 + $0x350] sm:$0xff]
      %v504 = vld [vmem:[%s312 + $0x358] sm:$0xff]
      %v505 = vld [vmem:[%s312 + $0x360] sm:$0xff]
      %v506 = vld [vmem:[%s312 + $0x368] sm:$0xff]
      %v507 = vld [vmem:[%s312 + $0x370] sm:$0xff]
      %v508 = vld [vmem:[%s312 + $0x378] sm:$0xff]
      %v509 = vld [vmem:[%s312 + $0x380] sm:$0xff]
      %v510 = vld [vmem:[%s312 + $0x388] sm:$0xff]
      %v511 = vld [vmem:[%s312 + $0x390] sm:$0xff]
      %v512 = vld [vmem:[%s312 + $0x398] sm:$0xff]
      %v513 = vld [vmem:[%s312 + $0x3a0] sm:$0xff]
      %v514 = vld [vmem:[%s312 + $0x3a8] sm:$0xff]
      %v515 = vld [vmem:[%s312 + $0x3b0] sm:$0xff]
      %v516 = vld [vmem:[%s312 + $0x3b8] sm:$0xff]
      %v517 = vld [vmem:[%s312 + $0x3c0] sm:$0xff]
      %v518 = vld [vmem:[%s312 + $0x3c8] sm:$0xff]
      %v519 = vld [vmem:[%s312 + $0x3d0] sm:$0xff]
      %v520 = vld [vmem:[%s312 + $0x3d8] sm:$0xff]
      %v521 = vld [vmem:[%s312 + $0x3e0] sm:$0xff]
      %v522 = vld [vmem:[%s312 + $0x3e8] sm:$0xff]
      %v523 = vld [vmem:[%s312 + $0x3f0] sm:$0xff]
      %v524 = vld [vmem:[%s312 + $0x3f8] sm:$0xff]
      %v525 = vld [vmem:[%s312 + $0x400] sm:$0xff]
      %v526 = vld [vmem:[%s312 + $0x408] sm:$0xff]
      %v527 = vld [vmem:[%s312 + $0x410] sm:$0xff]
      %v528 = vld [vmem:[%s312 + $0x418] sm:$0xff]
      %v529 = vld [vmem:[%s312 + $0x420] sm:$0xff]
      %v530 = vld [vmem:[%s312 + $0x428] sm:$0xff]
      %v531 = vld [vmem:[%s312 + $0x430] sm:$0xff]
      %v532 = vld [vmem:[%s312 + $0x438] sm:$0xff]
      %v533 = vld [vmem:[%s312 + $0x440] sm:$0xff]
      %v534 = vld [vmem:[%s312 + $0x448] sm:$0xff]
      %v535 = vld [vmem:[%s312 + $0x450] sm:$0xff]
      %v536 = vld [vmem:[%s312 + $0x458] sm:$0xff]
      %v537 = vld [vmem:[%s312 + $0x460] sm:$0xff]
      %v538 = vld [vmem:[%s312 + $0x468] sm:$0xff]
      %v539 = vld [vmem:[%s312 + $0x470] sm:$0xff]
      %v540 = vld [vmem:[%s312 + $0x478] sm:$0xff]
      %v541 = vld [vmem:[%s312 + $0x480] sm:$0xff]
      %v542 = vld [vmem:[%s312 + $0x488] sm:$0xff]
      %v543 = vld [vmem:[%s312 + $0x490] sm:$0xff]
      %v544 = vld [vmem:[%s312 + $0x498] sm:$0xff]
      %v545 = vld [vmem:[%s312 + $0x4a0] sm:$0xff]
      %v546 = vld [vmem:[%s312 + $0x4a8] sm:$0xff]
      %v547 = vld [vmem:[%s312 + $0x4b0] sm:$0xff]
      %v548 = vld [vmem:[%s312 + $0x4b8] sm:$0xff]
      %v549 = vld [vmem:[%s312 + $0x4c0] sm:$0xff]
      %v550 = vld [vmem:[%s312 + $0x4c8] sm:$0xff]
      %v551 = vld [vmem:[%s312 + $0x4d0] sm:$0xff]
      %v552 = vld [vmem:[%s312 + $0x4d8] sm:$0xff]
      %v553 = vld [vmem:[%s312 + $0x4e0] sm:$0xff]
      %v554 = vld [vmem:[%s312 + $0x4e8] sm:$0xff]
      %v555 = vld [vmem:[%s312 + $0x4f0] sm:$0xff]
      %v556 = vld [vmem:[%s312 + $0x4f8] sm:$0xff]
      %v557 = vld [vmem:[%s312 + $0x500] sm:$0xff]
      %v558 = vld [vmem:[%s312 + $0x508] sm:$0xff]
      %v559 = vld [vmem:[%s312 + $0x510] sm:$0xff]
      %v560 = vld [vmem:[%s312 + $0x518] sm:$0xff]
      %v561 = vld [vmem:[%s312 + $0x520] sm:$0xff]
      %v562 = vld [vmem:[%s312 + $0x528] sm:$0xff]
      %v563 = vld [vmem:[%s312 + $0x530] sm:$0xff]
      %v564 = vld [vmem:[%s312 + $0x538] sm:$0xff]
      %v565 = vld [vmem:[%s312 + $0x540] sm:$0xff]
      %v566 = vld [vmem:[%s312 + $0x548] sm:$0xff]
      %v567 = vld [vmem:[%s312 + $0x550] sm:$0xff]
      %v568 = vld [vmem:[%s312 + $0x558] sm:$0xff]
      %v569 = vld [vmem:[%s312 + $0x560] sm:$0xff]
      %v570 = vld [vmem:[%s312 + $0x568] sm:$0xff]
      %v571 = vld [vmem:[%s312 + $0x570] sm:$0xff]
      %v572 = vld [vmem:[%s312 + $0x578] sm:$0xff]
      %v573 = vld [vmem:[%s312 + $0x580] sm:$0xff]
      %v574 = vld [vmem:[%s312 + $0x588] sm:$0xff]
      %v575 = vld [vmem:[%s312 + $0x590] sm:$0xff]
      %v576 = vld [vmem:[%s312 + $0x598] sm:$0xff]
      %v577 = vld [vmem:[%s312 + $0x5a0] sm:$0xff]
      %v578 = vld [vmem:[%s312 + $0x5a8] sm:$0xff]
      %v579 = vld [vmem:[%s312 + $0x5b0] sm:$0xff]
      %v580 = vld [vmem:[%s312 + $0x5b8] sm:$0xff]
      %v581 = vld [vmem:[%s312 + $0x5c0] sm:$0xff]
      %v582 = vld [vmem:[%s312 + $0x5c8] sm:$0xff]
      %v583 = vld [vmem:[%s312 + $0x5d0] sm:$0xff]
      %v584 = vld [vmem:[%s312 + $0x5d8] sm:$0xff]
      %v585 = vld [vmem:[%s312 + $0x5e0] sm:$0xff]
      %v586 = vld [vmem:[%s312 + $0x5e8] sm:$0xff]
      %v587 = vld [vmem:[%s312 + $0x5f0] sm:$0xff]
      %v588 = vld [vmem:[%s312 + $0x5f8] sm:$0xff]
      %v589 = vld [vmem:[%s312 + $0x600] sm:$0xff]
      %v590 = vld [vmem:[%s312 + $0x608] sm:$0xff]
      %v591 = vld [vmem:[%s312 + $0x610] sm:$0xff]
      %v592 = vld [vmem:[%s312 + $0x618] sm:$0xff]
      %v593 = vld [vmem:[%s312 + $0x620] sm:$0xff]
      %v594 = vld [vmem:[%s312 + $0x628] sm:$0xff]
      %v595 = vld [vmem:[%s312 + $0x630] sm:$0xff]
      %v596 = vld [vmem:[%s312 + $0x638] sm:$0xff]
      %v597 = vld [vmem:[%s312 + $0x640] sm:$0xff]
      %v598 = vld [vmem:[%s312 + $0x648] sm:$0xff]
      %v599 = vld [vmem:[%s312 + $0x650] sm:$0xff]
      %v600 = vld [vmem:[%s312 + $0x658] sm:$0xff]
      %v601 = vld [vmem:[%s312 + $0x660] sm:$0xff]
      %v602 = vld [vmem:[%s312 + $0x668] sm:$0xff]
      %v603 = vld [vmem:[%s312 + $0x670] sm:$0xff]
      %v604 = vld [vmem:[%s312 + $0x678] sm:$0xff]
      %v605 = vld [vmem:[%s312 + $0x680] sm:$0xff]
      %v606 = vld [vmem:[%s312 + $0x688] sm:$0xff]
      %v607 = vld [vmem:[%s312 + $0x690] sm:$0xff]
      %v608 = vld [vmem:[%s312 + $0x698] sm:$0xff]
      %v609 = vld [vmem:[%s312 + $0x6a0] sm:$0xff]
      %v610 = vld [vmem:[%s312 + $0x6a8] sm:$0xff]
      %v611 = vld [vmem:[%s312 + $0x6b0] sm:$0xff]
      %v612 = vld [vmem:[%s312 + $0x6b8] sm:$0xff]
      %v613 = vld [vmem:[%s312 + $0x6c0] sm:$0xff]
      %v614 = vld [vmem:[%s312 + $0x6c8] sm:$0xff]
      %v615 = vld [vmem:[%s312 + $0x6d0] sm:$0xff]
      %v616 = vld [vmem:[%s312 + $0x6d8] sm:$0xff]
      %v617 = vld [vmem:[%s312 + $0x6e0] sm:$0xff]
      %v618 = vld [vmem:[%s312 + $0x6e8] sm:$0xff]
      %v619 = vld [vmem:[%s312 + $0x6f0] sm:$0xff]
      %v620 = vld [vmem:[%s312 + $0x6f8] sm:$0xff]
      %v621 = vld [vmem:[%s312 + $0x700] sm:$0xff]
      %v622 = vld [vmem:[%s312 + $0x708] sm:$0xff]
      %v623 = vld [vmem:[%s312 + $0x710] sm:$0xff]
      %v624 = vld [vmem:[%s312 + $0x718] sm:$0xff]
      %v625 = vld [vmem:[%s312 + $0x720] sm:$0xff]
      %v626 = vld [vmem:[%s312 + $0x728] sm:$0xff]
      %v627 = vld [vmem:[%s312 + $0x730] sm:$0xff]
      %v628 = vld [vmem:[%s312 + $0x738] sm:$0xff]
      %v629 = vld [vmem:[%s312 + $0x740] sm:$0xff]
      %v630 = vld [vmem:[%s312 + $0x748] sm:$0xff]
      %v631 = vld [vmem:[%s312 + $0x750] sm:$0xff]
      %v632 = vld [vmem:[%s312 + $0x758] sm:$0xff]
      %v633 = vld [vmem:[%s312 + $0x760] sm:$0xff]
      %v634 = vld [vmem:[%s312 + $0x768] sm:$0xff]
      %v635 = vld [vmem:[%s312 + $0x770] sm:$0xff]
      %v636 = vld [vmem:[%s312 + $0x778] sm:$0xff]
      %v637 = vld [vmem:[%s312 + $0x780] sm:$0xff]
      %v638 = vld [vmem:[%s312 + $0x788] sm:$0xff]
      %v639 = vld [vmem:[%s312 + $0x790] sm:$0xff]
      %v640 = vld [vmem:[%s312 + $0x798] sm:$0xff]
      %v641 = vld [vmem:[%s312 + $0x7a0] sm:$0xff]
      %v642 = vld [vmem:[%s312 + $0x7a8] sm:$0xff]
      %v643 = vld [vmem:[%s312 + $0x7b0] sm:$0xff]
      %v644 = vld [vmem:[%s312 + $0x7b8] sm:$0xff]
      %v645 = vld [vmem:[%s312 + $0x7c0] sm:$0xff]
      %v646 = vld [vmem:[%s312 + $0x7c8] sm:$0xff]
      %v647 = vld [vmem:[%s312 + $0x7d0] sm:$0xff]
      %v648 = vld [vmem:[%s312 + $0x7d8] sm:$0xff]
      %v649 = vld [vmem:[%s312 + $0x7e0] sm:$0xff]
      %v650 = vld [vmem:[%s312 + $0x7e8] sm:$0xff]
      %v651 = vld [vmem:[%s312 + $0x7f0] sm:$0xff]
      %v652 = vld [vmem:[%s312 + $0x7f8] sm:$0xff]
      %v685 = vunpack.c.l.b16 %v365
      %v686 = vunpack.c.h.b16 %v365
      %v687 = vunpack.c.l.b16 %v366
      %v688 = vunpack.c.h.b16 %v366
      %v689 = vunpack.c.l.b16 %v367
      %v690 = vunpack.c.h.b16 %v367
      %v691 = vunpack.c.l.b16 %v368
      %v692 = vunpack.c.h.b16 %v368
      %v693 = vunpack.c.l.b16 %v369
      %v694 = vunpack.c.h.b16 %v369
      %v695 = vunpack.c.l.b16 %v370
      %v696 = vunpack.c.h.b16 %v370
      %v697 = vunpack.c.l.b16 %v371
      %v698 = vunpack.c.h.b16 %v371
      %v699 = vunpack.c.l.b16 %v372
      %v700 = vunpack.c.h.b16 %v372
      %v701 = vunpack.c.l.b16 %v373
      %v702 = vunpack.c.h.b16 %v373
      %v703 = vunpack.c.l.b16 %v374
      %v704 = vunpack.c.h.b16 %v374
      %v705 = vunpack.c.l.b16 %v375
      %v706 = vunpack.c.h.b16 %v375
      %v707 = vunpack.c.l.b16 %v376
      %v708 = vunpack.c.h.b16 %v376
      %v709 = vunpack.c.l.b16 %v377
      %v710 = vunpack.c.h.b16 %v377
      %v711 = vunpack.c.l.b16 %v378
      %v712 = vunpack.c.h.b16 %v378
      %v713 = vunpack.c.l.b16 %v379
      %v714 = vunpack.c.h.b16 %v379
      %v715 = vunpack.c.l.b16 %v380
      %v716 = vunpack.c.h.b16 %v380
      %v717 = vunpack.c.l.b16 %v381
      %v718 = vunpack.c.h.b16 %v381
      %v719 = vunpack.c.l.b16 %v382
      %v720 = vunpack.c.h.b16 %v382
      %v721 = vunpack.c.l.b16 %v383
      %v722 = vunpack.c.h.b16 %v383
      %v723 = vunpack.c.l.b16 %v384
      %v724 = vunpack.c.h.b16 %v384
      %v725 = vunpack.c.l.b16 %v385
      %v726 = vunpack.c.h.b16 %v385
      %v727 = vunpack.c.l.b16 %v386
      %v728 = vunpack.c.h.b16 %v386
      %v729 = vunpack.c.l.b16 %v387
      %v730 = vunpack.c.h.b16 %v387
      %v731 = vunpack.c.l.b16 %v388
      %v732 = vunpack.c.h.b16 %v388
      %v733 = vunpack.c.l.b16 %v389
      %v734 = vunpack.c.h.b16 %v389
      %v735 = vunpack.c.l.b16 %v390
      %v736 = vunpack.c.h.b16 %v390
      %v737 = vunpack.c.l.b16 %v391
      %v738 = vunpack.c.h.b16 %v391
      %v739 = vunpack.c.l.b16 %v392
      %v740 = vunpack.c.h.b16 %v392
      %v741 = vunpack.c.l.b16 %v393
      %v742 = vunpack.c.h.b16 %v393
      %v743 = vunpack.c.l.b16 %v394
      %v744 = vunpack.c.h.b16 %v394
      %v745 = vunpack.c.l.b16 %v395
      %v746 = vunpack.c.h.b16 %v395
      %v747 = vunpack.c.l.b16 %v396
      %v748 = vunpack.c.h.b16 %v396
      %v749 = vpack.c.b16 %v701, %v685
      %v750 = vpack.c.b16 %v702, %v686
      %v751 = vpack.c.b16 %v703, %v687
      %v752 = vpack.c.b16 %v704, %v688
      %v753 = vpack.c.b16 %v705, %v689
      %v754 = vpack.c.b16 %v706, %v690
      %v755 = vpack.c.b16 %v707, %v691
      %v756 = vpack.c.b16 %v708, %v692
      %v757 = vpack.c.b16 %v709, %v693
      %v758 = vpack.c.b16 %v710, %v694
      %v759 = vpack.c.b16 %v711, %v695
      %v760 = vpack.c.b16 %v712, %v696
      %v761 = vpack.c.b16 %v713, %v697
      %v762 = vpack.c.b16 %v714, %v698
      %v763 = vpack.c.b16 %v715, %v699
      %v764 = vpack.c.b16 %v716, %v700
      %v765 = vpack.c.b16 %v733, %v717
      %v766 = vpack.c.b16 %v734, %v718
      %v767 = vpack.c.b16 %v735, %v719
      %v768 = vpack.c.b16 %v736, %v720
      %v769 = vpack.c.b16 %v737, %v721
      %v770 = vpack.c.b16 %v738, %v722
      %v771 = vpack.c.b16 %v739, %v723
      %v772 = vpack.c.b16 %v740, %v724
      %v773 = vpack.c.b16 %v741, %v725
      %v774 = vpack.c.b16 %v742, %v726
      %v775 = vpack.c.b16 %v743, %v727
      %v776 = vpack.c.b16 %v744, %v728
      %v777 = vpack.c.b16 %v745, %v729
      %v778 = vpack.c.b16 %v746, %v730
      %v779 = vpack.c.b16 %v747, %v731
      %v780 = vpack.c.b16 %v748, %v732
      %v1069 = vunpack.c.l.b16 %v397
      %v1070 = vunpack.c.h.b16 %v397
      %v1071 = vunpack.c.l.b16 %v398
      %v1072 = vunpack.c.h.b16 %v398
      %v1073 = vunpack.c.l.b16 %v399
      %v1074 = vunpack.c.h.b16 %v399
      %v1075 = vunpack.c.l.b16 %v400
      %v1076 = vunpack.c.h.b16 %v400
      %v1077 = vunpack.c.l.b16 %v401
      %v1078 = vunpack.c.h.b16 %v401
      %v1079 = vunpack.c.l.b16 %v402
      %v1080 = vunpack.c.h.b16 %v402
      %v1081 = vunpack.c.l.b16 %v403
      %v1082 = vunpack.c.h.b16 %v403
      %v1083 = vunpack.c.l.b16 %v404
      %v1084 = vunpack.c.h.b16 %v404
      %v1085 = vunpack.c.l.b16 %v405
      %v1086 = vunpack.c.h.b16 %v405
      %v1087 = vunpack.c.l.b16 %v406
      %v1088 = vunpack.c.h.b16 %v406
      %v1089 = vunpack.c.l.b16 %v407
      %v1090 = vunpack.c.h.b16 %v407
      %v1091 = vunpack.c.l.b16 %v408
      %v1092 = vunpack.c.h.b16 %v408
      %v1093 = vunpack.c.l.b16 %v409
      %v1094 = vunpack.c.h.b16 %v409
      %v1095 = vunpack.c.l.b16 %v410
      %v1096 = vunpack.c.h.b16 %v410
      %v1097 = vunpack.c.l.b16 %v411
      %v1098 = vunpack.c.h.b16 %v411
      %v1099 = vunpack.c.l.b16 %v412
      %v1100 = vunpack.c.h.b16 %v412
      %v1101 = vunpack.c.l.b16 %v413
      %v1102 = vunpack.c.h.b16 %v413
      %v1103 = vunpack.c.l.b16 %v414
      %v1104 = vunpack.c.h.b16 %v414
      %v1105 = vunpack.c.l.b16 %v415
      %v1106 = vunpack.c.h.b16 %v415
      %v1107 = vunpack.c.l.b16 %v416
      %v1108 = vunpack.c.h.b16 %v416
      %v1109 = vunpack.c.l.b16 %v417
      %v1110 = vunpack.c.h.b16 %v417
      %v1111 = vunpack.c.l.b16 %v418
      %v1112 = vunpack.c.h.b16 %v418
      %v1113 = vunpack.c.l.b16 %v419
      %v1114 = vunpack.c.h.b16 %v419
      %v1115 = vunpack.c.l.b16 %v420
      %v1116 = vunpack.c.h.b16 %v420
      %v1117 = vunpack.c.l.b16 %v421
      %v1118 = vunpack.c.h.b16 %v421
      %v1119 = vunpack.c.l.b16 %v422
      %v1120 = vunpack.c.h.b16 %v422
      %v1121 = vunpack.c.l.b16 %v423
      %v1122 = vunpack.c.h.b16 %v423
      %v1123 = vunpack.c.l.b16 %v424
      %v1124 = vunpack.c.h.b16 %v424
      %v1125 = vunpack.c.l.b16 %v425
      %v1126 = vunpack.c.h.b16 %v425
      %v1127 = vunpack.c.l.b16 %v426
      %v1128 = vunpack.c.h.b16 %v426
      %v1129 = vunpack.c.l.b16 %v427
      %v1130 = vunpack.c.h.b16 %v427
      %v1131 = vunpack.c.l.b16 %v428
      %v1132 = vunpack.c.h.b16 %v428
      %v1133 = vunpack.c.l.b16 %v429
      %v1134 = vunpack.c.h.b16 %v429
      %v1135 = vunpack.c.l.b16 %v430
      %v1136 = vunpack.c.h.b16 %v430
      %v1137 = vunpack.c.l.b16 %v431
      %v1138 = vunpack.c.h.b16 %v431
      %v1139 = vunpack.c.l.b16 %v432
      %v1140 = vunpack.c.h.b16 %v432
      %v1141 = vunpack.c.l.b16 %v433
      %v1142 = vunpack.c.h.b16 %v433
      %v1143 = vunpack.c.l.b16 %v434
      %v1144 = vunpack.c.h.b16 %v434
      %v1145 = vunpack.c.l.b16 %v435
      %v1146 = vunpack.c.h.b16 %v435
      %v1147 = vunpack.c.l.b16 %v436
      %v1148 = vunpack.c.h.b16 %v436
      %v1149 = vunpack.c.l.b16 %v437
      %v1150 = vunpack.c.h.b16 %v437
      %v1151 = vunpack.c.l.b16 %v438
      %v1152 = vunpack.c.h.b16 %v438
      %v1153 = vunpack.c.l.b16 %v439
      %v1154 = vunpack.c.h.b16 %v439
      %v1155 = vunpack.c.l.b16 %v440
      %v1156 = vunpack.c.h.b16 %v440
      %v1157 = vunpack.c.l.b16 %v441
      %v1158 = vunpack.c.h.b16 %v441
      %v1159 = vunpack.c.l.b16 %v442
      %v1160 = vunpack.c.h.b16 %v442
      %v1161 = vunpack.c.l.b16 %v443
      %v1162 = vunpack.c.h.b16 %v443
      %v1163 = vunpack.c.l.b16 %v444
      %v1164 = vunpack.c.h.b16 %v444
      %v1165 = vunpack.c.l.b16 %v445
      %v1166 = vunpack.c.h.b16 %v445
      %v1167 = vunpack.c.l.b16 %v446
      %v1168 = vunpack.c.h.b16 %v446
      %v1169 = vunpack.c.l.b16 %v447
      %v1170 = vunpack.c.h.b16 %v447
      %v1171 = vunpack.c.l.b16 %v448
      %v1172 = vunpack.c.h.b16 %v448
      %v1173 = vunpack.c.l.b16 %v449
      %v1174 = vunpack.c.h.b16 %v449
      %v1175 = vunpack.c.l.b16 %v450
      %v1176 = vunpack.c.h.b16 %v450
      %v1177 = vunpack.c.l.b16 %v451
      %v1178 = vunpack.c.h.b16 %v451
      %v1179 = vunpack.c.l.b16 %v452
      %v1180 = vunpack.c.h.b16 %v452
      %v1181 = vunpack.c.l.b16 %v453
      %v1182 = vunpack.c.h.b16 %v453
      %v1183 = vunpack.c.l.b16 %v454
      %v1184 = vunpack.c.h.b16 %v454
      %v1185 = vunpack.c.l.b16 %v455
      %v1186 = vunpack.c.h.b16 %v455
      %v1187 = vunpack.c.l.b16 %v456
      %v1188 = vunpack.c.h.b16 %v456
      %v1189 = vunpack.c.l.b16 %v457
      %v1190 = vunpack.c.h.b16 %v457
      %v1191 = vunpack.c.l.b16 %v458
      %v1192 = vunpack.c.h.b16 %v458
      %v1193 = vunpack.c.l.b16 %v459
      %v1194 = vunpack.c.h.b16 %v459
      %v1195 = vunpack.c.l.b16 %v460
      %v1196 = vunpack.c.h.b16 %v460
      %v1197 = vunpack.c.l.b16 %v461
      %v1198 = vunpack.c.h.b16 %v461
      %v1199 = vunpack.c.l.b16 %v462
      %v1200 = vunpack.c.h.b16 %v462
      %v1201 = vunpack.c.l.b16 %v463
      %v1202 = vunpack.c.h.b16 %v463
      %v1203 = vunpack.c.l.b16 %v464
      %v1204 = vunpack.c.h.b16 %v464
      %v1205 = vunpack.c.l.b16 %v465
      %v1206 = vunpack.c.h.b16 %v465
      %v1207 = vunpack.c.l.b16 %v466
      %v1208 = vunpack.c.h.b16 %v466
      %v1209 = vunpack.c.l.b16 %v467
      %v1210 = vunpack.c.h.b16 %v467
      %v1211 = vunpack.c.l.b16 %v468
      %v1212 = vunpack.c.h.b16 %v468
      %v1213 = vunpack.c.l.b16 %v469
      %v1214 = vunpack.c.h.b16 %v469
      %v1215 = vunpack.c.l.b16 %v470
      %v1216 = vunpack.c.h.b16 %v470
      %v1217 = vunpack.c.l.b16 %v471
      %v1218 = vunpack.c.h.b16 %v471
      %v1219 = vunpack.c.l.b16 %v472
      %v1220 = vunpack.c.h.b16 %v472
      %v1221 = vunpack.c.l.b16 %v473
      %v1222 = vunpack.c.h.b16 %v473
      %v1223 = vunpack.c.l.b16 %v474
      %v1224 = vunpack.c.h.b16 %v474
      %v1225 = vunpack.c.l.b16 %v475
      %v1226 = vunpack.c.h.b16 %v475
      %v1227 = vunpack.c.l.b16 %v476
      %v1228 = vunpack.c.h.b16 %v476
      %v1229 = vunpack.c.l.b16 %v477
      %v1230 = vunpack.c.h.b16 %v477
      %v1231 = vunpack.c.l.b16 %v478
      %v1232 = vunpack.c.h.b16 %v478
      %v1233 = vunpack.c.l.b16 %v479
      %v1234 = vunpack.c.h.b16 %v479
      %v1235 = vunpack.c.l.b16 %v480
      %v1236 = vunpack.c.h.b16 %v480
      %v1237 = vunpack.c.l.b16 %v481
      %v1238 = vunpack.c.h.b16 %v481
      %v1239 = vunpack.c.l.b16 %v482
      %v1240 = vunpack.c.h.b16 %v482
      %v1241 = vunpack.c.l.b16 %v483
      %v1242 = vunpack.c.h.b16 %v483
      %v1243 = vunpack.c.l.b16 %v484
      %v1244 = vunpack.c.h.b16 %v484
      %v1245 = vunpack.c.l.b16 %v485
      %v1246 = vunpack.c.h.b16 %v485
      %v1247 = vunpack.c.l.b16 %v486
      %v1248 = vunpack.c.h.b16 %v486
      %v1249 = vunpack.c.l.b16 %v487
      %v1250 = vunpack.c.h.b16 %v487
      %v1251 = vunpack.c.l.b16 %v488
      %v1252 = vunpack.c.h.b16 %v488
      %v1253 = vunpack.c.l.b16 %v489
      %v1254 = vunpack.c.h.b16 %v489
      %v1255 = vunpack.c.l.b16 %v490
      %v1256 = vunpack.c.h.b16 %v490
      %v1257 = vunpack.c.l.b16 %v491
      %v1258 = vunpack.c.h.b16 %v491
      %v1259 = vunpack.c.l.b16 %v492
      %v1260 = vunpack.c.h.b16 %v492
      %v1261 = vunpack.c.l.b16 %v493
      %v1262 = vunpack.c.h.b16 %v493
      %v1263 = vunpack.c.l.b16 %v494
      %v1264 = vunpack.c.h.b16 %v494
      %v1265 = vunpack.c.l.b16 %v495
      %v1266 = vunpack.c.h.b16 %v495
      %v1267 = vunpack.c.l.b16 %v496
      %v1268 = vunpack.c.h.b16 %v496
      %v1269 = vunpack.c.l.b16 %v497
      %v1270 = vunpack.c.h.b16 %v497
      %v1271 = vunpack.c.l.b16 %v498
      %v1272 = vunpack.c.h.b16 %v498
      %v1273 = vunpack.c.l.b16 %v499
      %v1274 = vunpack.c.h.b16 %v499
      %v1275 = vunpack.c.l.b16 %v500
      %v1276 = vunpack.c.h.b16 %v500
      %v1277 = vunpack.c.l.b16 %v501
      %v1278 = vunpack.c.h.b16 %v501
      %v1279 = vunpack.c.l.b16 %v502
      %v1280 = vunpack.c.h.b16 %v502
      %v1281 = vunpack.c.l.b16 %v503
      %v1282 = vunpack.c.h.b16 %v503
      %v1283 = vunpack.c.l.b16 %v504
      %v1284 = vunpack.c.h.b16 %v504
      %v1285 = vunpack.c.l.b16 %v505
      %v1286 = vunpack.c.h.b16 %v505
      %v1287 = vunpack.c.l.b16 %v506
      %v1288 = vunpack.c.h.b16 %v506
      %v1289 = vunpack.c.l.b16 %v507
      %v1290 = vunpack.c.h.b16 %v507
      %v1291 = vunpack.c.l.b16 %v508
      %v1292 = vunpack.c.h.b16 %v508
      %v1293 = vunpack.c.l.b16 %v509
      %v1294 = vunpack.c.h.b16 %v509
      %v1295 = vunpack.c.l.b16 %v510
      %v1296 = vunpack.c.h.b16 %v510
      %v1297 = vunpack.c.l.b16 %v511
      %v1298 = vunpack.c.h.b16 %v511
      %v1299 = vunpack.c.l.b16 %v512
      %v1300 = vunpack.c.h.b16 %v512
      %v1301 = vunpack.c.l.b16 %v513
      %v1302 = vunpack.c.h.b16 %v513
      %v1303 = vunpack.c.l.b16 %v514
      %v1304 = vunpack.c.h.b16 %v514
      %v1305 = vunpack.c.l.b16 %v515
      %v1306 = vunpack.c.h.b16 %v515
      %v1307 = vunpack.c.l.b16 %v516
      %v1308 = vunpack.c.h.b16 %v516
      %v1309 = vunpack.c.l.b16 %v517
      %v1310 = vunpack.c.h.b16 %v517
      %v1311 = vunpack.c.l.b16 %v518
      %v1312 = vunpack.c.h.b16 %v518
      %v1313 = vunpack.c.l.b16 %v519
      %v1314 = vunpack.c.h.b16 %v519
      %v1315 = vunpack.c.l.b16 %v520
      %v1316 = vunpack.c.h.b16 %v520
      %v1317 = vunpack.c.l.b16 %v521
      %v1318 = vunpack.c.h.b16 %v521
      %v1319 = vunpack.c.l.b16 %v522
      %v1320 = vunpack.c.h.b16 %v522
      %v1321 = vunpack.c.l.b16 %v523
      %v1322 = vunpack.c.h.b16 %v523
      %v1323 = vunpack.c.l.b16 %v524
      %v1324 = vunpack.c.h.b16 %v524
      %v1325 = vunpack.c.l.b16 %v525
      %v1326 = vunpack.c.h.b16 %v525
      %v1327 = vunpack.c.l.b16 %v526
      %v1328 = vunpack.c.h.b16 %v526
      %v1329 = vunpack.c.l.b16 %v527
      %v1330 = vunpack.c.h.b16 %v527
      %v1331 = vunpack.c.l.b16 %v528
      %v1332 = vunpack.c.h.b16 %v528
      %v1333 = vunpack.c.l.b16 %v529
      %v1334 = vunpack.c.h.b16 %v529
      %v1335 = vunpack.c.l.b16 %v530
      %v1336 = vunpack.c.h.b16 %v530
      %v1337 = vunpack.c.l.b16 %v531
      %v1338 = vunpack.c.h.b16 %v531
      %v1339 = vunpack.c.l.b16 %v532
      %v1340 = vunpack.c.h.b16 %v532
      %v1341 = vunpack.c.l.b16 %v533
      %v1342 = vunpack.c.h.b16 %v533
      %v1343 = vunpack.c.l.b16 %v534
      %v1344 = vunpack.c.h.b16 %v534
      %v1345 = vunpack.c.l.b16 %v535
      %v1346 = vunpack.c.h.b16 %v535
      %v1347 = vunpack.c.l.b16 %v536
      %v1348 = vunpack.c.h.b16 %v536
      %v1349 = vunpack.c.l.b16 %v537
      %v1350 = vunpack.c.h.b16 %v537
      %v1351 = vunpack.c.l.b16 %v538
      %v1352 = vunpack.c.h.b16 %v538
      %v1353 = vunpack.c.l.b16 %v539
      %v1354 = vunpack.c.h.b16 %v539
      %v1355 = vunpack.c.l.b16 %v540
      %v1356 = vunpack.c.h.b16 %v540
      %v1357 = vunpack.c.l.b16 %v541
      %v1358 = vunpack.c.h.b16 %v541
      %v1359 = vunpack.c.l.b16 %v542
      %v1360 = vunpack.c.h.b16 %v542
      %v1361 = vunpack.c.l.b16 %v543
      %v1362 = vunpack.c.h.b16 %v543
      %v1363 = vunpack.c.l.b16 %v544
      %v1364 = vunpack.c.h.b16 %v544
      %v1365 = vunpack.c.l.b16 %v545
      %v1366 = vunpack.c.h.b16 %v545
      %v1367 = vunpack.c.l.b16 %v546
      %v1368 = vunpack.c.h.b16 %v546
      %v1369 = vunpack.c.l.b16 %v547
      %v1370 = vunpack.c.h.b16 %v547
      %v1371 = vunpack.c.l.b16 %v548
      %v1372 = vunpack.c.h.b16 %v548
      %v1373 = vunpack.c.l.b16 %v549
      %v1374 = vunpack.c.h.b16 %v549
      %v1375 = vunpack.c.l.b16 %v550
      %v1376 = vunpack.c.h.b16 %v550
      %v1377 = vunpack.c.l.b16 %v551
      %v1378 = vunpack.c.h.b16 %v551
      %v1379 = vunpack.c.l.b16 %v552
      %v1380 = vunpack.c.h.b16 %v552
      %v1381 = vunpack.c.l.b16 %v553
      %v1382 = vunpack.c.h.b16 %v553
      %v1383 = vunpack.c.l.b16 %v554
      %v1384 = vunpack.c.h.b16 %v554
      %v1385 = vunpack.c.l.b16 %v555
      %v1386 = vunpack.c.h.b16 %v555
      %v1387 = vunpack.c.l.b16 %v556
      %v1388 = vunpack.c.h.b16 %v556
      %v1389 = vunpack.c.l.b16 %v557
      %v1390 = vunpack.c.h.b16 %v557
      %v1391 = vunpack.c.l.b16 %v558
      %v1392 = vunpack.c.h.b16 %v558
      %v1393 = vunpack.c.l.b16 %v559
      %v1394 = vunpack.c.h.b16 %v559
      %v1395 = vunpack.c.l.b16 %v560
      %v1396 = vunpack.c.h.b16 %v560
      %v1397 = vunpack.c.l.b16 %v561
      %v1398 = vunpack.c.h.b16 %v561
      %v1399 = vunpack.c.l.b16 %v562
      %v1400 = vunpack.c.h.b16 %v562
      %v1401 = vunpack.c.l.b16 %v563
      %v1402 = vunpack.c.h.b16 %v563
      %v1403 = vunpack.c.l.b16 %v564
      %v1404 = vunpack.c.h.b16 %v564
      %v1405 = vunpack.c.l.b16 %v565
      %v1406 = vunpack.c.h.b16 %v565
      %v1407 = vunpack.c.l.b16 %v566
      %v1408 = vunpack.c.h.b16 %v566
      %v1409 = vunpack.c.l.b16 %v567
      %v1410 = vunpack.c.h.b16 %v567
      %v1411 = vunpack.c.l.b16 %v568
      %v1412 = vunpack.c.h.b16 %v568
      %v1413 = vunpack.c.l.b16 %v569
      %v1414 = vunpack.c.h.b16 %v569
      %v1415 = vunpack.c.l.b16 %v570
      %v1416 = vunpack.c.h.b16 %v570
      %v1417 = vunpack.c.l.b16 %v571
      %v1418 = vunpack.c.h.b16 %v571
      %v1419 = vunpack.c.l.b16 %v572
      %v1420 = vunpack.c.h.b16 %v572
      %v1421 = vunpack.c.l.b16 %v573
      %v1422 = vunpack.c.h.b16 %v573
      %v1423 = vunpack.c.l.b16 %v574
      %v1424 = vunpack.c.h.b16 %v574
      %v1425 = vunpack.c.l.b16 %v575
      %v1426 = vunpack.c.h.b16 %v575
      %v1427 = vunpack.c.l.b16 %v576
      %v1428 = vunpack.c.h.b16 %v576
      %v1429 = vunpack.c.l.b16 %v577
      %v1430 = vunpack.c.h.b16 %v577
      %v1431 = vunpack.c.l.b16 %v578
      %v1432 = vunpack.c.h.b16 %v578
      %v1433 = vunpack.c.l.b16 %v579
      %v1434 = vunpack.c.h.b16 %v579
      %v1435 = vunpack.c.l.b16 %v580
      %v1436 = vunpack.c.h.b16 %v580
      %v1437 = vunpack.c.l.b16 %v581
      %v1438 = vunpack.c.h.b16 %v581
      %v1439 = vunpack.c.l.b16 %v582
      %v1440 = vunpack.c.h.b16 %v582
      %v1441 = vunpack.c.l.b16 %v583
      %v1442 = vunpack.c.h.b16 %v583
      %v1443 = vunpack.c.l.b16 %v584
      %v1444 = vunpack.c.h.b16 %v584
      %v1445 = vunpack.c.l.b16 %v585
      %v1446 = vunpack.c.h.b16 %v585
      %v1447 = vunpack.c.l.b16 %v586
      %v1448 = vunpack.c.h.b16 %v586
      %v1449 = vunpack.c.l.b16 %v587
      %v1450 = vunpack.c.h.b16 %v587
      %v1451 = vunpack.c.l.b16 %v588
      %v1452 = vunpack.c.h.b16 %v588
      %v1453 = vunpack.c.l.b16 %v589
      %v1454 = vunpack.c.h.b16 %v589
      %v1455 = vunpack.c.l.b16 %v590
      %v1456 = vunpack.c.h.b16 %v590
      %v1457 = vunpack.c.l.b16 %v591
      %v1458 = vunpack.c.h.b16 %v591
      %v1459 = vunpack.c.l.b16 %v592
      %v1460 = vunpack.c.h.b16 %v592
      %v1461 = vunpack.c.l.b16 %v593
      %v1462 = vunpack.c.h.b16 %v593
      %v1463 = vunpack.c.l.b16 %v594
      %v1464 = vunpack.c.h.b16 %v594
      %v1465 = vunpack.c.l.b16 %v595
      %v1466 = vunpack.c.h.b16 %v595
      %v1467 = vunpack.c.l.b16 %v596
      %v1468 = vunpack.c.h.b16 %v596
      %v1469 = vunpack.c.l.b16 %v597
      %v1470 = vunpack.c.h.b16 %v597
      %v1471 = vunpack.c.l.b16 %v598
      %v1472 = vunpack.c.h.b16 %v598
      %v1473 = vunpack.c.l.b16 %v599
      %v1474 = vunpack.c.h.b16 %v599
      %v1475 = vunpack.c.l.b16 %v600
      %v1476 = vunpack.c.h.b16 %v600
      %v1477 = vunpack.c.l.b16 %v601
      %v1478 = vunpack.c.h.b16 %v601
      %v1479 = vunpack.c.l.b16 %v602
      %v1480 = vunpack.c.h.b16 %v602
      %v1481 = vunpack.c.l.b16 %v603
      %v1482 = vunpack.c.h.b16 %v603
      %v1483 = vunpack.c.l.b16 %v604
      %v1484 = vunpack.c.h.b16 %v604
      %v1485 = vunpack.c.l.b16 %v605
      %v1486 = vunpack.c.h.b16 %v605
      %v1487 = vunpack.c.l.b16 %v606
      %v1488 = vunpack.c.h.b16 %v606
      %v1489 = vunpack.c.l.b16 %v607
      %v1490 = vunpack.c.h.b16 %v607
      %v1491 = vunpack.c.l.b16 %v608
      %v1492 = vunpack.c.h.b16 %v608
      %v1493 = vunpack.c.l.b16 %v609
      %v1494 = vunpack.c.h.b16 %v609
      %v1495 = vunpack.c.l.b16 %v610
      %v1496 = vunpack.c.h.b16 %v610
      %v1497 = vunpack.c.l.b16 %v611
      %v1498 = vunpack.c.h.b16 %v611
      %v1499 = vunpack.c.l.b16 %v612
      %v1500 = vunpack.c.h.b16 %v612
      %v1501 = vunpack.c.l.b16 %v613
      %v1502 = vunpack.c.h.b16 %v613
      %v1503 = vunpack.c.l.b16 %v614
      %v1504 = vunpack.c.h.b16 %v614
      %v1505 = vunpack.c.l.b16 %v615
      %v1506 = vunpack.c.h.b16 %v615
      %v1507 = vunpack.c.l.b16 %v616
      %v1508 = vunpack.c.h.b16 %v616
      %v1509 = vunpack.c.l.b16 %v617
      %v1510 = vunpack.c.h.b16 %v617
      %v1511 = vunpack.c.l.b16 %v618
      %v1512 = vunpack.c.h.b16 %v618
      %v1513 = vunpack.c.l.b16 %v619
      %v1514 = vunpack.c.h.b16 %v619
      %v1515 = vunpack.c.l.b16 %v620
      %v1516 = vunpack.c.h.b16 %v620
      %v1517 = vunpack.c.l.b16 %v621
      %v1518 = vunpack.c.h.b16 %v621
      %v1519 = vunpack.c.l.b16 %v622
      %v1520 = vunpack.c.h.b16 %v622
      %v1521 = vunpack.c.l.b16 %v623
      %v1522 = vunpack.c.h.b16 %v623
      %v1523 = vunpack.c.l.b16 %v624
      %v1524 = vunpack.c.h.b16 %v624
      %v1525 = vunpack.c.l.b16 %v625
      %v1526 = vunpack.c.h.b16 %v625
      %v1527 = vunpack.c.l.b16 %v626
      %v1528 = vunpack.c.h.b16 %v626
      %v1529 = vunpack.c.l.b16 %v627
      %v1530 = vunpack.c.h.b16 %v627
      %v1531 = vunpack.c.l.b16 %v628
      %v1532 = vunpack.c.h.b16 %v628
      %v1533 = vunpack.c.l.b16 %v629
      %v1534 = vunpack.c.h.b16 %v629
      %v1535 = vunpack.c.l.b16 %v630
      %v1536 = vunpack.c.h.b16 %v630
      %v1537 = vunpack.c.l.b16 %v631
      %v1538 = vunpack.c.h.b16 %v631
      %v1539 = vunpack.c.l.b16 %v632
      %v1540 = vunpack.c.h.b16 %v632
      %v1541 = vunpack.c.l.b16 %v633
      %v1542 = vunpack.c.h.b16 %v633
      %v1543 = vunpack.c.l.b16 %v634
      %v1544 = vunpack.c.h.b16 %v634
      %v1545 = vunpack.c.l.b16 %v635
      %v1546 = vunpack.c.h.b16 %v635
      %v1547 = vunpack.c.l.b16 %v636
      %v1548 = vunpack.c.h.b16 %v636
      %v1549 = vunpack.c.l.b16 %v637
      %v1550 = vunpack.c.h.b16 %v637
      %v1551 = vunpack.c.l.b16 %v638
      %v1552 = vunpack.c.h.b16 %v638
      %v1553 = vunpack.c.l.b16 %v639
      %v1554 = vunpack.c.h.b16 %v639
      %v1555 = vunpack.c.l.b16 %v640
      %v1556 = vunpack.c.h.b16 %v640
      %v1557 = vunpack.c.l.b16 %v641
      %v1558 = vunpack.c.h.b16 %v641
      %v1559 = vunpack.c.l.b16 %v642
      %v1560 = vunpack.c.h.b16 %v642
      %v1561 = vunpack.c.l.b16 %v643
      %v1562 = vunpack.c.h.b16 %v643
      %v1563 = vunpack.c.l.b16 %v644
      %v1564 = vunpack.c.h.b16 %v644
      %v1565 = vunpack.c.l.b16 %v645
      %v1566 = vunpack.c.h.b16 %v645
      %v1567 = vunpack.c.l.b16 %v646
      %v1568 = vunpack.c.h.b16 %v646
      %v1569 = vunpack.c.l.b16 %v647
      %v1570 = vunpack.c.h.b16 %v647
      %v1571 = vunpack.c.l.b16 %v648
      %v1572 = vunpack.c.h.b16 %v648
      %v1573 = vunpack.c.l.b16 %v649
      %v1574 = vunpack.c.h.b16 %v649
      %v1575 = vunpack.c.l.b16 %v650
      %v1576 = vunpack.c.h.b16 %v650
      %v1577 = vunpack.c.l.b16 %v651
      %v1578 = vunpack.c.h.b16 %v651
      %v1579 = vunpack.c.l.b16 %v652
      %v1580 = vunpack.c.h.b16 %v652
      %v1581 = vpack.c.b16 %v1071, %v1069
      %v1582 = vpack.c.b16 %v1072, %v1070
      %v1583 = vpack.c.b16 %v1075, %v1073
      %v1584 = vpack.c.b16 %v1076, %v1074
      %v1585 = vpack.c.b16 %v1079, %v1077
      %v1586 = vpack.c.b16 %v1080, %v1078
      %v1587 = vpack.c.b16 %v1083, %v1081
      %v1588 = vpack.c.b16 %v1084, %v1082
      %v1589 = vpack.c.b16 %v1087, %v1085
      %v1590 = vpack.c.b16 %v1088, %v1086
      %v1591 = vpack.c.b16 %v1091, %v1089
      %v1592 = vpack.c.b16 %v1092, %v1090
      %v1593 = vpack.c.b16 %v1095, %v1093
      %v1594 = vpack.c.b16 %v1096, %v1094
      %v1595 = vpack.c.b16 %v1099, %v1097
      %v1596 = vpack.c.b16 %v1100, %v1098
      %v1597 = vpack.c.b16 %v1103, %v1101
      %v1598 = vpack.c.b16 %v1104, %v1102
      %v1599 = vpack.c.b16 %v1107, %v1105
      %v1600 = vpack.c.b16 %v1108, %v1106
      %v1601 = vpack.c.b16 %v1111, %v1109
      %v1602 = vpack.c.b16 %v1112, %v1110
      %v1603 = vpack.c.b16 %v1115, %v1113
      %v1604 = vpack.c.b16 %v1116, %v1114
      %v1605 = vpack.c.b16 %v1119, %v1117
      %v1606 = vpack.c.b16 %v1120, %v1118
      %v1607 = vpack.c.b16 %v1123, %v1121
      %v1608 = vpack.c.b16 %v1124, %v1122
      %v1609 = vpack.c.b16 %v1127, %v1125
      %v1610 = vpack.c.b16 %v1128, %v1126
      %v1611 = vpack.c.b16 %v1131, %v1129
      %v1612 = vpack.c.b16 %v1132, %v1130
      %v1613 = vpack.c.b16 %v1135, %v1133
      %v1614 = vpack.c.b16 %v1136, %v1134
      %v1615 = vpack.c.b16 %v1139, %v1137
      %v1616 = vpack.c.b16 %v1140, %v1138
      %v1617 = vpack.c.b16 %v1143, %v1141
      %v1618 = vpack.c.b16 %v1144, %v1142
      %v1619 = vpack.c.b16 %v1147, %v1145
      %v1620 = vpack.c.b16 %v1148, %v1146
      %v1621 = vpack.c.b16 %v1151, %v1149
      %v1622 = vpack.c.b16 %v1152, %v1150
      %v1623 = vpack.c.b16 %v1155, %v1153
      %v1624 = vpack.c.b16 %v1156, %v1154
      %v1625 = vpack.c.b16 %v1159, %v1157
      %v1626 = vpack.c.b16 %v1160, %v1158
      %v1627 = vpack.c.b16 %v1163, %v1161
      %v1628 = vpack.c.b16 %v1164, %v1162
      %v1629 = vpack.c.b16 %v1167, %v1165
      %v1630 = vpack.c.b16 %v1168, %v1166
      %v1631 = vpack.c.b16 %v1171, %v1169
      %v1632 = vpack.c.b16 %v1172, %v1170
      %v1633 = vpack.c.b16 %v1175, %v1173
      %v1634 = vpack.c.b16 %v1176, %v1174
      %v1635 = vpack.c.b16 %v1179, %v1177
      %v1636 = vpack.c.b16 %v1180, %v1178
      %v1637 = vpack.c.b16 %v1183, %v1181
      %v1638 = vpack.c.b16 %v1184, %v1182
      %v1639 = vpack.c.b16 %v1187, %v1185
      %v1640 = vpack.c.b16 %v1188, %v1186
      %v1641 = vpack.c.b16 %v1191, %v1189
      %v1642 = vpack.c.b16 %v1192, %v1190
      %v1643 = vpack.c.b16 %v1195, %v1193
      %v1644 = vpack.c.b16 %v1196, %v1194
      %v1645 = vpack.c.b16 %v1199, %v1197
      %v1646 = vpack.c.b16 %v1200, %v1198
      %v1647 = vpack.c.b16 %v1203, %v1201
      %v1648 = vpack.c.b16 %v1204, %v1202
      %v1649 = vpack.c.b16 %v1207, %v1205
      %v1650 = vpack.c.b16 %v1208, %v1206
      %v1651 = vpack.c.b16 %v1211, %v1209
      %v1652 = vpack.c.b16 %v1212, %v1210
      %v1653 = vpack.c.b16 %v1215, %v1213
      %v1654 = vpack.c.b16 %v1216, %v1214
      %v1655 = vpack.c.b16 %v1219, %v1217
      %v1656 = vpack.c.b16 %v1220, %v1218
      %v1657 = vpack.c.b16 %v1223, %v1221
      %v1658 = vpack.c.b16 %v1224, %v1222
      %v1659 = vpack.c.b16 %v1227, %v1225
      %v1660 = vpack.c.b16 %v1228, %v1226
      %v1661 = vpack.c.b16 %v1231, %v1229
      %v1662 = vpack.c.b16 %v1232, %v1230
      %v1663 = vpack.c.b16 %v1235, %v1233
      %v1664 = vpack.c.b16 %v1236, %v1234
      %v1665 = vpack.c.b16 %v1239, %v1237
      %v1666 = vpack.c.b16 %v1240, %v1238
      %v1667 = vpack.c.b16 %v1243, %v1241
      %v1668 = vpack.c.b16 %v1244, %v1242
      %v1669 = vpack.c.b16 %v1247, %v1245
      %v1670 = vpack.c.b16 %v1248, %v1246
      %v1671 = vpack.c.b16 %v1251, %v1249
      %v1672 = vpack.c.b16 %v1252, %v1250
      %v1673 = vpack.c.b16 %v1255, %v1253
      %v1674 = vpack.c.b16 %v1256, %v1254
      %v1675 = vpack.c.b16 %v1259, %v1257
      %v1676 = vpack.c.b16 %v1260, %v1258
      %v1677 = vpack.c.b16 %v1263, %v1261
      %v1678 = vpack.c.b16 %v1264, %v1262
      %v1679 = vpack.c.b16 %v1267, %v1265
      %v1680 = vpack.c.b16 %v1268, %v1266
      %v1681 = vpack.c.b16 %v1271, %v1269
      %v1682 = vpack.c.b16 %v1272, %v1270
      %v1683 = vpack.c.b16 %v1275, %v1273
      %v1684 = vpack.c.b16 %v1276, %v1274
      %v1685 = vpack.c.b16 %v1279, %v1277
      %v1686 = vpack.c.b16 %v1280, %v1278
      %v1687 = vpack.c.b16 %v1283, %v1281
      %v1688 = vpack.c.b16 %v1284, %v1282
      %v1689 = vpack.c.b16 %v1287, %v1285
      %v1690 = vpack.c.b16 %v1288, %v1286
      %v1691 = vpack.c.b16 %v1291, %v1289
      %v1692 = vpack.c.b16 %v1292, %v1290
      %v1693 = vpack.c.b16 %v1295, %v1293
      %v1694 = vpack.c.b16 %v1296, %v1294
      %v1695 = vpack.c.b16 %v1299, %v1297
      %v1696 = vpack.c.b16 %v1300, %v1298
      %v1697 = vpack.c.b16 %v1303, %v1301
      %v1698 = vpack.c.b16 %v1304, %v1302
      %v1699 = vpack.c.b16 %v1307, %v1305
      %v1700 = vpack.c.b16 %v1308, %v1306
      %v1701 = vpack.c.b16 %v1311, %v1309
      %v1702 = vpack.c.b16 %v1312, %v1310
      %v1703 = vpack.c.b16 %v1315, %v1313
      %v1704 = vpack.c.b16 %v1316, %v1314
      %v1705 = vpack.c.b16 %v1319, %v1317
      %v1706 = vpack.c.b16 %v1320, %v1318
      %v1707 = vpack.c.b16 %v1323, %v1321
      %v1708 = vpack.c.b16 %v1324, %v1322
      %v1709 = vpack.c.b16 %v1327, %v1325
      %v1710 = vpack.c.b16 %v1328, %v1326
      %v1711 = vpack.c.b16 %v1331, %v1329
      %v1712 = vpack.c.b16 %v1332, %v1330
      %v1713 = vpack.c.b16 %v1335, %v1333
      %v1714 = vpack.c.b16 %v1336, %v1334
      %v1715 = vpack.c.b16 %v1339, %v1337
      %v1716 = vpack.c.b16 %v1340, %v1338
      %v1717 = vpack.c.b16 %v1343, %v1341
      %v1718 = vpack.c.b16 %v1344, %v1342
      %v1719 = vpack.c.b16 %v1347, %v1345
      %v1720 = vpack.c.b16 %v1348, %v1346
      %v1721 = vpack.c.b16 %v1351, %v1349
      %v1722 = vpack.c.b16 %v1352, %v1350
      %v1723 = vpack.c.b16 %v1355, %v1353
      %v1724 = vpack.c.b16 %v1356, %v1354
      %v1725 = vpack.c.b16 %v1359, %v1357
      %v1726 = vpack.c.b16 %v1360, %v1358
      %v1727 = vpack.c.b16 %v1363, %v1361
      %v1728 = vpack.c.b16 %v1364, %v1362
      %v1729 = vpack.c.b16 %v1367, %v1365
      %v1730 = vpack.c.b16 %v1368, %v1366
      %v1731 = vpack.c.b16 %v1371, %v1369
      %v1732 = vpack.c.b16 %v1372, %v1370
      %v1733 = vpack.c.b16 %v1375, %v1373
      %v1734 = vpack.c.b16 %v1376, %v1374
      %v1735 = vpack.c.b16 %v1379, %v1377
      %v1736 = vpack.c.b16 %v1380, %v1378
      %v1737 = vpack.c.b16 %v1383, %v1381
      %v1738 = vpack.c.b16 %v1384, %v1382
      %v1739 = vpack.c.b16 %v1387, %v1385
      %v1740 = vpack.c.b16 %v1388, %v1386
      %v1741 = vpack.c.b16 %v1391, %v1389
      %v1742 = vpack.c.b16 %v1392, %v1390
      %v1743 = vpack.c.b16 %v1395, %v1393
      %v1744 = vpack.c.b16 %v1396, %v1394
      %v1745 = vpack.c.b16 %v1399, %v1397
      %v1746 = vpack.c.b16 %v1400, %v1398
      %v1747 = vpack.c.b16 %v1403, %v1401
      %v1748 = vpack.c.b16 %v1404, %v1402
      %v1749 = vpack.c.b16 %v1407, %v1405
      %v1750 = vpack.c.b16 %v1408, %v1406
      %v1751 = vpack.c.b16 %v1411, %v1409
      %v1752 = vpack.c.b16 %v1412, %v1410
      %v1753 = vpack.c.b16 %v1415, %v1413
      %v1754 = vpack.c.b16 %v1416, %v1414
      %v1755 = vpack.c.b16 %v1419, %v1417
      %v1756 = vpack.c.b16 %v1420, %v1418
      %v1757 = vpack.c.b16 %v1423, %v1421
      %v1758 = vpack.c.b16 %v1424, %v1422
      %v1759 = vpack.c.b16 %v1427, %v1425
      %v1760 = vpack.c.b16 %v1428, %v1426
      %v1761 = vpack.c.b16 %v1431, %v1429
      %v1762 = vpack.c.b16 %v1432, %v1430
      %v1763 = vpack.c.b16 %v1435, %v1433
      %v1764 = vpack.c.b16 %v1436, %v1434
      %v1765 = vpack.c.b16 %v1439, %v1437
      %v1766 = vpack.c.b16 %v1440, %v1438
      %v1767 = vpack.c.b16 %v1443, %v1441
      %v1768 = vpack.c.b16 %v1444, %v1442
      %v1769 = vpack.c.b16 %v1447, %v1445
      %v1770 = vpack.c.b16 %v1448, %v1446
      %v1771 = vpack.c.b16 %v1451, %v1449
      %v1772 = vpack.c.b16 %v1452, %v1450
      %v1773 = vpack.c.b16 %v1455, %v1453
      %v1774 = vpack.c.b16 %v1456, %v1454
      %v1775 = vpack.c.b16 %v1459, %v1457
      %v1776 = vpack.c.b16 %v1460, %v1458
      %v1777 = vpack.c.b16 %v1463, %v1461
      %v1778 = vpack.c.b16 %v1464, %v1462
      %v1779 = vpack.c.b16 %v1467, %v1465
      %v1780 = vpack.c.b16 %v1468, %v1466
      %v1781 = vpack.c.b16 %v1471, %v1469
      %v1782 = vpack.c.b16 %v1472, %v1470
      %v1783 = vpack.c.b16 %v1475, %v1473
      %v1784 = vpack.c.b16 %v1476, %v1474
      %v1785 = vpack.c.b16 %v1479, %v1477
      %v1786 = vpack.c.b16 %v1480, %v1478
      %v1787 = vpack.c.b16 %v1483, %v1481
      %v1788 = vpack.c.b16 %v1484, %v1482
      %v1789 = vpack.c.b16 %v1487, %v1485
      %v1790 = vpack.c.b16 %v1488, %v1486
      %v1791 = vpack.c.b16 %v1491, %v1489
      %v1792 = vpack.c.b16 %v1492, %v1490
      %v1793 = vpack.c.b16 %v1495, %v1493
      %v1794 = vpack.c.b16 %v1496, %v1494
      %v1795 = vpack.c.b16 %v1499, %v1497
      %v1796 = vpack.c.b16 %v1500, %v1498
      %v1797 = vpack.c.b16 %v1503, %v1501
      %v1798 = vpack.c.b16 %v1504, %v1502
      %v1799 = vpack.c.b16 %v1507, %v1505
      %v1800 = vpack.c.b16 %v1508, %v1506
      %v1801 = vpack.c.b16 %v1511, %v1509
      %v1802 = vpack.c.b16 %v1512, %v1510
      %v1803 = vpack.c.b16 %v1515, %v1513
      %v1804 = vpack.c.b16 %v1516, %v1514
      %v1805 = vpack.c.b16 %v1519, %v1517
      %v1806 = vpack.c.b16 %v1520, %v1518
      %v1807 = vpack.c.b16 %v1523, %v1521
      %v1808 = vpack.c.b16 %v1524, %v1522
      %v1809 = vpack.c.b16 %v1527, %v1525
      %v1810 = vpack.c.b16 %v1528, %v1526
      %v1811 = vpack.c.b16 %v1531, %v1529
      %v1812 = vpack.c.b16 %v1532, %v1530
      %v1813 = vpack.c.b16 %v1535, %v1533
      %v1814 = vpack.c.b16 %v1536, %v1534
      %v1815 = vpack.c.b16 %v1539, %v1537
      %v1816 = vpack.c.b16 %v1540, %v1538
      %v1817 = vpack.c.b16 %v1543, %v1541
      %v1818 = vpack.c.b16 %v1544, %v1542
      %v1819 = vpack.c.b16 %v1547, %v1545
      %v1820 = vpack.c.b16 %v1548, %v1546
      %v1821 = vpack.c.b16 %v1551, %v1549
      %v1822 = vpack.c.b16 %v1552, %v1550
      %v1823 = vpack.c.b16 %v1555, %v1553
      %v1824 = vpack.c.b16 %v1556, %v1554
      %v1825 = vpack.c.b16 %v1559, %v1557
      %v1826 = vpack.c.b16 %v1560, %v1558
      %v1827 = vpack.c.b16 %v1563, %v1561
      %v1828 = vpack.c.b16 %v1564, %v1562
      %v1829 = vpack.c.b16 %v1567, %v1565
      %v1830 = vpack.c.b16 %v1568, %v1566
      %v1831 = vpack.c.b16 %v1571, %v1569
      %v1832 = vpack.c.b16 %v1572, %v1570
      %v1833 = vpack.c.b16 %v1575, %v1573
      %v1834 = vpack.c.b16 %v1576, %v1574
      %v1835 = vpack.c.b16 %v1579, %v1577
      %v1836 = vpack.c.b16 %v1580, %v1578
      %2093 = vmatprep.subr.bf16.mxu0 %v1596
      %2094 = vmatpush1.bf16.msra.mxu0 %v1595
      %2095 = vmatprep.subr.bf16.mxu0 %v1594
      %2096 = vmatpush1.bf16.msra.mxu0 %v1593
      %2097 = vmatprep.subr.bf16.mxu0 %v1592
      %2098 = vmatpush1.bf16.msra.mxu0 %v1591
      %2099 = vmatprep.subr.bf16.mxu0 %v1590
      %2100 = vmatpush1.bf16.msra.mxu0 %v1589
      %2101 = vmatprep.subr.bf16.mxu0 %v1588
      %2102 = vmatpush1.bf16.msra.mxu0 %v1587
      %2103 = vmatprep.subr.bf16.mxu0 %v1586
      %2104 = vmatpush1.bf16.msra.mxu0 %v1585
      %2105 = vmatprep.subr.bf16.mxu0 %v1584
      %2106 = vmatpush1.bf16.msra.mxu0 %v1583
      %2107 = vmatprep.subr.bf16.mxu0 %v1582
      %2108 = vmatpush1.bf16.msra.mxu0 %v1581
      %2109 = vmatprep.subr.bf16.mxu0 %v1612
      %2110 = vmatpush2.bf16.msra.mxu0 %v1611
      %2111 = vmatprep.subr.bf16.mxu0 %v1610
      %2112 = vmatpush2.bf16.msra.mxu0 %v1609
      %2113 = vmatprep.subr.bf16.mxu0 %v1608
      %2114 = vmatpush2.bf16.msra.mxu0 %v1607
      %2115 = vmatprep.subr.bf16.mxu0 %v1606
      %2116 = vmatpush2.bf16.msra.mxu0 %v1605
      %2117 = vmatprep.subr.bf16.mxu0 %v1604
      %2118 = vmatpush2.bf16.msra.mxu0 %v1603
      %2119 = vmatprep.subr.bf16.mxu0 %v1602
      %2120 = vmatpush2.bf16.msra.mxu0 %v1601
      %2121 = vmatprep.subr.bf16.mxu0 %v1600
      %2122 = vmatpush2.bf16.msra.mxu0 %v1599
      %2123 = vmatprep.subr.bf16.mxu0 %v1598
      %2124 = vmatpush2.bf16.msra.mxu0 %v1597
      %2125 = vmatprep.mubr.bf16.mxu0 %v750
      %2126 = vmatmul.mubr.bf16.gmra.mxu0 %v749
      %v2127 = vpop.f32.mrf.mxu0
      %v2128 = vadd.f32 0.0, %v2127
      %v2129 = vpop.f32.mrf.mxu0
      %v2130 = vadd.f32 0.0, %v2129
      %v2131 = vpop.f32.mrf.mxu0
      %v2132 = vadd.f32 0.0, %v2131
      %v2133 = vpop.f32.mrf.mxu0
      %v2134 = vadd.f32 0.0, %v2133
      %2135 = vmatprep.mubr.bf16.mxu0 %v766
      %2136 = vmatmul.mubr.bf16.gmra.mxu0 %v765
      %v2137 = vpop.f32.mrf.mxu0
      %v2138 = vadd.f32 0.0, %v2137
      %v2139 = vpop.f32.mrf.mxu0
      %v2140 = vadd.f32 0.0, %v2139
      %v2141 = vpop.f32.mrf.mxu0
      %v2142 = vadd.f32 0.0, %v2141
      %v2143 = vpop.f32.mrf.mxu0
      %v2144 = vadd.f32 0.0, %v2143
      %2145 = vdwg.mxu0
      %2146 = vmatprep.subr.bf16.mxu0 %v1628
      %2147 = vmatpush1.bf16.msra.mxu0 %v1627
      %2148 = vmatprep.subr.bf16.mxu0 %v1626
      %2149 = vmatpush1.bf16.msra.mxu0 %v1625
      %2150 = vmatprep.subr.bf16.mxu0 %v1624
      %2151 = vmatpush1.bf16.msra.mxu0 %v1623
      %2152 = vmatprep.subr.bf16.mxu0 %v1622
      %2153 = vmatpush1.bf16.msra.mxu0 %v1621
      %2154 = vmatprep.subr.bf16.mxu0 %v1620
      %2155 = vmatpush1.bf16.msra.mxu0 %v1619
      %2156 = vmatprep.subr.bf16.mxu0 %v1618
      %2157 = vmatpush1.bf16.msra.mxu0 %v1617
      %2158 = vmatprep.subr.bf16.mxu0 %v1616
      %2159 = vmatpush1.bf16.msra.mxu0 %v1615
      %2160 = vmatprep.subr.bf16.mxu0 %v1614
      %2161 = vmatpush1.bf16.msra.mxu0 %v1613
      %2162 = vmatprep.subr.bf16.mxu0 %v1644
      %2163 = vmatpush2.bf16.msra.mxu0 %v1643
      %2164 = vmatprep.subr.bf16.mxu0 %v1642
      %2165 = vmatpush2.bf16.msra.mxu0 %v1641
      %2166 = vmatprep.subr.bf16.mxu0 %v1640
      %2167 = vmatpush2.bf16.msra.mxu0 %v1639
      %2168 = vmatprep.subr.bf16.mxu0 %v1638
      %2169 = vmatpush2.bf16.msra.mxu0 %v1637
      %2170 = vmatprep.subr.bf16.mxu0 %v1636
      %2171 = vmatpush2.bf16.msra.mxu0 %v1635
      %2172 = vmatprep.subr.bf16.mxu0 %v1634
      %2173 = vmatpush2.bf16.msra.mxu0 %v1633
      %2174 = vmatprep.subr.bf16.mxu0 %v1632
      %2175 = vmatpush2.bf16.msra.mxu0 %v1631
      %2176 = vmatprep.subr.bf16.mxu0 %v1630
      %2177 = vmatpush2.bf16.msra.mxu0 %v1629
      %2178 = vmatprep.mubr.bf16.mxu0 %v752
      %2179 = vmatmul.mubr.bf16.gmra.mxu0 %v751
      %v2180 = vpop.f32.mrf.mxu0
      %v2181 = vadd.f32 %v2128, %v2180
      %v2182 = vpop.f32.mrf.mxu0
      %v2183 = vadd.f32 %v2130, %v2182
      %v2184 = vpop.f32.mrf.mxu0
      %v2185 = vadd.f32 %v2132, %v2184
      %v2186 = vpop.f32.mrf.mxu0
      %v2187 = vadd.f32 %v2134, %v2186
      %2188 = vmatprep.mubr.bf16.mxu0 %v768
      %2189 = vmatmul.mubr.bf16.gmra.mxu0 %v767
      %v2190 = vpop.f32.mrf.mxu0
      %v2191 = vadd.f32 %v2138, %v2190
      %v2192 = vpop.f32.mrf.mxu0
      %v2193 = vadd.f32 %v2140, %v2192
      %v2194 = vpop.f32.mrf.mxu0
      %v2195 = vadd.f32 %v2142, %v2194
      %v2196 = vpop.f32.mrf.mxu0
      %v2197 = vadd.f32 %v2144, %v2196
      %2198 = vdwg.mxu0
      %2199 = vmatprep.subr.bf16.mxu0 %v1660
      %2200 = vmatpush1.bf16.msra.mxu0 %v1659
      %2201 = vmatprep.subr.bf16.mxu0 %v1658
      %2202 = vmatpush1.bf16.msra.mxu0 %v1657
      %2203 = vmatprep.subr.bf16.mxu0 %v1656
      %2204 = vmatpush1.bf16.msra.mxu0 %v1655
      %2205 = vmatprep.subr.bf16.mxu0 %v1654
      %2206 = vmatpush1.bf16.msra.mxu0 %v1653
      %2207 = vmatprep.subr.bf16.mxu0 %v1652
      %2208 = vmatpush1.bf16.msra.mxu0 %v1651
      %2209 = vmatprep.subr.bf16.mxu0 %v1650
      %2210 = vmatpush1.bf16.msra.mxu0 %v1649
      %2211 = vmatprep.subr.bf16.mxu0 %v1648
      %2212 = vmatpush1.bf16.msra.mxu0 %v1647
      %2213 = vmatprep.subr.bf16.mxu0 %v1646
      %2214 = vmatpush1.bf16.msra.mxu0 %v1645
      %2215 = vmatprep.subr.bf16.mxu0 %v1676
      %2216 = vmatpush2.bf16.msra.mxu0 %v1675
      %2217 = vmatprep.subr.bf16.mxu0 %v1674
      %2218 = vmatpush2.bf16.msra.mxu0 %v1673
      %2219 = vmatprep.subr.bf16.mxu0 %v1672
      %2220 = vmatpush2.bf16.msra.mxu0 %v1671
      %2221 = vmatprep.subr.bf16.mxu0 %v1670
      %2222 = vmatpush2.bf16.msra.mxu0 %v1669
      %2223 = vmatprep.subr.bf16.mxu0 %v1668
      %2224 = vmatpush2.bf16.msra.mxu0 %v1667
      %2225 = vmatprep.subr.bf16.mxu0 %v1666
      %2226 = vmatpush2.bf16.msra.mxu0 %v1665
      %2227 = vmatprep.subr.bf16.mxu0 %v1664
      %2228 = vmatpush2.bf16.msra.mxu0 %v1663
      %2229 = vmatprep.subr.bf16.mxu0 %v1662
      %2230 = vmatpush2.bf16.msra.mxu0 %v1661
      %2231 = vmatprep.mubr.bf16.mxu0 %v754
      %2232 = vmatmul.mubr.bf16.gmra.mxu0 %v753
      %v2233 = vpop.f32.mrf.mxu0
      %v2234 = vadd.f32 %v2181, %v2233
      %v2235 = vpop.f32.mrf.mxu0
      %v2236 = vadd.f32 %v2183, %v2235
      %v2237 = vpop.f32.mrf.mxu0
      %v2238 = vadd.f32 %v2185, %v2237
      %v2239 = vpop.f32.mrf.mxu0
      %v2240 = vadd.f32 %v2187, %v2239
      %2241 = vmatprep.mubr.bf16.mxu0 %v770
      %2242 = vmatmul.mubr.bf16.gmra.mxu0 %v769
      %v2243 = vpop.f32.mrf.mxu0
      %v2244 = vadd.f32 %v2191, %v2243
      %v2245 = vpop.f32.mrf.mxu0
      %v2246 = vadd.f32 %v2193, %v2245
      %v2247 = vpop.f32.mrf.mxu0
      %v2248 = vadd.f32 %v2195, %v2247
      %v2249 = vpop.f32.mrf.mxu0
      %v2250 = vadd.f32 %v2197, %v2249
      %2251 = vdwg.mxu0
      %2252 = vmatprep.subr.bf16.mxu0 %v1692
      %2253 = vmatpush1.bf16.msra.mxu0 %v1691
      %2254 = vmatprep.subr.bf16.mxu0 %v1690
      %2255 = vmatpush1.bf16.msra.mxu0 %v1689
      %2256 = vmatprep.subr.bf16.mxu0 %v1688
      %2257 = vmatpush1.bf16.msra.mxu0 %v1687
      %2258 = vmatprep.subr.bf16.mxu0 %v1686
      %2259 = vmatpush1.bf16.msra.mxu0 %v1685
      %2260 = vmatprep.subr.bf16.mxu0 %v1684
      %2261 = vmatpush1.bf16.msra.mxu0 %v1683
      %2262 = vmatprep.subr.bf16.mxu0 %v1682
      %2263 = vmatpush1.bf16.msra.mxu0 %v1681
      %2264 = vmatprep.subr.bf16.mxu0 %v1680
      %2265 = vmatpush1.bf16.msra.mxu0 %v1679
      %2266 = vmatprep.subr.bf16.mxu0 %v1678
      %2267 = vmatpush1.bf16.msra.mxu0 %v1677
      %2268 = vmatprep.subr.bf16.mxu0 %v1708
      %2269 = vmatpush2.bf16.msra.mxu0 %v1707
      %2270 = vmatprep.subr.bf16.mxu0 %v1706
      %2271 = vmatpush2.bf16.msra.mxu0 %v1705
      %2272 = vmatprep.subr.bf16.mxu0 %v1704
      %2273 = vmatpush2.bf16.msra.mxu0 %v1703
      %2274 = vmatprep.subr.bf16.mxu0 %v1702
      %2275 = vmatpush2.bf16.msra.mxu0 %v1701
      %2276 = vmatprep.subr.bf16.mxu0 %v1700
      %2277 = vmatpush2.bf16.msra.mxu0 %v1699
      %2278 = vmatprep.subr.bf16.mxu0 %v1698
      %2279 = vmatpush2.bf16.msra.mxu0 %v1697
      %2280 = vmatprep.subr.bf16.mxu0 %v1696
      %2281 = vmatpush2.bf16.msra.mxu0 %v1695
      %2282 = vmatprep.subr.bf16.mxu0 %v1694
      %2283 = vmatpush2.bf16.msra.mxu0 %v1693
      %2284 = vmatprep.mubr.bf16.mxu0 %v756
      %2285 = vmatmul.mubr.bf16.gmra.mxu0 %v755
      %v2286 = vpop.f32.mrf.mxu0
      %v2287 = vadd.f32 %v2234, %v2286
      %v2288 = vpop.f32.mrf.mxu0
      %v2289 = vadd.f32 %v2236, %v2288
      %v2290 = vpop.f32.mrf.mxu0
      %v2291 = vadd.f32 %v2238, %v2290
      %v2292 = vpop.f32.mrf.mxu0
      %v2293 = vadd.f32 %v2240, %v2292
      %2294 = vmatprep.mubr.bf16.mxu0 %v772
      %2295 = vmatmul.mubr.bf16.gmra.mxu0 %v771
      %v2296 = vpop.f32.mrf.mxu0
      %v2297 = vadd.f32 %v2244, %v2296
      %v2298 = vpop.f32.mrf.mxu0
      %v2299 = vadd.f32 %v2246, %v2298
      %v2300 = vpop.f32.mrf.mxu0
      %v2301 = vadd.f32 %v2248, %v2300
      %v2302 = vpop.f32.mrf.mxu0
      %v2303 = vadd.f32 %v2250, %v2302
      %2304 = vdwg.mxu0
      %2305 = vmatprep.subr.bf16.mxu0 %v1724
      %2306 = vmatpush1.bf16.msra.mxu0 %v1723
      %2307 = vmatprep.subr.bf16.mxu0 %v1722
      %2308 = vmatpush1.bf16.msra.mxu0 %v1721
      %2309 = vmatprep.subr.bf16.mxu0 %v1720
      %2310 = vmatpush1.bf16.msra.mxu0 %v1719
      %2311 = vmatprep.subr.bf16.mxu0 %v1718
      %2312 = vmatpush1.bf16.msra.mxu0 %v1717
      %2313 = vmatprep.subr.bf16.mxu0 %v1716
      %2314 = vmatpush1.bf16.msra.mxu0 %v1715
      %2315 = vmatprep.subr.bf16.mxu0 %v1714
      %2316 = vmatpush1.bf16.msra.mxu0 %v1713
      %2317 = vmatprep.subr.bf16.mxu0 %v1712
      %2318 = vmatpush1.bf16.msra.mxu0 %v1711
      %2319 = vmatprep.subr.bf16.mxu0 %v1710
      %2320 = vmatpush1.bf16.msra.mxu0 %v1709
      %2321 = vmatprep.subr.bf16.mxu0 %v1740
      %2322 = vmatpush2.bf16.msra.mxu0 %v1739
      %2323 = vmatprep.subr.bf16.mxu0 %v1738
      %2324 = vmatpush2.bf16.msra.mxu0 %v1737
      %2325 = vmatprep.subr.bf16.mxu0 %v1736
      %2326 = vmatpush2.bf16.msra.mxu0 %v1735
      %2327 = vmatprep.subr.bf16.mxu0 %v1734
      %2328 = vmatpush2.bf16.msra.mxu0 %v1733
      %2329 = vmatprep.subr.bf16.mxu0 %v1732
      %2330 = vmatpush2.bf16.msra.mxu0 %v1731
      %2331 = vmatprep.subr.bf16.mxu0 %v1730
      %2332 = vmatpush2.bf16.msra.mxu0 %v1729
      %2333 = vmatprep.subr.bf16.mxu0 %v1728
      %2334 = vmatpush2.bf16.msra.mxu0 %v1727
      %2335 = vmatprep.subr.bf16.mxu0 %v1726
      %2336 = vmatpush2.bf16.msra.mxu0 %v1725
      %2337 = vmatprep.mubr.bf16.mxu0 %v758
      %2338 = vmatmul.mubr.bf16.gmra.mxu0 %v757
      %v2339 = vpop.f32.mrf.mxu0
      %v2340 = vadd.f32 %v2287, %v2339
      %v2341 = vpop.f32.mrf.mxu0
      %v2342 = vadd.f32 %v2289, %v2341
      %v2343 = vpop.f32.mrf.mxu0
      %v2344 = vadd.f32 %v2291, %v2343
      %v2345 = vpop.f32.mrf.mxu0
      %v2346 = vadd.f32 %v2293, %v2345
      %2347 = vmatprep.mubr.bf16.mxu0 %v774
      %2348 = vmatmul.mubr.bf16.gmra.mxu0 %v773
      %v2349 = vpop.f32.mrf.mxu0
      %v2350 = vadd.f32 %v2297, %v2349
      %v2351 = vpop.f32.mrf.mxu0
      %v2352 = vadd.f32 %v2299, %v2351
      %v2353 = vpop.f32.mrf.mxu0
      %v2354 = vadd.f32 %v2301, %v2353
      %v2355 = vpop.f32.mrf.mxu0
      %v2356 = vadd.f32 %v2303, %v2355
      %2357 = vdwg.mxu0
      %2358 = vmatprep.subr.bf16.mxu0 %v1756
      %2359 = vmatpush1.bf16.msra.mxu0 %v1755
      %2360 = vmatprep.subr.bf16.mxu0 %v1754
      %2361 = vmatpush1.bf16.msra.mxu0 %v1753
      %2362 = vmatprep.subr.bf16.mxu0 %v1752
      %2363 = vmatpush1.bf16.msra.mxu0 %v1751
      %2364 = vmatprep.subr.bf16.mxu0 %v1750
      %2365 = vmatpush1.bf16.msra.mxu0 %v1749
      %2366 = vmatprep.subr.bf16.mxu0 %v1748
      %2367 = vmatpush1.bf16.msra.mxu0 %v1747
      %2368 = vmatprep.subr.bf16.mxu0 %v1746
      %2369 = vmatpush1.bf16.msra.mxu0 %v1745
      %2370 = vmatprep.subr.bf16.mxu0 %v1744
      %2371 = vmatpush1.bf16.msra.mxu0 %v1743
      %2372 = vmatprep.subr.bf16.mxu0 %v1742
      %2373 = vmatpush1.bf16.msra.mxu0 %v1741
      %2374 = vmatprep.subr.bf16.mxu0 %v1772
      %2375 = vmatpush2.bf16.msra.mxu0 %v1771
      %2376 = vmatprep.subr.bf16.mxu0 %v1770
      %2377 = vmatpush2.bf16.msra.mxu0 %v1769
      %2378 = vmatprep.subr.bf16.mxu0 %v1768
      %2379 = vmatpush2.bf16.msra.mxu0 %v1767
      %2380 = vmatprep.subr.bf16.mxu0 %v1766
      %2381 = vmatpush2.bf16.msra.mxu0 %v1765
      %2382 = vmatprep.subr.bf16.mxu0 %v1764
      %2383 = vmatpush2.bf16.msra.mxu0 %v1763
      %2384 = vmatprep.subr.bf16.mxu0 %v1762
      %2385 = vmatpush2.bf16.msra.mxu0 %v1761
      %2386 = vmatprep.subr.bf16.mxu0 %v1760
      %2387 = vmatpush2.bf16.msra.mxu0 %v1759
      %2388 = vmatprep.subr.bf16.mxu0 %v1758
      %2389 = vmatpush2.bf16.msra.mxu0 %v1757
      %2390 = vmatprep.mubr.bf16.mxu0 %v760
      %2391 = vmatmul.mubr.bf16.gmra.mxu0 %v759
      %v2392 = vpop.f32.mrf.mxu0
      %v2393 = vadd.f32 %v2340, %v2392
      %v2394 = vpop.f32.mrf.mxu0
      %v2395 = vadd.f32 %v2342, %v2394
      %v2396 = vpop.f32.mrf.mxu0
      %v2397 = vadd.f32 %v2344, %v2396
      %v2398 = vpop.f32.mrf.mxu0
      %v2399 = vadd.f32 %v2346, %v2398
      %2400 = vmatprep.mubr.bf16.mxu0 %v776
      %2401 = vmatmul.mubr.bf16.gmra.mxu0 %v775
      %v2402 = vpop.f32.mrf.mxu0
      %v2403 = vadd.f32 %v2350, %v2402
      %v2404 = vpop.f32.mrf.mxu0
      %v2405 = vadd.f32 %v2352, %v2404
      %v2406 = vpop.f32.mrf.mxu0
      %v2407 = vadd.f32 %v2354, %v2406
      %v2408 = vpop.f32.mrf.mxu0
      %v2409 = vadd.f32 %v2356, %v2408
      %2410 = vdwg.mxu0
      %2411 = vmatprep.subr.bf16.mxu0 %v1788
      %2412 = vmatpush1.bf16.msra.mxu0 %v1787
      %2413 = vmatprep.subr.bf16.mxu0 %v1786
      %2414 = vmatpush1.bf16.msra.mxu0 %v1785
      %2415 = vmatprep.subr.bf16.mxu0 %v1784
      %2416 = vmatpush1.bf16.msra.mxu0 %v1783
      %2417 = vmatprep.subr.bf16.mxu0 %v1782
      %2418 = vmatpush1.bf16.msra.mxu0 %v1781
      %2419 = vmatprep.subr.bf16.mxu0 %v1780
      %2420 = vmatpush1.bf16.msra.mxu0 %v1779
      %2421 = vmatprep.subr.bf16.mxu0 %v1778
      %2422 = vmatpush1.bf16.msra.mxu0 %v1777
      %2423 = vmatprep.subr.bf16.mxu0 %v1776
      %2424 = vmatpush1.bf16.msra.mxu0 %v1775
      %2425 = vmatprep.subr.bf16.mxu0 %v1774
      %2426 = vmatpush1.bf16.msra.mxu0 %v1773
      %2427 = vmatprep.subr.bf16.mxu0 %v1804
      %2428 = vmatpush2.bf16.msra.mxu0 %v1803
      %2429 = vmatprep.subr.bf16.mxu0 %v1802
      %2430 = vmatpush2.bf16.msra.mxu0 %v1801
      %2431 = vmatprep.subr.bf16.mxu0 %v1800
      %2432 = vmatpush2.bf16.msra.mxu0 %v1799
      %2433 = vmatprep.subr.bf16.mxu0 %v1798
      %2434 = vmatpush2.bf16.msra.mxu0 %v1797
      %2435 = vmatprep.subr.bf16.mxu0 %v1796
      %2436 = vmatpush2.bf16.msra.mxu0 %v1795
      %2437 = vmatprep.subr.bf16.mxu0 %v1794
      %2438 = vmatpush2.bf16.msra.mxu0 %v1793
      %2439 = vmatprep.subr.bf16.mxu0 %v1792
      %2440 = vmatpush2.bf16.msra.mxu0 %v1791
      %2441 = vmatprep.subr.bf16.mxu0 %v1790
      %2442 = vmatpush2.bf16.msra.mxu0 %v1789
      %2443 = vmatprep.mubr.bf16.mxu0 %v762
      %2444 = vmatmul.mubr.bf16.gmra.mxu0 %v761
      %v2445 = vpop.f32.mrf.mxu0
      %v2446 = vadd.f32 %v2393, %v2445
      %v2447 = vpop.f32.mrf.mxu0
      %v2448 = vadd.f32 %v2395, %v2447
      %v2449 = vpop.f32.mrf.mxu0
      %v2450 = vadd.f32 %v2397, %v2449
      %v2451 = vpop.f32.mrf.mxu0
      %v2452 = vadd.f32 %v2399, %v2451
      %2453 = vmatprep.mubr.bf16.mxu0 %v778
      %2454 = vmatmul.mubr.bf16.gmra.mxu0 %v777
      %v2455 = vpop.f32.mrf.mxu0
      %v2456 = vadd.f32 %v2403, %v2455
      %v2457 = vpop.f32.mrf.mxu0
      %v2458 = vadd.f32 %v2405, %v2457
      %v2459 = vpop.f32.mrf.mxu0
      %v2460 = vadd.f32 %v2407, %v2459
      %v2461 = vpop.f32.mrf.mxu0
      %v2462 = vadd.f32 %v2409, %v2461
      %2463 = vdwg.mxu0
      %2464 = vmatprep.subr.bf16.mxu0 %v1820
      %2465 = vmatpush1.bf16.msra.mxu0 %v1819
      %2466 = vmatprep.subr.bf16.mxu0 %v1818
      %2467 = vmatpush1.bf16.msra.mxu0 %v1817
      %2468 = vmatprep.subr.bf16.mxu0 %v1816
      %2469 = vmatpush1.bf16.msra.mxu0 %v1815
      %2470 = vmatprep.subr.bf16.mxu0 %v1814
      %2471 = vmatpush1.bf16.msra.mxu0 %v1813
      %2472 = vmatprep.subr.bf16.mxu0 %v1812
      %2473 = vmatpush1.bf16.msra.mxu0 %v1811
      %2474 = vmatprep.subr.bf16.mxu0 %v1810
      %2475 = vmatpush1.bf16.msra.mxu0 %v1809
      %2476 = vmatprep.subr.bf16.mxu0 %v1808
      %2477 = vmatpush1.bf16.msra.mxu0 %v1807
      %2478 = vmatprep.subr.bf16.mxu0 %v1806
      %2479 = vmatpush1.bf16.msra.mxu0 %v1805
      %2480 = vmatprep.subr.bf16.mxu0 %v1836
      %2481 = vmatpush2.bf16.msra.mxu0 %v1835
      %2482 = vmatprep.subr.bf16.mxu0 %v1834
      %2483 = vmatpush2.bf16.msra.mxu0 %v1833
      %2484 = vmatprep.subr.bf16.mxu0 %v1832
      %2485 = vmatpush2.bf16.msra.mxu0 %v1831
      %2486 = vmatprep.subr.bf16.mxu0 %v1830
      %2487 = vmatpush2.bf16.msra.mxu0 %v1829
      %2488 = vmatprep.subr.bf16.mxu0 %v1828
      %2489 = vmatpush2.bf16.msra.mxu0 %v1827
      %2490 = vmatprep.subr.bf16.mxu0 %v1826
      %2491 = vmatpush2.bf16.msra.mxu0 %v1825
      %2492 = vmatprep.subr.bf16.mxu0 %v1824
      %2493 = vmatpush2.bf16.msra.mxu0 %v1823
      %2494 = vmatprep.subr.bf16.mxu0 %v1822
      %2495 = vmatpush2.bf16.msra.mxu0 %v1821
      %2496 = vmatprep.mubr.bf16.mxu0 %v764
      %2497 = vmatmul.mubr.bf16.gmra.mxu0 %v763
      %v2498 = vpop.f32.mrf.mxu0
      %v2499 = vadd.f32 %v2446, %v2498
      %v2500 = vpop.f32.mrf.mxu0
      %v2501 = vadd.f32 %v2448, %v2500
      %v2502 = vpop.f32.mrf.mxu0
      %v2503 = vadd.f32 %v2450, %v2502
      %v2504 = vpop.f32.mrf.mxu0
      %v2505 = vadd.f32 %v2452, %v2504
      %2506 = vmatprep.mubr.bf16.mxu0 %v780
      %2507 = vmatmul.mubr.bf16.gmra.mxu0 %v779
      %v2508 = vpop.f32.mrf.mxu0
      %v2509 = vadd.f32 %v2456, %v2508
      %v2510 = vpop.f32.mrf.mxu0
      %v2511 = vadd.f32 %v2458, %v2510
      %v2512 = vpop.f32.mrf.mxu0
      %v2513 = vadd.f32 %v2460, %v2512
      %v2514 = vpop.f32.mrf.mxu0
      %v2515 = vadd.f32 %v2462, %v2514
      %2516 = vdwg.mxu0
      %v2517 = vadd.f32 %v357, %v2499
      %v2518 = vadd.f32 %v358, %v2501
      %v2519 = vadd.f32 %v359, %v2503
      %v2520 = vadd.f32 %v360, %v2505
      %v2521 = vadd.f32 %v361, %v2509
      %v2522 = vadd.f32 %v362, %v2511
      %v2523 = vadd.f32 %v363, %v2513
      %v2524 = vadd.f32 %v364, %v2515
      %2525 = vst [vmem:[#allocation2] sm:$0xff] %v2517
      %2526 = vst [vmem:[#allocation2 + $0x8] sm:$0xff] %v2518
      %2527 = vst [vmem:[#allocation2 + $0x10] sm:$0xff] %v2519
      %2528 = vst [vmem:[#allocation2 + $0x18] sm:$0xff] %v2520
      %2529 = vst [vmem:[#allocation2 + $0x20] sm:$0xff] %v2521
      %2530 = vst [vmem:[#allocation2 + $0x28] sm:$0xff] %v2522
      %2531 = vst [vmem:[#allocation2 + $0x30] sm:$0xff] %v2523
      %2532 = vst [vmem:[#allocation2 + $0x38] sm:$0xff] %v2524
      // Predicated region
      $region33: #{_lambda_.11} parent=27 // pred_check
        %p2533 = pneg %p345
      $region34: #{_lambda_.11} parent=27 // pred_check_branch
        %2535 = sbr.rel (%p2533) target = $region36
      $region35: #{_lambda_.11} parent=27 // pred_region
        %v2536 = vld [vmem:[#allocation2] sm:$0xff]
        %v2537 = vld [vmem:[#allocation2 + $0x8] sm:$0xff]
        %v2538 = vld [vmem:[#allocation2 + $0x10] sm:$0xff]
        %v2539 = vld [vmem:[#allocation2 + $0x18] sm:$0xff]
        %v2540 = vld [vmem:[#allocation2 + $0x20] sm:$0xff]
        %v2541 = vld [vmem:[#allocation2 + $0x28] sm:$0xff]
        %v2542 = vld [vmem:[#allocation2 + $0x30] sm:$0xff]
        %v2543 = vld [vmem:[#allocation2 + $0x38] sm:$0xff]
        %v2544 = vpack.c.bf16 %v2538, %v2536
        %v2545 = vpack.c.bf16 %v2539, %v2537
        %v2546 = vpack.c.bf16 %v2542, %v2540
        %v2547 = vpack.c.bf16 %v2543, %v2541
        %v2552 = vunpack.c.l.b16 %v2544
        %v2553 = vunpack.c.l.b16 %v2545
        %v2554 = vunpack.c.h.b16 %v2544
        %v2555 = vunpack.c.h.b16 %v2545
        %v2556 = vunpack.c.l.b16 %v2546
        %v2557 = vunpack.c.l.b16 %v2547
        %v2558 = vunpack.c.h.b16 %v2546
        %v2559 = vunpack.c.h.b16 %v2547
        %v2560 = vpack.c.b16 %v2553, %v2552
        %v2561 = vpack.c.b16 %v2555, %v2554
        %v2562 = vpack.c.b16 %v2557, %v2556
        %v2563 = vpack.c.b16 %v2559, %v2558
        %2568 = vst [vmem:[%s328] sm:$0xff] %v2560
        %2569 = vst [vmem:[%s328 + $0x8] sm:$0xff] %v2561
        %2570 = vst [vmem:[%s328 + $0x10] sm:$0xff] %v2562
        %2571 = vst [vmem:[%s328 + $0x18] sm:$0xff] %v2563
        %v2572 = vadd.f32 %v2536, %v2538
        %v2573 = vadd.f32 %v2572, %v2540
        %v2574 = vadd.f32 %v2573, %v2542
        %v2575 = vrot.slane %v2574, 4
        %v2576 = vadd.f32 %v2574, %v2575
        %v2577 = vrot.slane %v2576, 2
        %v2578 = vadd.f32 %v2576, %v2577
        %v2579 = vrot.slane %v2578, 1
        %v2580 = vadd.f32 %v2578, %v2579
        %v2581 = vadd.f32 %v2537, %v2539
        %v2582 = vadd.f32 %v2581, %v2541
        %v2583 = vadd.f32 %v2582, %v2543
        %v2584 = vrot.slane %v2583, 4
        %v2585 = vadd.f32 %v2583, %v2584
        %v2586 = vrot.slane %v2585, 2
        %v2587 = vadd.f32 %v2585, %v2586
        %v2588 = vrot.slane %v2587, 1
        %v2589 = vadd.f32 %v2587, %v2588
        %v2590 = vmul.f32 %v2536, %v2536
        %v2591 = vmul.f32 %v2537, %v2537
        %v2592 = vmul.f32 %v2538, %v2538
        %v2593 = vmul.f32 %v2539, %v2539
        %v2594 = vmul.f32 %v2540, %v2540
        %v2595 = vmul.f32 %v2541, %v2541
        %v2596 = vmul.f32 %v2542, %v2542
        %v2597 = vmul.f32 %v2543, %v2543
        %v2598 = vadd.f32 %v2590, %v2592
        %v2599 = vadd.f32 %v2598, %v2594
        %v2600 = vadd.f32 %v2599, %v2596
        %v2601 = vrot.slane %v2600, 4
        %v2602 = vadd.f32 %v2600, %v2601
        %v2603 = vrot.slane %v2602, 2
        %v2604 = vadd.f32 %v2602, %v2603
        %v2605 = vrot.slane %v2604, 1
        %v2606 = vadd.f32 %v2604, %v2605
        %v2607 = vadd.f32 %v2591, %v2593
        %v2608 = vadd.f32 %v2607, %v2595
        %v2609 = vadd.f32 %v2608, %v2597
        %v2610 = vrot.slane %v2609, 4
        %v2611 = vadd.f32 %v2609, %v2610
        %v2612 = vrot.slane %v2611, 2
        %v2613 = vadd.f32 %v2611, %v2612
        %v2614 = vrot.slane %v2613, 1
        %v2615 = vadd.f32 %v2613, %v2614
        %v2616 = vlaneseq
        %v2617 = vshrl.u32 %v2616, 7
        %vm2618 = vcmp.eq.s32.totalorder %v2617, 0
        %vm2619 = vcmp.eq.s32.totalorder %v2617, 1
        %v2620 = vsel %vm2619, %v2606, 0.0
        %v2621 = vsel %vm2619, %v2615, 0.0
        %v2622 = vsel %vm2618, %v2580, %v2620
        %v2623 = vsel %vm2618, %v2589, %v2621
        %2624 = vst [vmem:[%s343] sm:$0xff] %v2622
        %2625 = vst [vmem:[%s343 + $0x8] sm:$0xff] %v2623
      $region36: #{_lambda_.11} parent=27 // pred_fallthru
        _
      %s2626 = smul.u32 4, %s22
      %s2627 = smul.u32 2, %s23
      %p2628 = scmp.lt.s32.totalorder %s21, 3
      %s2629 = scalar_select %p2628, %s21, 3
      %p2630 = scmp.lt.s32.totalorder %s2626, 3
      %s2631 = scalar_select %p2630, %s2626, 3
      %p2632 = scmp.lt.s32.totalorder %s2627, 1
      %s2633 = scalar_select %p2632, %s2627, 1
      %s2634 = smul.addr %s2631, 2
      %s2635 = sadd.s32 %s2633, %s2634
      %s2636 = smul.addr %s2629, 8
      %s2637 = sadd.s32 %s2635, %s2636
      %s2638 = smul.addr %s2637, 4
      %s2639 = scalar_lea.vmem %s2, %s2638
      %s2640 = smul.u32 2, %s23
      %p2641 = scmp.lt.s32.totalorder %s21, 3
      %s2642 = scalar_select %p2641, %s21, 3
      %p2643 = scmp.lt.s32.totalorder %s22, 0
      %s2644 = scalar_select %p2643, %s22, 0
      %p2645 = scmp.lt.s32.totalorder %s2640, 1
      %s2646 = scalar_select %p2645, %s2640, 1
      %s2647 = smul.addr %s2644, 2
      %s2648 = sadd.s32 %s2646, %s2647
      %s2649 = smul.addr %s2642, 2
      %s2650 = sadd.s32 %s2648, %s2649
      %s2651 = smul.addr %s2650, 8
      %s2652 = scalar_lea.vmem %s3, %s2651
      // Predicated region
      $region37: #{_lambda_.11} parent=27 // pred_check
        %p2653 = pneg %p123
      $region38: #{_lambda_.11} parent=27 // pred_check_branch
        %2655 = sbr.rel (%p2653) target = $region40
      $region39: #{_lambda_.11} parent=27 // pred_region
        %s2656 = smul.u32 4, %s22
        %s2657 = smul.u32 2, %s23
      $region40: #{_lambda_.11} parent=27 // pred_fallthru
        _
      // Predicated region
      $region41: #{_lambda_.11} parent=27 // pred_check
        %p2658 = pneg %p153
      $region42: #{_lambda_.11} parent=27 // pred_check_branch
        %2660 = sbr.rel (%p2658) target = $region44
      $region43: #{_lambda_.11} parent=27 // pred_region
        %s2661 = smul.u32 2, %s23
      $region44: #{_lambda_.11} parent=27 // pred_fallthru
        _
    $region28: #{_lambda_.11} parent=5 // pred_fallthru
      _
    %p2662 = scmp.le.s32.totalorder 2, %s10
    // Predicated region
    $region45: #{_lambda_.11} parent=5 // pred_check
      %p2663 = pneg %p2662
    $region46: #{_lambda_.11} parent=5 // pred_check_branch
      %2665 = sbr.rel (%p2663) target = $region48
    $region47: #{_lambda_.11} parent=5 // pred_region
      %s2666 = ssub.s32 %s10, 2
      // Predicated region
      $region49: #{_lambda_.11} parent=47 // pred_check
        %p2667 = pneg %p129
      $region50: #{_lambda_.11} parent=47 // pred_check_branch
        %2669 = sbr.rel (%p2667) target = $region52
      $region51: #{_lambda_.11} parent=47 // pred_region
        %s2670 = smul.u32 4, %s26
        %s2671 = smul.u32 2, %s27
        %p2672 = scmp.lt.s32.totalorder %s25, 3
        %s2673 = scalar_select %p2672, %s25, 3
        %p2674 = scmp.lt.s32.totalorder %s2670, 3
        %s2675 = scalar_select %p2674, %s2670, 3
        %p2676 = scmp.lt.s32.totalorder %s2671, 1
        %s2677 = scalar_select %p2676, %s2671, 1
        %s2678 = smul.addr %s2675, 2
        %s2679 = sadd.s32 %s2677, %s2678
        %s2680 = smul.addr %s2673, 8
        %s2681 = sadd.s32 %s2679, %s2680
        %s2682 = smul.addr %s2681, 4
        %s2683 = scalar_lea.vmem %s2, %s2682
      $region52: #{_lambda_.11} parent=47 // pred_fallthru
        _
      // Predicated region
      $region53: #{_lambda_.11} parent=47 // pred_check
        %p2684 = pneg %p159
      $region54: #{_lambda_.11} parent=47 // pred_check_branch
        %2686 = sbr.rel (%p2684) target = $region56
      $region55: #{_lambda_.11} parent=47 // pred_region
        %s2687 = smul.u32 2, %s27
        %p2688 = scmp.lt.s32.totalorder %s25, 3
        %s2689 = scalar_select %p2688, %s25, 3
        %p2690 = scmp.lt.s32.totalorder %s26, 0
        %s2691 = scalar_select %p2690, %s26, 0
        %p2692 = scmp.lt.s32.totalorder %s2687, 1
        %s2693 = scalar_select %p2692, %s2687, 1
        %s2694 = smul.addr %s2691, 2
        %s2695 = sadd.s32 %s2693, %s2694
        %s2696 = smul.addr %s2689, 2
        %s2697 = sadd.s32 %s2695, %s2696
        %s2698 = smul.addr %s2697, 8
        %s2699 = scalar_lea.vmem %s3, %s2698
      $region56: #{_lambda_.11} parent=47 // pred_fallthru
        _
    $region48: #{_lambda_.11} parent=5 // pred_fallthru
      _
  $region6: #{_lambda_.11} parent=0 // loop_footer
    %s14 = sadd.s32 1, %s10
  $region7: #{_lambda_.11} parent=0 // loop_footer_branch
    %9 = sbr.rel target = $region3
  $region8: #{_lambda_.11} parent=0 // loop_exit
    _

// kernel: _lambda_.14
$region0: #{_lambda_.14}
  #allocation0 [shape = 'u32[]', space=smem, size = 0x4, offset = 0x4, fixed_abs, tag = 'smem constant byte address 0x4 - core index']
  #allocation1 [shape = 'u32[144,128]{1,0:T(1,128)}', space=vmem, size = 0x12000, scoped, tag = 'internal scratch']
  %s0 = inlined_call_operand.vmem [shape: bf16[512,128], index: 0, kind: input, shape index: {}]
  %s1 = inlined_call_operand.vmem [shape: f32[1,128], index: 1, kind: input, shape index: {}]
  %s2 = inlined_call_operand.vmem [shape: f32[1,128], index: 2, kind: input, shape index: {}]
  %s3 = inlined_call_operand.vmem [shape: bf16[512,128], index: 3, kind: output, shape index: {}]
  %s4 = sld [smem:[#allocation0]]
  $region22: #{_lambda_.14} parent=0
    _
  %s6 = ssub.s32 1, %s4
  %s7 = scalar_select 0, %s6, %s4
  // Predicated region
  $region2: #{_lambda_.14} parent=0 // pred_check
    _
  $region3: #{_lambda_.14} parent=0 // pred_check_branch
    %9 = sbr.rel (0) target = $region5
  $region4: #{_lambda_.14} parent=0 // pred_region
    _
  $region5: #{_lambda_.14} parent=0 // pred_fallthru
    _
  // Predicated region
  $region6: #{_lambda_.14} parent=0 // pred_check
    _
  $region7: #{_lambda_.14} parent=0 // pred_check_branch
    %11 = sbr.rel (0) target = $region9
  $region8: #{_lambda_.14} parent=0 // pred_region
    _
  $region9: #{_lambda_.14} parent=0 // pred_fallthru
    _
  // Predicated region
  $region10: #{_lambda_.14} parent=0 // pred_check
    _
  $region11: #{_lambda_.14} parent=0 // pred_check_branch
    %13 = sbr.rel (0) target = $region13
  $region12: #{_lambda_.14} parent=0 // pred_region
    _
  $region13: #{_lambda_.14} parent=0 // pred_fallthru
    _
  %v14 = vld [vmem:[%s0] sm:$0xf]
  %v15 = vld [vmem:[%s0 + $0x4] sm:$0xf]
  %v16 = vld [vmem:[%s0 + $0x8] sm:$0xf]
  %v17 = vld [vmem:[%s0 + $0xc] sm:$0xf]
  %v18 = vld [vmem:[%s0 + $0x10] sm:$0xf]
  %v19 = vld [vmem:[%s0 + $0x14] sm:$0xf]
  %v20 = vld [vmem:[%s0 + $0x18] sm:$0xf]
  %v21 = vld [vmem:[%s0 + $0x1c] sm:$0xf]
  %v22 = vld [vmem:[%s0 + $0x20] sm:$0xf]
  %v23 = vld [vmem:[%s0 + $0x24] sm:$0xf]
  %v24 = vld [vmem:[%s0 + $0x28] sm:$0xf]
  %v25 = vld [vmem:[%s0 + $0x2c] sm:$0xf]
  %v26 = vld [vmem:[%s0 + $0x30] sm:$0xf]
  %v27 = vld [vmem:[%s0 + $0x34] sm:$0xf]
  %v28 = vld [vmem:[%s0 + $0x38] sm:$0xf]
  %v29 = vld [vmem:[%s0 + $0x3c] sm:$0xf]
  %v30 = vld [vmem:[%s0 + $0x40] sm:$0xf]
  %v31 = vld [vmem:[%s0 + $0x44] sm:$0xf]
  %v32 = vld [vmem:[%s0 + $0x48] sm:$0xf]
  %v33 = vld [vmem:[%s0 + $0x4c] sm:$0xf]
  %v34 = vld [vmem:[%s0 + $0x50] sm:$0xf]
  %v35 = vld [vmem:[%s0 + $0x54] sm:$0xf]
  %v36 = vld [vmem:[%s0 + $0x58] sm:$0xf]
  %v37 = vld [vmem:[%s0 + $0x5c] sm:$0xf]
  %v38 = vld [vmem:[%s0 + $0x60] sm:$0xf]
  %v39 = vld [vmem:[%s0 + $0x64] sm:$0xf]
  %v40 = vld [vmem:[%s0 + $0x68] sm:$0xf]
  %v41 = vld [vmem:[%s0 + $0x6c] sm:$0xf]
  %v42 = vld [vmem:[%s0 + $0x70] sm:$0xf]
  %v43 = vld [vmem:[%s0 + $0x74] sm:$0xf]
  %v44 = vld [vmem:[%s0 + $0x78] sm:$0xf]
  %v45 = vld [vmem:[%s0 + $0x7c] sm:$0xf]
  %v46 = vld [vmem:[%s0 + $0x80] sm:$0xf]
  %v47 = vld [vmem:[%s0 + $0x84] sm:$0xf]
  %v48 = vld [vmem:[%s0 + $0x88] sm:$0xf]
  %v49 = vld [vmem:[%s0 + $0x8c] sm:$0xf]
  %v50 = vld [vmem:[%s0 + $0x90] sm:$0xf]
  %v51 = vld [vmem:[%s0 + $0x94] sm:$0xf]
  %v52 = vld [vmem:[%s0 + $0x98] sm:$0xf]
  %v53 = vld [vmem:[%s0 + $0x9c] sm:$0xf]
  %v54 = vld [vmem:[%s0 + $0xa0] sm:$0xf]
  %v55 = vld [vmem:[%s0 + $0xa4] sm:$0xf]
  %v56 = vld [vmem:[%s0 + $0xa8] sm:$0xf]
  %v57 = vld [vmem:[%s0 + $0xac] sm:$0xf]
  %v58 = vld [vmem:[%s0 + $0xb0] sm:$0xf]
  %v59 = vld [vmem:[%s0 + $0xb4] sm:$0xf]
  %v60 = vld [vmem:[%s0 + $0xb8] sm:$0xf]
  %v61 = vld [vmem:[%s0 + $0xbc] sm:$0xf]
  %v62 = vld [vmem:[%s0 + $0xc0] sm:$0xf]
  %v63 = vld [vmem:[%s0 + $0xc4] sm:$0xf]
  %v64 = vld [vmem:[%s0 + $0xc8] sm:$0xf]
  %v65 = vld [vmem:[%s0 + $0xcc] sm:$0xf]
  %v66 = vld [vmem:[%s0 + $0xd0] sm:$0xf]
  %v67 = vld [vmem:[%s0 + $0xd4] sm:$0xf]
  %v68 = vld [vmem:[%s0 + $0xd8] sm:$0xf]
  %v69 = vld [vmem:[%s0 + $0xdc] sm:$0xf]
  %v70 = vld [vmem:[%s0 + $0xe0] sm:$0xf]
  %v71 = vld [vmem:[%s0 + $0xe4] sm:$0xf]
  %v72 = vld [vmem:[%s0 + $0xe8] sm:$0xf]
  %v73 = vld [vmem:[%s0 + $0xec] sm:$0xf]
  %v74 = vld [vmem:[%s0 + $0xf0] sm:$0xf]
  %v75 = vld [vmem:[%s0 + $0xf4] sm:$0xf]
  %v76 = vld [vmem:[%s0 + $0xf8] sm:$0xf]
  %v77 = vld [vmem:[%s0 + $0xfc] sm:$0xf]
  %v78 = vunpack.c.l.bf16 %v14
  %v79 = vunpack.c.l.bf16 %v15
  %v80 = vunpack.c.l.bf16 %v16
  %v81 = vunpack.c.l.bf16 %v17
  %v82 = vunpack.c.l.bf16 %v18
  %v83 = vunpack.c.l.bf16 %v19
  %v84 = vunpack.c.l.bf16 %v20
  %v85 = vunpack.c.l.bf16 %v21
  %v86 = vunpack.c.l.bf16 %v22
  %v87 = vunpack.c.l.bf16 %v23
  %v88 = vunpack.c.l.bf16 %v24
  %v89 = vunpack.c.l.bf16 %v25
  %v90 = vunpack.c.l.bf16 %v26
  %v91 = vunpack.c.l.bf16 %v27
  %v92 = vunpack.c.l.bf16 %v28
  %v93 = vunpack.c.l.bf16 %v29
  %v94 = vunpack.c.l.bf16 %v30
  %v95 = vunpack.c.l.bf16 %v31
  %v96 = vunpack.c.l.bf16 %v32
  %v97 = vunpack.c.l.bf16 %v33
  %v98 = vunpack.c.l.bf16 %v34
  %v99 = vunpack.c.l.bf16 %v35
  %v100 = vunpack.c.l.bf16 %v36
  %v101 = vunpack.c.l.bf16 %v37
  %v102 = vunpack.c.l.bf16 %v38
  %v103 = vunpack.c.l.bf16 %v39
  %v104 = vunpack.c.l.bf16 %v40
  %v105 = vunpack.c.l.bf16 %v41
  %v106 = vunpack.c.l.bf16 %v42
  %v107 = vunpack.c.l.bf16 %v43
  %v108 = vunpack.c.l.bf16 %v44
  %v109 = vunpack.c.l.bf16 %v45
  %v110 = vunpack.c.l.bf16 %v46
  %v111 = vunpack.c.l.bf16 %v47
  %v112 = vunpack.c.l.bf16 %v48
  %v113 = vunpack.c.l.bf16 %v49
  %v114 = vunpack.c.l.bf16 %v50
  %v115 = vunpack.c.l.bf16 %v51
  %v116 = vunpack.c.l.bf16 %v52
  %v117 = vunpack.c.l.bf16 %v53
  %v118 = vunpack.c.l.bf16 %v54
  %v119 = vunpack.c.l.bf16 %v55
  %v120 = vunpack.c.l.bf16 %v56
  %v121 = vunpack.c.l.bf16 %v57
  %v122 = vunpack.c.l.bf16 %v58
  %v123 = vunpack.c.l.bf16 %v59
  %v124 = vunpack.c.l.bf16 %v60
  %v125 = vunpack.c.l.bf16 %v61
  %v126 = vunpack.c.l.bf16 %v62
  %v127 = vunpack.c.l.bf16 %v63
  %v128 = vunpack.c.l.bf16 %v64
  %v129 = vunpack.c.l.bf16 %v65
  %v130 = vunpack.c.l.bf16 %v66
  %v131 = vunpack.c.l.bf16 %v67
  %v132 = vunpack.c.l.bf16 %v68
  %v133 = vunpack.c.l.bf16 %v69
  %v134 = vunpack.c.l.bf16 %v70
  %v135 = vunpack.c.l.bf16 %v71
  %v136 = vunpack.c.l.bf16 %v72
  %v137 = vunpack.c.l.bf16 %v73
  %v138 = vunpack.c.l.bf16 %v74
  %v139 = vunpack.c.l.bf16 %v75
  %v140 = vunpack.c.l.bf16 %v76
  %v141 = vunpack.c.l.bf16 %v77
  %v142 = vld [vmem:[%s1] sm:$0x1]
  %v144 = vlaneseq
  %v145 = vshrl.u32 %v144, 7
  %v146 = vsub.s32 0, %v145
  %v147 = vrot.slane %v142, %v146
  %v149 = vmul.f32 %v78, %v147
  %v150 = vmul.f32 %v79, %v147
  %v151 = vmul.f32 %v80, %v147
  %v152 = vmul.f32 %v81, %v147
  %v153 = vmul.f32 %v82, %v147
  %v154 = vmul.f32 %v83, %v147
  %v155 = vmul.f32 %v84, %v147
  %v156 = vmul.f32 %v85, %v147
  %v157 = vmul.f32 %v86, %v147
  %v158 = vmul.f32 %v87, %v147
  %v159 = vmul.f32 %v88, %v147
  %v160 = vmul.f32 %v89, %v147
  %v161 = vmul.f32 %v90, %v147
  %v162 = vmul.f32 %v91, %v147
  %v163 = vmul.f32 %v92, %v147
  %v164 = vmul.f32 %v93, %v147
  %v165 = vmul.f32 %v94, %v147
  %v166 = vmul.f32 %v95, %v147
  %v167 = vmul.f32 %v96, %v147
  %v168 = vmul.f32 %v97, %v147
  %v169 = vmul.f32 %v98, %v147
  %v170 = vmul.f32 %v99, %v147
  %v171 = vmul.f32 %v100, %v147
  %v172 = vmul.f32 %v101, %v147
  %v173 = vmul.f32 %v102, %v147
  %v174 = vmul.f32 %v103, %v147
  %v175 = vmul.f32 %v104, %v147
  %v176 = vmul.f32 %v105, %v147
  %v177 = vmul.f32 %v106, %v147
  %v178 = vmul.f32 %v107, %v147
  %v179 = vmul.f32 %v108, %v147
  %v180 = vmul.f32 %v109, %v147
  %v181 = vmul.f32 %v110, %v147
  %v182 = vmul.f32 %v111, %v147
  %v183 = vmul.f32 %v112, %v147
  %v184 = vmul.f32 %v113, %v147
  %v185 = vmul.f32 %v114, %v147
  %v186 = vmul.f32 %v115, %v147
  %v187 = vmul.f32 %v116, %v147
  %v188 = vmul.f32 %v117, %v147
  %v189 = vmul.f32 %v118, %v147
  %v190 = vmul.f32 %v119, %v147
  %v191 = vmul.f32 %v120, %v147
  %v192 = vmul.f32 %v121, %v147
  %v193 = vmul.f32 %v122, %v147
  %v194 = vmul.f32 %v123, %v147
  %v195 = vmul.f32 %v124, %v147
  %v196 = vmul.f32 %v125, %v147
  %v197 = vmul.f32 %v126, %v147
  %v198 = vmul.f32 %v127, %v147
  %v199 = vmul.f32 %v128, %v147
  %v200 = vmul.f32 %v129, %v147
  %v201 = vmul.f32 %v130, %v147
  %v202 = vmul.f32 %v131, %v147
  %v203 = vmul.f32 %v132, %v147
  %v204 = vmul.f32 %v133, %v147
  %v205 = vmul.f32 %v134, %v147
  %v206 = vmul.f32 %v135, %v147
  %v207 = vmul.f32 %v136, %v147
  %v208 = vmul.f32 %v137, %v147
  %v209 = vmul.f32 %v138, %v147
  %v210 = vmul.f32 %v139, %v147
  %v211 = vmul.f32 %v140, %v147
  %v212 = vmul.f32 %v141, %v147
  %v213 = vld [vmem:[%s2] sm:$0x1]
  %v215 = vlaneseq
  %v216 = vshrl.u32 %v215, 7
  %v217 = vsub.s32 0, %v216
  %v218 = vrot.slane %v213, %v217
  %v220 = vadd.f32 %v149, %v218
  %v221 = vadd.f32 %v150, %v218
  %v222 = vadd.f32 %v151, %v218
  %v223 = vadd.f32 %v152, %v218
  %v224 = vadd.f32 %v153, %v218
  %v225 = vadd.f32 %v154, %v218
  %v226 = vadd.f32 %v155, %v218
  %v227 = vadd.f32 %v156, %v218
  %v228 = vadd.f32 %v157, %v218
  %v229 = vadd.f32 %v158, %v218
  %v230 = vadd.f32 %v159, %v218
  %v231 = vadd.f32 %v160, %v218
  %v232 = vadd.f32 %v161, %v218
  %v233 = vadd.f32 %v162, %v218
  %v234 = vadd.f32 %v163, %v218
  %v235 = vadd.f32 %v164, %v218
  %v236 = vadd.f32 %v165, %v218
  %v237 = vadd.f32 %v166, %v218
  %v238 = vadd.f32 %v167, %v218
  %v239 = vadd.f32 %v168, %v218
  %v240 = vadd.f32 %v169, %v218
  %v241 = vadd.f32 %v170, %v218
  %v242 = vadd.f32 %v171, %v218
  %v243 = vadd.f32 %v172, %v218
  %v244 = vadd.f32 %v173, %v218
  %v245 = vadd.f32 %v174, %v218
  %v246 = vadd.f32 %v175, %v218
  %v247 = vadd.f32 %v176, %v218
  %v248 = vadd.f32 %v177, %v218
  %v249 = vadd.f32 %v178, %v218
  %v250 = vadd.f32 %v179, %v218
  %v251 = vadd.f32 %v180, %v218
  %v252 = vadd.f32 %v181, %v218
  %v253 = vadd.f32 %v182, %v218
  %v254 = vadd.f32 %v183, %v218
  %v255 = vadd.f32 %v184, %v218
  %v256 = vadd.f32 %v185, %v218
  %v257 = vadd.f32 %v186, %v218
  %v258 = vadd.f32 %v187, %v218
  %v259 = vadd.f32 %v188, %v218
  %v260 = vadd.f32 %v189, %v218
  %v261 = vadd.f32 %v190, %v218
  %v262 = vadd.f32 %v191, %v218
  %v263 = vadd.f32 %v192, %v218
  %v264 = vadd.f32 %v193, %v218
  %v265 = vadd.f32 %v194, %v218
  %v266 = vadd.f32 %v195, %v218
  %v267 = vadd.f32 %v196, %v218
  %v268 = vadd.f32 %v197, %v218
  %v269 = vadd.f32 %v198, %v218
  %v270 = vadd.f32 %v199, %v218
  %v271 = vadd.f32 %v200, %v218
  %v272 = vadd.f32 %v201, %v218
  %v273 = vadd.f32 %v202, %v218
  %v274 = vadd.f32 %v203, %v218
  %v275 = vadd.f32 %v204, %v218
  %v276 = vadd.f32 %v205, %v218
  %v277 = vadd.f32 %v206, %v218
  %v278 = vadd.f32 %v207, %v218
  %v279 = vadd.f32 %v208, %v218
  %v280 = vadd.f32 %v209, %v218
  %v281 = vadd.f32 %v210, %v218
  %v282 = vadd.f32 %v211, %v218
  %v283 = vadd.f32 %v212, %v218
  %v284 = vmax.f32 %v220, 0.0
  %v285 = vmax.f32 %v221, 0.0
  %v286 = vmax.f32 %v222, 0.0
  %v287 = vmax.f32 %v223, 0.0
  %v288 = vmax.f32 %v224, 0.0
  %v289 = vmax.f32 %v225, 0.0
  %v290 = vmax.f32 %v226, 0.0
  %v291 = vmax.f32 %v227, 0.0
  %v292 = vmax.f32 %v228, 0.0
  %v293 = vmax.f32 %v229, 0.0
  %v294 = vmax.f32 %v230, 0.0
  %v295 = vmax.f32 %v231, 0.0
  %v296 = vmax.f32 %v232, 0.0
  %v297 = vmax.f32 %v233, 0.0
  %v298 = vmax.f32 %v234, 0.0
  %v299 = vmax.f32 %v235, 0.0
  %v300 = vmax.f32 %v236, 0.0
  %v301 = vmax.f32 %v237, 0.0
  %v302 = vmax.f32 %v238, 0.0
  %v303 = vmax.f32 %v239, 0.0
  %v304 = vmax.f32 %v240, 0.0
  %v305 = vmax.f32 %v241, 0.0
  %v306 = vmax.f32 %v242, 0.0
  %v307 = vmax.f32 %v243, 0.0
  %v308 = vmax.f32 %v244, 0.0
  %v309 = vmax.f32 %v245, 0.0
  %v310 = vmax.f32 %v246, 0.0
  %v311 = vmax.f32 %v247, 0.0
  %v312 = vmax.f32 %v248, 0.0
  %v313 = vmax.f32 %v249, 0.0
  %v314 = vmax.f32 %v250, 0.0
  %v315 = vmax.f32 %v251, 0.0
  %v316 = vmax.f32 %v252, 0.0
  %v317 = vmax.f32 %v253, 0.0
  %v318 = vmax.f32 %v254, 0.0
  %v319 = vmax.f32 %v255, 0.0
  %v320 = vmax.f32 %v256, 0.0
  %v321 = vmax.f32 %v257, 0.0
  %v322 = vmax.f32 %v258, 0.0
  %v323 = vmax.f32 %v259, 0.0
  %v324 = vmax.f32 %v260, 0.0
  %v325 = vmax.f32 %v261, 0.0
  %v326 = vmax.f32 %v262, 0.0
  %v327 = vmax.f32 %v263, 0.0
  %v328 = vmax.f32 %v264, 0.0
  %v329 = vmax.f32 %v265, 0.0
  %v330 = vmax.f32 %v266, 0.0
  %v331 = vmax.f32 %v267, 0.0
  %v332 = vmax.f32 %v268, 0.0
  %v333 = vmax.f32 %v269, 0.0
  %v334 = vmax.f32 %v270, 0.0
  %v335 = vmax.f32 %v271, 0.0
  %v336 = vmax.f32 %v272, 0.0
  %v337 = vmax.f32 %v273, 0.0
  %v338 = vmax.f32 %v274, 0.0
  %v339 = vmax.f32 %v275, 0.0
  %v340 = vmax.f32 %v276, 0.0
  %v341 = vmax.f32 %v277, 0.0
  %v342 = vmax.f32 %v278, 0.0
  %v343 = vmax.f32 %v279, 0.0
  %v344 = vmax.f32 %v280, 0.0
  %v345 = vmax.f32 %v281, 0.0
  %v346 = vmax.f32 %v282, 0.0
  %v347 = vmax.f32 %v283, 0.0
  %v348 = vpack.c.bf16 %v285, %v284
  %v349 = vpack.c.bf16 %v287, %v286
  %v350 = vpack.c.bf16 %v289, %v288
  %v351 = vpack.c.bf16 %v291, %v290
  %v352 = vpack.c.bf16 %v293, %v292
  %v353 = vpack.c.bf16 %v295, %v294
  %v354 = vpack.c.bf16 %v297, %v296
  %v355 = vpack.c.bf16 %v299, %v298
  %v356 = vpack.c.bf16 %v301, %v300
  %v357 = vpack.c.bf16 %v303, %v302
  %v358 = vpack.c.bf16 %v305, %v304
  %v359 = vpack.c.bf16 %v307, %v306
  %v360 = vpack.c.bf16 %v309, %v308
  %v361 = vpack.c.bf16 %v311, %v310
  %v362 = vpack.c.bf16 %v313, %v312
  %v363 = vpack.c.bf16 %v315, %v314
  %v364 = vpack.c.bf16 %v317, %v316
  %v365 = vpack.c.bf16 %v319, %v318
  %v366 = vpack.c.bf16 %v321, %v320
  %v367 = vpack.c.bf16 %v323, %v322
  %v368 = vpack.c.bf16 %v325, %v324
  %v369 = vpack.c.bf16 %v327, %v326
  %v370 = vpack.c.bf16 %v329, %v328
  %v371 = vpack.c.bf16 %v331, %v330
  %v372 = vpack.c.bf16 %v333, %v332
  %v373 = vpack.c.bf16 %v335, %v334
  %v374 = vpack.c.bf16 %v337, %v336
  %v375 = vpack.c.bf16 %v339, %v338
  %v376 = vpack.c.bf16 %v341, %v340
  %v377 = vpack.c.bf16 %v343, %v342
  %v378 = vpack.c.bf16 %v345, %v344
  %v379 = vpack.c.bf16 %v347, %v346
  %v412 = vunpack.c.l.b16 %v348
  %v413 = vunpack.c.h.b16 %v348
  %v414 = vunpack.c.l.b16 %v349
  %v415 = vunpack.c.h.b16 %v349
  %v416 = vunpack.c.l.b16 %v350
  %v417 = vunpack.c.h.b16 %v350
  %v418 = vunpack.c.l.b16 %v351
  %v419 = vunpack.c.h.b16 %v351
  %v420 = vunpack.c.l.b16 %v352
  %v421 = vunpack.c.h.b16 %v352
  %v422 = vunpack.c.l.b16 %v353
  %v423 = vunpack.c.h.b16 %v353
  %v424 = vunpack.c.l.b16 %v354
  %v425 = vunpack.c.h.b16 %v354
  %v426 = vunpack.c.l.b16 %v355
  %v427 = vunpack.c.h.b16 %v355
  %v428 = vunpack.c.l.b16 %v356
  %v429 = vunpack.c.h.b16 %v356
  %v430 = vunpack.c.l.b16 %v357
  %v431 = vunpack.c.h.b16 %v357
  %v432 = vunpack.c.l.b16 %v358
  %v433 = vunpack.c.h.b16 %v358
  %v434 = vunpack.c.l.b16 %v359
  %v435 = vunpack.c.h.b16 %v359
  %v436 = vunpack.c.l.b16 %v360
  %v437 = vunpack.c.h.b16 %v360
  %v438 = vunpack.c.l.b16 %v361
  %v439 = vunpack.c.h.b16 %v361
  %v440 = vunpack.c.l.b16 %v362
  %v441 = vunpack.c.h.b16 %v362
  %v442 = vunpack.c.l.b16 %v363
  %v443 = vunpack.c.h.b16 %v363
  %v444 = vunpack.c.l.b16 %v364
  %v445 = vunpack.c.h.b16 %v364
  %v446 = vunpack.c.l.b16 %v365
  %v447 = vunpack.c.h.b16 %v365
  %v448 = vunpack.c.l.b16 %v366
  %v449 = vunpack.c.h.b16 %v366
  %v450 = vunpack.c.l.b16 %v367
  %v451 = vunpack.c.h.b16 %v367
  %v452 = vunpack.c.l.b16 %v368
  %v453 = vunpack.c.h.b16 %v368
  %v454 = vunpack.c.l.b16 %v369
  %v455 = vunpack.c.h.b16 %v369
  %v456 = vunpack.c.l.b16 %v370
  %v457 = vunpack.c.h.b16 %v370
  %v458 = vunpack.c.l.b16 %v371
  %v459 = vunpack.c.h.b16 %v371
  %v460 = vunpack.c.l.b16 %v372
  %v461 = vunpack.c.h.b16 %v372
  %v462 = vunpack.c.l.b16 %v373
  %v463 = vunpack.c.h.b16 %v373
  %v464 = vunpack.c.l.b16 %v374
  %v465 = vunpack.c.h.b16 %v374
  %v466 = vunpack.c.l.b16 %v375
  %v467 = vunpack.c.h.b16 %v375
  %v468 = vunpack.c.l.b16 %v376
  %v469 = vunpack.c.h.b16 %v376
  %v470 = vunpack.c.l.b16 %v377
  %v471 = vunpack.c.h.b16 %v377
  %v472 = vunpack.c.l.b16 %v378
  %v473 = vunpack.c.h.b16 %v378
  %v474 = vunpack.c.l.b16 %v379
  %v475 = vunpack.c.h.b16 %v379
  %v476 = vpack.c.b16 %v412, %v412
  %v477 = vpack.c.b16 %v413, %v413
  %v478 = vpack.c.b16 %v414, %v414
  %v479 = vpack.c.b16 %v415, %v415
  %v480 = vpack.c.b16 %v416, %v416
  %v481 = vpack.c.b16 %v417, %v417
  %v482 = vpack.c.b16 %v418, %v418
  %v483 = vpack.c.b16 %v419, %v419
  %v484 = vpack.c.b16 %v420, %v420
  %v485 = vpack.c.b16 %v421, %v421
  %v486 = vpack.c.b16 %v422, %v422
  %v487 = vpack.c.b16 %v423, %v423
  %v488 = vpack.c.b16 %v424, %v424
  %v489 = vpack.c.b16 %v425, %v425
  %v490 = vpack.c.b16 %v426, %v426
  %v491 = vpack.c.b16 %v427, %v427
  %v492 = vpack.c.b16 %v428, %v428
  %v493 = vpack.c.b16 %v429, %v429
  %v494 = vpack.c.b16 %v430, %v430
  %v495 = vpack.c.b16 %v431, %v431
  %v496 = vpack.c.b16 %v432, %v432
  %v497 = vpack.c.b16 %v433, %v433
  %v498 = vpack.c.b16 %v434, %v434
  %v499 = vpack.c.b16 %v435, %v435
  %v500 = vpack.c.b16 %v436, %v436
  %v501 = vpack.c.b16 %v437, %v437
  %v502 = vpack.c.b16 %v438, %v438
  %v503 = vpack.c.b16 %v439, %v439
  %v504 = vpack.c.b16 %v440, %v440
  %v505 = vpack.c.b16 %v441, %v441
  %v506 = vpack.c.b16 %v442, %v442
  %v507 = vpack.c.b16 %v443, %v443
  %v508 = vpack.c.b16 %v444, %v444
  %v509 = vpack.c.b16 %v445, %v445
  %v510 = vpack.c.b16 %v446, %v446
  %v511 = vpack.c.b16 %v447, %v447
  %v512 = vpack.c.b16 %v448, %v448
  %v513 = vpack.c.b16 %v449, %v449
  %v514 = vpack.c.b16 %v450, %v450
  %v515 = vpack.c.b16 %v451, %v451
  %v516 = vpack.c.b16 %v452, %v452
  %v517 = vpack.c.b16 %v453, %v453
  %v518 = vpack.c.b16 %v454, %v454
  %v519 = vpack.c.b16 %v455, %v455
  %v520 = vpack.c.b16 %v456, %v456
  %v521 = vpack.c.b16 %v457, %v457
  %v522 = vpack.c.b16 %v458, %v458
  %v523 = vpack.c.b16 %v459, %v459
  %v524 = vpack.c.b16 %v460, %v460
  %v525 = vpack.c.b16 %v461, %v461
  %v526 = vpack.c.b16 %v462, %v462
  %v527 = vpack.c.b16 %v463, %v463
  %v528 = vpack.c.b16 %v464, %v464
  %v529 = vpack.c.b16 %v465, %v465
  %v530 = vpack.c.b16 %v466, %v466
  %v531 = vpack.c.b16 %v467, %v467
  %v532 = vpack.c.b16 %v468, %v468
  %v533 = vpack.c.b16 %v469, %v469
  %v534 = vpack.c.b16 %v470, %v470
  %v535 = vpack.c.b16 %v471, %v471
  %v536 = vpack.c.b16 %v472, %v472
  %v537 = vpack.c.b16 %v473, %v473
  %v538 = vpack.c.b16 %v474, %v474
  %v539 = vpack.c.b16 %v475, %v475
  %604 = vst [vmem:[%s3] sm:$0xf] %v476
  %605 = vst [vmem:[%s3 + $0x4] sm:$0xf] %v477
  %606 = vst [vmem:[%s3 + $0x8] sm:$0xf] %v478
  %607 = vst [vmem:[%s3 + $0xc] sm:$0xf] %v479
  %608 = vst [vmem:[%s3 + $0x10] sm:$0xf] %v480
  %609 = vst [vmem:[%s3 + $0x14] sm:$0xf] %v481
  %610 = vst [vmem:[%s3 + $0x18] sm:$0xf] %v482
  %611 = vst [vmem:[%s3 + $0x1c] sm:$0xf] %v483
  %612 = vst [vmem:[%s3 + $0x20] sm:$0xf] %v484
  %613 = vst [vmem:[%s3 + $0x24] sm:$0xf] %v485
  %614 = vst [vmem:[%s3 + $0x28] sm:$0xf] %v486
  %615 = vst [vmem:[%s3 + $0x2c] sm:$0xf] %v487
  %616 = vst [vmem:[%s3 + $0x30] sm:$0xf] %v488
  %617 = vst [vmem:[%s3 + $0x34] sm:$0xf] %v489
  %618 = vst [vmem:[%s3 + $0x38] sm:$0xf] %v490
  %619 = vst [vmem:[%s3 + $0x3c] sm:$0xf] %v491
  %620 = vst [vmem:[%s3 + $0x40] sm:$0xf] %v492
  %621 = vst [vmem:[%s3 + $0x44] sm:$0xf] %v493
  %622 = vst [vmem:[%s3 + $0x48] sm:$0xf] %v494
  %623 = vst [vmem:[%s3 + $0x4c] sm:$0xf] %v495
  %624 = vst [vmem:[%s3 + $0x50] sm:$0xf] %v496
  %625 = vst [vmem:[%s3 + $0x54] sm:$0xf] %v497
  %626 = vst [vmem:[%s3 + $0x58] sm:$0xf] %v498
  %627 = vst [vmem:[%s3 + $0x5c] sm:$0xf] %v499
  %628 = vst [vmem:[%s3 + $0x60] sm:$0xf] %v500
  %629 = vst [vmem:[%s3 + $0x64] sm:$0xf] %v501
  %630 = vst [vmem:[%s3 + $0x68] sm:$0xf] %v502
  %631 = vst [vmem:[%s3 + $0x6c] sm:$0xf] %v503
  %632 = vst [vmem:[%s3 + $0x70] sm:$0xf] %v504
  %633 = vst [vmem:[%s3 + $0x74] sm:$0xf] %v505
  %634 = vst [vmem:[%s3 + $0x78] sm:$0xf] %v506
  %635 = vst [vmem:[%s3 + $0x7c] sm:$0xf] %v507
  %636 = vst [vmem:[%s3 + $0x80] sm:$0xf] %v508
  %637 = vst [vmem:[%s3 + $0x84] sm:$0xf] %v509
  %638 = vst [vmem:[%s3 + $0x88] sm:$0xf] %v510
  %639 = vst [vmem:[%s3 + $0x8c] sm:$0xf] %v511
  %640 = vst [vmem:[%s3 + $0x90] sm:$0xf] %v512
  %641 = vst [vmem:[%s3 + $0x94] sm:$0xf] %v513
  %642 = vst [vmem:[%s3 + $0x98] sm:$0xf] %v514
  %643 = vst [vmem:[%s3 + $0x9c] sm:$0xf] %v515
  %644 = vst [vmem:[%s3 + $0xa0] sm:$0xf] %v516
  %645 = vst [vmem:[%s3 + $0xa4] sm:$0xf] %v517
  %646 = vst [vmem:[%s3 + $0xa8] sm:$0xf] %v518
  %647 = vst [vmem:[%s3 + $0xac] sm:$0xf] %v519
  %648 = vst [vmem:[%s3 + $0xb0] sm:$0xf] %v520
  %649 = vst [vmem:[%s3 + $0xb4] sm:$0xf] %v521
  %650 = vst [vmem:[%s3 + $0xb8] sm:$0xf] %v522
  %651 = vst [vmem:[%s3 + $0xbc] sm:$0xf] %v523
  %652 = vst [vmem:[%s3 + $0xc0] sm:$0xf] %v524
  %653 = vst [vmem:[%s3 + $0xc4] sm:$0xf] %v525
  %654 = vst [vmem:[%s3 + $0xc8] sm:$0xf] %v526
  %655 = vst [vmem:[%s3 + $0xcc] sm:$0xf] %v527
  %656 = vst [vmem:[%s3 + $0xd0] sm:$0xf] %v528
  %657 = vst [vmem:[%s3 + $0xd4] sm:$0xf] %v529
  %658 = vst [vmem:[%s3 + $0xd8] sm:$0xf] %v530
  %659 = vst [vmem:[%s3 + $0xdc] sm:$0xf] %v531
  %660 = vst [vmem:[%s3 + $0xe0] sm:$0xf] %v532
  %661 = vst [vmem:[%s3 + $0xe4] sm:$0xf] %v533
  %662 = vst [vmem:[%s3 + $0xe8] sm:$0xf] %v534
  %663 = vst [vmem:[%s3 + $0xec] sm:$0xf] %v535
  %664 = vst [vmem:[%s3 + $0xf0] sm:$0xf] %v536
  %665 = vst [vmem:[%s3 + $0xf4] sm:$0xf] %v537
  %666 = vst [vmem:[%s3 + $0xf8] sm:$0xf] %v538
  %667 = vst [vmem:[%s3 + $0xfc] sm:$0xf] %v539
  // Predicated region
  $region14: #{_lambda_.14} parent=0 // pred_check
    _
  $region15: #{_lambda_.14} parent=0 // pred_check_branch
    %669 = sbr.rel (0) target = $region17
  $region16: #{_lambda_.14} parent=0 // pred_region
    _
  $region17: #{_lambda_.14} parent=0 // pred_fallthru
    _
  // Predicated region
  $region18: #{_lambda_.14} parent=0 // pred_check
    _
  $region19: #{_lambda_.14} parent=0 // pred_check_branch
    %671 = sbr.rel (0) target = $region21
  $region20: #{_lambda_.14} parent=0 // pred_region
    _
  $region21: #{_lambda_.14} parent=0 // pred_fallthru
    _

// kernel: _lambda_.13
$region0: #{_lambda_.13}
  #allocation0 [shape = 'u32[]', space=smem, size = 0x4, offset = 0x4, fixed_abs, tag = 'smem constant byte address 0x4 - core index']
  #allocation1 [shape = 'u32[144,128]{1,0:T(1,128)}', space=vmem, size = 0x12000, scoped, tag = 'internal scratch']
  #allocation2 [shape = 'f32[128,128]{1,0:T(8,128)}', space=vmem, size = 0x10000, scoped, tag = 'scratch operand']
  %s0 = inlined_call_operand.vmem [shape: bf16[4,128,1024], index: 0, kind: input, shape index: {}]
  %s1 = inlined_call_operand.vmem [shape: bf16[4,1024,128], index: 1, kind: input, shape index: {}]
  %s2 = inlined_call_operand.vmem [shape: bf16[4,128,128], index: 2, kind: output, shape index: {0}]
  %s3 = inlined_call_operand.vmem [shape: f32[4,1,8,128], index: 3, kind: output, shape index: {1}]
  %4 = xla_tuple %s2, %s3
  %s5 = sld [smem:[#allocation0]]
  $region57: #{_lambda_.13} parent=0
    _
  %s7 = ssub.s32 1, %s5
  %s8 = scalar_select 0, %s7, %s5
  loop: start=0, step=1, limit=6
  $region2: #{_lambda_.13} parent=0 // loop_pre_header
    _
  $region3: #{_lambda_.13} parent=0 // loop_header
    %s10 = sphi 0, %s14
    %p11 = scmp.ge.s32.totalorder %s10, 6
    %s17 = sphi 0, %s43
    %s18 = sphi 0, %s39
    %s19 = sphi 0, %s35
    %s20 = sphi 0, %s31
    %s21 = sphi 0, %s17
    %s22 = sphi 0, %s18
    %s23 = sphi 0, %s19
    %s24 = sphi 0, %s20
    %s25 = sphi 0, %s21
    %s26 = sphi 0, %s22
    %s27 = sphi 0, %s23
    %s28 = sphi 0, %s24
    %s50 = sphi 0, %s52
    %s53 = sphi 0, %s50
    %s54 = sphi 0, %s53
    %s70 = sphi 0, %s54
    %s80 = sphi 0, %s82
    %s83 = sphi 0, %s80
    %s84 = sphi 0, %s83
    %s100 = sphi 0, %s84
    %s110 = sphi 0, %s112
    %s113 = sphi 0, %s110
    %s114 = sphi 0, %s113
    %s130 = sphi 0, %s114
    %s140 = sphi 0, %s142
    %s143 = sphi 0, %s140
    %s144 = sphi 0, %s143
    %s160 = sphi 0, %s144
  $region4: #{_lambda_.13} parent=0 // loop_header_branch
    %13 = sbr.rel (%p11) target = $region8
  $region5: #{_lambda_.13} parent=0 // loop_body
    %s15 = ssub.s32 %s10, 1
    %s16 = ssub.s32 %s10, 2
    %s29 = sadd.s32 1, %s20
    %p30 = scmp.ge.s32.totalorder %s29, 1
    %s31 = scalar_select %p30, 0, %s29
    %s32 = sadd.s32 1, %s19
    %s33 = scalar_select %p30, %s32, %s19
    %p34 = scmp.ge.s32.totalorder %s33, 1
    %s35 = scalar_select %p34, 0, %s33
    %s36 = sadd.s32 1, %s18
    %s37 = scalar_select %p34, %s36, %s18
    %p38 = scmp.ge.s32.totalorder %s37, 1
    %s39 = scalar_select %p38, 0, %s37
    %s40 = sadd.s32 1, %s17
    %s41 = scalar_select %p38, %s40, %s17
    %p42 = scmp.ge.s32.totalorder %s41, 4
    %s43 = scalar_select %p42, 0, %s41
    %s44 = ssub.s32 %s17, %s43
    %s45 = ssub.s32 %s18, %s39
    %s46 = sor.u32 %s44, %s45
    %s47 = ssub.s32 %s20, %s31
    %s48 = sor.u32 %s46, %s47
    %p49 = scmp.eq.s32.totalorder %s48, 0
    %s51 = sadd.s32 %s50, 1
    %s52 = scalar_select %p49, %s50, %s51
    %p55 = pneg %p49
    %p56 = scmp.eq.s32.totalorder %s10, 3
    %p57 = por %p55, %p56
    %p58 = scmp.ne.s32.totalorder %s50, %s53
    %p59 = scmp.eq.s32.totalorder %s10, 0
    %p60 = por %p58, %p59
    %p61 = scmp.ne.s32.totalorder %s50, %s53
    %p62 = scmp.eq.s32.totalorder %s15, 3
    %p63 = por %p61, %p62
    %p64 = scmp.ne.s32.totalorder %s53, %s54
    %p65 = scmp.eq.s32.totalorder %s15, 0
    %p66 = por %p64, %p65
    %p67 = scmp.ne.s32.totalorder %s53, %s54
    %p68 = scmp.eq.s32.totalorder %s16, 3
    %p69 = por %p67, %p68
    %p71 = scmp.ne.s32.totalorder %s54, %s70
    %p72 = scmp.eq.s32.totalorder %s16, 0
    %p73 = por %p71, %p72
    %s74 = ssub.s32 %s17, %s43
    %s75 = ssub.s32 %s20, %s31
    %s76 = sor.u32 %s74, %s75
    %s77 = ssub.s32 %s19, %s35
    %s78 = sor.u32 %s76, %s77
    %p79 = scmp.eq.s32.totalorder %s78, 0
    %s81 = sadd.s32 %s80, 1
    %s82 = scalar_select %p79, %s80, %s81
    %p85 = pneg %p79
    %p86 = scmp.eq.s32.totalorder %s10, 3
    %p87 = por %p85, %p86
    %p88 = scmp.ne.s32.totalorder %s80, %s83
    %p89 = scmp.eq.s32.totalorder %s10, 0
    %p90 = por %p88, %p89
    %p91 = scmp.ne.s32.totalorder %s80, %s83
    %p92 = scmp.eq.s32.totalorder %s15, 3
    %p93 = por %p91, %p92
    %p94 = scmp.ne.s32.totalorder %s83, %s84
    %p95 = scmp.eq.s32.totalorder %s15, 0
    %p96 = por %p94, %p95
    %p97 = scmp.ne.s32.totalorder %s83, %s84
    %p98 = scmp.eq.s32.totalorder %s16, 3
    %p99 = por %p97, %p98
    %p101 = scmp.ne.s32.totalorder %s84, %s100
    %p102 = scmp.eq.s32.totalorder %s16, 0
    %p103 = por %p101, %p102
    %s104 = ssub.s32 %s17, %s43
    %s105 = ssub.s32 %s18, %s39
    %s106 = sor.u32 %s104, %s105
    %s107 = ssub.s32 %s19, %s35
    %s108 = sor.u32 %s106, %s107
    %p109 = scmp.eq.s32.totalorder %s108, 0
    %s111 = sadd.s32 %s110, 1
    %s112 = scalar_select %p109, %s110, %s111
    %p115 = pneg %p109
    %p116 = scmp.eq.s32.totalorder %s10, 3
    %p117 = por %p115, %p116
    %p118 = scmp.ne.s32.totalorder %s110, %s113
    %p119 = scmp.eq.s32.totalorder %s10, 0
    %p120 = por %p118, %p119
    %p121 = scmp.ne.s32.totalorder %s110, %s113
    %p122 = scmp.eq.s32.totalorder %s15, 3
    %p123 = por %p121, %p122
    %p124 = scmp.ne.s32.totalorder %s113, %s114
    %p125 = scmp.eq.s32.totalorder %s15, 0
    %p126 = por %p124, %p125
    %p127 = scmp.ne.s32.totalorder %s113, %s114
    %p128 = scmp.eq.s32.totalorder %s16, 3
    %p129 = por %p127, %p128
    %p131 = scmp.ne.s32.totalorder %s114, %s130
    %p132 = scmp.eq.s32.totalorder %s16, 0
    %p133 = por %p131, %p132
    %s134 = ssub.s32 %s17, %s43
    %s135 = ssub.s32 %s18, %s39
    %s136 = sor.u32 %s134, %s135
    %s137 = ssub.s32 %s19, %s35
    %s138 = sor.u32 %s136, %s137
    %p139 = scmp.eq.s32.totalorder %s138, 0
    %s141 = sadd.s32 %s140, 1
    %s142 = scalar_select %p139, %s140, %s141
    %p145 = pneg %p139
    %p146 = scmp.eq.s32.totalorder %s10, 3
    %p147 = por %p145, %p146
    %p148 = scmp.ne.s32.totalorder %s140, %s143
    %p149 = scmp.eq.s32.totalorder %s10, 0
    %p150 = por %p148, %p149
    %p151 = scmp.ne.s32.totalorder %s140, %s143
    %p152 = scmp.eq.s32.totalorder %s15, 3
    %p153 = por %p151, %p152
    %p154 = scmp.ne.s32.totalorder %s143, %s144
    %p155 = scmp.eq.s32.totalorder %s15, 0
    %p156 = por %p154, %p155
    %p157 = scmp.ne.s32.totalorder %s143, %s144
    %p158 = scmp.eq.s32.totalorder %s16, 3
    %p159 = por %p157, %p158
    %p161 = scmp.ne.s32.totalorder %s144, %s160
    %p162 = scmp.eq.s32.totalorder %s16, 0
    %p163 = por %p161, %p162
    %p164 = scmp.le.s32.totalorder 1, %s10
    %p165 = scmp.lt.s32.totalorder %s10, 5
    %p166 = pnand %p164, %p165
    %p167 = pneg %p166
    // Predicated region
    $region9: #{_lambda_.13} parent=5 // pred_check
      _
    $region10: #{_lambda_.13} parent=5 // pred_check_branch
      %169 = sbr.rel (%p166) target = $region12
    $region11: #{_lambda_.13} parent=5 // pred_region
      %s170 = ssub.s32 %s10, 1
    $region12: #{_lambda_.13} parent=5 // pred_fallthru
      _
    %p171 = scmp.lt.s32.totalorder %s10, 4
    // Predicated region
    $region13: #{_lambda_.13} parent=5 // pred_check
      %p172 = pneg %p171
    $region14: #{_lambda_.13} parent=5 // pred_check_branch
      %174 = sbr.rel (%p172) target = $region16
    $region15: #{_lambda_.13} parent=5 // pred_region
      // Predicated region
      $region17: #{_lambda_.13} parent=15 // pred_check
        %p175 = pneg %p60
      $region18: #{_lambda_.13} parent=15 // pred_check_branch
        %177 = sbr.rel (%p175) target = $region20
      $region19: #{_lambda_.13} parent=15 // pred_region
        %s178 = smul.u32 16, %s18
        %s179 = smul.u32 8, %s20
        %p180 = scmp.lt.s32.totalorder %s17, 3
        %s181 = scalar_select %p180, %s17, 3
        %p182 = scmp.lt.s32.totalorder %s178, 15
        %s183 = scalar_select %p182, %s178, 15
        %p184 = scmp.lt.s32.totalorder %s179, 7
        %s185 = scalar_select %p184, %s179, 7
        %s186 = smul.addr %s183, 8
        %s187 = sadd.s32 %s185, %s186
        %s188 = smul.addr %s181, 128
        %s189 = sadd.s32 %s187, %s188
        %s190 = smul.addr %s189, 4
        %s191 = scalar_lea.vmem %s0, %s190
        %s192 = smul.u32 16, %s18
        %s193 = smul.u32 8, %s20
      $region20: #{_lambda_.13} parent=15 // pred_fallthru
        _
      // Predicated region
      $region21: #{_lambda_.13} parent=15 // pred_check
        %p194 = pneg %p90
      $region22: #{_lambda_.13} parent=15 // pred_check_branch
        %196 = sbr.rel (%p194) target = $region24
      $region23: #{_lambda_.13} parent=15 // pred_region
        %s197 = smul.u32 128, %s20
        %p198 = scmp.lt.s32.totalorder %s17, 3
        %s199 = scalar_select %p198, %s17, 3
        %p200 = scmp.lt.s32.totalorder %s197, 127
        %s201 = scalar_select %p200, %s197, 127
        %p202 = scmp.lt.s32.totalorder %s19, 0
        %s203 = scalar_select %p202, %s19, 0
        %s204 = sadd.s32 %s203, %s201
        %s205 = smul.addr %s199, 128
        %s206 = sadd.s32 %s204, %s205
        %s207 = smul.addr %s206, 4
        %s208 = scalar_lea.vmem %s1, %s207
        %s209 = smul.u32 128, %s20
      $region24: #{_lambda_.13} parent=15 // pred_fallthru
        _
    $region16: #{_lambda_.13} parent=5 // pred_fallthru
      _
    %p210 = scmp.le.s32.totalorder 1, %s10
    %p211 = scmp.lt.s32.totalorder %s10, 5
    %p212 = pnand %p210, %p211
    %p213 = pneg %p212
    // Predicated region
    $region25: #{_lambda_.13} parent=5 // pred_check
      _
    $region26: #{_lambda_.13} parent=5 // pred_check_branch
      %215 = sbr.rel (%p212) target = $region28
    $region27: #{_lambda_.13} parent=5 // pred_region
      %s216 = ssub.s32 %s10, 1
      %s217 = smul.u32 16, %s22
      %s218 = smul.u32 8, %s24
      %p219 = scmp.lt.s32.totalorder %s21, 3
      %s220 = scalar_select %p219, %s21, 3
      %p221 = scmp.lt.s32.totalorder %s217, 15
      %s222 = scalar_select %p221, %s217, 15
      %p223 = scmp.lt.s32.totalorder %s218, 7
      %s224 = scalar_select %p223, %s218, 7
      %s225 = smul.addr %s222, 8
      %s226 = sadd.s32 %s224, %s225
      %s227 = smul.addr %s220, 128
      %s228 = sadd.s32 %s226, %s227
      %s229 = smul.addr %s228, 4
      %s230 = scalar_lea.vmem %s0, %s229
      %p231 = pneg %p66
      %p232 = pneg %p63
      %s233 = smul.u32 128, %s24
      %p234 = scmp.lt.s32.totalorder %s21, 3
      %s235 = scalar_select %p234, %s21, 3
      %p236 = scmp.lt.s32.totalorder %s233, 127
      %s237 = scalar_select %p236, %s233, 127
      %p238 = scmp.lt.s32.totalorder %s23, 0
      %s239 = scalar_select %p238, %s23, 0
      %s240 = sadd.s32 %s239, %s237
      %s241 = smul.addr %s235, 128
      %s242 = sadd.s32 %s240, %s241
      %s243 = smul.addr %s242, 4
      %s244 = scalar_lea.vmem %s1, %s243
      %p245 = pneg %p96
      %p246 = pneg %p93
      %p247 = pneg %p126
      %p248 = pneg %p123
      %s249 = smul.u32 16, %s22
      %p250 = scmp.lt.s32.totalorder %s21, 3
      %s251 = scalar_select %p250, %s21, 3
      %p252 = scmp.lt.s32.totalorder %s249, 15
      %s253 = scalar_select %p252, %s249, 15
      %p254 = scmp.lt.s32.totalorder %s23, 0
      %s255 = scalar_select %p254, %s23, 0
      %s256 = sadd.s32 %s255, %s253
      %s257 = smul.addr %s251, 16
      %s258 = sadd.s32 %s256, %s257
      %s259 = smul.addr %s258, 4
      %s260 = scalar_lea.vmem %s2, %s259
      %p261 = pneg %p156
      %p262 = pneg %p153
      %p263 = scmp.lt.s32.totalorder %s21, 3
      %s264 = scalar_select %p263, %s21, 3
      %p265 = scmp.lt.s32.totalorder %s22, 0
      %s266 = scalar_select %p265, %s22, 0
      %p267 = scmp.lt.s32.totalorder %s23, 0
      %s268 = scalar_select %p267, %s23, 0
      %s269 = sadd.s32 %s268, %s266
      %s270 = sadd.s32 %s269, %s264
      %s271 = smul.addr %s270, 8
      %s272 = scalar_lea.vmem %s3, %s271
      %s273 = smul.u32 16, %s22
      %s274 = smul.u32 8, %s24
      %p275 = scmp.lt.s32.totalorder %s21, 3
      %s276 = scalar_select %p275, %s21, 3
      %p277 = scmp.lt.s32.totalorder %s273, 15
      %s278 = scalar_select %p277, %s273, 15
      %p279 = scmp.lt.s32.totalorder %s274, 7
      %s280 = scalar_select %p279, %s274, 7
      %s281 = smul.addr %s278, 8
      %s282 = sadd.s32 %s280, %s281
      %s283 = smul.addr %s276, 128
      %s284 = sadd.s32 %s282, %s283
      %s285 = smul.addr %s284, 4
      %s286 = scalar_lea.vmem %s0, %s285
      %s287 = smul.u32 16, %s22
      %s288 = smul.u32 8, %s24
      %s289 = smul.u32 128, %s24
      %p290 = scmp.lt.s32.totalorder %s21, 3
      %s291 = scalar_select %p290, %s21, 3
      %p292 = scmp.lt.s32.totalorder %s289, 127
      %s293 = scalar_select %p292, %s289, 127
      %p294 = scmp.lt.s32.totalorder %s23, 0
      %s295 = scalar_select %p294, %s23, 0
      %s296 = sadd.s32 %s295, %s293
      %s297 = smul.addr %s291, 128
      %s298 = sadd.s32 %s296, %s297
      %s299 = smul.addr %s298, 4
      %s300 = scalar_lea.vmem %s1, %s299
      %s301 = smul.u32 128, %s24
      %s302 = smul.u32 16, %s22
      %p303 = scmp.lt.s32.totalorder %s21, 3
      %s304 = scalar_select %p303, %s21, 3
      %p305 = scmp.lt.s32.totalorder %s302, 15
      %s306 = scalar_select %p305, %s302, 15
      %p307 = scmp.lt.s32.totalorder %s23, 0
      %s308 = scalar_select %p307, %s23, 0
      %s309 = sadd.s32 %s308, %s306
      %s310 = smul.addr %s304, 16
      %s311 = sadd.s32 %s309, %s310
      %s312 = smul.addr %s311, 4
      %s313 = scalar_lea.vmem %s2, %s312
      %s314 = smul.u32 16, %s22
      %p315 = scmp.lt.s32.totalorder %s21, 3
      %s316 = scalar_select %p315, %s21, 3
      %p317 = scmp.lt.s32.totalorder %s22, 0
      %s318 = scalar_select %p317, %s22, 0
      %p319 = scmp.lt.s32.totalorder %s23, 0
      %s320 = scalar_select %p319, %s23, 0
      %s321 = sadd.s32 %s320, %s318
      %s322 = sadd.s32 %s321, %s316
      %s323 = smul.addr %s322, 8
      %s324 = scalar_lea.vmem %s3, %s323
      %p326 = scmp.eq.s32.totalorder %s24, 0
      // Predicated region
      $region29: #{_lambda_.13} parent=27 // pred_check
        %p327 = pneg %p326
      $region30: #{_lambda_.13} parent=27 // pred_check_branch
        %329 = sbr.rel (%p327) target = $region32
      $region31: #{_lambda_.13} parent=27 // pred_region
        %330 = vst [vmem:[#allocation2] sm:$0xff] 0.0
        %331 = vst [vmem:[#allocation2 + $0x8] sm:$0xff] 0.0
        %332 = vst [vmem:[#allocation2 + $0x10] sm:$0xff] 0.0
        %333 = vst [vmem:[#allocation2 + $0x18] sm:$0xff] 0.0
        %334 = vst [vmem:[#allocation2 + $0x20] sm:$0xff] 0.0
        %335 = vst [vmem:[#allocation2 + $0x28] sm:$0xff] 0.0
        %336 = vst [vmem:[#allocation2 + $0x30] sm:$0xff] 0.0
        %337 = vst [vmem:[#allocation2 + $0x38] sm:$0xff] 0.0
        %338 = vst [vmem:[#allocation2 + $0x40] sm:$0xff] 0.0
        %339 = vst [vmem:[#allocation2 + $0x48] sm:$0xff] 0.0
        %340 = vst [vmem:[#allocation2 + $0x50] sm:$0xff] 0.0
        %341 = vst [vmem:[#allocation2 + $0x58] sm:$0xff] 0.0
        %342 = vst [vmem:[#allocation2 + $0x60] sm:$0xff] 0.0
        %343 = vst [vmem:[#allocation2 + $0x68] sm:$0xff] 0.0
        %344 = vst [vmem:[#allocation2 + $0x70] sm:$0xff] 0.0
        %345 = vst [vmem:[#allocation2 + $0x78] sm:$0xff] 0.0
      $region32: #{_lambda_.13} parent=27 // pred_fallthru
        _
      %v346 = vld [vmem:[#allocation2] sm:$0xff]
      %v347 = vld [vmem:[#allocation2 + $0x8] sm:$0xff]
      %v348 = vld [vmem:[#allocation2 + $0x10] sm:$0xff]
      %v349 = vld [vmem:[#allocation2 + $0x18] sm:$0xff]
      %v350 = vld [vmem:[#allocation2 + $0x20] sm:$0xff]
      %v351 = vld [vmem:[#allocation2 + $0x28] sm:$0xff]
      %v352 = vld [vmem:[#allocation2 + $0x30] sm:$0xff]
      %v353 = vld [vmem:[#allocation2 + $0x38] sm:$0xff]
      %v354 = vld [vmem:[#allocation2 + $0x40] sm:$0xff]
      %v355 = vld [vmem:[#allocation2 + $0x48] sm:$0xff]
      %v356 = vld [vmem:[#allocation2 + $0x50] sm:$0xff]
      %v357 = vld [vmem:[#allocation2 + $0x58] sm:$0xff]
      %v358 = vld [vmem:[#allocation2 + $0x60] sm:$0xff]
      %v359 = vld [vmem:[#allocation2 + $0x68] sm:$0xff]
      %v360 = vld [vmem:[#allocation2 + $0x70] sm:$0xff]
      %v361 = vld [vmem:[#allocation2 + $0x78] sm:$0xff]
      %v362 = vld [vmem:[%s286] sm:$0xff]
      %v363 = vld [vmem:[%s286 + $0x8] sm:$0xff]
      %v364 = vld [vmem:[%s286 + $0x10] sm:$0xff]
      %v365 = vld [vmem:[%s286 + $0x18] sm:$0xff]
      %v366 = vld [vmem:[%s286 + $0x20] sm:$0xff]
      %v367 = vld [vmem:[%s286 + $0x28] sm:$0xff]
      %v368 = vld [vmem:[%s286 + $0x30] sm:$0xff]
      %v369 = vld [vmem:[%s286 + $0x38] sm:$0xff]
      %v370 = vld [vmem:[%s286 + $0x40] sm:$0xff]
      %v371 = vld [vmem:[%s286 + $0x48] sm:$0xff]
      %v372 = vld [vmem:[%s286 + $0x50] sm:$0xff]
      %v373 = vld [vmem:[%s286 + $0x58] sm:$0xff]
      %v374 = vld [vmem:[%s286 + $0x60] sm:$0xff]
      %v375 = vld [vmem:[%s286 + $0x68] sm:$0xff]
      %v376 = vld [vmem:[%s286 + $0x70] sm:$0xff]
      %v377 = vld [vmem:[%s286 + $0x78] sm:$0xff]
      %v378 = vld [vmem:[%s286 + $0x80] sm:$0xff]
      %v379 = vld [vmem:[%s286 + $0x88] sm:$0xff]
      %v380 = vld [vmem:[%s286 + $0x90] sm:$0xff]
      %v381 = vld [vmem:[%s286 + $0x98] sm:$0xff]
      %v382 = vld [vmem:[%s286 + $0xa0] sm:$0xff]
      %v383 = vld [vmem:[%s286 + $0xa8] sm:$0xff]
      %v384 = vld [vmem:[%s286 + $0xb0] sm:$0xff]
      %v385 = vld [vmem:[%s286 + $0xb8] sm:$0xff]
      %v386 = vld [vmem:[%s286 + $0xc0] sm:$0xff]
      %v387 = vld [vmem:[%s286 + $0xc8] sm:$0xff]
      %v388 = vld [vmem:[%s286 + $0xd0] sm:$0xff]
      %v389 = vld [vmem:[%s286 + $0xd8] sm:$0xff]
      %v390 = vld [vmem:[%s286 + $0xe0] sm:$0xff]
      %v391 = vld [vmem:[%s286 + $0xe8] sm:$0xff]
      %v392 = vld [vmem:[%s286 + $0xf0] sm:$0xff]
      %v393 = vld [vmem:[%s286 + $0xf8] sm:$0xff]
      %v394 = vld [vmem:[%s286 + $0x100] sm:$0xff]
      %v395 = vld [vmem:[%s286 + $0x108] sm:$0xff]
      %v396 = vld [vmem:[%s286 + $0x110] sm:$0xff]
      %v397 = vld [vmem:[%s286 + $0x118] sm:$0xff]
      %v398 = vld [vmem:[%s286 + $0x120] sm:$0xff]
      %v399 = vld [vmem:[%s286 + $0x128] sm:$0xff]
      %v400 = vld [vmem:[%s286 + $0x130] sm:$0xff]
      %v401 = vld [vmem:[%s286 + $0x138] sm:$0xff]
      %v402 = vld [vmem:[%s286 + $0x140] sm:$0xff]
      %v403 = vld [vmem:[%s286 + $0x148] sm:$0xff]
      %v404 = vld [vmem:[%s286 + $0x150] sm:$0xff]
      %v405 = vld [vmem:[%s286 + $0x158] sm:$0xff]
      %v406 = vld [vmem:[%s286 + $0x160] sm:$0xff]
      %v407 = vld [vmem:[%s286 + $0x168] sm:$0xff]
      %v408 = vld [vmem:[%s286 + $0x170] sm:$0xff]
      %v409 = vld [vmem:[%s286 + $0x178] sm:$0xff]
      %v410 = vld [vmem:[%s286 + $0x180] sm:$0xff]
      %v411 = vld [vmem:[%s286 + $0x188] sm:$0xff]
      %v412 = vld [vmem:[%s286 + $0x190] sm:$0xff]
      %v413 = vld [vmem:[%s286 + $0x198] sm:$0xff]
      %v414 = vld [vmem:[%s286 + $0x1a0] sm:$0xff]
      %v415 = vld [vmem:[%s286 + $0x1a8] sm:$0xff]
      %v416 = vld [vmem:[%s286 + $0x1b0] sm:$0xff]
      %v417 = vld [vmem:[%s286 + $0x1b8] sm:$0xff]
      %v418 = vld [vmem:[%s286 + $0x1c0] sm:$0xff]
      %v419 = vld [vmem:[%s286 + $0x1c8] sm:$0xff]
      %v420 = vld [vmem:[%s286 + $0x1d0] sm:$0xff]
      %v421 = vld [vmem:[%s286 + $0x1d8] sm:$0xff]
      %v422 = vld [vmem:[%s286 + $0x1e0] sm:$0xff]
      %v423 = vld [vmem:[%s286 + $0x1e8] sm:$0xff]
      %v424 = vld [vmem:[%s286 + $0x1f0] sm:$0xff]
      %v425 = vld [vmem:[%s286 + $0x1f8] sm:$0xff]
      %v426 = vld [vmem:[%s300] sm:$0xf]
      %v427 = vld [vmem:[%s300 + $0x4] sm:$0xf]
      %v428 = vld [vmem:[%s300 + $0x8] sm:$0xf]
      %v429 = vld [vmem:[%s300 + $0xc] sm:$0xf]
      %v430 = vld [vmem:[%s300 + $0x10] sm:$0xf]
      %v431 = vld [vmem:[%s300 + $0x14] sm:$0xf]
      %v432 = vld [vmem:[%s300 + $0x18] sm:$0xf]
      %v433 = vld [vmem:[%s300 + $0x1c] sm:$0xf]
      %v434 = vld [vmem:[%s300 + $0x20] sm:$0xf]
      %v435 = vld [vmem:[%s300 + $0x24] sm:$0xf]
      %v436 = vld [vmem:[%s300 + $0x28] sm:$0xf]
      %v437 = vld [vmem:[%s300 + $0x2c] sm:$0xf]
      %v438 = vld [vmem:[%s300 + $0x30] sm:$0xf]
      %v439 = vld [vmem:[%s300 + $0x34] sm:$0xf]
      %v440 = vld [vmem:[%s300 + $0x38] sm:$0xf]
      %v441 = vld [vmem:[%s300 + $0x3c] sm:$0xf]
      %v442 = vld [vmem:[%s300 + $0x40] sm:$0xf]
      %v443 = vld [vmem:[%s300 + $0x44] sm:$0xf]
      %v444 = vld [vmem:[%s300 + $0x48] sm:$0xf]
      %v445 = vld [vmem:[%s300 + $0x4c] sm:$0xf]
      %v446 = vld [vmem:[%s300 + $0x50] sm:$0xf]
      %v447 = vld [vmem:[%s300 + $0x54] sm:$0xf]
      %v448 = vld [vmem:[%s300 + $0x58] sm:$0xf]
      %v449 = vld [vmem:[%s300 + $0x5c] sm:$0xf]
      %v450 = vld [vmem:[%s300 + $0x60] sm:$0xf]
      %v451 = vld [vmem:[%s300 + $0x64] sm:$0xf]
      %v452 = vld [vmem:[%s300 + $0x68] sm:$0xf]
      %v453 = vld [vmem:[%s300 + $0x6c] sm:$0xf]
      %v454 = vld [vmem:[%s300 + $0x70] sm:$0xf]
      %v455 = vld [vmem:[%s300 + $0x74] sm:$0xf]
      %v456 = vld [vmem:[%s300 + $0x78] sm:$0xf]
      %v457 = vld [vmem:[%s300 + $0x7c] sm:$0xf]
      %v458 = vld [vmem:[%s300 + $0x80] sm:$0xf]
      %v459 = vld [vmem:[%s300 + $0x84] sm:$0xf]
      %v460 = vld [vmem:[%s300 + $0x88] sm:$0xf]
      %v461 = vld [vmem:[%s300 + $0x8c] sm:$0xf]
      %v462 = vld [vmem:[%s300 + $0x90] sm:$0xf]
      %v463 = vld [vmem:[%s300 + $0x94] sm:$0xf]
      %v464 = vld [vmem:[%s300 + $0x98] sm:$0xf]
      %v465 = vld [vmem:[%s300 + $0x9c] sm:$0xf]
      %v466 = vld [vmem:[%s300 + $0xa0] sm:$0xf]
      %v467 = vld [vmem:[%s300 + $0xa4] sm:$0xf]
      %v468 = vld [vmem:[%s300 + $0xa8] sm:$0xf]
      %v469 = vld [vmem:[%s300 + $0xac] sm:$0xf]
      %v470 = vld [vmem:[%s300 + $0xb0] sm:$0xf]
      %v471 = vld [vmem:[%s300 + $0xb4] sm:$0xf]
      %v472 = vld [vmem:[%s300 + $0xb8] sm:$0xf]
      %v473 = vld [vmem:[%s300 + $0xbc] sm:$0xf]
      %v474 = vld [vmem:[%s300 + $0xc0] sm:$0xf]
      %v475 = vld [vmem:[%s300 + $0xc4] sm:$0xf]
      %v476 = vld [vmem:[%s300 + $0xc8] sm:$0xf]
      %v477 = vld [vmem:[%s300 + $0xcc] sm:$0xf]
      %v478 = vld [vmem:[%s300 + $0xd0] sm:$0xf]
      %v479 = vld [vmem:[%s300 + $0xd4] sm:$0xf]
      %v480 = vld [vmem:[%s300 + $0xd8] sm:$0xf]
      %v481 = vld [vmem:[%s300 + $0xdc] sm:$0xf]
      %v482 = vld [vmem:[%s300 + $0xe0] sm:$0xf]
      %v483 = vld [vmem:[%s300 + $0xe4] sm:$0xf]
      %v484 = vld [vmem:[%s300 + $0xe8] sm:$0xf]
      %v485 = vld [vmem:[%s300 + $0xec] sm:$0xf]
      %v486 = vld [vmem:[%s300 + $0xf0] sm:$0xf]
      %v487 = vld [vmem:[%s300 + $0xf4] sm:$0xf]
      %v488 = vld [vmem:[%s300 + $0xf8] sm:$0xf]
      %v489 = vld [vmem:[%s300 + $0xfc] sm:$0xf]
      %v490 = vld [vmem:[%s300 + $0x100] sm:$0xf]
      %v491 = vld [vmem:[%s300 + $0x104] sm:$0xf]
      %v492 = vld [vmem:[%s300 + $0x108] sm:$0xf]
      %v493 = vld [vmem:[%s300 + $0x10c] sm:$0xf]
      %v494 = vld [vmem:[%s300 + $0x110] sm:$0xf]
      %v495 = vld [vmem:[%s300 + $0x114] sm:$0xf]
      %v496 = vld [vmem:[%s300 + $0x118] sm:$0xf]
      %v497 = vld [vmem:[%s300 + $0x11c] sm:$0xf]
      %v498 = vld [vmem:[%s300 + $0x120] sm:$0xf]
      %v499 = vld [vmem:[%s300 + $0x124] sm:$0xf]
      %v500 = vld [vmem:[%s300 + $0x128] sm:$0xf]
      %v501 = vld [vmem:[%s300 + $0x12c] sm:$0xf]
      %v502 = vld [vmem:[%s300 + $0x130] sm:$0xf]
      %v503 = vld [vmem:[%s300 + $0x134] sm:$0xf]
      %v504 = vld [vmem:[%s300 + $0x138] sm:$0xf]
      %v505 = vld [vmem:[%s300 + $0x13c] sm:$0xf]
      %v506 = vld [vmem:[%s300 + $0x140] sm:$0xf]
      %v507 = vld [vmem:[%s300 + $0x144] sm:$0xf]
      %v508 = vld [vmem:[%s300 + $0x148] sm:$0xf]
      %v509 = vld [vmem:[%s300 + $0x14c] sm:$0xf]
      %v510 = vld [vmem:[%s300 + $0x150] sm:$0xf]
      %v511 = vld [vmem:[%s300 + $0x154] sm:$0xf]
      %v512 = vld [vmem:[%s300 + $0x158] sm:$0xf]
      %v513 = vld [vmem:[%s300 + $0x15c] sm:$0xf]
      %v514 = vld [vmem:[%s300 + $0x160] sm:$0xf]
      %v515 = vld [vmem:[%s300 + $0x164] sm:$0xf]
      %v516 = vld [vmem:[%s300 + $0x168] sm:$0xf]
      %v517 = vld [vmem:[%s300 + $0x16c] sm:$0xf]
      %v518 = vld [vmem:[%s300 + $0x170] sm:$0xf]
      %v519 = vld [vmem:[%s300 + $0x174] sm:$0xf]
      %v520 = vld [vmem:[%s300 + $0x178] sm:$0xf]
      %v521 = vld [vmem:[%s300 + $0x17c] sm:$0xf]
      %v522 = vld [vmem:[%s300 + $0x180] sm:$0xf]
      %v523 = vld [vmem:[%s300 + $0x184] sm:$0xf]
      %v524 = vld [vmem:[%s300 + $0x188] sm:$0xf]
      %v525 = vld [vmem:[%s300 + $0x18c] sm:$0xf]
      %v526 = vld [vmem:[%s300 + $0x190] sm:$0xf]
      %v527 = vld [vmem:[%s300 + $0x194] sm:$0xf]
      %v528 = vld [vmem:[%s300 + $0x198] sm:$0xf]
      %v529 = vld [vmem:[%s300 + $0x19c] sm:$0xf]
      %v530 = vld [vmem:[%s300 + $0x1a0] sm:$0xf]
      %v531 = vld [vmem:[%s300 + $0x1a4] sm:$0xf]
      %v532 = vld [vmem:[%s300 + $0x1a8] sm:$0xf]
      %v533 = vld [vmem:[%s300 + $0x1ac] sm:$0xf]
      %v534 = vld [vmem:[%s300 + $0x1b0] sm:$0xf]
      %v535 = vld [vmem:[%s300 + $0x1b4] sm:$0xf]
      %v536 = vld [vmem:[%s300 + $0x1b8] sm:$0xf]
      %v537 = vld [vmem:[%s300 + $0x1bc] sm:$0xf]
      %v538 = vld [vmem:[%s300 + $0x1c0] sm:$0xf]
      %v539 = vld [vmem:[%s300 + $0x1c4] sm:$0xf]
      %v540 = vld [vmem:[%s300 + $0x1c8] sm:$0xf]
      %v541 = vld [vmem:[%s300 + $0x1cc] sm:$0xf]
      %v542 = vld [vmem:[%s300 + $0x1d0] sm:$0xf]
      %v543 = vld [vmem:[%s300 + $0x1d4] sm:$0xf]
      %v544 = vld [vmem:[%s300 + $0x1d8] sm:$0xf]
      %v545 = vld [vmem:[%s300 + $0x1dc] sm:$0xf]
      %v546 = vld [vmem:[%s300 + $0x1e0] sm:$0xf]
      %v547 = vld [vmem:[%s300 + $0x1e4] sm:$0xf]
      %v548 = vld [vmem:[%s300 + $0x1e8] sm:$0xf]
      %v549 = vld [vmem:[%s300 + $0x1ec] sm:$0xf]
      %v550 = vld [vmem:[%s300 + $0x1f0] sm:$0xf]
      %v551 = vld [vmem:[%s300 + $0x1f4] sm:$0xf]
      %v552 = vld [vmem:[%s300 + $0x1f8] sm:$0xf]
      %v553 = vld [vmem:[%s300 + $0x1fc] sm:$0xf]
      %v618 = vunpack.c.l.b16 %v362
      %v619 = vunpack.c.h.b16 %v362
      %v620 = vunpack.c.l.b16 %v363
      %v621 = vunpack.c.h.b16 %v363
      %v622 = vunpack.c.l.b16 %v364
      %v623 = vunpack.c.h.b16 %v364
      %v624 = vunpack.c.l.b16 %v365
      %v625 = vunpack.c.h.b16 %v365
      %v626 = vunpack.c.l.b16 %v366
      %v627 = vunpack.c.h.b16 %v366
      %v628 = vunpack.c.l.b16 %v367
      %v629 = vunpack.c.h.b16 %v367
      %v630 = vunpack.c.l.b16 %v368
      %v631 = vunpack.c.h.b16 %v368
      %v632 = vunpack.c.l.b16 %v369
      %v633 = vunpack.c.h.b16 %v369
      %v634 = vunpack.c.l.b16 %v370
      %v635 = vunpack.c.h.b16 %v370
      %v636 = vunpack.c.l.b16 %v371
      %v637 = vunpack.c.h.b16 %v371
      %v638 = vunpack.c.l.b16 %v372
      %v639 = vunpack.c.h.b16 %v372
      %v640 = vunpack.c.l.b16 %v373
      %v641 = vunpack.c.h.b16 %v373
      %v642 = vunpack.c.l.b16 %v374
      %v643 = vunpack.c.h.b16 %v374
      %v644 = vunpack.c.l.b16 %v375
      %v645 = vunpack.c.h.b16 %v375
      %v646 = vunpack.c.l.b16 %v376
      %v647 = vunpack.c.h.b16 %v376
      %v648 = vunpack.c.l.b16 %v377
      %v649 = vunpack.c.h.b16 %v377
      %v650 = vunpack.c.l.b16 %v378
      %v651 = vunpack.c.h.b16 %v378
      %v652 = vunpack.c.l.b16 %v379
      %v653 = vunpack.c.h.b16 %v379
      %v654 = vunpack.c.l.b16 %v380
      %v655 = vunpack.c.h.b16 %v380
      %v656 = vunpack.c.l.b16 %v381
      %v657 = vunpack.c.h.b16 %v381
      %v658 = vunpack.c.l.b16 %v382
      %v659 = vunpack.c.h.b16 %v382
      %v660 = vunpack.c.l.b16 %v383
      %v661 = vunpack.c.h.b16 %v383
      %v662 = vunpack.c.l.b16 %v384
      %v663 = vunpack.c.h.b16 %v384
      %v664 = vunpack.c.l.b16 %v385
      %v665 = vunpack.c.h.b16 %v385
      %v666 = vunpack.c.l.b16 %v386
      %v667 = vunpack.c.h.b16 %v386
      %v668 = vunpack.c.l.b16 %v387
      %v669 = vunpack.c.h.b16 %v387
      %v670 = vunpack.c.l.b16 %v388
      %v671 = vunpack.c.h.b16 %v388
      %v672 = vunpack.c.l.b16 %v389
      %v673 = vunpack.c.h.b16 %v389
      %v674 = vunpack.c.l.b16 %v390
      %v675 = vunpack.c.h.b16 %v390
      %v676 = vunpack.c.l.b16 %v391
      %v677 = vunpack.c.h.b16 %v391
      %v678 = vunpack.c.l.b16 %v392
      %v679 = vunpack.c.h.b16 %v392
      %v680 = vunpack.c.l.b16 %v393
      %v681 = vunpack.c.h.b16 %v393
      %v682 = vunpack.c.l.b16 %v394
      %v683 = vunpack.c.h.b16 %v394
      %v684 = vunpack.c.l.b16 %v395
      %v685 = vunpack.c.h.b16 %v395
      %v686 = vunpack.c.l.b16 %v396
      %v687 = vunpack.c.h.b16 %v396
      %v688 = vunpack.c.l.b16 %v397
      %v689 = vunpack.c.h.b16 %v397
      %v690 = vunpack.c.l.b16 %v398
      %v691 = vunpack.c.h.b16 %v398
      %v692 = vunpack.c.l.b16 %v399
      %v693 = vunpack.c.h.b16 %v399
      %v694 = vunpack.c.l.b16 %v400
      %v695 = vunpack.c.h.b16 %v400
      %v696 = vunpack.c.l.b16 %v401
      %v697 = vunpack.c.h.b16 %v401
      %v698 = vunpack.c.l.b16 %v402
      %v699 = vunpack.c.h.b16 %v402
      %v700 = vunpack.c.l.b16 %v403
      %v701 = vunpack.c.h.b16 %v403
      %v702 = vunpack.c.l.b16 %v404
      %v703 = vunpack.c.h.b16 %v404
      %v704 = vunpack.c.l.b16 %v405
      %v705 = vunpack.c.h.b16 %v405
      %v706 = vunpack.c.l.b16 %v406
      %v707 = vunpack.c.h.b16 %v406
      %v708 = vunpack.c.l.b16 %v407
      %v709 = vunpack.c.h.b16 %v407
      %v710 = vunpack.c.l.b16 %v408
      %v711 = vunpack.c.h.b16 %v408
      %v712 = vunpack.c.l.b16 %v409
      %v713 = vunpack.c.h.b16 %v409
      %v714 = vunpack.c.l.b16 %v410
      %v715 = vunpack.c.h.b16 %v410
      %v716 = vunpack.c.l.b16 %v411
      %v717 = vunpack.c.h.b16 %v411
      %v718 = vunpack.c.l.b16 %v412
      %v719 = vunpack.c.h.b16 %v412
      %v720 = vunpack.c.l.b16 %v413
      %v721 = vunpack.c.h.b16 %v413
      %v722 = vunpack.c.l.b16 %v414
      %v723 = vunpack.c.h.b16 %v414
      %v724 = vunpack.c.l.b16 %v415
      %v725 = vunpack.c.h.b16 %v415
      %v726 = vunpack.c.l.b16 %v416
      %v727 = vunpack.c.h.b16 %v416
      %v728 = vunpack.c.l.b16 %v417
      %v729 = vunpack.c.h.b16 %v417
      %v730 = vunpack.c.l.b16 %v418
      %v731 = vunpack.c.h.b16 %v418
      %v732 = vunpack.c.l.b16 %v419
      %v733 = vunpack.c.h.b16 %v419
      %v734 = vunpack.c.l.b16 %v420
      %v735 = vunpack.c.h.b16 %v420
      %v736 = vunpack.c.l.b16 %v421
      %v737 = vunpack.c.h.b16 %v421
      %v738 = vunpack.c.l.b16 %v422
      %v739 = vunpack.c.h.b16 %v422
      %v740 = vunpack.c.l.b16 %v423
      %v741 = vunpack.c.h.b16 %v423
      %v742 = vunpack.c.l.b16 %v424
      %v743 = vunpack.c.h.b16 %v424
      %v744 = vunpack.c.l.b16 %v425
      %v745 = vunpack.c.h.b16 %v425
      %v746 = vpack.c.b16 %v626, %v618
      %v747 = vpack.c.b16 %v627, %v619
      %v748 = vpack.c.b16 %v628, %v620
      %v749 = vpack.c.b16 %v629, %v621
      %v750 = vpack.c.b16 %v630, %v622
      %v751 = vpack.c.b16 %v631, %v623
      %v752 = vpack.c.b16 %v632, %v624
      %v753 = vpack.c.b16 %v633, %v625
      %v754 = vpack.c.b16 %v642, %v634
      %v755 = vpack.c.b16 %v643, %v635
      %v756 = vpack.c.b16 %v644, %v636
      %v757 = vpack.c.b16 %v645, %v637
      %v758 = vpack.c.b16 %v646, %v638
      %v759 = vpack.c.b16 %v647, %v639
      %v760 = vpack.c.b16 %v648, %v640
      %v761 = vpack.c.b16 %v649, %v641
      %v762 = vpack.c.b16 %v658, %v650
      %v763 = vpack.c.b16 %v659, %v651
      %v764 = vpack.c.b16 %v660, %v652
      %v765 = vpack.c.b16 %v661, %v653
      %v766 = vpack.c.b16 %v662, %v654
      %v767 = vpack.c.b16 %v663, %v655
      %v768 = vpack.c.b16 %v664, %v656
      %v769 = vpack.c.b16 %v665, %v657
      %v770 = vpack.c.b16 %v674, %v666
      %v771 = vpack.c.b16 %v675, %v667
      %v772 = vpack.c.b16 %v676, %v668
      %v773 = vpack.c.b16 %v677, %v669
      %v774 = vpack.c.b16 %v678, %v670
      %v775 = vpack.c.b16 %v679, %v671
      %v776 = vpack.c.b16 %v680, %v672
      %v777 = vpack.c.b16 %v681, %v673
      %v778 = vpack.c.b16 %v690, %v682
      %v779 = vpack.c.b16 %v691, %v683
      %v780 = vpack.c.b16 %v692, %v684
      %v781 = vpack.c.b16 %v693, %v685
      %v782 = vpack.c.b16 %v694, %v686
      %v783 = vpack.c.b16 %v695, %v687
      %v784 = vpack.c.b16 %v696, %v688
      %v785 = vpack.c.b16 %v697, %v689
      %v786 = vpack.c.b16 %v706, %v698
      %v787 = vpack.c.b16 %v707, %v699
      %v788 = vpack.c.b16 %v708, %v700
      %v789 = vpack.c.b16 %v709, %v701
      %v790 = vpack.c.b16 %v710, %v702
      %v791 = vpack.c.b16 %v711, %v703
      %v792 = vpack.c.b16 %v712, %v704
      %v793 = vpack.c.b16 %v713, %v705
      %v794 = vpack.c.b16 %v722, %v714
      %v795 = vpack.c.b16 %v723, %v715
      %v796 = vpack.c.b16 %v724, %v716
      %v797 = vpack.c.b16 %v725, %v717
      %v798 = vpack.c.b16 %v726, %v718
      %v799 = vpack.c.b16 %v727, %v719
      %v800 = vpack.c.b16 %v728, %v720
      %v801 = vpack.c.b16 %v729, %v721
      %v802 = vpack.c.b16 %v738, %v730
      %v803 = vpack.c.b16 %v739, %v731
      %v804 = vpack.c.b16 %v740, %v732
      %v805 = vpack.c.b16 %v741, %v733
      %v806 = vpack.c.b16 %v742, %v734
      %v807 = vpack.c.b16 %v743, %v735
      %v808 = vpack.c.b16 %v744, %v736
      %v809 = vpack.c.b16 %v745, %v737
      %v1002 = vunpack.c.l.b16 %v426
      %v1003 = vunpack.c.l.b16 %v427
      %v1004 = vunpack.c.l.b16 %v428
      %v1005 = vunpack.c.l.b16 %v429
      %v1006 = vunpack.c.l.b16 %v430
      %v1007 = vunpack.c.l.b16 %v431
      %v1008 = vunpack.c.l.b16 %v432
      %v1009 = vunpack.c.l.b16 %v433
      %v1010 = vunpack.c.l.b16 %v434
      %v1011 = vunpack.c.l.b16 %v435
      %v1012 = vunpack.c.l.b16 %v436
      %v1013 = vunpack.c.l.b16 %v437
      %v1014 = vunpack.c.l.b16 %v438
      %v1015 = vunpack.c.l.b16 %v439
      %v1016 = vunpack.c.l.b16 %v440
      %v1017 = vunpack.c.l.b16 %v441
      %v1018 = vunpack.c.l.b16 %v442
      %v1019 = vunpack.c.l.b16 %v443
      %v1020 = vunpack.c.l.b16 %v444
      %v1021 = vunpack.c.l.b16 %v445
      %v1022 = vunpack.c.l.b16 %v446
      %v1023 = vunpack.c.l.b16 %v447
      %v1024 = vunpack.c.l.b16 %v448
      %v1025 = vunpack.c.l.b16 %v449
      %v1026 = vunpack.c.l.b16 %v450
      %v1027 = vunpack.c.l.b16 %v451
      %v1028 = vunpack.c.l.b16 %v452
      %v1029 = vunpack.c.l.b16 %v453
      %v1030 = vunpack.c.l.b16 %v454
      %v1031 = vunpack.c.l.b16 %v455
      %v1032 = vunpack.c.l.b16 %v456
      %v1033 = vunpack.c.l.b16 %v457
      %v1034 = vunpack.c.l.b16 %v458
      %v1035 = vunpack.c.l.b16 %v459
      %v1036 = vunpack.c.l.b16 %v460
      %v1037 = vunpack.c.l.b16 %v461
      %v1038 = vunpack.c.l.b16 %v462
      %v1039 = vunpack.c.l.b16 %v463
      %v1040 = vunpack.c.l.b16 %v464
      %v1041 = vunpack.c.l.b16 %v465
      %v1042 = vunpack.c.l.b16 %v466
      %v1043 = vunpack.c.l.b16 %v467
      %v1044 = vunpack.c.l.b16 %v468
      %v1045 = vunpack.c.l.b16 %v469
      %v1046 = vunpack.c.l.b16 %v470
      %v1047 = vunpack.c.l.b16 %v471
      %v1048 = vunpack.c.l.b16 %v472
      %v1049 = vunpack.c.l.b16 %v473
      %v1050 = vunpack.c.l.b16 %v474
      %v1051 = vunpack.c.l.b16 %v475
      %v1052 = vunpack.c.l.b16 %v476
      %v1053 = vunpack.c.l.b16 %v477
      %v1054 = vunpack.c.l.b16 %v478
      %v1055 = vunpack.c.l.b16 %v479
      %v1056 = vunpack.c.l.b16 %v480
      %v1057 = vunpack.c.l.b16 %v481
      %v1058 = vunpack.c.l.b16 %v482
      %v1059 = vunpack.c.l.b16 %v483
      %v1060 = vunpack.c.l.b16 %v484
      %v1061 = vunpack.c.l.b16 %v485
      %v1062 = vunpack.c.l.b16 %v486
      %v1063 = vunpack.c.l.b16 %v487
      %v1064 = vunpack.c.l.b16 %v488
      %v1065 = vunpack.c.l.b16 %v489
      %v1066 = vunpack.c.l.b16 %v490
      %v1067 = vunpack.c.l.b16 %v491
      %v1068 = vunpack.c.l.b16 %v492
      %v1069 = vunpack.c.l.b16 %v493
      %v1070 = vunpack.c.l.b16 %v494
      %v1071 = vunpack.c.l.b16 %v495
      %v1072 = vunpack.c.l.b16 %v496
      %v1073 = vunpack.c.l.b16 %v497
      %v1074 = vunpack.c.l.b16 %v498
      %v1075 = vunpack.c.l.b16 %v499
      %v1076 = vunpack.c.l.b16 %v500
      %v1077 = vunpack.c.l.b16 %v501
      %v1078 = vunpack.c.l.b16 %v502
      %v1079 = vunpack.c.l.b16 %v503
      %v1080 = vunpack.c.l.b16 %v504
      %v1081 = vunpack.c.l.b16 %v505
      %v1082 = vunpack.c.l.b16 %v506
      %v1083 = vunpack.c.l.b16 %v507
      %v1084 = vunpack.c.l.b16 %v508
      %v1085 = vunpack.c.l.b16 %v509
      %v1086 = vunpack.c.l.b16 %v510
      %v1087 = vunpack.c.l.b16 %v511
      %v1088 = vunpack.c.l.b16 %v512
      %v1089 = vunpack.c.l.b16 %v513
      %v1090 = vunpack.c.l.b16 %v514
      %v1091 = vunpack.c.l.b16 %v515
      %v1092 = vunpack.c.l.b16 %v516
      %v1093 = vunpack.c.l.b16 %v517
      %v1094 = vunpack.c.l.b16 %v518
      %v1095 = vunpack.c.l.b16 %v519
      %v1096 = vunpack.c.l.b16 %v520
      %v1097 = vunpack.c.l.b16 %v521
      %v1098 = vunpack.c.l.b16 %v522
      %v1099 = vunpack.c.l.b16 %v523
      %v1100 = vunpack.c.l.b16 %v524
      %v1101 = vunpack.c.l.b16 %v525
      %v1102 = vunpack.c.l.b16 %v526
      %v1103 = vunpack.c.l.b16 %v527
      %v1104 = vunpack.c.l.b16 %v528
      %v1105 = vunpack.c.l.b16 %v529
      %v1106 = vunpack.c.l.b16 %v530
      %v1107 = vunpack.c.l.b16 %v531
      %v1108 = vunpack.c.l.b16 %v532
      %v1109 = vunpack.c.l.b16 %v533
      %v1110 = vunpack.c.l.b16 %v534
      %v1111 = vunpack.c.l.b16 %v535
      %v1112 = vunpack.c.l.b16 %v536
      %v1113 = vunpack.c.l.b16 %v537
      %v1114 = vunpack.c.l.b16 %v538
      %v1115 = vunpack.c.l.b16 %v539
      %v1116 = vunpack.c.l.b16 %v540
      %v1117 = vunpack.c.l.b16 %v541
      %v1118 = vunpack.c.l.b16 %v542
      %v1119 = vunpack.c.l.b16 %v543
      %v1120 = vunpack.c.l.b16 %v544
      %v1121 = vunpack.c.l.b16 %v545
      %v1122 = vunpack.c.l.b16 %v546
      %v1123 = vunpack.c.l.b16 %v547
      %v1124 = vunpack.c.l.b16 %v548
      %v1125 = vunpack.c.l.b16 %v549
      %v1126 = vunpack.c.l.b16 %v550
      %v1127 = vunpack.c.l.b16 %v551
      %v1128 = vunpack.c.l.b16 %v552
      %v1129 = vunpack.c.l.b16 %v553
      %v1130 = vpack.c.b16 %v1003, %v1002
      %v1131 = vpack.c.b16 %v1005, %v1004
      %v1132 = vpack.c.b16 %v1007, %v1006
      %v1133 = vpack.c.b16 %v1009, %v1008
      %v1134 = vpack.c.b16 %v1011, %v1010
      %v1135 = vpack.c.b16 %v1013, %v1012
      %v1136 = vpack.c.b16 %v1015, %v1014
      %v1137 = vpack.c.b16 %v1017, %v1016
      %v1138 = vpack.c.b16 %v1019, %v1018
      %v1139 = vpack.c.b16 %v1021, %v1020
      %v1140 = vpack.c.b16 %v1023, %v1022
      %v1141 = vpack.c.b16 %v1025, %v1024
      %v1142 = vpack.c.b16 %v1027, %v1026
      %v1143 = vpack.c.b16 %v1029, %v1028
      %v1144 = vpack.c.b16 %v1031, %v1030
      %v1145 = vpack.c.b16 %v1033, %v1032
      %v1146 = vpack.c.b16 %v1035, %v1034
      %v1147 = vpack.c.b16 %v1037, %v1036
      %v1148 = vpack.c.b16 %v1039, %v1038
      %v1149 = vpack.c.b16 %v1041, %v1040
      %v1150 = vpack.c.b16 %v1043, %v1042
      %v1151 = vpack.c.b16 %v1045, %v1044
      %v1152 = vpack.c.b16 %v1047, %v1046
      %v1153 = vpack.c.b16 %v1049, %v1048
      %v1154 = vpack.c.b16 %v1051, %v1050
      %v1155 = vpack.c.b16 %v1053, %v1052
      %v1156 = vpack.c.b16 %v1055, %v1054
      %v1157 = vpack.c.b16 %v1057, %v1056
      %v1158 = vpack.c.b16 %v1059, %v1058
      %v1159 = vpack.c.b16 %v1061, %v1060
      %v1160 = vpack.c.b16 %v1063, %v1062
      %v1161 = vpack.c.b16 %v1065, %v1064
      %v1162 = vpack.c.b16 %v1067, %v1066
      %v1163 = vpack.c.b16 %v1069, %v1068
      %v1164 = vpack.c.b16 %v1071, %v1070
      %v1165 = vpack.c.b16 %v1073, %v1072
      %v1166 = vpack.c.b16 %v1075, %v1074
      %v1167 = vpack.c.b16 %v1077, %v1076
      %v1168 = vpack.c.b16 %v1079, %v1078
      %v1169 = vpack.c.b16 %v1081, %v1080
      %v1170 = vpack.c.b16 %v1083, %v1082
      %v1171 = vpack.c.b16 %v1085, %v1084
      %v1172 = vpack.c.b16 %v1087, %v1086
      %v1173 = vpack.c.b16 %v1089, %v1088
      %v1174 = vpack.c.b16 %v1091, %v1090
      %v1175 = vpack.c.b16 %v1093, %v1092
      %v1176 = vpack.c.b16 %v1095, %v1094
      %v1177 = vpack.c.b16 %v1097, %v1096
      %v1178 = vpack.c.b16 %v1099, %v1098
      %v1179 = vpack.c.b16 %v1101, %v1100
      %v1180 = vpack.c.b16 %v1103, %v1102
      %v1181 = vpack.c.b16 %v1105, %v1104
      %v1182 = vpack.c.b16 %v1107, %v1106
      %v1183 = vpack.c.b16 %v1109, %v1108
      %v1184 = vpack.c.b16 %v1111, %v1110
      %v1185 = vpack.c.b16 %v1113, %v1112
      %v1186 = vpack.c.b16 %v1115, %v1114
      %v1187 = vpack.c.b16 %v1117, %v1116
      %v1188 = vpack.c.b16 %v1119, %v1118
      %v1189 = vpack.c.b16 %v1121, %v1120
      %v1190 = vpack.c.b16 %v1123, %v1122
      %v1191 = vpack.c.b16 %v1125, %v1124
      %v1192 = vpack.c.b16 %v1127, %v1126
      %v1193 = vpack.c.b16 %v1129, %v1128
      %1258 = vmatprep.subr.bf16.mxu0 0
      %1259 = vmatpush1.bf16.msra.mxu0 %v1137
      %1260 = vmatprep.subr.bf16.mxu0 0
      %1261 = vmatpush1.bf16.msra.mxu0 %v1136
      %1262 = vmatprep.subr.bf16.mxu0 0
      %1263 = vmatpush1.bf16.msra.mxu0 %v1135
      %1264 = vmatprep.subr.bf16.mxu0 0
      %1265 = vmatpush1.bf16.msra.mxu0 %v1134
      %1266 = vmatprep.subr.bf16.mxu0 0
      %1267 = vmatpush1.bf16.msra.mxu0 %v1133
      %1268 = vmatprep.subr.bf16.mxu0 0
      %1269 = vmatpush1.bf16.msra.mxu0 %v1132
      %1270 = vmatprep.subr.bf16.mxu0 0
      %1271 = vmatpush1.bf16.msra.mxu0 %v1131
      %1272 = vmatprep.subr.bf16.mxu0 0
      %1273 = vmatpush1.bf16.msra.mxu0 %v1130
      %1274 = vmatprep.subr.bf16.mxu0 0
      %1275 = vmatpush2.bf16.msra.mxu0 %v1145
      %1276 = vmatprep.subr.bf16.mxu0 0
      %1277 = vmatpush2.bf16.msra.mxu0 %v1144
      %1278 = vmatprep.subr.bf16.mxu0 0
      %1279 = vmatpush2.bf16.msra.mxu0 %v1143
      %1280 = vmatprep.subr.bf16.mxu0 0
      %1281 = vmatpush2.bf16.msra.mxu0 %v1142
      %1282 = vmatprep.subr.bf16.mxu0 0
      %1283 = vmatpush2.bf16.msra.mxu0 %v1141
      %1284 = vmatprep.subr.bf16.mxu0 0
      %1285 = vmatpush2.bf16.msra.mxu0 %v1140
      %1286 = vmatprep.subr.bf16.mxu0 0
      %1287 = vmatpush2.bf16.msra.mxu0 %v1139
      %1288 = vmatprep.subr.bf16.mxu0 0
      %1289 = vmatpush2.bf16.msra.mxu0 %v1138
      %1290 = vmatprep.mubr.bf16.mxu0 %v747
      %1291 = vmatmul.mubr.bf16.gmra.mxu0 %v746
      %v1292 = vpop.f32.mrf.mxu0
      %v1293 = vadd.f32 0.0, %v1292
      %v1294 = vpop.f32.mrf.mxu0
      %v1295 = vpop.f32.mrf.mxu0
      %v1296 = vadd.f32 0.0, %v1295
      %v1297 = vpop.f32.mrf.mxu0
      %1298 = vmatprep.mubr.bf16.mxu0 %v755
      %1299 = vmatmul.mubr.bf16.gmra.mxu0 %v754
      %v1300 = vpop.f32.mrf.mxu0
      %v1301 = vadd.f32 0.0, %v1300
      %v1302 = vpop.f32.mrf.mxu0
      %v1303 = vpop.f32.mrf.mxu0
      %v1304 = vadd.f32 0.0, %v1303
      %v1305 = vpop.f32.mrf.mxu0
      %1306 = vmatprep.mubr.bf16.mxu0 %v763
      %1307 = vmatmul.mubr.bf16.gmra.mxu0 %v762
      %v1308 = vpop.f32.mrf.mxu0
      %v1309 = vadd.f32 0.0, %v1308
      %v1310 = vpop.f32.mrf.mxu0
      %v1311 = vpop.f32.mrf.mxu0
      %v1312 = vadd.f32 0.0, %v1311
      %v1313 = vpop.f32.mrf.mxu0
      %1314 = vmatprep.mubr.bf16.mxu0 %v771
      %1315 = vmatmul.mubr.bf16.gmra.mxu0 %v770
      %v1316 = vpop.f32.mrf.mxu0
      %v1317 = vadd.f32 0.0, %v1316
      %v1318 = vpop.f32.mrf.mxu0
      %v1319 = vpop.f32.mrf.mxu0
      %v1320 = vadd.f32 0.0, %v1319
      %v1321 = vpop.f32.mrf.mxu0
      %1322 = vmatprep.mubr.bf16.mxu0 %v779
      %1323 = vmatmul.mubr.bf16.gmra.mxu0 %v778
      %v1324 = vpop.f32.mrf.mxu0
      %v1325 = vadd.f32 0.0, %v1324
      %v1326 = vpop.f32.mrf.mxu0
      %v1327 = vpop.f32.mrf.mxu0
      %v1328 = vadd.f32 0.0, %v1327
      %v1329 = vpop.f32.mrf.mxu0
      %1330 = vmatprep.mubr.bf16.mxu0 %v787
      %1331 = vmatmul.mubr.bf16.gmra.mxu0 %v786
      %v1332 = vpop.f32.mrf.mxu0
      %v1333 = vadd.f32 0.0, %v1332
      %v1334 = vpop.f32.mrf.mxu0
      %v1335 = vpop.f32.mrf.mxu0
      %v1336 = vadd.f32 0.0, %v1335
      %v1337 = vpop.f32.mrf.mxu0
      %1338 = vmatprep.mubr.bf16.mxu0 %v795
      %1339 = vmatmul.mubr.bf16.gmra.mxu0 %v794
      %v1340 = vpop.f32.mrf.mxu0
      %v1341 = vadd.f32 0.0, %v1340
      %v1342 = vpop.f32.mrf.mxu0
      %v1343 = vpop.f32.mrf.mxu0
      %v1344 = vadd.f32 0.0, %v1343
      %v1345 = vpop.f32.mrf.mxu0
      %1346 = vmatprep.mubr.bf16.mxu0 %v803
      %1347 = vmatmul.mubr.bf16.gmra.mxu0 %v802
      %v1348 = vpop.f32.mrf.mxu0
      %v1349 = vadd.f32 0.0, %v1348
      %v1350 = vpop.f32.mrf.mxu0
      %v1351 = vpop.f32.mrf.mxu0
      %v1352 = vadd.f32 0.0, %v1351
      %v1353 = vpop.f32.mrf.mxu0
      %1354 = vdwg.mxu0
      %1355 = vmatprep.subr.bf16.mxu0 0
      %1356 = vmatpush1.bf16.msra.mxu0 %v1153
      %1357 = vmatprep.subr.bf16.mxu0 0
      %1358 = vmatpush1.bf16.msra.mxu0 %v1152
      %1359 = vmatprep.subr.bf16.mxu0 0
      %1360 = vmatpush1.bf16.msra.mxu0 %v1151
      %1361 = vmatprep.subr.bf16.mxu0 0
      %1362 = vmatpush1.bf16.msra.mxu0 %v1150
      %1363 = vmatprep.subr.bf16.mxu0 0
      %1364 = vmatpush1.bf16.msra.mxu0 %v1149
      %1365 = vmatprep.subr.bf16.mxu0 0
      %1366 = vmatpush1.bf16.msra.mxu0 %v1148
      %1367 = vmatprep.subr.bf16.mxu0 0
      %1368 = vmatpush1.bf16.msra.mxu0 %v1147
      %1369 = vmatprep.subr.bf16.mxu0 0
      %1370 = vmatpush1.bf16.msra.mxu0 %v1146
      %1371 = vmatprep.subr.bf16.mxu0 0
      %1372 = vmatpush2.bf16.msra.mxu0 %v1161
      %1373 = vmatprep.subr.bf16.mxu0 0
      %1374 = vmatpush2.bf16.msra.mxu0 %v1160
      %1375 = vmatprep.subr.bf16.mxu0 0
      %1376 = vmatpush2.bf16.msra.mxu0 %v1159
      %1377 = vmatprep.subr.bf16.mxu0 0
      %1378 = vmatpush2.bf16.msra.mxu0 %v1158
      %1379 = vmatprep.subr.bf16.mxu0 0
      %1380 = vmatpush2.bf16.msra.mxu0 %v1157
      %1381 = vmatprep.subr.bf16.mxu0 0
      %1382 = vmatpush2.bf16.msra.mxu0 %v1156
      %1383 = vmatprep.subr.bf16.mxu0 0
      %1384 = vmatpush2.bf16.msra.mxu0 %v1155
      %1385 = vmatprep.subr.bf16.mxu0 0
      %1386 = vmatpush2.bf16.msra.mxu0 %v1154
      %1387 = vmatprep.mubr.bf16.mxu0 %v749
      %1388 = vmatmul.mubr.bf16.gmra.mxu0 %v748
      %v1389 = vpop.f32.mrf.mxu0
      %v1390 = vadd.f32 %v1293, %v1389
      %v1391 = vpop.f32.mrf.mxu0
      %v1392 = vpop.f32.mrf.mxu0
      %v1393 = vadd.f32 %v1296, %v1392
      %v1394 = vpop.f32.mrf.mxu0
      %1395 = vmatprep.mubr.bf16.mxu0 %v757
      %1396 = vmatmul.mubr.bf16.gmra.mxu0 %v756
      %v1397 = vpop.f32.mrf.mxu0
      %v1398 = vadd.f32 %v1301, %v1397
      %v1399 = vpop.f32.mrf.mxu0
      %v1400 = vpop.f32.mrf.mxu0
      %v1401 = vadd.f32 %v1304, %v1400
      %v1402 = vpop.f32.mrf.mxu0
      %1403 = vmatprep.mubr.bf16.mxu0 %v765
      %1404 = vmatmul.mubr.bf16.gmra.mxu0 %v764
      %v1405 = vpop.f32.mrf.mxu0
      %v1406 = vadd.f32 %v1309, %v1405
      %v1407 = vpop.f32.mrf.mxu0
      %v1408 = vpop.f32.mrf.mxu0
      %v1409 = vadd.f32 %v1312, %v1408
      %v1410 = vpop.f32.mrf.mxu0
      %1411 = vmatprep.mubr.bf16.mxu0 %v773
      %1412 = vmatmul.mubr.bf16.gmra.mxu0 %v772
      %v1413 = vpop.f32.mrf.mxu0
      %v1414 = vadd.f32 %v1317, %v1413
      %v1415 = vpop.f32.mrf.mxu0
      %v1416 = vpop.f32.mrf.mxu0
      %v1417 = vadd.f32 %v1320, %v1416
      %v1418 = vpop.f32.mrf.mxu0
      %1419 = vmatprep.mubr.bf16.mxu0 %v781
      %1420 = vmatmul.mubr.bf16.gmra.mxu0 %v780
      %v1421 = vpop.f32.mrf.mxu0
      %v1422 = vadd.f32 %v1325, %v1421
      %v1423 = vpop.f32.mrf.mxu0
      %v1424 = vpop.f32.mrf.mxu0
      %v1425 = vadd.f32 %v1328, %v1424
      %v1426 = vpop.f32.mrf.mxu0
      %1427 = vmatprep.mubr.bf16.mxu0 %v789
      %1428 = vmatmul.mubr.bf16.gmra.mxu0 %v788
      %v1429 = vpop.f32.mrf.mxu0
      %v1430 = vadd.f32 %v1333, %v1429
      %v1431 = vpop.f32.mrf.mxu0
      %v1432 = vpop.f32.mrf.mxu0
      %v1433 = vadd.f32 %v1336, %v1432
      %v1434 = vpop.f32.mrf.mxu0
      %1435 = vmatprep.mubr.bf16.mxu0 %v797
      %1436 = vmatmul.mubr.bf16.gmra.mxu0 %v796
      %v1437 = vpop.f32.mrf.mxu0
      %v1438 = vadd.f32 %v1341, %v1437
      %v1439 = vpop.f32.mrf.mxu0
      %v1440 = vpop.f32.mrf.mxu0
      %v1441 = vadd.f32 %v1344, %v1440
      %v1442 = vpop.f32.mrf.mxu0
      %1443 = vmatprep.mubr.bf16.mxu0 %v805
      %1444 = vmatmul.mubr.bf16.gmra.mxu0 %v804
      %v1445 = vpop.f32.mrf.mxu0
      %v1446 = vadd.f32 %v1349, %v1445
      %v1447 = vpop.f32.mrf.mxu0
      %v1448 = vpop.f32.mrf.mxu0
      %v1449 = vadd.f32 %v1352, %v1448
      %v1450 = vpop.f32.mrf.mxu0
      %1451 = vdwg.mxu0
      %1452 = vmatprep.subr.bf16.mxu0 0
      %1453 = vmatpush1.bf16.msra.mxu0 %v1169
      %1454 = vmatprep.subr.bf16.mxu0 0
      %1455 = vmatpush1.bf16.msra.mxu0 %v1168
      %1456 = vmatprep.subr.bf16.mxu0 0
      %1457 = vmatpush1.bf16.msra.mxu0 %v1167
      %1458 = vmatprep.subr.bf16.mxu0 0
      %1459 = vmatpush1.bf16.msra.mxu0 %v1166
      %1460 = vmatprep.subr.bf16.mxu0 0
      %1461 = vmatpush1.bf16.msra.mxu0 %v1165
      %1462 = vmatprep.subr.bf16.mxu0 0
      %1463 = vmatpush1.bf16.msra.mxu0 %v1164
      %1464 = vmatprep.subr.bf16.mxu0 0
      %1465 = vmatpush1.bf16.msra.mxu0 %v1163
      %1466 = vmatprep.subr.bf16.mxu0 0
      %1467 = vmatpush1.bf16.msra.mxu0 %v1162
      %1468 = vmatprep.subr.bf16.mxu0 0
      %1469 = vmatpush2.bf16.msra.mxu0 %v1177
      %1470 = vmatprep.subr.bf16.mxu0 0
      %1471 = vmatpush2.bf16.msra.mxu0 %v1176
      %1472 = vmatprep.subr.bf16.mxu0 0
      %1473 = vmatpush2.bf16.msra.mxu0 %v1175
      %1474 = vmatprep.subr.bf16.mxu0 0
      %1475 = vmatpush2.bf16.msra.mxu0 %v1174
      %1476 = vmatprep.subr.bf16.mxu0 0
      %1477 = vmatpush2.bf16.msra.mxu0 %v1173
      %1478 = vmatprep.subr.bf16.mxu0 0
      %1479 = vmatpush2.bf16.msra.mxu0 %v1172
      %1480 = vmatprep.subr.bf16.mxu0 0
      %1481 = vmatpush2.bf16.msra.mxu0 %v1171
      %1482 = vmatprep.subr.bf16.mxu0 0
      %1483 = vmatpush2.bf16.msra.mxu0 %v1170
      %1484 = vmatprep.mubr.bf16.mxu0 %v751
      %1485 = vmatmul.mubr.bf16.gmra.mxu0 %v750
      %v1486 = vpop.f32.mrf.mxu0
      %v1487 = vadd.f32 %v1390, %v1486
      %v1488 = vpop.f32.mrf.mxu0
      %v1489 = vpop.f32.mrf.mxu0
      %v1490 = vadd.f32 %v1393, %v1489
      %v1491 = vpop.f32.mrf.mxu0
      %1492 = vmatprep.mubr.bf16.mxu0 %v759
      %1493 = vmatmul.mubr.bf16.gmra.mxu0 %v758
      %v1494 = vpop.f32.mrf.mxu0
      %v1495 = vadd.f32 %v1398, %v1494
      %v1496 = vpop.f32.mrf.mxu0
      %v1497 = vpop.f32.mrf.mxu0
      %v1498 = vadd.f32 %v1401, %v1497
      %v1499 = vpop.f32.mrf.mxu0
      %1500 = vmatprep.mubr.bf16.mxu0 %v767
      %1501 = vmatmul.mubr.bf16.gmra.mxu0 %v766
      %v1502 = vpop.f32.mrf.mxu0
      %v1503 = vadd.f32 %v1406, %v1502
      %v1504 = vpop.f32.mrf.mxu0
      %v1505 = vpop.f32.mrf.mxu0
      %v1506 = vadd.f32 %v1409, %v1505
      %v1507 = vpop.f32.mrf.mxu0
      %1508 = vmatprep.mubr.bf16.mxu0 %v775
      %1509 = vmatmul.mubr.bf16.gmra.mxu0 %v774
      %v1510 = vpop.f32.mrf.mxu0
      %v1511 = vadd.f32 %v1414, %v1510
      %v1512 = vpop.f32.mrf.mxu0
      %v1513 = vpop.f32.mrf.mxu0
      %v1514 = vadd.f32 %v1417, %v1513
      %v1515 = vpop.f32.mrf.mxu0
      %1516 = vmatprep.mubr.bf16.mxu0 %v783
      %1517 = vmatmul.mubr.bf16.gmra.mxu0 %v782
      %v1518 = vpop.f32.mrf.mxu0
      %v1519 = vadd.f32 %v1422, %v1518
      %v1520 = vpop.f32.mrf.mxu0
      %v1521 = vpop.f32.mrf.mxu0
      %v1522 = vadd.f32 %v1425, %v1521
      %v1523 = vpop.f32.mrf.mxu0
      %1524 = vmatprep.mubr.bf16.mxu0 %v791
      %1525 = vmatmul.mubr.bf16.gmra.mxu0 %v790
      %v1526 = vpop.f32.mrf.mxu0
      %v1527 = vadd.f32 %v1430, %v1526
      %v1528 = vpop.f32.mrf.mxu0
      %v1529 = vpop.f32.mrf.mxu0
      %v1530 = vadd.f32 %v1433, %v1529
      %v1531 = vpop.f32.mrf.mxu0
      %1532 = vmatprep.mubr.bf16.mxu0 %v799
      %1533 = vmatmul.mubr.bf16.gmra.mxu0 %v798
      %v1534 = vpop.f32.mrf.mxu0
      %v1535 = vadd.f32 %v1438, %v1534
      %v1536 = vpop.f32.mrf.mxu0
      %v1537 = vpop.f32.mrf.mxu0
      %v1538 = vadd.f32 %v1441, %v1537
      %v1539 = vpop.f32.mrf.mxu0
      %1540 = vmatprep.mubr.bf16.mxu0 %v807
      %1541 = vmatmul.mubr.bf16.gmra.mxu0 %v806
      %v1542 = vpop.f32.mrf.mxu0
      %v1543 = vadd.f32 %v1446, %v1542
      %v1544 = vpop.f32.mrf.mxu0
      %v1545 = vpop.f32.mrf.mxu0
      %v1546 = vadd.f32 %v1449, %v1545
      %v1547 = vpop.f32.mrf.mxu0
      %1548 = vdwg.mxu0
      %1549 = vmatprep.subr.bf16.mxu0 0
      %1550 = vmatpush1.bf16.msra.mxu0 %v1185
      %1551 = vmatprep.subr.bf16.mxu0 0
      %1552 = vmatpush1.bf16.msra.mxu0 %v1184
      %1553 = vmatprep.subr.bf16.mxu0 0
      %1554 = vmatpush1.bf16.msra.mxu0 %v1183
      %1555 = vmatprep.subr.bf16.mxu0 0
      %1556 = vmatpush1.bf16.msra.mxu0 %v1182
      %1557 = vmatprep.subr.bf16.mxu0 0
      %1558 = vmatpush1.bf16.msra.mxu0 %v1181
      %1559 = vmatprep.subr.bf16.mxu0 0
      %1560 = vmatpush1.bf16.msra.mxu0 %v1180
      %1561 = vmatprep.subr.bf16.mxu0 0
      %1562 = vmatpush1.bf16.msra.mxu0 %v1179
      %1563 = vmatprep.subr.bf16.mxu0 0
      %1564 = vmatpush1.bf16.msra.mxu0 %v1178
      %1565 = vmatprep.subr.bf16.mxu0 0
      %1566 = vmatpush2.bf16.msra.mxu0 %v1193
      %1567 = vmatprep.subr.bf16.mxu0 0
      %1568 = vmatpush2.bf16.msra.mxu0 %v1192
      %1569 = vmatprep.subr.bf16.mxu0 0
      %1570 = vmatpush2.bf16.msra.mxu0 %v1191
      %1571 = vmatprep.subr.bf16.mxu0 0
      %1572 = vmatpush2.bf16.msra.mxu0 %v1190
      %1573 = vmatprep.subr.bf16.mxu0 0
      %1574 = vmatpush2.bf16.msra.mxu0 %v1189
      %1575 = vmatprep.subr.bf16.mxu0 0
      %1576 = vmatpush2.bf16.msra.mxu0 %v1188
      %1577 = vmatprep.subr.bf16.mxu0 0
      %1578 = vmatpush2.bf16.msra.mxu0 %v1187
      %1579 = vmatprep.subr.bf16.mxu0 0
      %1580 = vmatpush2.bf16.msra.mxu0 %v1186
      %1581 = vmatprep.mubr.bf16.mxu0 %v753
      %1582 = vmatmul.mubr.bf16.gmra.mxu0 %v752
      %v1583 = vpop.f32.mrf.mxu0
      %v1584 = vadd.f32 %v1487, %v1583
      %v1585 = vpop.f32.mrf.mxu0
      %v1586 = vpop.f32.mrf.mxu0
      %v1587 = vadd.f32 %v1490, %v1586
      %v1588 = vpop.f32.mrf.mxu0
      %1589 = vmatprep.mubr.bf16.mxu0 %v761
      %1590 = vmatmul.mubr.bf16.gmra.mxu0 %v760
      %v1591 = vpop.f32.mrf.mxu0
      %v1592 = vadd.f32 %v1495, %v1591
      %v1593 = vpop.f32.mrf.mxu0
      %v1594 = vpop.f32.mrf.mxu0
      %v1595 = vadd.f32 %v1498, %v1594
      %v1596 = vpop.f32.mrf.mxu0
      %1597 = vmatprep.mubr.bf16.mxu0 %v769
      %1598 = vmatmul.mubr.bf16.gmra.mxu0 %v768
      %v1599 = vpop.f32.mrf.mxu0
      %v1600 = vadd.f32 %v1503, %v1599
      %v1601 = vpop.f32.mrf.mxu0
      %v1602 = vpop.f32.mrf.mxu0
      %v1603 = vadd.f32 %v1506, %v1602
      %v1604 = vpop.f32.mrf.mxu0
      %1605 = vmatprep.mubr.bf16.mxu0 %v777
      %1606 = vmatmul.mubr.bf16.gmra.mxu0 %v776
      %v1607 = vpop.f32.mrf.mxu0
      %v1608 = vadd.f32 %v1511, %v1607
      %v1609 = vpop.f32.mrf.mxu0
      %v1610 = vpop.f32.mrf.mxu0
      %v1611 = vadd.f32 %v1514, %v1610
      %v1612 = vpop.f32.mrf.mxu0
      %1613 = vmatprep.mubr.bf16.mxu0 %v785
      %1614 = vmatmul.mubr.bf16.gmra.mxu0 %v784
      %v1615 = vpop.f32.mrf.mxu0
      %v1616 = vadd.f32 %v1519, %v1615
      %v1617 = vpop.f32.mrf.mxu0
      %v1618 = vpop.f32.mrf.mxu0
      %v1619 = vadd.f32 %v1522, %v1618
      %v1620 = vpop.f32.mrf.mxu0
      %1621 = vmatprep.mubr.bf16.mxu0 %v793
      %1622 = vmatmul.mubr.bf16.gmra.mxu0 %v792
      %v1623 = vpop.f32.mrf.mxu0
      %v1624 = vadd.f32 %v1527, %v1623
      %v1625 = vpop.f32.mrf.mxu0
      %v1626 = vpop.f32.mrf.mxu0
      %v1627 = vadd.f32 %v1530, %v1626
      %v1628 = vpop.f32.mrf.mxu0
      %1629 = vmatprep.mubr.bf16.mxu0 %v801
      %1630 = vmatmul.mubr.bf16.gmra.mxu0 %v800
      %v1631 = vpop.f32.mrf.mxu0
      %v1632 = vadd.f32 %v1535, %v1631
      %v1633 = vpop.f32.mrf.mxu0
      %v1634 = vpop.f32.mrf.mxu0
      %v1635 = vadd.f32 %v1538, %v1634
      %v1636 = vpop.f32.mrf.mxu0
      %1637 = vmatprep.mubr.bf16.mxu0 %v809
      %1638 = vmatmul.mubr.bf16.gmra.mxu0 %v808
      %v1639 = vpop.f32.mrf.mxu0
      %v1640 = vadd.f32 %v1543, %v1639
      %v1641 = vpop.f32.mrf.mxu0
      %v1642 = vpop.f32.mrf.mxu0
      %v1643 = vadd.f32 %v1546, %v1642
      %v1644 = vpop.f32.mrf.mxu0
      %1645 = vdwg.mxu0
      %v1646 = vadd.f32 %v346, %v1584
      %v1647 = vadd.f32 %v347, %v1587
      %v1648 = vadd.f32 %v348, %v1592
      %v1649 = vadd.f32 %v349, %v1595
      %v1650 = vadd.f32 %v350, %v1600
      %v1651 = vadd.f32 %v351, %v1603
      %v1652 = vadd.f32 %v352, %v1608
      %v1653 = vadd.f32 %v353, %v1611
      %v1654 = vadd.f32 %v354, %v1616
      %v1655 = vadd.f32 %v355, %v1619
      %v1656 = vadd.f32 %v356, %v1624
      %v1657 = vadd.f32 %v357, %v1627
      %v1658 = vadd.f32 %v358, %v1632
      %v1659 = vadd.f32 %v359, %v1635
      %v1660 = vadd.f32 %v360, %v1640
      %v1661 = vadd.f32 %v361, %v1643
      %1662 = vst [vmem:[#allocation2] sm:$0xff] %v1646
      %1663 = vst [vmem:[#allocation2 + $0x8] sm:$0xff] %v1647
      %1664 = vst [vmem:[#allocation2 + $0x10] sm:$0xff] %v1648
      %1665 = vst [vmem:[#allocation2 + $0x18] sm:$0xff] %v1649
      %1666 = vst [vmem:[#allocation2 + $0x20] sm:$0xff] %v1650
      %1667 = vst [vmem:[#allocation2 + $0x28] sm:$0xff] %v1651
      %1668 = vst [vmem:[#allocation2 + $0x30] sm:$0xff] %v1652
      %1669 = vst [vmem:[#allocation2 + $0x38] sm:$0xff] %v1653
      %1670 = vst [vmem:[#allocation2 + $0x40] sm:$0xff] %v1654
      %1671 = vst [vmem:[#allocation2 + $0x48] sm:$0xff] %v1655
      %1672 = vst [vmem:[#allocation2 + $0x50] sm:$0xff] %v1656
      %1673 = vst [vmem:[#allocation2 + $0x58] sm:$0xff] %v1657
      %1674 = vst [vmem:[#allocation2 + $0x60] sm:$0xff] %v1658
      %1675 = vst [vmem:[#allocation2 + $0x68] sm:$0xff] %v1659
      %1676 = vst [vmem:[#allocation2 + $0x70] sm:$0xff] %v1660
      %1677 = vst [vmem:[#allocation2 + $0x78] sm:$0xff] %v1661
      // Predicated region
      $region33: #{_lambda_.13} parent=27 // pred_check
        %p1678 = pneg %p326
      $region34: #{_lambda_.13} parent=27 // pred_check_branch
        %1680 = sbr.rel (%p1678) target = $region36
      $region35: #{_lambda_.13} parent=27 // pred_region
        %v1681 = vld [vmem:[#allocation2] sm:$0xff]
        %v1682 = vld [vmem:[#allocation2 + $0x8] sm:$0xff]
        %v1683 = vld [vmem:[#allocation2 + $0x10] sm:$0xff]
        %v1684 = vld [vmem:[#allocation2 + $0x18] sm:$0xff]
        %v1685 = vld [vmem:[#allocation2 + $0x20] sm:$0xff]
        %v1686 = vld [vmem:[#allocation2 + $0x28] sm:$0xff]
        %v1687 = vld [vmem:[#allocation2 + $0x30] sm:$0xff]
        %v1688 = vld [vmem:[#allocation2 + $0x38] sm:$0xff]
        %v1689 = vld [vmem:[#allocation2 + $0x40] sm:$0xff]
        %v1690 = vld [vmem:[#allocation2 + $0x48] sm:$0xff]
        %v1691 = vld [vmem:[#allocation2 + $0x50] sm:$0xff]
        %v1692 = vld [vmem:[#allocation2 + $0x58] sm:$0xff]
        %v1693 = vld [vmem:[#allocation2 + $0x60] sm:$0xff]
        %v1694 = vld [vmem:[#allocation2 + $0x68] sm:$0xff]
        %v1695 = vld [vmem:[#allocation2 + $0x70] sm:$0xff]
        %v1696 = vld [vmem:[#allocation2 + $0x78] sm:$0xff]
        %v1697 = vpack.c.bf16 %v1682, %v1681
        %v1698 = vpack.c.bf16 %v1684, %v1683
        %v1699 = vpack.c.bf16 %v1686, %v1685
        %v1700 = vpack.c.bf16 %v1688, %v1687
        %v1701 = vpack.c.bf16 %v1690, %v1689
        %v1702 = vpack.c.bf16 %v1692, %v1691
        %v1703 = vpack.c.bf16 %v1694, %v1693
        %v1704 = vpack.c.bf16 %v1696, %v1695
        %v1713 = vunpack.c.l.b16 %v1697
        %v1714 = vunpack.c.h.b16 %v1697
        %v1715 = vunpack.c.l.b16 %v1698
        %v1716 = vunpack.c.h.b16 %v1698
        %v1717 = vunpack.c.l.b16 %v1699
        %v1718 = vunpack.c.h.b16 %v1699
        %v1719 = vunpack.c.l.b16 %v1700
        %v1720 = vunpack.c.h.b16 %v1700
        %v1721 = vunpack.c.l.b16 %v1701
        %v1722 = vunpack.c.h.b16 %v1701
        %v1723 = vunpack.c.l.b16 %v1702
        %v1724 = vunpack.c.h.b16 %v1702
        %v1725 = vunpack.c.l.b16 %v1703
        %v1726 = vunpack.c.h.b16 %v1703
        %v1727 = vunpack.c.l.b16 %v1704
        %v1728 = vunpack.c.h.b16 %v1704
        %v1729 = vpack.c.b16 %v1713, %v1713
        %v1730 = vpack.c.b16 %v1714, %v1714
        %v1731 = vpack.c.b16 %v1715, %v1715
        %v1732 = vpack.c.b16 %v1716, %v1716
        %v1733 = vpack.c.b16 %v1717, %v1717
        %v1734 = vpack.c.b16 %v1718, %v1718
        %v1735 = vpack.c.b16 %v1719, %v1719
        %v1736 = vpack.c.b16 %v1720, %v1720
        %v1737 = vpack.c.b16 %v1721, %v1721
        %v1738 = vpack.c.b16 %v1722, %v1722
        %v1739 = vpack.c.b16 %v1723, %v1723
        %v1740 = vpack.c.b16 %v1724, %v1724
        %v1741 = vpack.c.b16 %v1725, %v1725
        %v1742 = vpack.c.b16 %v1726, %v1726
        %v1743 = vpack.c.b16 %v1727, %v1727
        %v1744 = vpack.c.b16 %v1728, %v1728
        %1761 = vst [vmem:[%s313] sm:$0xf] %v1729
        %1762 = vst [vmem:[%s313 + $0x4] sm:$0xf] %v1730
        %1763 = vst [vmem:[%s313 + $0x8] sm:$0xf] %v1731
        %1764 = vst [vmem:[%s313 + $0xc] sm:$0xf] %v1732
        %1765 = vst [vmem:[%s313 + $0x10] sm:$0xf] %v1733
        %1766 = vst [vmem:[%s313 + $0x14] sm:$0xf] %v1734
        %1767 = vst [vmem:[%s313 + $0x18] sm:$0xf] %v1735
        %1768 = vst [vmem:[%s313 + $0x1c] sm:$0xf] %v1736
        %1769 = vst [vmem:[%s313 + $0x20] sm:$0xf] %v1737
        %1770 = vst [vmem:[%s313 + $0x24] sm:$0xf] %v1738
        %1771 = vst [vmem:[%s313 + $0x28] sm:$0xf] %v1739
        %1772 = vst [vmem:[%s313 + $0x2c] sm:$0xf] %v1740
        %1773 = vst [vmem:[%s313 + $0x30] sm:$0xf] %v1741
        %1774 = vst [vmem:[%s313 + $0x34] sm:$0xf] %v1742
        %1775 = vst [vmem:[%s313 + $0x38] sm:$0xf] %v1743
        %1776 = vst [vmem:[%s313 + $0x3c] sm:$0xf] %v1744
        %v1777 = vadd.f32 %v1681, %v1682
        %v1778 = vadd.f32 %v1777, %v1683
        %v1779 = vadd.f32 %v1778, %v1684
        %v1780 = vadd.f32 %v1779, %v1685
        %v1781 = vadd.f32 %v1780, %v1686
        %v1782 = vadd.f32 %v1781, %v1687
        %v1783 = vadd.f32 %v1782, %v1688
        %v1784 = vadd.f32 %v1783, %v1689
        %v1785 = vadd.f32 %v1784, %v1690
        %v1786 = vadd.f32 %v1785, %v1691
        %v1787 = vadd.f32 %v1786, %v1692
        %v1788 = vadd.f32 %v1787, %v1693
        %v1789 = vadd.f32 %v1788, %v1694
        %v1790 = vadd.f32 %v1789, %v1695
        %v1791 = vadd.f32 %v1790, %v1696
        %v1792 = vrot.slane %v1791, 4
        %v1793 = vadd.f32 %v1791, %v1792
        %v1794 = vrot.slane %v1793, 2
        %v1795 = vadd.f32 %v1793, %v1794
        %v1796 = vrot.slane %v1795, 1
        %v1797 = vadd.f32 %v1795, %v1796
        %v1798 = vmul.f32 %v1681, %v1681
        %v1799 = vmul.f32 %v1682, %v1682
        %v1800 = vmul.f32 %v1683, %v1683
        %v1801 = vmul.f32 %v1684, %v1684
        %v1802 = vmul.f32 %v1685, %v1685
        %v1803 = vmul.f32 %v1686, %v1686
        %v1804 = vmul.f32 %v1687, %v1687
        %v1805 = vmul.f32 %v1688, %v1688
        %v1806 = vmul.f32 %v1689, %v1689
        %v1807 = vmul.f32 %v1690, %v1690
        %v1808 = vmul.f32 %v1691, %v1691
        %v1809 = vmul.f32 %v1692, %v1692
        %v1810 = vmul.f32 %v1693, %v1693
        %v1811 = vmul.f32 %v1694, %v1694
        %v1812 = vmul.f32 %v1695, %v1695
        %v1813 = vmul.f32 %v1696, %v1696
        %v1814 = vadd.f32 %v1798, %v1799
        %v1815 = vadd.f32 %v1814, %v1800
        %v1816 = vadd.f32 %v1815, %v1801
        %v1817 = vadd.f32 %v1816, %v1802
        %v1818 = vadd.f32 %v1817, %v1803
        %v1819 = vadd.f32 %v1818, %v1804
        %v1820 = vadd.f32 %v1819, %v1805
        %v1821 = vadd.f32 %v1820, %v1806
        %v1822 = vadd.f32 %v1821, %v1807
        %v1823 = vadd.f32 %v1822, %v1808
        %v1824 = vadd.f32 %v1823, %v1809
        %v1825 = vadd.f32 %v1824, %v1810
        %v1826 = vadd.f32 %v1825, %v1811
        %v1827 = vadd.f32 %v1826, %v1812
        %v1828 = vadd.f32 %v1827, %v1813
        %v1829 = vrot.slane %v1828, 4
        %v1830 = vadd.f32 %v1828, %v1829
        %v1831 = vrot.slane %v1830, 2
        %v1832 = vadd.f32 %v1830, %v1831
        %v1833 = vrot.slane %v1832, 1
        %v1834 = vadd.f32 %v1832, %v1833
        %v1835 = vlaneseq
        %v1836 = vshrl.u32 %v1835, 7
        %vm1837 = vcmp.eq.s32.totalorder %v1836, 0
        %vm1838 = vcmp.eq.s32.totalorder %v1836, 1
        %v1839 = vsel %vm1838, %v1834, 0.0
        %v1840 = vsel %vm1837, %v1797, %v1839
        %1841 = vst [vmem:[%s324] sm:$0xff] %v1840
      $region36: #{_lambda_.13} parent=27 // pred_fallthru
        _
      %s1842 = smul.u32 16, %s22
      %p1843 = scmp.lt.s32.totalorder %s21, 3
      %s1844 = scalar_select %p1843, %s21, 3
      %p1845 = scmp.lt.s32.totalorder %s1842, 15
      %s1846 = scalar_select %p1845, %s1842, 15
      %p1847 = scmp.lt.s32.totalorder %s23, 0
      %s1848 = scalar_select %p1847, %s23, 0
      %s1849 = sadd.s32 %s1848, %s1846
      %s1850 = smul.addr %s1844, 16
      %s1851 = sadd.s32 %s1849, %s1850
      %s1852 = smul.addr %s1851, 4
      %s1853 = scalar_lea.vmem %s2, %s1852
      %p1854 = scmp.lt.s32.totalorder %s21, 3
      %s1855 = scalar_select %p1854, %s21, 3
      %p1856 = scmp.lt.s32.totalorder %s22, 0
      %s1857 = scalar_select %p1856, %s22, 0
      %p1858 = scmp.lt.s32.totalorder %s23, 0
      %s1859 = scalar_select %p1858, %s23, 0
      %s1860 = sadd.s32 %s1859, %s1857
      %s1861 = sadd.s32 %s1860, %s1855
      %s1862 = smul.addr %s1861, 8
      %s1863 = scalar_lea.vmem %s3, %s1862
      // Predicated region
      $region37: #{_lambda_.13} parent=27 // pred_check
        %p1864 = pneg %p123
      $region38: #{_lambda_.13} parent=27 // pred_check_branch
        %1866 = sbr.rel (%p1864) target = $region40
      $region39: #{_lambda_.13} parent=27 // pred_region
        %s1867 = smul.u32 16, %s22
      $region40: #{_lambda_.13} parent=27 // pred_fallthru
        _
      // Predicated region
      $region41: #{_lambda_.13} parent=27 // pred_check
        %p1868 = pneg %p153
      $region42: #{_lambda_.13} parent=27 // pred_check_branch
        %1870 = sbr.rel (%p1868) target = $region44
      $region43: #{_lambda_.13} parent=27 // pred_region
        _
      $region44: #{_lambda_.13} parent=27 // pred_fallthru
        _
    $region28: #{_lambda_.13} parent=5 // pred_fallthru
      _
    %p1871 = scmp.le.s32.totalorder 2, %s10
    // Predicated region
    $region45: #{_lambda_.13} parent=5 // pred_check
      %p1872 = pneg %p1871
    $region46: #{_lambda_.13} parent=5 // pred_check_branch
      %1874 = sbr.rel (%p1872) target = $region48
    $region47: #{_lambda_.13} parent=5 // pred_region
      %s1875 = ssub.s32 %s10, 2
      // Predicated region
      $region49: #{_lambda_.13} parent=47 // pred_check
        %p1876 = pneg %p129
      $region50: #{_lambda_.13} parent=47 // pred_check_branch
        %1878 = sbr.rel (%p1876) target = $region52
      $region51: #{_lambda_.13} parent=47 // pred_region
        %s1879 = smul.u32 16, %s26
        %p1880 = scmp.lt.s32.totalorder %s25, 3
        %s1881 = scalar_select %p1880, %s25, 3
        %p1882 = scmp.lt.s32.totalorder %s1879, 15
        %s1883 = scalar_select %p1882, %s1879, 15
        %p1884 = scmp.lt.s32.totalorder %s27, 0
        %s1885 = scalar_select %p1884, %s27, 0
        %s1886 = sadd.s32 %s1885, %s1883
        %s1887 = smul.addr %s1881, 16
        %s1888 = sadd.s32 %s1886, %s1887
        %s1889 = smul.addr %s1888, 4
        %s1890 = scalar_lea.vmem %s2, %s1889
      $region52: #{_lambda_.13} parent=47 // pred_fallthru
        _
      // Predicated region
      $region53: #{_lambda_.13} parent=47 // pred_check
        %p1891 = pneg %p159
      $region54: #{_lambda_.13} parent=47 // pred_check_branch
        %1893 = sbr.rel (%p1891) target = $region56
      $region55: #{_lambda_.13} parent=47 // pred_region
        %p1894 = scmp.lt.s32.totalorder %s25, 3
        %s1895 = scalar_select %p1894, %s25, 3
        %p1896 = scmp.lt.s32.totalorder %s26, 0
        %s1897 = scalar_select %p1896, %s26, 0
        %p1898 = scmp.lt.s32.totalorder %s27, 0
        %s1899 = scalar_select %p1898, %s27, 0
        %s1900 = sadd.s32 %s1899, %s1897
        %s1901 = sadd.s32 %s1900, %s1895
        %s1902 = smul.addr %s1901, 8
        %s1903 = scalar_lea.vmem %s3, %s1902
      $region56: #{_lambda_.13} parent=47 // pred_fallthru
        _
    $region48: #{_lambda_.13} parent=5 // pred_fallthru
      _
  $region6: #{_lambda_.13} parent=0 // loop_footer
    %s14 = sadd.s32 1, %s10
  $region7: #{_lambda_.13} parent=0 // loop_footer_branch
    %9 = sbr.rel target = $region3
  $region8: #{_lambda_.13} parent=0 // loop_exit
    _

// kernel: _lambda_.15
$region0: #{_lambda_.15}
  #allocation0 [shape = 'u32[]', space=smem, size = 0x4, offset = 0x4, fixed_abs, tag = 'smem constant byte address 0x4 - core index']
  #allocation1 [shape = 'u32[144,128]{1,0:T(1,128)}', space=vmem, size = 0x12000, scoped, tag = 'internal scratch']
  #allocation2 [shape = 'f32[256,128]{1,0:T(8,128)}', space=vmem, size = 0x20000, scoped, tag = 'scratch operand']
  %s0 = inlined_call_operand.vmem [shape: bf16[4,512,512], index: 0, kind: input, shape index: {}]
  %s1 = inlined_call_operand.vmem [shape: bf16[4,512,128], index: 1, kind: input, shape index: {}]
  %s2 = inlined_call_operand.vmem [shape: bf16[4,512,128], index: 2, kind: output, shape index: {0}]
  %s3 = inlined_call_operand.vmem [shape: f32[4,2,8,128], index: 3, kind: output, shape index: {1}]
  %4 = xla_tuple %s2, %s3
  %s5 = sld [smem:[#allocation0]]
  $region57: #{_lambda_.15} parent=0
    _
  %s7 = ssub.s32 1, %s5
  %s8 = scalar_select 0, %s7, %s5
  loop: start=0, step=1, limit=10
  $region2: #{_lambda_.15} parent=0 // loop_pre_header
    _
  $region3: #{_lambda_.15} parent=0 // loop_header
    %s10 = sphi 0, %s14
    %p11 = scmp.ge.s32.totalorder %s10, 10
    %s17 = sphi 0, %s43
    %s18 = sphi 0, %s39
    %s19 = sphi 0, %s35
    %s20 = sphi 0, %s31
    %s21 = sphi 0, %s17
    %s22 = sphi 0, %s18
    %s23 = sphi 0, %s19
    %s24 = sphi 0, %s20
    %s25 = sphi 0, %s21
    %s26 = sphi 0, %s22
    %s27 = sphi 0, %s23
    %s28 = sphi 0, %s24
    %s50 = sphi 0, %s52
    %s53 = sphi 0, %s50
    %s54 = sphi 0, %s53
    %s70 = sphi 0, %s54
    %s80 = sphi 0, %s82
    %s83 = sphi 0, %s80
    %s84 = sphi 0, %s83
    %s100 = sphi 0, %s84
    %s110 = sphi 0, %s112
    %s113 = sphi 0, %s110
    %s114 = sphi 0, %s113
    %s130 = sphi 0, %s114
    %s140 = sphi 0, %s142
    %s143 = sphi 0, %s140
    %s144 = sphi 0, %s143
    %s160 = sphi 0, %s144
  $region4: #{_lambda_.15} parent=0 // loop_header_branch
    %13 = sbr.rel (%p11) target = $region8
  $region5: #{_lambda_.15} parent=0 // loop_body
    %s15 = ssub.s32 %s10, 1
    %s16 = ssub.s32 %s10, 2
    %s29 = sadd.s32 1, %s20
    %p30 = scmp.ge.s32.totalorder %s29, 1
    %s31 = scalar_select %p30, 0, %s29
    %s32 = sadd.s32 1, %s19
    %s33 = scalar_select %p30, %s32, %s19
    %p34 = scmp.ge.s32.totalorder %s33, 1
    %s35 = scalar_select %p34, 0, %s33
    %s36 = sadd.s32 1, %s18
    %s37 = scalar_select %p34, %s36, %s18
    %p38 = scmp.ge.s32.totalorder %s37, 2
    %s39 = scalar_select %p38, 0, %s37
    %s40 = sadd.s32 1, %s17
    %s41 = scalar_select %p38, %s40, %s17
    %p42 = scmp.ge.s32.totalorder %s41, 4
    %s43 = scalar_select %p42, 0, %s41
    %s44 = ssub.s32 %s17, %s43
    %s45 = ssub.s32 %s18, %s39
    %s46 = sor.u32 %s44, %s45
    %s47 = ssub.s32 %s20, %s31
    %s48 = sor.u32 %s46, %s47
    %p49 = scmp.eq.s32.totalorder %s48, 0
    %s51 = sadd.s32 %s50, 1
    %s52 = scalar_select %p49, %s50, %s51
    %p55 = pneg %p49
    %p56 = scmp.eq.s32.totalorder %s10, 7
    %p57 = por %p55, %p56
    %p58 = scmp.ne.s32.totalorder %s50, %s53
    %p59 = scmp.eq.s32.totalorder %s10, 0
    %p60 = por %p58, %p59
    %p61 = scmp.ne.s32.totalorder %s50, %s53
    %p62 = scmp.eq.s32.totalorder %s15, 7
    %p63 = por %p61, %p62
    %p64 = scmp.ne.s32.totalorder %s53, %s54
    %p65 = scmp.eq.s32.totalorder %s15, 0
    %p66 = por %p64, %p65
    %p67 = scmp.ne.s32.totalorder %s53, %s54
    %p68 = scmp.eq.s32.totalorder %s16, 7
    %p69 = por %p67, %p68
    %p71 = scmp.ne.s32.totalorder %s54, %s70
    %p72 = scmp.eq.s32.totalorder %s16, 0
    %p73 = por %p71, %p72
    %s74 = ssub.s32 %s17, %s43
    %s75 = ssub.s32 %s20, %s31
    %s76 = sor.u32 %s74, %s75
    %s77 = ssub.s32 %s19, %s35
    %s78 = sor.u32 %s76, %s77
    %p79 = scmp.eq.s32.totalorder %s78, 0
    %s81 = sadd.s32 %s80, 1
    %s82 = scalar_select %p79, %s80, %s81
    %p85 = pneg %p79
    %p86 = scmp.eq.s32.totalorder %s10, 7
    %p87 = por %p85, %p86
    %p88 = scmp.ne.s32.totalorder %s80, %s83
    %p89 = scmp.eq.s32.totalorder %s10, 0
    %p90 = por %p88, %p89
    %p91 = scmp.ne.s32.totalorder %s80, %s83
    %p92 = scmp.eq.s32.totalorder %s15, 7
    %p93 = por %p91, %p92
    %p94 = scmp.ne.s32.totalorder %s83, %s84
    %p95 = scmp.eq.s32.totalorder %s15, 0
    %p96 = por %p94, %p95
    %p97 = scmp.ne.s32.totalorder %s83, %s84
    %p98 = scmp.eq.s32.totalorder %s16, 7
    %p99 = por %p97, %p98
    %p101 = scmp.ne.s32.totalorder %s84, %s100
    %p102 = scmp.eq.s32.totalorder %s16, 0
    %p103 = por %p101, %p102
    %s104 = ssub.s32 %s17, %s43
    %s105 = ssub.s32 %s18, %s39
    %s106 = sor.u32 %s104, %s105
    %s107 = ssub.s32 %s19, %s35
    %s108 = sor.u32 %s106, %s107
    %p109 = scmp.eq.s32.totalorder %s108, 0
    %s111 = sadd.s32 %s110, 1
    %s112 = scalar_select %p109, %s110, %s111
    %p115 = pneg %p109
    %p116 = scmp.eq.s32.totalorder %s10, 7
    %p117 = por %p115, %p116
    %p118 = scmp.ne.s32.totalorder %s110, %s113
    %p119 = scmp.eq.s32.totalorder %s10, 0
    %p120 = por %p118, %p119
    %p121 = scmp.ne.s32.totalorder %s110, %s113
    %p122 = scmp.eq.s32.totalorder %s15, 7
    %p123 = por %p121, %p122
    %p124 = scmp.ne.s32.totalorder %s113, %s114
    %p125 = scmp.eq.s32.totalorder %s15, 0
    %p126 = por %p124, %p125
    %p127 = scmp.ne.s32.totalorder %s113, %s114
    %p128 = scmp.eq.s32.totalorder %s16, 7
    %p129 = por %p127, %p128
    %p131 = scmp.ne.s32.totalorder %s114, %s130
    %p132 = scmp.eq.s32.totalorder %s16, 0
    %p133 = por %p131, %p132
    %s134 = ssub.s32 %s17, %s43
    %s135 = ssub.s32 %s18, %s39
    %s136 = sor.u32 %s134, %s135
    %s137 = ssub.s32 %s19, %s35
    %s138 = sor.u32 %s136, %s137
    %p139 = scmp.eq.s32.totalorder %s138, 0
    %s141 = sadd.s32 %s140, 1
    %s142 = scalar_select %p139, %s140, %s141
    %p145 = pneg %p139
    %p146 = scmp.eq.s32.totalorder %s10, 7
    %p147 = por %p145, %p146
    %p148 = scmp.ne.s32.totalorder %s140, %s143
    %p149 = scmp.eq.s32.totalorder %s10, 0
    %p150 = por %p148, %p149
    %p151 = scmp.ne.s32.totalorder %s140, %s143
    %p152 = scmp.eq.s32.totalorder %s15, 7
    %p153 = por %p151, %p152
    %p154 = scmp.ne.s32.totalorder %s143, %s144
    %p155 = scmp.eq.s32.totalorder %s15, 0
    %p156 = por %p154, %p155
    %p157 = scmp.ne.s32.totalorder %s143, %s144
    %p158 = scmp.eq.s32.totalorder %s16, 7
    %p159 = por %p157, %p158
    %p161 = scmp.ne.s32.totalorder %s144, %s160
    %p162 = scmp.eq.s32.totalorder %s16, 0
    %p163 = por %p161, %p162
    %p164 = scmp.le.s32.totalorder 1, %s10
    %p165 = scmp.lt.s32.totalorder %s10, 9
    %p166 = pnand %p164, %p165
    %p167 = pneg %p166
    // Predicated region
    $region9: #{_lambda_.15} parent=5 // pred_check
      _
    $region10: #{_lambda_.15} parent=5 // pred_check_branch
      %169 = sbr.rel (%p166) target = $region12
    $region11: #{_lambda_.15} parent=5 // pred_region
      %s170 = ssub.s32 %s10, 1
    $region12: #{_lambda_.15} parent=5 // pred_fallthru
      _
    %p171 = scmp.lt.s32.totalorder %s10, 8
    // Predicated region
    $region13: #{_lambda_.15} parent=5 // pred_check
      %p172 = pneg %p171
    $region14: #{_lambda_.15} parent=5 // pred_check_branch
      %174 = sbr.rel (%p172) target = $region16
    $region15: #{_lambda_.15} parent=5 // pred_region
      // Predicated region
      $region17: #{_lambda_.15} parent=15 // pred_check
        %p175 = pneg %p60
      $region18: #{_lambda_.15} parent=15 // pred_check_branch
        %177 = sbr.rel (%p175) target = $region20
      $region19: #{_lambda_.15} parent=15 // pred_region
        %s178 = smul.u32 32, %s18
        %s179 = smul.u32 4, %s20
        %p180 = scmp.lt.s32.totalorder %s17, 3
        %s181 = scalar_select %p180, %s17, 3
        %p182 = scmp.lt.s32.totalorder %s178, 63
        %s183 = scalar_select %p182, %s178, 63
        %p184 = scmp.lt.s32.totalorder %s179, 3
        %s185 = scalar_select %p184, %s179, 3
        %s186 = smul.addr %s183, 4
        %s187 = sadd.s32 %s185, %s186
        %s188 = smul.addr %s181, 256
        %s189 = sadd.s32 %s187, %s188
        %s190 = smul.addr %s189, 4
        %s191 = scalar_lea.vmem %s0, %s190
        %s192 = smul.u32 32, %s18
        %s193 = smul.u32 4, %s20
      $region20: #{_lambda_.15} parent=15 // pred_fallthru
        _
      // Predicated region
      $region21: #{_lambda_.15} parent=15 // pred_check
        %p194 = pneg %p90
      $region22: #{_lambda_.15} parent=15 // pred_check_branch
        %196 = sbr.rel (%p194) target = $region24
      $region23: #{_lambda_.15} parent=15 // pred_region
        %s197 = smul.u32 64, %s20
        %p198 = scmp.lt.s32.totalorder %s17, 3
        %s199 = scalar_select %p198, %s17, 3
        %p200 = scmp.lt.s32.totalorder %s197, 63
        %s201 = scalar_select %p200, %s197, 63
        %p202 = scmp.lt.s32.totalorder %s19, 0
        %s203 = scalar_select %p202, %s19, 0
        %s204 = sadd.s32 %s203, %s201
        %s205 = smul.addr %s199, 64
        %s206 = sadd.s32 %s204, %s205
        %s207 = smul.addr %s206, 4
        %s208 = scalar_lea.vmem %s1, %s207
        %s209 = smul.u32 64, %s20
      $region24: #{_lambda_.15} parent=15 // pred_fallthru
        _
    $region16: #{_lambda_.15} parent=5 // pred_fallthru
      _
    %p210 = scmp.le.s32.totalorder 1, %s10
    %p211 = scmp.lt.s32.totalorder %s10, 9
    %p212 = pnand %p210, %p211
    %p213 = pneg %p212
    // Predicated region
    $region25: #{_lambda_.15} parent=5 // pred_check
      _
    $region26: #{_lambda_.15} parent=5 // pred_check_branch
      %215 = sbr.rel (%p212) target = $region28
    $region27: #{_lambda_.15} parent=5 // pred_region
      %s216 = ssub.s32 %s10, 1
      %s217 = smul.u32 32, %s22
      %s218 = smul.u32 4, %s24
      %p219 = scmp.lt.s32.totalorder %s21, 3
      %s220 = scalar_select %p219, %s21, 3
      %p221 = scmp.lt.s32.totalorder %s217, 63
      %s222 = scalar_select %p221, %s217, 63
      %p223 = scmp.lt.s32.totalorder %s218, 3
      %s224 = scalar_select %p223, %s218, 3
      %s225 = smul.addr %s222, 4
      %s226 = sadd.s32 %s224, %s225
      %s227 = smul.addr %s220, 256
      %s228 = sadd.s32 %s226, %s227
      %s229 = smul.addr %s228, 4
      %s230 = scalar_lea.vmem %s0, %s229
      %p231 = pneg %p66
      %p232 = pneg %p63
      %s233 = smul.u32 64, %s24
      %p234 = scmp.lt.s32.totalorder %s21, 3
      %s235 = scalar_select %p234, %s21, 3
      %p236 = scmp.lt.s32.totalorder %s233, 63
      %s237 = scalar_select %p236, %s233, 63
      %p238 = scmp.lt.s32.totalorder %s23, 0
      %s239 = scalar_select %p238, %s23, 0
      %s240 = sadd.s32 %s239, %s237
      %s241 = smul.addr %s235, 64
      %s242 = sadd.s32 %s240, %s241
      %s243 = smul.addr %s242, 4
      %s244 = scalar_lea.vmem %s1, %s243
      %p245 = pneg %p96
      %p246 = pneg %p93
      %p247 = pneg %p126
      %p248 = pneg %p123
      %s249 = smul.u32 32, %s22
      %p250 = scmp.lt.s32.totalorder %s21, 3
      %s251 = scalar_select %p250, %s21, 3
      %p252 = scmp.lt.s32.totalorder %s249, 63
      %s253 = scalar_select %p252, %s249, 63
      %p254 = scmp.lt.s32.totalorder %s23, 0
      %s255 = scalar_select %p254, %s23, 0
      %s256 = sadd.s32 %s255, %s253
      %s257 = smul.addr %s251, 64
      %s258 = sadd.s32 %s256, %s257
      %s259 = smul.addr %s258, 4
      %s260 = scalar_lea.vmem %s2, %s259
      %p261 = pneg %p156
      %p262 = pneg %p153
      %p263 = scmp.lt.s32.totalorder %s21, 3
      %s264 = scalar_select %p263, %s21, 3
      %p265 = scmp.lt.s32.totalorder %s22, 1
      %s266 = scalar_select %p265, %s22, 1
      %p267 = scmp.lt.s32.totalorder %s23, 0
      %s268 = scalar_select %p267, %s23, 0
      %s269 = sadd.s32 %s268, %s266
      %s270 = smul.addr %s264, 2
      %s271 = sadd.s32 %s269, %s270
      %s272 = smul.addr %s271, 8
      %s273 = scalar_lea.vmem %s3, %s272
      %s274 = smul.u32 32, %s22
      %s275 = smul.u32 4, %s24
      %p276 = scmp.lt.s32.totalorder %s21, 3
      %s277 = scalar_select %p276, %s21, 3
      %p278 = scmp.lt.s32.totalorder %s274, 63
      %s279 = scalar_select %p278, %s274, 63
      %p280 = scmp.lt.s32.totalorder %s275, 3
      %s281 = scalar_select %p280, %s275, 3
      %s282 = smul.addr %s279, 4
      %s283 = sadd.s32 %s281, %s282
      %s284 = smul.addr %s277, 256
      %s285 = sadd.s32 %s283, %s284
      %s286 = smul.addr %s285, 4
      %s287 = scalar_lea.vmem %s0, %s286
      %s288 = smul.u32 32, %s22
      %s289 = smul.u32 4, %s24
      %s290 = smul.u32 64, %s24
      %p291 = scmp.lt.s32.totalorder %s21, 3
      %s292 = scalar_select %p291, %s21, 3
      %p293 = scmp.lt.s32.totalorder %s290, 63
      %s294 = scalar_select %p293, %s290, 63
      %p295 = scmp.lt.s32.totalorder %s23, 0
      %s296 = scalar_select %p295, %s23, 0
      %s297 = sadd.s32 %s296, %s294
      %s298 = smul.addr %s292, 64
      %s299 = sadd.s32 %s297, %s298
      %s300 = smul.addr %s299, 4
      %s301 = scalar_lea.vmem %s1, %s300
      %s302 = smul.u32 64, %s24
      %s303 = smul.u32 32, %s22
      %p304 = scmp.lt.s32.totalorder %s21, 3
      %s305 = scalar_select %p304, %s21, 3
      %p306 = scmp.lt.s32.totalorder %s303, 63
      %s307 = scalar_select %p306, %s303, 63
      %p308 = scmp.lt.s32.totalorder %s23, 0
      %s309 = scalar_select %p308, %s23, 0
      %s310 = sadd.s32 %s309, %s307
      %s311 = smul.addr %s305, 64
      %s312 = sadd.s32 %s310, %s311
      %s313 = smul.addr %s312, 4
      %s314 = scalar_lea.vmem %s2, %s313
      %s315 = smul.u32 32, %s22
      %p316 = scmp.lt.s32.totalorder %s21, 3
      %s317 = scalar_select %p316, %s21, 3
      %p318 = scmp.lt.s32.totalorder %s22, 1
      %s319 = scalar_select %p318, %s22, 1
      %p320 = scmp.lt.s32.totalorder %s23, 0
      %s321 = scalar_select %p320, %s23, 0
      %s322 = sadd.s32 %s321, %s319
      %s323 = smul.addr %s317, 2
      %s324 = sadd.s32 %s322, %s323
      %s325 = smul.addr %s324, 8
      %s326 = scalar_lea.vmem %s3, %s325
      %p328 = scmp.eq.s32.totalorder %s24, 0
      // Predicated region
      $region29: #{_lambda_.15} parent=27 // pred_check
        %p329 = pneg %p328
      $region30: #{_lambda_.15} parent=27 // pred_check_branch
        %331 = sbr.rel (%p329) target = $region32
      $region31: #{_lambda_.15} parent=27 // pred_region
        %332 = vst [vmem:[#allocation2] sm:$0xff] 0.0
        %333 = vst [vmem:[#allocation2 + $0x8] sm:$0xff] 0.0
        %334 = vst [vmem:[#allocation2 + $0x10] sm:$0xff] 0.0
        %335 = vst [vmem:[#allocation2 + $0x18] sm:$0xff] 0.0
        %336 = vst [vmem:[#allocation2 + $0x20] sm:$0xff] 0.0
        %337 = vst [vmem:[#allocation2 + $0x28] sm:$0xff] 0.0
        %338 = vst [vmem:[#allocation2 + $0x30] sm:$0xff] 0.0
        %339 = vst [vmem:[#allocation2 + $0x38] sm:$0xff] 0.0
        %340 = vst [vmem:[#allocation2 + $0x40] sm:$0xff] 0.0
        %341 = vst [vmem:[#allocation2 + $0x48] sm:$0xff] 0.0
        %342 = vst [vmem:[#allocation2 + $0x50] sm:$0xff] 0.0
        %343 = vst [vmem:[#allocation2 + $0x58] sm:$0xff] 0.0
        %344 = vst [vmem:[#allocation2 + $0x60] sm:$0xff] 0.0
        %345 = vst [vmem:[#allocation2 + $0x68] sm:$0xff] 0.0
        %346 = vst [vmem:[#allocation2 + $0x70] sm:$0xff] 0.0
        %347 = vst [vmem:[#allocation2 + $0x78] sm:$0xff] 0.0
        %348 = vst [vmem:[#allocation2 + $0x80] sm:$0xff] 0.0
        %349 = vst [vmem:[#allocation2 + $0x88] sm:$0xff] 0.0
        %350 = vst [vmem:[#allocation2 + $0x90] sm:$0xff] 0.0
        %351 = vst [vmem:[#allocation2 + $0x98] sm:$0xff] 0.0
        %352 = vst [vmem:[#allocation2 + $0xa0] sm:$0xff] 0.0
        %353 = vst [vmem:[#allocation2 + $0xa8] sm:$0xff] 0.0
        %354 = vst [vmem:[#allocation2 + $0xb0] sm:$0xff] 0.0
        %355 = vst [vmem:[#allocation2 + $0xb8] sm:$0xff] 0.0
        %356 = vst [vmem:[#allocation2 + $0xc0] sm:$0xff] 0.0
        %357 = vst [vmem:[#allocation2 + $0xc8] sm:$0xff] 0.0
        %358 = vst [vmem:[#allocation2 + $0xd0] sm:$0xff] 0.0
        %359 = vst [vmem:[#allocation2 + $0xd8] sm:$0xff] 0.0
        %360 = vst [vmem:[#allocation2 + $0xe0] sm:$0xff] 0.0
        %361 = vst [vmem:[#allocation2 + $0xe8] sm:$0xff] 0.0
        %362 = vst [vmem:[#allocation2 + $0xf0] sm:$0xff] 0.0
        %363 = vst [vmem:[#allocation2 + $0xf8] sm:$0xff] 0.0
      $region32: #{_lambda_.15} parent=27 // pred_fallthru
        _
      %v364 = vld [vmem:[#allocation2] sm:$0xff]
      %v365 = vld [vmem:[#allocation2 + $0x8] sm:$0xff]
      %v366 = vld [vmem:[#allocation2 + $0x10] sm:$0xff]
      %v367 = vld [vmem:[#allocation2 + $0x18] sm:$0xff]
      %v368 = vld [vmem:[#allocation2 + $0x20] sm:$0xff]
      %v369 = vld [vmem:[#allocation2 + $0x28] sm:$0xff]
      %v370 = vld [vmem:[#allocation2 + $0x30] sm:$0xff]
      %v371 = vld [vmem:[#allocation2 + $0x38] sm:$0xff]
      %v372 = vld [vmem:[#allocation2 + $0x40] sm:$0xff]
      %v373 = vld [vmem:[#allocation2 + $0x48] sm:$0xff]
      %v374 = vld [vmem:[#allocation2 + $0x50] sm:$0xff]
      %v375 = vld [vmem:[#allocation2 + $0x58] sm:$0xff]
      %v376 = vld [vmem:[#allocation2 + $0x60] sm:$0xff]
      %v377 = vld [vmem:[#allocation2 + $0x68] sm:$0xff]
      %v378 = vld [vmem:[#allocation2 + $0x70] sm:$0xff]
      %v379 = vld [vmem:[#allocation2 + $0x78] sm:$0xff]
      %v380 = vld [vmem:[#allocation2 + $0x80] sm:$0xff]
      %v381 = vld [vmem:[#allocation2 + $0x88] sm:$0xff]
      %v382 = vld [vmem:[#allocation2 + $0x90] sm:$0xff]
      %v383 = vld [vmem:[#allocation2 + $0x98] sm:$0xff]
      %v384 = vld [vmem:[#allocation2 + $0xa0] sm:$0xff]
      %v385 = vld [vmem:[#allocation2 + $0xa8] sm:$0xff]
      %v386 = vld [vmem:[#allocation2 + $0xb0] sm:$0xff]
      %v387 = vld [vmem:[#allocation2 + $0xb8] sm:$0xff]
      %v388 = vld [vmem:[#allocation2 + $0xc0] sm:$0xff]
      %v389 = vld [vmem:[#allocation2 + $0xc8] sm:$0xff]
      %v390 = vld [vmem:[#allocation2 + $0xd0] sm:$0xff]
      %v391 = vld [vmem:[#allocation2 + $0xd8] sm:$0xff]
      %v392 = vld [vmem:[#allocation2 + $0xe0] sm:$0xff]
      %v393 = vld [vmem:[#allocation2 + $0xe8] sm:$0xff]
      %v394 = vld [vmem:[#allocation2 + $0xf0] sm:$0xff]
      %v395 = vld [vmem:[#allocation2 + $0xf8] sm:$0xff]
      %v396 = vld [vmem:[%s287] sm:$0xff]
      %v397 = vld [vmem:[%s287 + $0x8] sm:$0xff]
      %v398 = vld [vmem:[%s287 + $0x10] sm:$0xff]
      %v399 = vld [vmem:[%s287 + $0x18] sm:$0xff]
      %v400 = vld [vmem:[%s287 + $0x20] sm:$0xff]
      %v401 = vld [vmem:[%s287 + $0x28] sm:$0xff]
      %v402 = vld [vmem:[%s287 + $0x30] sm:$0xff]
      %v403 = vld [vmem:[%s287 + $0x38] sm:$0xff]
      %v404 = vld [vmem:[%s287 + $0x40] sm:$0xff]
      %v405 = vld [vmem:[%s287 + $0x48] sm:$0xff]
      %v406 = vld [vmem:[%s287 + $0x50] sm:$0xff]
      %v407 = vld [vmem:[%s287 + $0x58] sm:$0xff]
      %v408 = vld [vmem:[%s287 + $0x60] sm:$0xff]
      %v409 = vld [vmem:[%s287 + $0x68] sm:$0xff]
      %v410 = vld [vmem:[%s287 + $0x70] sm:$0xff]
      %v411 = vld [vmem:[%s287 + $0x78] sm:$0xff]
      %v412 = vld [vmem:[%s287 + $0x80] sm:$0xff]
      %v413 = vld [vmem:[%s287 + $0x88] sm:$0xff]
      %v414 = vld [vmem:[%s287 + $0x90] sm:$0xff]
      %v415 = vld [vmem:[%s287 + $0x98] sm:$0xff]
      %v416 = vld [vmem:[%s287 + $0xa0] sm:$0xff]
      %v417 = vld [vmem:[%s287 + $0xa8] sm:$0xff]
      %v418 = vld [vmem:[%s287 + $0xb0] sm:$0xff]
      %v419 = vld [vmem:[%s287 + $0xb8] sm:$0xff]
      %v420 = vld [vmem:[%s287 + $0xc0] sm:$0xff]
      %v421 = vld [vmem:[%s287 + $0xc8] sm:$0xff]
      %v422 = vld [vmem:[%s287 + $0xd0] sm:$0xff]
      %v423 = vld [vmem:[%s287 + $0xd8] sm:$0xff]
      %v424 = vld [vmem:[%s287 + $0xe0] sm:$0xff]
      %v425 = vld [vmem:[%s287 + $0xe8] sm:$0xff]
      %v426 = vld [vmem:[%s287 + $0xf0] sm:$0xff]
      %v427 = vld [vmem:[%s287 + $0xf8] sm:$0xff]
      %v428 = vld [vmem:[%s287 + $0x100] sm:$0xff]
      %v429 = vld [vmem:[%s287 + $0x108] sm:$0xff]
      %v430 = vld [vmem:[%s287 + $0x110] sm:$0xff]
      %v431 = vld [vmem:[%s287 + $0x118] sm:$0xff]
      %v432 = vld [vmem:[%s287 + $0x120] sm:$0xff]
      %v433 = vld [vmem:[%s287 + $0x128] sm:$0xff]
      %v434 = vld [vmem:[%s287 + $0x130] sm:$0xff]
      %v435 = vld [vmem:[%s287 + $0x138] sm:$0xff]
      %v436 = vld [vmem:[%s287 + $0x140] sm:$0xff]
      %v437 = vld [vmem:[%s287 + $0x148] sm:$0xff]
      %v438 = vld [vmem:[%s287 + $0x150] sm:$0xff]
      %v439 = vld [vmem:[%s287 + $0x158] sm:$0xff]
      %v440 = vld [vmem:[%s287 + $0x160] sm:$0xff]
      %v441 = vld [vmem:[%s287 + $0x168] sm:$0xff]
      %v442 = vld [vmem:[%s287 + $0x170] sm:$0xff]
      %v443 = vld [vmem:[%s287 + $0x178] sm:$0xff]
      %v444 = vld [vmem:[%s287 + $0x180] sm:$0xff]
      %v445 = vld [vmem:[%s287 + $0x188] sm:$0xff]
      %v446 = vld [vmem:[%s287 + $0x190] sm:$0xff]
      %v447 = vld [vmem:[%s287 + $0x198] sm:$0xff]
      %v448 = vld [vmem:[%s287 + $0x1a0] sm:$0xff]
      %v449 = vld [vmem:[%s287 + $0x1a8] sm:$0xff]
      %v450 = vld [vmem:[%s287 + $0x1b0] sm:$0xff]
      %v451 = vld [vmem:[%s287 + $0x1b8] sm:$0xff]
      %v452 = vld [vmem:[%s287 + $0x1c0] sm:$0xff]
      %v453 = vld [vmem:[%s287 + $0x1c8] sm:$0xff]
      %v454 = vld [vmem:[%s287 + $0x1d0] sm:$0xff]
      %v455 = vld [vmem:[%s287 + $0x1d8] sm:$0xff]
      %v456 = vld [vmem:[%s287 + $0x1e0] sm:$0xff]
      %v457 = vld [vmem:[%s287 + $0x1e8] sm:$0xff]
      %v458 = vld [vmem:[%s287 + $0x1f0] sm:$0xff]
      %v459 = vld [vmem:[%s287 + $0x1f8] sm:$0xff]
      %v460 = vld [vmem:[%s301] sm:$0xf]
      %v461 = vld [vmem:[%s301 + $0x4] sm:$0xf]
      %v462 = vld [vmem:[%s301 + $0x8] sm:$0xf]
      %v463 = vld [vmem:[%s301 + $0xc] sm:$0xf]
      %v464 = vld [vmem:[%s301 + $0x10] sm:$0xf]
      %v465 = vld [vmem:[%s301 + $0x14] sm:$0xf]
      %v466 = vld [vmem:[%s301 + $0x18] sm:$0xf]
      %v467 = vld [vmem:[%s301 + $0x1c] sm:$0xf]
      %v468 = vld [vmem:[%s301 + $0x20] sm:$0xf]
      %v469 = vld [vmem:[%s301 + $0x24] sm:$0xf]
      %v470 = vld [vmem:[%s301 + $0x28] sm:$0xf]
      %v471 = vld [vmem:[%s301 + $0x2c] sm:$0xf]
      %v472 = vld [vmem:[%s301 + $0x30] sm:$0xf]
      %v473 = vld [vmem:[%s301 + $0x34] sm:$0xf]
      %v474 = vld [vmem:[%s301 + $0x38] sm:$0xf]
      %v475 = vld [vmem:[%s301 + $0x3c] sm:$0xf]
      %v476 = vld [vmem:[%s301 + $0x40] sm:$0xf]
      %v477 = vld [vmem:[%s301 + $0x44] sm:$0xf]
      %v478 = vld [vmem:[%s301 + $0x48] sm:$0xf]
      %v479 = vld [vmem:[%s301 + $0x4c] sm:$0xf]
      %v480 = vld [vmem:[%s301 + $0x50] sm:$0xf]
      %v481 = vld [vmem:[%s301 + $0x54] sm:$0xf]
      %v482 = vld [vmem:[%s301 + $0x58] sm:$0xf]
      %v483 = vld [vmem:[%s301 + $0x5c] sm:$0xf]
      %v484 = vld [vmem:[%s301 + $0x60] sm:$0xf]
      %v485 = vld [vmem:[%s301 + $0x64] sm:$0xf]
      %v486 = vld [vmem:[%s301 + $0x68] sm:$0xf]
      %v487 = vld [vmem:[%s301 + $0x6c] sm:$0xf]
      %v488 = vld [vmem:[%s301 + $0x70] sm:$0xf]
      %v489 = vld [vmem:[%s301 + $0x74] sm:$0xf]
      %v490 = vld [vmem:[%s301 + $0x78] sm:$0xf]
      %v491 = vld [vmem:[%s301 + $0x7c] sm:$0xf]
      %v492 = vld [vmem:[%s301 + $0x80] sm:$0xf]
      %v493 = vld [vmem:[%s301 + $0x84] sm:$0xf]
      %v494 = vld [vmem:[%s301 + $0x88] sm:$0xf]
      %v495 = vld [vmem:[%s301 + $0x8c] sm:$0xf]
      %v496 = vld [vmem:[%s301 + $0x90] sm:$0xf]
      %v497 = vld [vmem:[%s301 + $0x94] sm:$0xf]
      %v498 = vld [vmem:[%s301 + $0x98] sm:$0xf]
      %v499 = vld [vmem:[%s301 + $0x9c] sm:$0xf]
      %v500 = vld [vmem:[%s301 + $0xa0] sm:$0xf]
      %v501 = vld [vmem:[%s301 + $0xa4] sm:$0xf]
      %v502 = vld [vmem:[%s301 + $0xa8] sm:$0xf]
      %v503 = vld [vmem:[%s301 + $0xac] sm:$0xf]
      %v504 = vld [vmem:[%s301 + $0xb0] sm:$0xf]
      %v505 = vld [vmem:[%s301 + $0xb4] sm:$0xf]
      %v506 = vld [vmem:[%s301 + $0xb8] sm:$0xf]
      %v507 = vld [vmem:[%s301 + $0xbc] sm:$0xf]
      %v508 = vld [vmem:[%s301 + $0xc0] sm:$0xf]
      %v509 = vld [vmem:[%s301 + $0xc4] sm:$0xf]
      %v510 = vld [vmem:[%s301 + $0xc8] sm:$0xf]
      %v511 = vld [vmem:[%s301 + $0xcc] sm:$0xf]
      %v512 = vld [vmem:[%s301 + $0xd0] sm:$0xf]
      %v513 = vld [vmem:[%s301 + $0xd4] sm:$0xf]
      %v514 = vld [vmem:[%s301 + $0xd8] sm:$0xf]
      %v515 = vld [vmem:[%s301 + $0xdc] sm:$0xf]
      %v516 = vld [vmem:[%s301 + $0xe0] sm:$0xf]
      %v517 = vld [vmem:[%s301 + $0xe4] sm:$0xf]
      %v518 = vld [vmem:[%s301 + $0xe8] sm:$0xf]
      %v519 = vld [vmem:[%s301 + $0xec] sm:$0xf]
      %v520 = vld [vmem:[%s301 + $0xf0] sm:$0xf]
      %v521 = vld [vmem:[%s301 + $0xf4] sm:$0xf]
      %v522 = vld [vmem:[%s301 + $0xf8] sm:$0xf]
      %v523 = vld [vmem:[%s301 + $0xfc] sm:$0xf]
      %v588 = vunpack.c.l.b16 %v396
      %v589 = vunpack.c.h.b16 %v396
      %v590 = vunpack.c.l.b16 %v397
      %v591 = vunpack.c.h.b16 %v397
      %v592 = vunpack.c.l.b16 %v398
      %v593 = vunpack.c.h.b16 %v398
      %v594 = vunpack.c.l.b16 %v399
      %v595 = vunpack.c.h.b16 %v399
      %v596 = vunpack.c.l.b16 %v400
      %v597 = vunpack.c.h.b16 %v400
      %v598 = vunpack.c.l.b16 %v401
      %v599 = vunpack.c.h.b16 %v401
      %v600 = vunpack.c.l.b16 %v402
      %v601 = vunpack.c.h.b16 %v402
      %v602 = vunpack.c.l.b16 %v403
      %v603 = vunpack.c.h.b16 %v403
      %v604 = vunpack.c.l.b16 %v404
      %v605 = vunpack.c.h.b16 %v404
      %v606 = vunpack.c.l.b16 %v405
      %v607 = vunpack.c.h.b16 %v405
      %v608 = vunpack.c.l.b16 %v406
      %v609 = vunpack.c.h.b16 %v406
      %v610 = vunpack.c.l.b16 %v407
      %v611 = vunpack.c.h.b16 %v407
      %v612 = vunpack.c.l.b16 %v408
      %v613 = vunpack.c.h.b16 %v408
      %v614 = vunpack.c.l.b16 %v409
      %v615 = vunpack.c.h.b16 %v409
      %v616 = vunpack.c.l.b16 %v410
      %v617 = vunpack.c.h.b16 %v410
      %v618 = vunpack.c.l.b16 %v411
      %v619 = vunpack.c.h.b16 %v411
      %v620 = vunpack.c.l.b16 %v412
      %v621 = vunpack.c.h.b16 %v412
      %v622 = vunpack.c.l.b16 %v413
      %v623 = vunpack.c.h.b16 %v413
      %v624 = vunpack.c.l.b16 %v414
      %v625 = vunpack.c.h.b16 %v414
      %v626 = vunpack.c.l.b16 %v415
      %v627 = vunpack.c.h.b16 %v415
      %v628 = vunpack.c.l.b16 %v416
      %v629 = vunpack.c.h.b16 %v416
      %v630 = vunpack.c.l.b16 %v417
      %v631 = vunpack.c.h.b16 %v417
      %v632 = vunpack.c.l.b16 %v418
      %v633 = vunpack.c.h.b16 %v418
      %v634 = vunpack.c.l.b16 %v419
      %v635 = vunpack.c.h.b16 %v419
      %v636 = vunpack.c.l.b16 %v420
      %v637 = vunpack.c.h.b16 %v420
      %v638 = vunpack.c.l.b16 %v421
      %v639 = vunpack.c.h.b16 %v421
      %v640 = vunpack.c.l.b16 %v422
      %v641 = vunpack.c.h.b16 %v422
      %v642 = vunpack.c.l.b16 %v423
      %v643 = vunpack.c.h.b16 %v423
      %v644 = vunpack.c.l.b16 %v424
      %v645 = vunpack.c.h.b16 %v424
      %v646 = vunpack.c.l.b16 %v425
      %v647 = vunpack.c.h.b16 %v425
      %v648 = vunpack.c.l.b16 %v426
      %v649 = vunpack.c.h.b16 %v426
      %v650 = vunpack.c.l.b16 %v427
      %v651 = vunpack.c.h.b16 %v427
      %v652 = vunpack.c.l.b16 %v428
      %v653 = vunpack.c.h.b16 %v428
      %v654 = vunpack.c.l.b16 %v429
      %v655 = vunpack.c.h.b16 %v429
      %v656 = vunpack.c.l.b16 %v430
      %v657 = vunpack.c.h.b16 %v430
      %v658 = vunpack.c.l.b16 %v431
      %v659 = vunpack.c.h.b16 %v431
      %v660 = vunpack.c.l.b16 %v432
      %v661 = vunpack.c.h.b16 %v432
      %v662 = vunpack.c.l.b16 %v433
      %v663 = vunpack.c.h.b16 %v433
      %v664 = vunpack.c.l.b16 %v434
      %v665 = vunpack.c.h.b16 %v434
      %v666 = vunpack.c.l.b16 %v435
      %v667 = vunpack.c.h.b16 %v435
      %v668 = vunpack.c.l.b16 %v436
      %v669 = vunpack.c.h.b16 %v436
      %v670 = vunpack.c.l.b16 %v437
      %v671 = vunpack.c.h.b16 %v437
      %v672 = vunpack.c.l.b16 %v438
      %v673 = vunpack.c.h.b16 %v438
      %v674 = vunpack.c.l.b16 %v439
      %v675 = vunpack.c.h.b16 %v439
      %v676 = vunpack.c.l.b16 %v440
      %v677 = vunpack.c.h.b16 %v440
      %v678 = vunpack.c.l.b16 %v441
      %v679 = vunpack.c.h.b16 %v441
      %v680 = vunpack.c.l.b16 %v442
      %v681 = vunpack.c.h.b16 %v442
      %v682 = vunpack.c.l.b16 %v443
      %v683 = vunpack.c.h.b16 %v443
      %v684 = vunpack.c.l.b16 %v444
      %v685 = vunpack.c.h.b16 %v444
      %v686 = vunpack.c.l.b16 %v445
      %v687 = vunpack.c.h.b16 %v445
      %v688 = vunpack.c.l.b16 %v446
      %v689 = vunpack.c.h.b16 %v446
      %v690 = vunpack.c.l.b16 %v447
      %v691 = vunpack.c.h.b16 %v447
      %v692 = vunpack.c.l.b16 %v448
      %v693 = vunpack.c.h.b16 %v448
      %v694 = vunpack.c.l.b16 %v449
      %v695 = vunpack.c.h.b16 %v449
      %v696 = vunpack.c.l.b16 %v450
      %v697 = vunpack.c.h.b16 %v450
      %v698 = vunpack.c.l.b16 %v451
      %v699 = vunpack.c.h.b16 %v451
      %v700 = vunpack.c.l.b16 %v452
      %v701 = vunpack.c.h.b16 %v452
      %v702 = vunpack.c.l.b16 %v453
      %v703 = vunpack.c.h.b16 %v453
      %v704 = vunpack.c.l.b16 %v454
      %v705 = vunpack.c.h.b16 %v454
      %v706 = vunpack.c.l.b16 %v455
      %v707 = vunpack.c.h.b16 %v455
      %v708 = vunpack.c.l.b16 %v456
      %v709 = vunpack.c.h.b16 %v456
      %v710 = vunpack.c.l.b16 %v457
      %v711 = vunpack.c.h.b16 %v457
      %v712 = vunpack.c.l.b16 %v458
      %v713 = vunpack.c.h.b16 %v458
      %v714 = vunpack.c.l.b16 %v459
      %v715 = vunpack.c.h.b16 %v459
      %v716 = vpack.c.b16 %v592, %v588
      %v717 = vpack.c.b16 %v593, %v589
      %v718 = vpack.c.b16 %v594, %v590
      %v719 = vpack.c.b16 %v595, %v591
      %v720 = vpack.c.b16 %v600, %v596
      %v721 = vpack.c.b16 %v601, %v597
      %v722 = vpack.c.b16 %v602, %v598
      %v723 = vpack.c.b16 %v603, %v599
      %v724 = vpack.c.b16 %v608, %v604
      %v725 = vpack.c.b16 %v609, %v605
      %v726 = vpack.c.b16 %v610, %v606
      %v727 = vpack.c.b16 %v611, %v607
      %v728 = vpack.c.b16 %v616, %v612
      %v729 = vpack.c.b16 %v617, %v613
      %v730 = vpack.c.b16 %v618, %v614
      %v731 = vpack.c.b16 %v619, %v615
      %v732 = vpack.c.b16 %v624, %v620
      %v733 = vpack.c.b16 %v625, %v621
      %v734 = vpack.c.b16 %v626, %v622
      %v735 = vpack.c.b16 %v627, %v623
      %v736 = vpack.c.b16 %v632, %v628
      %v737 = vpack.c.b16 %v633, %v629
      %v738 = vpack.c.b16 %v634, %v630
      %v739 = vpack.c.b16 %v635, %v631
      %v740 = vpack.c.b16 %v640, %v636
      %v741 = vpack.c.b16 %v641, %v637
      %v742 = vpack.c.b16 %v642, %v638
      %v743 = vpack.c.b16 %v643, %v639
      %v744 = vpack.c.b16 %v648, %v644
      %v745 = vpack.c.b16 %v649, %v645
      %v746 = vpack.c.b16 %v650, %v646
      %v747 = vpack.c.b16 %v651, %v647
      %v748 = vpack.c.b16 %v656, %v652
      %v749 = vpack.c.b16 %v657, %v653
      %v750 = vpack.c.b16 %v658, %v654
      %v751 = vpack.c.b16 %v659, %v655
      %v752 = vpack.c.b16 %v664, %v660
      %v753 = vpack.c.b16 %v665, %v661
      %v754 = vpack.c.b16 %v666, %v662
      %v755 = vpack.c.b16 %v667, %v663
      %v756 = vpack.c.b16 %v672, %v668
      %v757 = vpack.c.b16 %v673, %v669
      %v758 = vpack.c.b16 %v674, %v670
      %v759 = vpack.c.b16 %v675, %v671
      %v760 = vpack.c.b16 %v680, %v676
      %v761 = vpack.c.b16 %v681, %v677
      %v762 = vpack.c.b16 %v682, %v678
      %v763 = vpack.c.b16 %v683, %v679
      %v764 = vpack.c.b16 %v688, %v684
      %v765 = vpack.c.b16 %v689, %v685
      %v766 = vpack.c.b16 %v690, %v686
      %v767 = vpack.c.b16 %v691, %v687
      %v768 = vpack.c.b16 %v696, %v692
      %v769 = vpack.c.b16 %v697, %v693
      %v770 = vpack.c.b16 %v698, %v694
      %v771 = vpack.c.b16 %v699, %v695
      %v772 = vpack.c.b16 %v704, %v700
      %v773 = vpack.c.b16 %v705, %v701
      %v774 = vpack.c.b16 %v706, %v702
      %v775 = vpack.c.b16 %v707, %v703
      %v776 = vpack.c.b16 %v712, %v708
      %v777 = vpack.c.b16 %v713, %v709
      %v778 = vpack.c.b16 %v714, %v710
      %v779 = vpack.c.b16 %v715, %v711
      %v908 = vunpack.c.l.b16 %v460
      %v909 = vunpack.c.l.b16 %v461
      %v910 = vunpack.c.l.b16 %v462
      %v911 = vunpack.c.l.b16 %v463
      %v912 = vunpack.c.l.b16 %v464
      %v913 = vunpack.c.l.b16 %v465
      %v914 = vunpack.c.l.b16 %v466
      %v915 = vunpack.c.l.b16 %v467
      %v916 = vunpack.c.l.b16 %v468
      %v917 = vunpack.c.l.b16 %v469
      %v918 = vunpack.c.l.b16 %v470
      %v919 = vunpack.c.l.b16 %v471
      %v920 = vunpack.c.l.b16 %v472
      %v921 = vunpack.c.l.b16 %v473
      %v922 = vunpack.c.l.b16 %v474
      %v923 = vunpack.c.l.b16 %v475
      %v924 = vunpack.c.l.b16 %v476
      %v925 = vunpack.c.l.b16 %v477
      %v926 = vunpack.c.l.b16 %v478
      %v927 = vunpack.c.l.b16 %v479
      %v928 = vunpack.c.l.b16 %v480
      %v929 = vunpack.c.l.b16 %v481
      %v930 = vunpack.c.l.b16 %v482
      %v931 = vunpack.c.l.b16 %v483
      %v932 = vunpack.c.l.b16 %v484
      %v933 = vunpack.c.l.b16 %v485
      %v934 = vunpack.c.l.b16 %v486
      %v935 = vunpack.c.l.b16 %v487
      %v936 = vunpack.c.l.b16 %v488
      %v937 = vunpack.c.l.b16 %v489
      %v938 = vunpack.c.l.b16 %v490
      %v939 = vunpack.c.l.b16 %v491
      %v940 = vunpack.c.l.b16 %v492
      %v941 = vunpack.c.l.b16 %v493
      %v942 = vunpack.c.l.b16 %v494
      %v943 = vunpack.c.l.b16 %v495
      %v944 = vunpack.c.l.b16 %v496
      %v945 = vunpack.c.l.b16 %v497
      %v946 = vunpack.c.l.b16 %v498
      %v947 = vunpack.c.l.b16 %v499
      %v948 = vunpack.c.l.b16 %v500
      %v949 = vunpack.c.l.b16 %v501
      %v950 = vunpack.c.l.b16 %v502
      %v951 = vunpack.c.l.b16 %v503
      %v952 = vunpack.c.l.b16 %v504
      %v953 = vunpack.c.l.b16 %v505
      %v954 = vunpack.c.l.b16 %v506
      %v955 = vunpack.c.l.b16 %v507
      %v956 = vunpack.c.l.b16 %v508
      %v957 = vunpack.c.l.b16 %v509
      %v958 = vunpack.c.l.b16 %v510
      %v959 = vunpack.c.l.b16 %v511
      %v960 = vunpack.c.l.b16 %v512
      %v961 = vunpack.c.l.b16 %v513
      %v962 = vunpack.c.l.b16 %v514
      %v963 = vunpack.c.l.b16 %v515
      %v964 = vunpack.c.l.b16 %v516
      %v965 = vunpack.c.l.b16 %v517
      %v966 = vunpack.c.l.b16 %v518
      %v967 = vunpack.c.l.b16 %v519
      %v968 = vunpack.c.l.b16 %v520
      %v969 = vunpack.c.l.b16 %v521
      %v970 = vunpack.c.l.b16 %v522
      %v971 = vunpack.c.l.b16 %v523
      %v972 = vpack.c.b16 %v909, %v908
      %v973 = vpack.c.b16 %v911, %v910
      %v974 = vpack.c.b16 %v913, %v912
      %v975 = vpack.c.b16 %v915, %v914
      %v976 = vpack.c.b16 %v917, %v916
      %v977 = vpack.c.b16 %v919, %v918
      %v978 = vpack.c.b16 %v921, %v920
      %v979 = vpack.c.b16 %v923, %v922
      %v980 = vpack.c.b16 %v925, %v924
      %v981 = vpack.c.b16 %v927, %v926
      %v982 = vpack.c.b16 %v929, %v928
      %v983 = vpack.c.b16 %v931, %v930
      %v984 = vpack.c.b16 %v933, %v932
      %v985 = vpack.c.b16 %v935, %v934
      %v986 = vpack.c.b16 %v937, %v936
      %v987 = vpack.c.b16 %v939, %v938
      %v988 = vpack.c.b16 %v941, %v940
      %v989 = vpack.c.b16 %v943, %v942
      %v990 = vpack.c.b16 %v945, %v944
      %v991 = vpack.c.b16 %v947, %v946
      %v992 = vpack.c.b16 %v949, %v948
      %v993 = vpack.c.b16 %v951, %v950
      %v994 = vpack.c.b16 %v953, %v952
      %v995 = vpack.c.b16 %v955, %v954
      %v996 = vpack.c.b16 %v957, %v956
      %v997 = vpack.c.b16 %v959, %v958
      %v998 = vpack.c.b16 %v961, %v960
      %v999 = vpack.c.b16 %v963, %v962
      %v1000 = vpack.c.b16 %v965, %v964
      %v1001 = vpack.c.b16 %v967, %v966
      %v1002 = vpack.c.b16 %v969, %v968
      %v1003 = vpack.c.b16 %v971, %v970
      %1036 = vmatprep.subr.bf16.mxu0 0
      %1037 = vmatpush1.bf16.msra.mxu0 %v979
      %1038 = vmatprep.subr.bf16.mxu0 0
      %1039 = vmatpush1.bf16.msra.mxu0 %v978
      %1040 = vmatprep.subr.bf16.mxu0 0
      %1041 = vmatpush1.bf16.msra.mxu0 %v977
      %1042 = vmatprep.subr.bf16.mxu0 0
      %1043 = vmatpush1.bf16.msra.mxu0 %v976
      %1044 = vmatprep.subr.bf16.mxu0 0
      %1045 = vmatpush1.bf16.msra.mxu0 %v975
      %1046 = vmatprep.subr.bf16.mxu0 0
      %1047 = vmatpush1.bf16.msra.mxu0 %v974
      %1048 = vmatprep.subr.bf16.mxu0 0
      %1049 = vmatpush1.bf16.msra.mxu0 %v973
      %1050 = vmatprep.subr.bf16.mxu0 0
      %1051 = vmatpush1.bf16.msra.mxu0 %v972
      %1052 = vmatprep.subr.bf16.mxu0 0
      %1053 = vmatpush2.bf16.msra.mxu0 %v987
      %1054 = vmatprep.subr.bf16.mxu0 0
      %1055 = vmatpush2.bf16.msra.mxu0 %v986
      %1056 = vmatprep.subr.bf16.mxu0 0
      %1057 = vmatpush2.bf16.msra.mxu0 %v985
      %1058 = vmatprep.subr.bf16.mxu0 0
      %1059 = vmatpush2.bf16.msra.mxu0 %v984
      %1060 = vmatprep.subr.bf16.mxu0 0
      %1061 = vmatpush2.bf16.msra.mxu0 %v983
      %1062 = vmatprep.subr.bf16.mxu0 0
      %1063 = vmatpush2.bf16.msra.mxu0 %v982
      %1064 = vmatprep.subr.bf16.mxu0 0
      %1065 = vmatpush2.bf16.msra.mxu0 %v981
      %1066 = vmatprep.subr.bf16.mxu0 0
      %1067 = vmatpush2.bf16.msra.mxu0 %v980
      %1068 = vmatprep.mubr.bf16.mxu0 %v717
      %1069 = vmatmul.mubr.bf16.gmra.mxu0 %v716
      %v1070 = vpop.f32.mrf.mxu0
      %v1071 = vadd.f32 0.0, %v1070
      %v1072 = vpop.f32.mrf.mxu0
      %v1073 = vpop.f32.mrf.mxu0
      %v1074 = vadd.f32 0.0, %v1073
      %v1075 = vpop.f32.mrf.mxu0
      %1076 = vmatprep.mubr.bf16.mxu0 %v721
      %1077 = vmatmul.mubr.bf16.gmra.mxu0 %v720
      %v1078 = vpop.f32.mrf.mxu0
      %v1079 = vadd.f32 0.0, %v1078
      %v1080 = vpop.f32.mrf.mxu0
      %v1081 = vpop.f32.mrf.mxu0
      %v1082 = vadd.f32 0.0, %v1081
      %v1083 = vpop.f32.mrf.mxu0
      %1084 = vmatprep.mubr.bf16.mxu0 %v725
      %1085 = vmatmul.mubr.bf16.gmra.mxu0 %v724
      %v1086 = vpop.f32.mrf.mxu0
      %v1087 = vadd.f32 0.0, %v1086
      %v1088 = vpop.f32.mrf.mxu0
      %v1089 = vpop.f32.mrf.mxu0
      %v1090 = vadd.f32 0.0, %v1089
      %v1091 = vpop.f32.mrf.mxu0
      %1092 = vmatprep.mubr.bf16.mxu0 %v729
      %1093 = vmatmul.mubr.bf16.gmra.mxu0 %v728
      %v1094 = vpop.f32.mrf.mxu0
      %v1095 = vadd.f32 0.0, %v1094
      %v1096 = vpop.f32.mrf.mxu0
      %v1097 = vpop.f32.mrf.mxu0
      %v1098 = vadd.f32 0.0, %v1097
      %v1099 = vpop.f32.mrf.mxu0
      %1100 = vmatprep.mubr.bf16.mxu0 %v733
      %1101 = vmatmul.mubr.bf16.gmra.mxu0 %v732
      %v1102 = vpop.f32.mrf.mxu0
      %v1103 = vadd.f32 0.0, %v1102
      %v1104 = vpop.f32.mrf.mxu0
      %v1105 = vpop.f32.mrf.mxu0
      %v1106 = vadd.f32 0.0, %v1105
      %v1107 = vpop.f32.mrf.mxu0
      %1108 = vmatprep.mubr.bf16.mxu0 %v737
      %1109 = vmatmul.mubr.bf16.gmra.mxu0 %v736
      %v1110 = vpop.f32.mrf.mxu0
      %v1111 = vadd.f32 0.0, %v1110
      %v1112 = vpop.f32.mrf.mxu0
      %v1113 = vpop.f32.mrf.mxu0
      %v1114 = vadd.f32 0.0, %v1113
      %v1115 = vpop.f32.mrf.mxu0
      %1116 = vmatprep.mubr.bf16.mxu0 %v741
      %1117 = vmatmul.mubr.bf16.gmra.mxu0 %v740
      %v1118 = vpop.f32.mrf.mxu0
      %v1119 = vadd.f32 0.0, %v1118
      %v1120 = vpop.f32.mrf.mxu0
      %v1121 = vpop.f32.mrf.mxu0
      %v1122 = vadd.f32 0.0, %v1121
      %v1123 = vpop.f32.mrf.mxu0
      %1124 = vmatprep.mubr.bf16.mxu0 %v745
      %1125 = vmatmul.mubr.bf16.gmra.mxu0 %v744
      %v1126 = vpop.f32.mrf.mxu0
      %v1127 = vadd.f32 0.0, %v1126
      %v1128 = vpop.f32.mrf.mxu0
      %v1129 = vpop.f32.mrf.mxu0
      %v1130 = vadd.f32 0.0, %v1129
      %v1131 = vpop.f32.mrf.mxu0
      %1132 = vmatprep.mubr.bf16.mxu0 %v749
      %1133 = vmatmul.mubr.bf16.gmra.mxu0 %v748
      %v1134 = vpop.f32.mrf.mxu0
      %v1135 = vadd.f32 0.0, %v1134
      %v1136 = vpop.f32.mrf.mxu0
      %v1137 = vpop.f32.mrf.mxu0
      %v1138 = vadd.f32 0.0, %v1137
      %v1139 = vpop.f32.mrf.mxu0
      %1140 = vmatprep.mubr.bf16.mxu0 %v753
      %1141 = vmatmul.mubr.bf16.gmra.mxu0 %v752
      %v1142 = vpop.f32.mrf.mxu0
      %v1143 = vadd.f32 0.0, %v1142
      %v1144 = vpop.f32.mrf.mxu0
      %v1145 = vpop.f32.mrf.mxu0
      %v1146 = vadd.f32 0.0, %v1145
      %v1147 = vpop.f32.mrf.mxu0
      %1148 = vmatprep.mubr.bf16.mxu0 %v757
      %1149 = vmatmul.mubr.bf16.gmra.mxu0 %v756
      %v1150 = vpop.f32.mrf.mxu0
      %v1151 = vadd.f32 0.0, %v1150
      %v1152 = vpop.f32.mrf.mxu0
      %v1153 = vpop.f32.mrf.mxu0
      %v1154 = vadd.f32 0.0, %v1153
      %v1155 = vpop.f32.mrf.mxu0
      %1156 = vmatprep.mubr.bf16.mxu0 %v761
      %1157 = vmatmul.mubr.bf16.gmra.mxu0 %v760
      %v1158 = vpop.f32.mrf.mxu0
      %v1159 = vadd.f32 0.0, %v1158
      %v1160 = vpop.f32.mrf.mxu0
      %v1161 = vpop.f32.mrf.mxu0
      %v1162 = vadd.f32 0.0, %v1161
      %v1163 = vpop.f32.mrf.mxu0
      %1164 = vmatprep.mubr.bf16.mxu0 %v765
      %1165 = vmatmul.mubr.bf16.gmra.mxu0 %v764
      %v1166 = vpop.f32.mrf.mxu0
      %v1167 = vadd.f32 0.0, %v1166
      %v1168 = vpop.f32.mrf.mxu0
      %v1169 = vpop.f32.mrf.mxu0
      %v1170 = vadd.f32 0.0, %v1169
      %v1171 = vpop.f32.mrf.mxu0
      %1172 = vmatprep.mubr.bf16.mxu0 %v769
      %1173 = vmatmul.mubr.bf16.gmra.mxu0 %v768
      %v1174 = vpop.f32.mrf.mxu0
      %v1175 = vadd.f32 0.0, %v1174
      %v1176 = vpop.f32.mrf.mxu0
      %v1177 = vpop.f32.mrf.mxu0
      %v1178 = vadd.f32 0.0, %v1177
      %v1179 = vpop.f32.mrf.mxu0
      %1180 = vmatprep.mubr.bf16.mxu0 %v773
      %1181 = vmatmul.mubr.bf16.gmra.mxu0 %v772
      %v1182 = vpop.f32.mrf.mxu0
      %v1183 = vadd.f32 0.0, %v1182
      %v1184 = vpop.f32.mrf.mxu0
      %v1185 = vpop.f32.mrf.mxu0
      %v1186 = vadd.f32 0.0, %v1185
      %v1187 = vpop.f32.mrf.mxu0
      %1188 = vmatprep.mubr.bf16.mxu0 %v777
      %1189 = vmatmul.mubr.bf16.gmra.mxu0 %v776
      %v1190 = vpop.f32.mrf.mxu0
      %v1191 = vadd.f32 0.0, %v1190
      %v1192 = vpop.f32.mrf.mxu0
      %v1193 = vpop.f32.mrf.mxu0
      %v1194 = vadd.f32 0.0, %v1193
      %v1195 = vpop.f32.mrf.mxu0
      %1196 = vdwg.mxu0
      %1197 = vmatprep.subr.bf16.mxu0 0
      %1198 = vmatpush1.bf16.msra.mxu0 %v995
      %1199 = vmatprep.subr.bf16.mxu0 0
      %1200 = vmatpush1.bf16.msra.mxu0 %v994
      %1201 = vmatprep.subr.bf16.mxu0 0
      %1202 = vmatpush1.bf16.msra.mxu0 %v993
      %1203 = vmatprep.subr.bf16.mxu0 0
      %1204 = vmatpush1.bf16.msra.mxu0 %v992
      %1205 = vmatprep.subr.bf16.mxu0 0
      %1206 = vmatpush1.bf16.msra.mxu0 %v991
      %1207 = vmatprep.subr.bf16.mxu0 0
      %1208 = vmatpush1.bf16.msra.mxu0 %v990
      %1209 = vmatprep.subr.bf16.mxu0 0
      %1210 = vmatpush1.bf16.msra.mxu0 %v989
      %1211 = vmatprep.subr.bf16.mxu0 0
      %1212 = vmatpush1.bf16.msra.mxu0 %v988
      %1213 = vmatprep.subr.bf16.mxu0 0
      %1214 = vmatpush2.bf16.msra.mxu0 %v1003
      %1215 = vmatprep.subr.bf16.mxu0 0
      %1216 = vmatpush2.bf16.msra.mxu0 %v1002
      %1217 = vmatprep.subr.bf16.mxu0 0
      %1218 = vmatpush2.bf16.msra.mxu0 %v1001
      %1219 = vmatprep.subr.bf16.mxu0 0
      %1220 = vmatpush2.bf16.msra.mxu0 %v1000
      %1221 = vmatprep.subr.bf16.mxu0 0
      %1222 = vmatpush2.bf16.msra.mxu0 %v999
      %1223 = vmatprep.subr.bf16.mxu0 0
      %1224 = vmatpush2.bf16.msra.mxu0 %v998
      %1225 = vmatprep.subr.bf16.mxu0 0
      %1226 = vmatpush2.bf16.msra.mxu0 %v997
      %1227 = vmatprep.subr.bf16.mxu0 0
      %1228 = vmatpush2.bf16.msra.mxu0 %v996
      %1229 = vmatprep.mubr.bf16.mxu0 %v719
      %1230 = vmatmul.mubr.bf16.gmra.mxu0 %v718
      %v1231 = vpop.f32.mrf.mxu0
      %v1232 = vadd.f32 %v1071, %v1231
      %v1233 = vpop.f32.mrf.mxu0
      %v1234 = vpop.f32.mrf.mxu0
      %v1235 = vadd.f32 %v1074, %v1234
      %v1236 = vpop.f32.mrf.mxu0
      %1237 = vmatprep.mubr.bf16.mxu0 %v723
      %1238 = vmatmul.mubr.bf16.gmra.mxu0 %v722
      %v1239 = vpop.f32.mrf.mxu0
      %v1240 = vadd.f32 %v1079, %v1239
      %v1241 = vpop.f32.mrf.mxu0
      %v1242 = vpop.f32.mrf.mxu0
      %v1243 = vadd.f32 %v1082, %v1242
      %v1244 = vpop.f32.mrf.mxu0
      %1245 = vmatprep.mubr.bf16.mxu0 %v727
      %1246 = vmatmul.mubr.bf16.gmra.mxu0 %v726
      %v1247 = vpop.f32.mrf.mxu0
      %v1248 = vadd.f32 %v1087, %v1247
      %v1249 = vpop.f32.mrf.mxu0
      %v1250 = vpop.f32.mrf.mxu0
      %v1251 = vadd.f32 %v1090, %v1250
      %v1252 = vpop.f32.mrf.mxu0
      %1253 = vmatprep.mubr.bf16.mxu0 %v731
      %1254 = vmatmul.mubr.bf16.gmra.mxu0 %v730
      %v1255 = vpop.f32.mrf.mxu0
      %v1256 = vadd.f32 %v1095, %v1255
      %v1257 = vpop.f32.mrf.mxu0
      %v1258 = vpop.f32.mrf.mxu0
      %v1259 = vadd.f32 %v1098, %v1258
      %v1260 = vpop.f32.mrf.mxu0
      %1261 = vmatprep.mubr.bf16.mxu0 %v735
      %1262 = vmatmul.mubr.bf16.gmra.mxu0 %v734
      %v1263 = vpop.f32.mrf.mxu0
      %v1264 = vadd.f32 %v1103, %v1263
      %v1265 = vpop.f32.mrf.mxu0
      %v1266 = vpop.f32.mrf.mxu0
      %v1267 = vadd.f32 %v1106, %v1266
      %v1268 = vpop.f32.mrf.mxu0
      %1269 = vmatprep.mubr.bf16.mxu0 %v739
      %1270 = vmatmul.mubr.bf16.gmra.mxu0 %v738
      %v1271 = vpop.f32.mrf.mxu0
      %v1272 = vadd.f32 %v1111, %v1271
      %v1273 = vpop.f32.mrf.mxu0
      %v1274 = vpop.f32.mrf.mxu0
      %v1275 = vadd.f32 %v1114, %v1274
      %v1276 = vpop.f32.mrf.mxu0
      %1277 = vmatprep.mubr.bf16.mxu0 %v743
      %1278 = vmatmul.mubr.bf16.gmra.mxu0 %v742
      %v1279 = vpop.f32.mrf.mxu0
      %v1280 = vadd.f32 %v1119, %v1279
      %v1281 = vpop.f32.mrf.mxu0
      %v1282 = vpop.f32.mrf.mxu0
      %v1283 = vadd.f32 %v1122, %v1282
      %v1284 = vpop.f32.mrf.mxu0
      %1285 = vmatprep.mubr.bf16.mxu0 %v747
      %1286 = vmatmul.mubr.bf16.gmra.mxu0 %v746
      %v1287 = vpop.f32.mrf.mxu0
      %v1288 = vadd.f32 %v1127, %v1287
      %v1289 = vpop.f32.mrf.mxu0
      %v1290 = vpop.f32.mrf.mxu0
      %v1291 = vadd.f32 %v1130, %v1290
      %v1292 = vpop.f32.mrf.mxu0
      %1293 = vmatprep.mubr.bf16.mxu0 %v751
      %1294 = vmatmul.mubr.bf16.gmra.mxu0 %v750
      %v1295 = vpop.f32.mrf.mxu0
      %v1296 = vadd.f32 %v1135, %v1295
      %v1297 = vpop.f32.mrf.mxu0
      %v1298 = vpop.f32.mrf.mxu0
      %v1299 = vadd.f32 %v1138, %v1298
      %v1300 = vpop.f32.mrf.mxu0
      %1301 = vmatprep.mubr.bf16.mxu0 %v755
      %1302 = vmatmul.mubr.bf16.gmra.mxu0 %v754
      %v1303 = vpop.f32.mrf.mxu0
      %v1304 = vadd.f32 %v1143, %v1303
      %v1305 = vpop.f32.mrf.mxu0
      %v1306 = vpop.f32.mrf.mxu0
      %v1307 = vadd.f32 %v1146, %v1306
      %v1308 = vpop.f32.mrf.mxu0
      %1309 = vmatprep.mubr.bf16.mxu0 %v759
      %1310 = vmatmul.mubr.bf16.gmra.mxu0 %v758
      %v1311 = vpop.f32.mrf.mxu0
      %v1312 = vadd.f32 %v1151, %v1311
      %v1313 = vpop.f32.mrf.mxu0
      %v1314 = vpop.f32.mrf.mxu0
      %v1315 = vadd.f32 %v1154, %v1314
      %v1316 = vpop.f32.mrf.mxu0
      %1317 = vmatprep.mubr.bf16.mxu0 %v763
      %1318 = vmatmul.mubr.bf16.gmra.mxu0 %v762
      %v1319 = vpop.f32.mrf.mxu0
      %v1320 = vadd.f32 %v1159, %v1319
      %v1321 = vpop.f32.mrf.mxu0
      %v1322 = vpop.f32.mrf.mxu0
      %v1323 = vadd.f32 %v1162, %v1322
      %v1324 = vpop.f32.mrf.mxu0
      %1325 = vmatprep.mubr.bf16.mxu0 %v767
      %1326 = vmatmul.mubr.bf16.gmra.mxu0 %v766
      %v1327 = vpop.f32.mrf.mxu0
      %v1328 = vadd.f32 %v1167, %v1327
      %v1329 = vpop.f32.mrf.mxu0
      %v1330 = vpop.f32.mrf.mxu0
      %v1331 = vadd.f32 %v1170, %v1330
      %v1332 = vpop.f32.mrf.mxu0
      %1333 = vmatprep.mubr.bf16.mxu0 %v771
      %1334 = vmatmul.mubr.bf16.gmra.mxu0 %v770
      %v1335 = vpop.f32.mrf.mxu0
      %v1336 = vadd.f32 %v1175, %v1335
      %v1337 = vpop.f32.mrf.mxu0
      %v1338 = vpop.f32.mrf.mxu0
      %v1339 = vadd.f32 %v1178, %v1338
      %v1340 = vpop.f32.mrf.mxu0
      %1341 = vmatprep.mubr.bf16.mxu0 %v775
      %1342 = vmatmul.mubr.bf16.gmra.mxu0 %v774
      %v1343 = vpop.f32.mrf.mxu0
      %v1344 = vadd.f32 %v1183, %v1343
      %v1345 = vpop.f32.mrf.mxu0
      %v1346 = vpop.f32.mrf.mxu0
      %v1347 = vadd.f32 %v1186, %v1346
      %v1348 = vpop.f32.mrf.mxu0
      %1349 = vmatprep.mubr.bf16.mxu0 %v779
      %1350 = vmatmul.mubr.bf16.gmra.mxu0 %v778
      %v1351 = vpop.f32.mrf.mxu0
      %v1352 = vadd.f32 %v1191, %v1351
      %v1353 = vpop.f32.mrf.mxu0
      %v1354 = vpop.f32.mrf.mxu0
      %v1355 = vadd.f32 %v1194, %v1354
      %v1356 = vpop.f32.mrf.mxu0
      %1357 = vdwg.mxu0
      %v1358 = vadd.f32 %v364, %v1232
      %v1359 = vadd.f32 %v365, %v1235
      %v1360 = vadd.f32 %v366, %v1240
      %v1361 = vadd.f32 %v367, %v1243
      %v1362 = vadd.f32 %v368, %v1248
      %v1363 = vadd.f32 %v369, %v1251
      %v1364 = vadd.f32 %v370, %v1256
      %v1365 = vadd.f32 %v371, %v1259
      %v1366 = vadd.f32 %v372, %v1264
      %v1367 = vadd.f32 %v373, %v1267
      %v1368 = vadd.f32 %v374, %v1272
      %v1369 = vadd.f32 %v375, %v1275
      %v1370 = vadd.f32 %v376, %v1280
      %v1371 = vadd.f32 %v377, %v1283
      %v1372 = vadd.f32 %v378, %v1288
      %v1373 = vadd.f32 %v379, %v1291
      %v1374 = vadd.f32 %v380, %v1296
      %v1375 = vadd.f32 %v381, %v1299
      %v1376 = vadd.f32 %v382, %v1304
      %v1377 = vadd.f32 %v383, %v1307
      %v1378 = vadd.f32 %v384, %v1312
      %v1379 = vadd.f32 %v385, %v1315
      %v1380 = vadd.f32 %v386, %v1320
      %v1381 = vadd.f32 %v387, %v1323
      %v1382 = vadd.f32 %v388, %v1328
      %v1383 = vadd.f32 %v389, %v1331
      %v1384 = vadd.f32 %v390, %v1336
      %v1385 = vadd.f32 %v391, %v1339
      %v1386 = vadd.f32 %v392, %v1344
      %v1387 = vadd.f32 %v393, %v1347
      %v1388 = vadd.f32 %v394, %v1352
      %v1389 = vadd.f32 %v395, %v1355
      %1390 = vst [vmem:[#allocation2] sm:$0xff] %v1358
      %1391 = vst [vmem:[#allocation2 + $0x8] sm:$0xff] %v1359
      %1392 = vst [vmem:[#allocation2 + $0x10] sm:$0xff] %v1360
      %1393 = vst [vmem:[#allocation2 + $0x18] sm:$0xff] %v1361
      %1394 = vst [vmem:[#allocation2 + $0x20] sm:$0xff] %v1362
      %1395 = vst [vmem:[#allocation2 + $0x28] sm:$0xff] %v1363
      %1396 = vst [vmem:[#allocation2 + $0x30] sm:$0xff] %v1364
      %1397 = vst [vmem:[#allocation2 + $0x38] sm:$0xff] %v1365
      %1398 = vst [vmem:[#allocation2 + $0x40] sm:$0xff] %v1366
      %1399 = vst [vmem:[#allocation2 + $0x48] sm:$0xff] %v1367
      %1400 = vst [vmem:[#allocation2 + $0x50] sm:$0xff] %v1368
      %1401 = vst [vmem:[#allocation2 + $0x58] sm:$0xff] %v1369
      %1402 = vst [vmem:[#allocation2 + $0x60] sm:$0xff] %v1370
      %1403 = vst [vmem:[#allocation2 + $0x68] sm:$0xff] %v1371
      %1404 = vst [vmem:[#allocation2 + $0x70] sm:$0xff] %v1372
      %1405 = vst [vmem:[#allocation2 + $0x78] sm:$0xff] %v1373
      %1406 = vst [vmem:[#allocation2 + $0x80] sm:$0xff] %v1374
      %1407 = vst [vmem:[#allocation2 + $0x88] sm:$0xff] %v1375
      %1408 = vst [vmem:[#allocation2 + $0x90] sm:$0xff] %v1376
      %1409 = vst [vmem:[#allocation2 + $0x98] sm:$0xff] %v1377
      %1410 = vst [vmem:[#allocation2 + $0xa0] sm:$0xff] %v1378
      %1411 = vst [vmem:[#allocation2 + $0xa8] sm:$0xff] %v1379
      %1412 = vst [vmem:[#allocation2 + $0xb0] sm:$0xff] %v1380
      %1413 = vst [vmem:[#allocation2 + $0xb8] sm:$0xff] %v1381
      %1414 = vst [vmem:[#allocation2 + $0xc0] sm:$0xff] %v1382
      %1415 = vst [vmem:[#allocation2 + $0xc8] sm:$0xff] %v1383
      %1416 = vst [vmem:[#allocation2 + $0xd0] sm:$0xff] %v1384
      %1417 = vst [vmem:[#allocation2 + $0xd8] sm:$0xff] %v1385
      %1418 = vst [vmem:[#allocation2 + $0xe0] sm:$0xff] %v1386
      %1419 = vst [vmem:[#allocation2 + $0xe8] sm:$0xff] %v1387
      %1420 = vst [vmem:[#allocation2 + $0xf0] sm:$0xff] %v1388
      %1421 = vst [vmem:[#allocation2 + $0xf8] sm:$0xff] %v1389
      // Predicated region
      $region33: #{_lambda_.15} parent=27 // pred_check
        %p1422 = pneg %p328
      $region34: #{_lambda_.15} parent=27 // pred_check_branch
        %1424 = sbr.rel (%p1422) target = $region36
      $region35: #{_lambda_.15} parent=27 // pred_region
        %v1425 = vld [vmem:[#allocation2] sm:$0xff]
        %v1426 = vld [vmem:[#allocation2 + $0x8] sm:$0xff]
        %v1427 = vld [vmem:[#allocation2 + $0x10] sm:$0xff]
        %v1428 = vld [vmem:[#allocation2 + $0x18] sm:$0xff]
        %v1429 = vld [vmem:[#allocation2 + $0x20] sm:$0xff]
        %v1430 = vld [vmem:[#allocation2 + $0x28] sm:$0xff]
        %v1431 = vld [vmem:[#allocation2 + $0x30] sm:$0xff]
        %v1432 = vld [vmem:[#allocation2 + $0x38] sm:$0xff]
        %v1433 = vld [vmem:[#allocation2 + $0x40] sm:$0xff]
        %v1434 = vld [vmem:[#allocation2 + $0x48] sm:$0xff]
        %v1435 = vld [vmem:[#allocation2 + $0x50] sm:$0xff]
        %v1436 = vld [vmem:[#allocation2 + $0x58] sm:$0xff]
        %v1437 = vld [vmem:[#allocation2 + $0x60] sm:$0xff]
        %v1438 = vld [vmem:[#allocation2 + $0x68] sm:$0xff]
        %v1439 = vld [vmem:[#allocation2 + $0x70] sm:$0xff]
        %v1440 = vld [vmem:[#allocation2 + $0x78] sm:$0xff]
        %v1441 = vld [vmem:[#allocation2 + $0x80] sm:$0xff]
        %v1442 = vld [vmem:[#allocation2 + $0x88] sm:$0xff]
        %v1443 = vld [vmem:[#allocation2 + $0x90] sm:$0xff]
        %v1444 = vld [vmem:[#allocation2 + $0x98] sm:$0xff]
        %v1445 = vld [vmem:[#allocation2 + $0xa0] sm:$0xff]
        %v1446 = vld [vmem:[#allocation2 + $0xa8] sm:$0xff]
        %v1447 = vld [vmem:[#allocation2 + $0xb0] sm:$0xff]
        %v1448 = vld [vmem:[#allocation2 + $0xb8] sm:$0xff]
        %v1449 = vld [vmem:[#allocation2 + $0xc0] sm:$0xff]
        %v1450 = vld [vmem:[#allocation2 + $0xc8] sm:$0xff]
        %v1451 = vld [vmem:[#allocation2 + $0xd0] sm:$0xff]
        %v1452 = vld [vmem:[#allocation2 + $0xd8] sm:$0xff]
        %v1453 = vld [vmem:[#allocation2 + $0xe0] sm:$0xff]
        %v1454 = vld [vmem:[#allocation2 + $0xe8] sm:$0xff]
        %v1455 = vld [vmem:[#allocation2 + $0xf0] sm:$0xff]
        %v1456 = vld [vmem:[#allocation2 + $0xf8] sm:$0xff]
        %v1457 = vpack.c.bf16 %v1426, %v1425
        %v1458 = vpack.c.bf16 %v1428, %v1427
        %v1459 = vpack.c.bf16 %v1430, %v1429
        %v1460 = vpack.c.bf16 %v1432, %v1431
        %v1461 = vpack.c.bf16 %v1434, %v1433
        %v1462 = vpack.c.bf16 %v1436, %v1435
        %v1463 = vpack.c.bf16 %v1438, %v1437
        %v1464 = vpack.c.bf16 %v1440, %v1439
        %v1465 = vpack.c.bf16 %v1442, %v1441
        %v1466 = vpack.c.bf16 %v1444, %v1443
        %v1467 = vpack.c.bf16 %v1446, %v1445
        %v1468 = vpack.c.bf16 %v1448, %v1447
        %v1469 = vpack.c.bf16 %v1450, %v1449
        %v1470 = vpack.c.bf16 %v1452, %v1451
        %v1471 = vpack.c.bf16 %v1454, %v1453
        %v1472 = vpack.c.bf16 %v1456, %v1455
        %v1489 = vunpack.c.l.b16 %v1457
        %v1490 = vunpack.c.h.b16 %v1457
        %v1491 = vunpack.c.l.b16 %v1458
        %v1492 = vunpack.c.h.b16 %v1458
        %v1493 = vunpack.c.l.b16 %v1459
        %v1494 = vunpack.c.h.b16 %v1459
        %v1495 = vunpack.c.l.b16 %v1460
        %v1496 = vunpack.c.h.b16 %v1460
        %v1497 = vunpack.c.l.b16 %v1461
        %v1498 = vunpack.c.h.b16 %v1461
        %v1499 = vunpack.c.l.b16 %v1462
        %v1500 = vunpack.c.h.b16 %v1462
        %v1501 = vunpack.c.l.b16 %v1463
        %v1502 = vunpack.c.h.b16 %v1463
        %v1503 = vunpack.c.l.b16 %v1464
        %v1504 = vunpack.c.h.b16 %v1464
        %v1505 = vunpack.c.l.b16 %v1465
        %v1506 = vunpack.c.h.b16 %v1465
        %v1507 = vunpack.c.l.b16 %v1466
        %v1508 = vunpack.c.h.b16 %v1466
        %v1509 = vunpack.c.l.b16 %v1467
        %v1510 = vunpack.c.h.b16 %v1467
        %v1511 = vunpack.c.l.b16 %v1468
        %v1512 = vunpack.c.h.b16 %v1468
        %v1513 = vunpack.c.l.b16 %v1469
        %v1514 = vunpack.c.h.b16 %v1469
        %v1515 = vunpack.c.l.b16 %v1470
        %v1516 = vunpack.c.h.b16 %v1470
        %v1517 = vunpack.c.l.b16 %v1471
        %v1518 = vunpack.c.h.b16 %v1471
        %v1519 = vunpack.c.l.b16 %v1472
        %v1520 = vunpack.c.h.b16 %v1472
        %v1521 = vpack.c.b16 %v1489, %v1489
        %v1522 = vpack.c.b16 %v1490, %v1490
        %v1523 = vpack.c.b16 %v1491, %v1491
        %v1524 = vpack.c.b16 %v1492, %v1492
        %v1525 = vpack.c.b16 %v1493, %v1493
        %v1526 = vpack.c.b16 %v1494, %v1494
        %v1527 = vpack.c.b16 %v1495, %v1495
        %v1528 = vpack.c.b16 %v1496, %v1496
        %v1529 = vpack.c.b16 %v1497, %v1497
        %v1530 = vpack.c.b16 %v1498, %v1498
        %v1531 = vpack.c.b16 %v1499, %v1499
        %v1532 = vpack.c.b16 %v1500, %v1500
        %v1533 = vpack.c.b16 %v1501, %v1501
        %v1534 = vpack.c.b16 %v1502, %v1502
        %v1535 = vpack.c.b16 %v1503, %v1503
        %v1536 = vpack.c.b16 %v1504, %v1504
        %v1537 = vpack.c.b16 %v1505, %v1505
        %v1538 = vpack.c.b16 %v1506, %v1506
        %v1539 = vpack.c.b16 %v1507, %v1507
        %v1540 = vpack.c.b16 %v1508, %v1508
        %v1541 = vpack.c.b16 %v1509, %v1509
        %v1542 = vpack.c.b16 %v1510, %v1510
        %v1543 = vpack.c.b16 %v1511, %v1511
        %v1544 = vpack.c.b16 %v1512, %v1512
        %v1545 = vpack.c.b16 %v1513, %v1513
        %v1546 = vpack.c.b16 %v1514, %v1514
        %v1547 = vpack.c.b16 %v1515, %v1515
        %v1548 = vpack.c.b16 %v1516, %v1516
        %v1549 = vpack.c.b16 %v1517, %v1517
        %v1550 = vpack.c.b16 %v1518, %v1518
        %v1551 = vpack.c.b16 %v1519, %v1519
        %v1552 = vpack.c.b16 %v1520, %v1520
        %1585 = vst [vmem:[%s314] sm:$0xf] %v1521
        %1586 = vst [vmem:[%s314 + $0x4] sm:$0xf] %v1522
        %1587 = vst [vmem:[%s314 + $0x8] sm:$0xf] %v1523
        %1588 = vst [vmem:[%s314 + $0xc] sm:$0xf] %v1524
        %1589 = vst [vmem:[%s314 + $0x10] sm:$0xf] %v1525
        %1590 = vst [vmem:[%s314 + $0x14] sm:$0xf] %v1526
        %1591 = vst [vmem:[%s314 + $0x18] sm:$0xf] %v1527
        %1592 = vst [vmem:[%s314 + $0x1c] sm:$0xf] %v1528
        %1593 = vst [vmem:[%s314 + $0x20] sm:$0xf] %v1529
        %1594 = vst [vmem:[%s314 + $0x24] sm:$0xf] %v1530
        %1595 = vst [vmem:[%s314 + $0x28] sm:$0xf] %v1531
        %1596 = vst [vmem:[%s314 + $0x2c] sm:$0xf] %v1532
        %1597 = vst [vmem:[%s314 + $0x30] sm:$0xf] %v1533
        %1598 = vst [vmem:[%s314 + $0x34] sm:$0xf] %v1534
        %1599 = vst [vmem:[%s314 + $0x38] sm:$0xf] %v1535
        %1600 = vst [vmem:[%s314 + $0x3c] sm:$0xf] %v1536
        %1601 = vst [vmem:[%s314 + $0x40] sm:$0xf] %v1537
        %1602 = vst [vmem:[%s314 + $0x44] sm:$0xf] %v1538
        %1603 = vst [vmem:[%s314 + $0x48] sm:$0xf] %v1539
        %1604 = vst [vmem:[%s314 + $0x4c] sm:$0xf] %v1540
        %1605 = vst [vmem:[%s314 + $0x50] sm:$0xf] %v1541
        %1606 = vst [vmem:[%s314 + $0x54] sm:$0xf] %v1542
        %1607 = vst [vmem:[%s314 + $0x58] sm:$0xf] %v1543
        %1608 = vst [vmem:[%s314 + $0x5c] sm:$0xf] %v1544
        %1609 = vst [vmem:[%s314 + $0x60] sm:$0xf] %v1545
        %1610 = vst [vmem:[%s314 + $0x64] sm:$0xf] %v1546
        %1611 = vst [vmem:[%s314 + $0x68] sm:$0xf] %v1547
        %1612 = vst [vmem:[%s314 + $0x6c] sm:$0xf] %v1548
        %1613 = vst [vmem:[%s314 + $0x70] sm:$0xf] %v1549
        %1614 = vst [vmem:[%s314 + $0x74] sm:$0xf] %v1550
        %1615 = vst [vmem:[%s314 + $0x78] sm:$0xf] %v1551
        %1616 = vst [vmem:[%s314 + $0x7c] sm:$0xf] %v1552
        %v1617 = vadd.f32 %v1425, %v1426
        %v1618 = vadd.f32 %v1617, %v1427
        %v1619 = vadd.f32 %v1618, %v1428
        %v1620 = vadd.f32 %v1619, %v1429
        %v1621 = vadd.f32 %v1620, %v1430
        %v1622 = vadd.f32 %v1621, %v1431
        %v1623 = vadd.f32 %v1622, %v1432
        %v1624 = vadd.f32 %v1623, %v1433
        %v1625 = vadd.f32 %v1624, %v1434
        %v1626 = vadd.f32 %v1625, %v1435
        %v1627 = vadd.f32 %v1626, %v1436
        %v1628 = vadd.f32 %v1627, %v1437
        %v1629 = vadd.f32 %v1628, %v1438
        %v1630 = vadd.f32 %v1629, %v1439
        %v1631 = vadd.f32 %v1630, %v1440
        %v1632 = vadd.f32 %v1631, %v1441
        %v1633 = vadd.f32 %v1632, %v1442
        %v1634 = vadd.f32 %v1633, %v1443
        %v1635 = vadd.f32 %v1634, %v1444
        %v1636 = vadd.f32 %v1635, %v1445
        %v1637 = vadd.f32 %v1636, %v1446
        %v1638 = vadd.f32 %v1637, %v1447
        %v1639 = vadd.f32 %v1638, %v1448
        %v1640 = vadd.f32 %v1639, %v1449
        %v1641 = vadd.f32 %v1640, %v1450
        %v1642 = vadd.f32 %v1641, %v1451
        %v1643 = vadd.f32 %v1642, %v1452
        %v1644 = vadd.f32 %v1643, %v1453
        %v1645 = vadd.f32 %v1644, %v1454
        %v1646 = vadd.f32 %v1645, %v1455
        %v1647 = vadd.f32 %v1646, %v1456
        %v1648 = vrot.slane %v1647, 4
        %v1649 = vadd.f32 %v1647, %v1648
        %v1650 = vrot.slane %v1649, 2
        %v1651 = vadd.f32 %v1649, %v1650
        %v1652 = vrot.slane %v1651, 1
        %v1653 = vadd.f32 %v1651, %v1652
        %v1654 = vmul.f32 %v1425, %v1425
        %v1655 = vmul.f32 %v1426, %v1426
        %v1656 = vmul.f32 %v1427, %v1427
        %v1657 = vmul.f32 %v1428, %v1428
        %v1658 = vmul.f32 %v1429, %v1429
        %v1659 = vmul.f32 %v1430, %v1430
        %v1660 = vmul.f32 %v1431, %v1431
        %v1661 = vmul.f32 %v1432, %v1432
        %v1662 = vmul.f32 %v1433, %v1433
        %v1663 = vmul.f32 %v1434, %v1434
        %v1664 = vmul.f32 %v1435, %v1435
        %v1665 = vmul.f32 %v1436, %v1436
        %v1666 = vmul.f32 %v1437, %v1437
        %v1667 = vmul.f32 %v1438, %v1438
        %v1668 = vmul.f32 %v1439, %v1439
        %v1669 = vmul.f32 %v1440, %v1440
        %v1670 = vmul.f32 %v1441, %v1441
        %v1671 = vmul.f32 %v1442, %v1442
        %v1672 = vmul.f32 %v1443, %v1443
        %v1673 = vmul.f32 %v1444, %v1444
        %v1674 = vmul.f32 %v1445, %v1445
        %v1675 = vmul.f32 %v1446, %v1446
        %v1676 = vmul.f32 %v1447, %v1447
        %v1677 = vmul.f32 %v1448, %v1448
        %v1678 = vmul.f32 %v1449, %v1449
        %v1679 = vmul.f32 %v1450, %v1450
        %v1680 = vmul.f32 %v1451, %v1451
        %v1681 = vmul.f32 %v1452, %v1452
        %v1682 = vmul.f32 %v1453, %v1453
        %v1683 = vmul.f32 %v1454, %v1454
        %v1684 = vmul.f32 %v1455, %v1455
        %v1685 = vmul.f32 %v1456, %v1456
        %v1686 = vadd.f32 %v1654, %v1655
        %v1687 = vadd.f32 %v1686, %v1656
        %v1688 = vadd.f32 %v1687, %v1657
        %v1689 = vadd.f32 %v1688, %v1658
        %v1690 = vadd.f32 %v1689, %v1659
        %v1691 = vadd.f32 %v1690, %v1660
        %v1692 = vadd.f32 %v1691, %v1661
        %v1693 = vadd.f32 %v1692, %v1662
        %v1694 = vadd.f32 %v1693, %v1663
        %v1695 = vadd.f32 %v1694, %v1664
        %v1696 = vadd.f32 %v1695, %v1665
        %v1697 = vadd.f32 %v1696, %v1666
        %v1698 = vadd.f32 %v1697, %v1667
        %v1699 = vadd.f32 %v1698, %v1668
        %v1700 = vadd.f32 %v1699, %v1669
        %v1701 = vadd.f32 %v1700, %v1670
        %v1702 = vadd.f32 %v1701, %v1671
        %v1703 = vadd.f32 %v1702, %v1672
        %v1704 = vadd.f32 %v1703, %v1673
        %v1705 = vadd.f32 %v1704, %v1674
        %v1706 = vadd.f32 %v1705, %v1675
        %v1707 = vadd.f32 %v1706, %v1676
        %v1708 = vadd.f32 %v1707, %v1677
        %v1709 = vadd.f32 %v1708, %v1678
        %v1710 = vadd.f32 %v1709, %v1679
        %v1711 = vadd.f32 %v1710, %v1680
        %v1712 = vadd.f32 %v1711, %v1681
        %v1713 = vadd.f32 %v1712, %v1682
        %v1714 = vadd.f32 %v1713, %v1683
        %v1715 = vadd.f32 %v1714, %v1684
        %v1716 = vadd.f32 %v1715, %v1685
        %v1717 = vrot.slane %v1716, 4
        %v1718 = vadd.f32 %v1716, %v1717
        %v1719 = vrot.slane %v1718, 2
        %v1720 = vadd.f32 %v1718, %v1719
        %v1721 = vrot.slane %v1720, 1
        %v1722 = vadd.f32 %v1720, %v1721
        %v1723 = vlaneseq
        %v1724 = vshrl.u32 %v1723, 7
        %vm1725 = vcmp.eq.s32.totalorder %v1724, 0
        %vm1726 = vcmp.eq.s32.totalorder %v1724, 1
        %v1727 = vsel %vm1726, %v1722, 0.0
        %v1728 = vsel %vm1725, %v1653, %v1727
        %1729 = vst [vmem:[%s326] sm:$0xff] %v1728
      $region36: #{_lambda_.15} parent=27 // pred_fallthru
        _
      %s1730 = smul.u32 32, %s22
      %p1731 = scmp.lt.s32.totalorder %s21, 3
      %s1732 = scalar_select %p1731, %s21, 3
      %p1733 = scmp.lt.s32.totalorder %s1730, 63
      %s1734 = scalar_select %p1733, %s1730, 63
      %p1735 = scmp.lt.s32.totalorder %s23, 0
      %s1736 = scalar_select %p1735, %s23, 0
      %s1737 = sadd.s32 %s1736, %s1734
      %s1738 = smul.addr %s1732, 64
      %s1739 = sadd.s32 %s1737, %s1738
      %s1740 = smul.addr %s1739, 4
      %s1741 = scalar_lea.vmem %s2, %s1740
      %p1742 = scmp.lt.s32.totalorder %s21, 3
      %s1743 = scalar_select %p1742, %s21, 3
      %p1744 = scmp.lt.s32.totalorder %s22, 1
      %s1745 = scalar_select %p1744, %s22, 1
      %p1746 = scmp.lt.s32.totalorder %s23, 0
      %s1747 = scalar_select %p1746, %s23, 0
      %s1748 = sadd.s32 %s1747, %s1745
      %s1749 = smul.addr %s1743, 2
      %s1750 = sadd.s32 %s1748, %s1749
      %s1751 = smul.addr %s1750, 8
      %s1752 = scalar_lea.vmem %s3, %s1751
      // Predicated region
      $region37: #{_lambda_.15} parent=27 // pred_check
        %p1753 = pneg %p123
      $region38: #{_lambda_.15} parent=27 // pred_check_branch
        %1755 = sbr.rel (%p1753) target = $region40
      $region39: #{_lambda_.15} parent=27 // pred_region
        %s1756 = smul.u32 32, %s22
      $region40: #{_lambda_.15} parent=27 // pred_fallthru
        _
      // Predicated region
      $region41: #{_lambda_.15} parent=27 // pred_check
        %p1757 = pneg %p153
      $region42: #{_lambda_.15} parent=27 // pred_check_branch
        %1759 = sbr.rel (%p1757) target = $region44
      $region43: #{_lambda_.15} parent=27 // pred_region
        _
      $region44: #{_lambda_.15} parent=27 // pred_fallthru
        _
    $region28: #{_lambda_.15} parent=5 // pred_fallthru
      _
    %p1760 = scmp.le.s32.totalorder 2, %s10
    // Predicated region
    $region45: #{_lambda_.15} parent=5 // pred_check
      %p1761 = pneg %p1760
    $region46: #{_lambda_.15} parent=5 // pred_check_branch
      %1763 = sbr.rel (%p1761) target = $region48
    $region47: #{_lambda_.15} parent=5 // pred_region
      %s1764 = ssub.s32 %s10, 2
      // Predicated region
      $region49: #{_lambda_.15} parent=47 // pred_check
        %p1765 = pneg %p129
      $region50: #{_lambda_.15} parent=47 // pred_check_branch
        %1767 = sbr.rel (%p1765) target = $region52
      $region51: #{_lambda_.15} parent=47 // pred_region
        %s1768 = smul.u32 32, %s26
        %p1769 = scmp.lt.s32.totalorder %s25, 3
        %s1770 = scalar_select %p1769, %s25, 3
        %p1771 = scmp.lt.s32.totalorder %s1768, 63
        %s1772 = scalar_select %p1771, %s1768, 63
        %p1773 = scmp.lt.s32.totalorder %s27, 0
        %s1774 = scalar_select %p1773, %s27, 0
        %s1775 = sadd.s32 %s1774, %s1772
        %s1776 = smul.addr %s1770, 64
        %s1777 = sadd.s32 %s1775, %s1776
        %s1778 = smul.addr %s1777, 4
        %s1779 = scalar_lea.vmem %s2, %s1778
      $region52: #{_lambda_.15} parent=47 // pred_fallthru
        _
      // Predicated region
      $region53: #{_lambda_.15} parent=47 // pred_check
        %p1780 = pneg %p159
      $region54: #{_lambda_.15} parent=47 // pred_check_branch
        %1782 = sbr.rel (%p1780) target = $region56
      $region55: #{_lambda_.15} parent=47 // pred_region
        %p1783 = scmp.lt.s32.totalorder %s25, 3
        %s1784 = scalar_select %p1783, %s25, 3
        %p1785 = scmp.lt.s32.totalorder %s26, 1
        %s1786 = scalar_select %p1785, %s26, 1
        %p1787 = scmp.lt.s32.totalorder %s27, 0
        %s1788 = scalar_select %p1787, %s27, 0
        %s1789 = sadd.s32 %s1788, %s1786
        %s1790 = smul.addr %s1784, 2
        %s1791 = sadd.s32 %s1789, %s1790
        %s1792 = smul.addr %s1791, 8
        %s1793 = scalar_lea.vmem %s3, %s1792
      $region56: #{_lambda_.15} parent=47 // pred_fallthru
        _
    $region48: #{_lambda_.15} parent=5 // pred_fallthru
      _
  $region6: #{_lambda_.15} parent=0 // loop_footer
    %s14 = sadd.s32 1, %s10
  $region7: #{_lambda_.15} parent=0 // loop_footer_branch
    %9 = sbr.rel target = $region3
  $region8: #{_lambda_.15} parent=0 // loop_exit
    _

// kernel: _lambda_.16
$region0: #{_lambda_.16}
  #allocation0 [shape = 'u32[]', space=smem, size = 0x4, offset = 0x4, fixed_abs, tag = 'smem constant byte address 0x4 - core index']
  #allocation1 [shape = 'u32[144,128]{1,0:T(1,128)}', space=vmem, size = 0x12000, scoped, tag = 'internal scratch']
  %s0 = inlined_call_operand.vmem [shape: bf16[2048,128], index: 0, kind: input, shape index: {}]
  %s1 = inlined_call_operand.vmem [shape: f32[1,128], index: 1, kind: input, shape index: {}]
  %s2 = inlined_call_operand.vmem [shape: f32[1,128], index: 2, kind: input, shape index: {}]
  %s3 = inlined_call_operand.vmem [shape: bf16[2048,128], index: 3, kind: output, shape index: {}]
  %s4 = sld [smem:[#allocation0]]
  $region45: #{_lambda_.16} parent=0
    _
  %s6 = ssub.s32 1, %s4
  %s7 = scalar_select 0, %s6, %s4
  loop: start=0, step=1, limit=4
  $region2: #{_lambda_.16} parent=0 // loop_pre_header
    _
  $region3: #{_lambda_.16} parent=0 // loop_header
    %s9 = sphi 0, %s13
    %p10 = scmp.ge.s32.totalorder %s9, 4
    %s19 = sphi 0, %s21
    %s22 = sphi 0, %s19
    %s23 = sphi 0, %s22
    %s39 = sphi 0, %s23
    %s43 = sphi 0, %s43
    %s45 = sphi 0, %s43
    %s46 = sphi 0, %s45
    %s60 = sphi 0, %s46
    %s64 = sphi 0, %s64
    %s66 = sphi 0, %s64
    %s67 = sphi 0, %s66
    %s81 = sphi 0, %s67
    %s87 = sphi 0, %s89
    %s90 = sphi 0, %s87
    %s91 = sphi 0, %s90
    %s107 = sphi 0, %s91
  $region4: #{_lambda_.16} parent=0 // loop_header_branch
    %12 = sbr.rel (%p10) target = $region8
  $region5: #{_lambda_.16} parent=0 // loop_body
    %s14 = ssub.s32 %s9, 1
    %s15 = ssub.s32 %s9, 2
    %s16 = sadd.s32 %s9, 1
    %s17 = ssub.s32 %s9, %s16
    %p18 = scmp.eq.s32.totalorder %s17, 0
    %s20 = sadd.s32 %s19, 1
    %s21 = scalar_select %p18, %s19, %s20
    %p24 = pneg %p18
    %p25 = scmp.eq.s32.totalorder %s9, 1
    %p26 = por %p24, %p25
    %p27 = scmp.ne.s32.totalorder %s19, %s22
    %p28 = scmp.eq.s32.totalorder %s9, 0
    %p29 = por %p27, %p28
    %p30 = scmp.ne.s32.totalorder %s19, %s22
    %p31 = scmp.eq.s32.totalorder %s14, 1
    %p32 = por %p30, %p31
    %p33 = scmp.ne.s32.totalorder %s22, %s23
    %p34 = scmp.eq.s32.totalorder %s14, 0
    %p35 = por %p33, %p34
    %p36 = scmp.ne.s32.totalorder %s22, %s23
    %p37 = scmp.eq.s32.totalorder %s15, 1
    %p38 = por %p36, %p37
    %p40 = scmp.ne.s32.totalorder %s23, %s39
    %p41 = scmp.eq.s32.totalorder %s15, 0
    %p42 = por %p40, %p41
    %s44 = sadd.s32 %s43, 1
    %p47 = scmp.eq.s32.totalorder %s9, 1
    %p48 = scmp.ne.s32.totalorder %s43, %s45
    %p49 = scmp.eq.s32.totalorder %s9, 0
    %p50 = por %p48, %p49
    %p51 = scmp.ne.s32.totalorder %s43, %s45
    %p52 = scmp.eq.s32.totalorder %s14, 1
    %p53 = por %p51, %p52
    %p54 = scmp.ne.s32.totalorder %s45, %s46
    %p55 = scmp.eq.s32.totalorder %s14, 0
    %p56 = por %p54, %p55
    %p57 = scmp.ne.s32.totalorder %s45, %s46
    %p58 = scmp.eq.s32.totalorder %s15, 1
    %p59 = por %p57, %p58
    %p61 = scmp.ne.s32.totalorder %s46, %s60
    %p62 = scmp.eq.s32.totalorder %s15, 0
    %p63 = por %p61, %p62
    %s65 = sadd.s32 %s64, 1
    %p68 = scmp.eq.s32.totalorder %s9, 1
    %p69 = scmp.ne.s32.totalorder %s64, %s66
    %p70 = scmp.eq.s32.totalorder %s9, 0
    %p71 = por %p69, %p70
    %p72 = scmp.ne.s32.totalorder %s64, %s66
    %p73 = scmp.eq.s32.totalorder %s14, 1
    %p74 = por %p72, %p73
    %p75 = scmp.ne.s32.totalorder %s66, %s67
    %p76 = scmp.eq.s32.totalorder %s14, 0
    %p77 = por %p75, %p76
    %p78 = scmp.ne.s32.totalorder %s66, %s67
    %p79 = scmp.eq.s32.totalorder %s15, 1
    %p80 = por %p78, %p79
    %p82 = scmp.ne.s32.totalorder %s67, %s81
    %p83 = scmp.eq.s32.totalorder %s15, 0
    %p84 = por %p82, %p83
    %s85 = ssub.s32 %s9, %s16
    %p86 = scmp.eq.s32.totalorder %s85, 0
    %s88 = sadd.s32 %s87, 1
    %s89 = scalar_select %p86, %s87, %s88
    %p92 = pneg %p86
    %p93 = scmp.eq.s32.totalorder %s9, 1
    %p94 = por %p92, %p93
    %p95 = scmp.ne.s32.totalorder %s87, %s90
    %p96 = scmp.eq.s32.totalorder %s9, 0
    %p97 = por %p95, %p96
    %p98 = scmp.ne.s32.totalorder %s87, %s90
    %p99 = scmp.eq.s32.totalorder %s14, 1
    %p100 = por %p98, %p99
    %p101 = scmp.ne.s32.totalorder %s90, %s91
    %p102 = scmp.eq.s32.totalorder %s14, 0
    %p103 = por %p101, %p102
    %p104 = scmp.ne.s32.totalorder %s90, %s91
    %p105 = scmp.eq.s32.totalorder %s15, 1
    %p106 = por %p104, %p105
    %p108 = scmp.ne.s32.totalorder %s91, %s107
    %p109 = scmp.eq.s32.totalorder %s15, 0
    %p110 = por %p108, %p109
    %p111 = scmp.le.s32.totalorder 1, %s9
    %p112 = scmp.lt.s32.totalorder %s9, 3
    %p113 = pnand %p111, %p112
    %p114 = pneg %p113
    // Predicated region
    $region9: #{_lambda_.16} parent=5 // pred_check
      _
    $region10: #{_lambda_.16} parent=5 // pred_check_branch
      %116 = sbr.rel (%p113) target = $region12
    $region11: #{_lambda_.16} parent=5 // pred_region
      %s117 = ssub.s32 %s9, 1
      // Predicated region
      $region13: #{_lambda_.16} parent=11 // pred_check
        %p118 = pneg %p56
      $region14: #{_lambda_.16} parent=11 // pred_check_branch
        %120 = sbr.rel (%p118) target = $region16
      $region15: #{_lambda_.16} parent=11 // pred_region
        _
      $region16: #{_lambda_.16} parent=11 // pred_fallthru
        _
      // Predicated region
      $region17: #{_lambda_.16} parent=11 // pred_check
        %p121 = pneg %p77
      $region18: #{_lambda_.16} parent=11 // pred_check_branch
        %123 = sbr.rel (%p121) target = $region20
      $region19: #{_lambda_.16} parent=11 // pred_region
        _
      $region20: #{_lambda_.16} parent=11 // pred_fallthru
        _
    $region12: #{_lambda_.16} parent=5 // pred_fallthru
      _
    %p124 = scmp.lt.s32.totalorder %s9, 2
    // Predicated region
    $region21: #{_lambda_.16} parent=5 // pred_check
      %p125 = pneg %p124
    $region22: #{_lambda_.16} parent=5 // pred_check_branch
      %127 = sbr.rel (%p125) target = $region24
    $region23: #{_lambda_.16} parent=5 // pred_region
      // Predicated region
      $region25: #{_lambda_.16} parent=23 // pred_check
        %p128 = pneg %p29
      $region26: #{_lambda_.16} parent=23 // pred_check_branch
        %130 = sbr.rel (%p128) target = $region28
      $region27: #{_lambda_.16} parent=23 // pred_region
        %s131 = smul.u32 128, %s9
        %p132 = scmp.lt.s32.totalorder %s131, 255
        %s133 = scalar_select %p132, %s131, 255
        %s134 = smul.addr %s133, 4
        %s135 = scalar_lea.vmem %s0, %s134
        %s136 = smul.u32 128, %s9
      $region28: #{_lambda_.16} parent=23 // pred_fallthru
        _
    $region24: #{_lambda_.16} parent=5 // pred_fallthru
      _
    %p137 = scmp.le.s32.totalorder 1, %s9
    %p138 = scmp.lt.s32.totalorder %s9, 3
    %p139 = pnand %p137, %p138
    %p140 = pneg %p139
    // Predicated region
    $region29: #{_lambda_.16} parent=5 // pred_check
      _
    $region30: #{_lambda_.16} parent=5 // pred_check_branch
      %142 = sbr.rel (%p139) target = $region32
    $region31: #{_lambda_.16} parent=5 // pred_region
      %s143 = ssub.s32 %s9, 1
      %s144 = smul.u32 128, %s14
      %p145 = scmp.lt.s32.totalorder %s144, 255
      %s146 = scalar_select %p145, %s144, 255
      %s147 = smul.addr %s146, 4
      %s148 = scalar_lea.vmem %s0, %s147
      %p149 = pneg %p35
      %p150 = pneg %p32
      %p151 = pneg %p56
      %p152 = pneg %p53
      %p153 = pneg %p77
      %p154 = pneg %p74
      %p155 = pneg %p103
      %p156 = pneg %p100
      %s157 = smul.u32 128, %s14
      %p158 = scmp.lt.s32.totalorder %s157, 255
      %s159 = scalar_select %p158, %s157, 255
      %s160 = smul.addr %s159, 4
      %s161 = scalar_lea.vmem %s3, %s160
      %s162 = smul.u32 128, %s14
      %p163 = scmp.lt.s32.totalorder %s162, 255
      %s164 = scalar_select %p163, %s162, 255
      %s165 = smul.addr %s164, 4
      %s166 = scalar_lea.vmem %s0, %s165
      %s167 = smul.u32 128, %s14
      %s168 = smul.u32 128, %s14
      %p169 = scmp.lt.s32.totalorder %s168, 255
      %s170 = scalar_select %p169, %s168, 255
      %s171 = smul.addr %s170, 4
      %s172 = scalar_lea.vmem %s3, %s171
      %s173 = smul.u32 128, %s14
      %v174 = vld [vmem:[%s166] sm:$0xf]
      %v175 = vld [vmem:[%s166 + $0x4] sm:$0xf]
      %v176 = vld [vmem:[%s166 + $0x8] sm:$0xf]
      %v177 = vld [vmem:[%s166 + $0xc] sm:$0xf]
      %v178 = vld [vmem:[%s166 + $0x10] sm:$0xf]
      %v179 = vld [vmem:[%s166 + $0x14] sm:$0xf]
      %v180 = vld [vmem:[%s166 + $0x18] sm:$0xf]
      %v181 = vld [vmem:[%s166 + $0x1c] sm:$0xf]
      %v182 = vld [vmem:[%s166 + $0x20] sm:$0xf]
      %v183 = vld [vmem:[%s166 + $0x24] sm:$0xf]
      %v184 = vld [vmem:[%s166 + $0x28] sm:$0xf]
      %v185 = vld [vmem:[%s166 + $0x2c] sm:$0xf]
      %v186 = vld [vmem:[%s166 + $0x30] sm:$0xf]
      %v187 = vld [vmem:[%s166 + $0x34] sm:$0xf]
      %v188 = vld [vmem:[%s166 + $0x38] sm:$0xf]
      %v189 = vld [vmem:[%s166 + $0x3c] sm:$0xf]
      %v190 = vld [vmem:[%s166 + $0x40] sm:$0xf]
      %v191 = vld [vmem:[%s166 + $0x44] sm:$0xf]
      %v192 = vld [vmem:[%s166 + $0x48] sm:$0xf]
      %v193 = vld [vmem:[%s166 + $0x4c] sm:$0xf]
      %v194 = vld [vmem:[%s166 + $0x50] sm:$0xf]
      %v195 = vld [vmem:[%s166 + $0x54] sm:$0xf]
      %v196 = vld [vmem:[%s166 + $0x58] sm:$0xf]
      %v197 = vld [vmem:[%s166 + $0x5c] sm:$0xf]
      %v198 = vld [vmem:[%s166 + $0x60] sm:$0xf]
      %v199 = vld [vmem:[%s166 + $0x64] sm:$0xf]
      %v200 = vld [vmem:[%s166 + $0x68] sm:$0xf]
      %v201 = vld [vmem:[%s166 + $0x6c] sm:$0xf]
      %v202 = vld [vmem:[%s166 + $0x70] sm:$0xf]
      %v203 = vld [vmem:[%s166 + $0x74] sm:$0xf]
      %v204 = vld [vmem:[%s166 + $0x78] sm:$0xf]
      %v205 = vld [vmem:[%s166 + $0x7c] sm:$0xf]
      %v206 = vld [vmem:[%s166 + $0x80] sm:$0xf]
      %v207 = vld [vmem:[%s166 + $0x84] sm:$0xf]
      %v208 = vld [vmem:[%s166 + $0x88] sm:$0xf]
      %v209 = vld [vmem:[%s166 + $0x8c] sm:$0xf]
      %v210 = vld [vmem:[%s166 + $0x90] sm:$0xf]
      %v211 = vld [vmem:[%s166 + $0x94] sm:$0xf]
      %v212 = vld [vmem:[%s166 + $0x98] sm:$0xf]
      %v213 = vld [vmem:[%s166 + $0x9c] sm:$0xf]
      %v214 = vld [vmem:[%s166 + $0xa0] sm:$0xf]
      %v215 = vld [vmem:[%s166 + $0xa4] sm:$0xf]
      %v216 = vld [vmem:[%s166 + $0xa8] sm:$0xf]
      %v217 = vld [vmem:[%s166 + $0xac] sm:$0xf]
      %v218 = vld [vmem:[%s166 + $0xb0] sm:$0xf]
      %v219 = vld [vmem:[%s166 + $0xb4] sm:$0xf]
      %v220 = vld [vmem:[%s166 + $0xb8] sm:$0xf]
      %v221 = vld [vmem:[%s166 + $0xbc] sm:$0xf]
      %v222 = vld [vmem:[%s166 + $0xc0] sm:$0xf]
      %v223 = vld [vmem:[%s166 + $0xc4] sm:$0xf]
      %v224 = vld [vmem:[%s166 + $0xc8] sm:$0xf]
      %v225 = vld [vmem:[%s166 + $0xcc] sm:$0xf]
      %v226 = vld [vmem:[%s166 + $0xd0] sm:$0xf]
      %v227 = vld [vmem:[%s166 + $0xd4] sm:$0xf]
      %v228 = vld [vmem:[%s166 + $0xd8] sm:$0xf]
      %v229 = vld [vmem:[%s166 + $0xdc] sm:$0xf]
      %v230 = vld [vmem:[%s166 + $0xe0] sm:$0xf]
      %v231 = vld [vmem:[%s166 + $0xe4] sm:$0xf]
      %v232 = vld [vmem:[%s166 + $0xe8] sm:$0xf]
      %v233 = vld [vmem:[%s166 + $0xec] sm:$0xf]
      %v234 = vld [vmem:[%s166 + $0xf0] sm:$0xf]
      %v235 = vld [vmem:[%s166 + $0xf4] sm:$0xf]
      %v236 = vld [vmem:[%s166 + $0xf8] sm:$0xf]
      %v237 = vld [vmem:[%s166 + $0xfc] sm:$0xf]
      %v238 = vld [vmem:[%s166 + $0x100] sm:$0xf]
      %v239 = vld [vmem:[%s166 + $0x104] sm:$0xf]
      %v240 = vld [vmem:[%s166 + $0x108] sm:$0xf]
      %v241 = vld [vmem:[%s166 + $0x10c] sm:$0xf]
      %v242 = vld [vmem:[%s166 + $0x110] sm:$0xf]
      %v243 = vld [vmem:[%s166 + $0x114] sm:$0xf]
      %v244 = vld [vmem:[%s166 + $0x118] sm:$0xf]
      %v245 = vld [vmem:[%s166 + $0x11c] sm:$0xf]
      %v246 = vld [vmem:[%s166 + $0x120] sm:$0xf]
      %v247 = vld [vmem:[%s166 + $0x124] sm:$0xf]
      %v248 = vld [vmem:[%s166 + $0x128] sm:$0xf]
      %v249 = vld [vmem:[%s166 + $0x12c] sm:$0xf]
      %v250 = vld [vmem:[%s166 + $0x130] sm:$0xf]
      %v251 = vld [vmem:[%s166 + $0x134] sm:$0xf]
      %v252 = vld [vmem:[%s166 + $0x138] sm:$0xf]
      %v253 = vld [vmem:[%s166 + $0x13c] sm:$0xf]
      %v254 = vld [vmem:[%s166 + $0x140] sm:$0xf]
      %v255 = vld [vmem:[%s166 + $0x144] sm:$0xf]
      %v256 = vld [vmem:[%s166 + $0x148] sm:$0xf]
      %v257 = vld [vmem:[%s166 + $0x14c] sm:$0xf]
      %v258 = vld [vmem:[%s166 + $0x150] sm:$0xf]
      %v259 = vld [vmem:[%s166 + $0x154] sm:$0xf]
      %v260 = vld [vmem:[%s166 + $0x158] sm:$0xf]
      %v261 = vld [vmem:[%s166 + $0x15c] sm:$0xf]
      %v262 = vld [vmem:[%s166 + $0x160] sm:$0xf]
      %v263 = vld [vmem:[%s166 + $0x164] sm:$0xf]
      %v264 = vld [vmem:[%s166 + $0x168] sm:$0xf]
      %v265 = vld [vmem:[%s166 + $0x16c] sm:$0xf]
      %v266 = vld [vmem:[%s166 + $0x170] sm:$0xf]
      %v267 = vld [vmem:[%s166 + $0x174] sm:$0xf]
      %v268 = vld [vmem:[%s166 + $0x178] sm:$0xf]
      %v269 = vld [vmem:[%s166 + $0x17c] sm:$0xf]
      %v270 = vld [vmem:[%s166 + $0x180] sm:$0xf]
      %v271 = vld [vmem:[%s166 + $0x184] sm:$0xf]
      %v272 = vld [vmem:[%s166 + $0x188] sm:$0xf]
      %v273 = vld [vmem:[%s166 + $0x18c] sm:$0xf]
      %v274 = vld [vmem:[%s166 + $0x190] sm:$0xf]
      %v275 = vld [vmem:[%s166 + $0x194] sm:$0xf]
      %v276 = vld [vmem:[%s166 + $0x198] sm:$0xf]
      %v277 = vld [vmem:[%s166 + $0x19c] sm:$0xf]
      %v278 = vld [vmem:[%s166 + $0x1a0] sm:$0xf]
      %v279 = vld [vmem:[%s166 + $0x1a4] sm:$0xf]
      %v280 = vld [vmem:[%s166 + $0x1a8] sm:$0xf]
      %v281 = vld [vmem:[%s166 + $0x1ac] sm:$0xf]
      %v282 = vld [vmem:[%s166 + $0x1b0] sm:$0xf]
      %v283 = vld [vmem:[%s166 + $0x1b4] sm:$0xf]
      %v284 = vld [vmem:[%s166 + $0x1b8] sm:$0xf]
      %v285 = vld [vmem:[%s166 + $0x1bc] sm:$0xf]
      %v286 = vld [vmem:[%s166 + $0x1c0] sm:$0xf]
      %v287 = vld [vmem:[%s166 + $0x1c4] sm:$0xf]
      %v288 = vld [vmem:[%s166 + $0x1c8] sm:$0xf]
      %v289 = vld [vmem:[%s166 + $0x1cc] sm:$0xf]
      %v290 = vld [vmem:[%s166 + $0x1d0] sm:$0xf]
      %v291 = vld [vmem:[%s166 + $0x1d4] sm:$0xf]
      %v292 = vld [vmem:[%s166 + $0x1d8] sm:$0xf]
      %v293 = vld [vmem:[%s166 + $0x1dc] sm:$0xf]
      %v294 = vld [vmem:[%s166 + $0x1e0] sm:$0xf]
      %v295 = vld [vmem:[%s166 + $0x1e4] sm:$0xf]
      %v296 = vld [vmem:[%s166 + $0x1e8] sm:$0xf]
      %v297 = vld [vmem:[%s166 + $0x1ec] sm:$0xf]
      %v298 = vld [vmem:[%s166 + $0x1f0] sm:$0xf]
      %v299 = vld [vmem:[%s166 + $0x1f4] sm:$0xf]
      %v300 = vld [vmem:[%s166 + $0x1f8] sm:$0xf]
      %v301 = vld [vmem:[%s166 + $0x1fc] sm:$0xf]
      %v302 = vunpack.c.l.bf16 %v174
      %v303 = vunpack.c.l.bf16 %v175
      %v304 = vunpack.c.l.bf16 %v176
      %v305 = vunpack.c.l.bf16 %v177
      %v306 = vunpack.c.l.bf16 %v178
      %v307 = vunpack.c.l.bf16 %v179
      %v308 = vunpack.c.l.bf16 %v180
      %v309 = vunpack.c.l.bf16 %v181
      %v310 = vunpack.c.l.bf16 %v182
      %v311 = vunpack.c.l.bf16 %v183
      %v312 = vunpack.c.l.bf16 %v184
      %v313 = vunpack.c.l.bf16 %v185
      %v314 = vunpack.c.l.bf16 %v186
      %v315 = vunpack.c.l.bf16 %v187
      %v316 = vunpack.c.l.bf16 %v188
      %v317 = vunpack.c.l.bf16 %v189
      %v318 = vunpack.c.l.bf16 %v190
      %v319 = vunpack.c.l.bf16 %v191
      %v320 = vunpack.c.l.bf16 %v192
      %v321 = vunpack.c.l.bf16 %v193
      %v322 = vunpack.c.l.bf16 %v194
      %v323 = vunpack.c.l.bf16 %v195
      %v324 = vunpack.c.l.bf16 %v196
      %v325 = vunpack.c.l.bf16 %v197
      %v326 = vunpack.c.l.bf16 %v198
      %v327 = vunpack.c.l.bf16 %v199
      %v328 = vunpack.c.l.bf16 %v200
      %v329 = vunpack.c.l.bf16 %v201
      %v330 = vunpack.c.l.bf16 %v202
      %v331 = vunpack.c.l.bf16 %v203
      %v332 = vunpack.c.l.bf16 %v204
      %v333 = vunpack.c.l.bf16 %v205
      %v334 = vunpack.c.l.bf16 %v206
      %v335 = vunpack.c.l.bf16 %v207
      %v336 = vunpack.c.l.bf16 %v208
      %v337 = vunpack.c.l.bf16 %v209
      %v338 = vunpack.c.l.bf16 %v210
      %v339 = vunpack.c.l.bf16 %v211
      %v340 = vunpack.c.l.bf16 %v212
      %v341 = vunpack.c.l.bf16 %v213
      %v342 = vunpack.c.l.bf16 %v214
      %v343 = vunpack.c.l.bf16 %v215
      %v344 = vunpack.c.l.bf16 %v216
      %v345 = vunpack.c.l.bf16 %v217
      %v346 = vunpack.c.l.bf16 %v218
      %v347 = vunpack.c.l.bf16 %v219
      %v348 = vunpack.c.l.bf16 %v220
      %v349 = vunpack.c.l.bf16 %v221
      %v350 = vunpack.c.l.bf16 %v222
      %v351 = vunpack.c.l.bf16 %v223
      %v352 = vunpack.c.l.bf16 %v224
      %v353 = vunpack.c.l.bf16 %v225
      %v354 = vunpack.c.l.bf16 %v226
      %v355 = vunpack.c.l.bf16 %v227
      %v356 = vunpack.c.l.bf16 %v228
      %v357 = vunpack.c.l.bf16 %v229
      %v358 = vunpack.c.l.bf16 %v230
      %v359 = vunpack.c.l.bf16 %v231
      %v360 = vunpack.c.l.bf16 %v232
      %v361 = vunpack.c.l.bf16 %v233
      %v362 = vunpack.c.l.bf16 %v234
      %v363 = vunpack.c.l.bf16 %v235
      %v364 = vunpack.c.l.bf16 %v236
      %v365 = vunpack.c.l.bf16 %v237
      %v366 = vunpack.c.l.bf16 %v238
      %v367 = vunpack.c.l.bf16 %v239
      %v368 = vunpack.c.l.bf16 %v240
      %v369 = vunpack.c.l.bf16 %v241
      %v370 = vunpack.c.l.bf16 %v242
      %v371 = vunpack.c.l.bf16 %v243
      %v372 = vunpack.c.l.bf16 %v244
      %v373 = vunpack.c.l.bf16 %v245
      %v374 = vunpack.c.l.bf16 %v246
      %v375 = vunpack.c.l.bf16 %v247
      %v376 = vunpack.c.l.bf16 %v248
      %v377 = vunpack.c.l.bf16 %v249
      %v378 = vunpack.c.l.bf16 %v250
      %v379 = vunpack.c.l.bf16 %v251
      %v380 = vunpack.c.l.bf16 %v252
      %v381 = vunpack.c.l.bf16 %v253
      %v382 = vunpack.c.l.bf16 %v254
      %v383 = vunpack.c.l.bf16 %v255
      %v384 = vunpack.c.l.bf16 %v256
      %v385 = vunpack.c.l.bf16 %v257
      %v386 = vunpack.c.l.bf16 %v258
      %v387 = vunpack.c.l.bf16 %v259
      %v388 = vunpack.c.l.bf16 %v260
      %v389 = vunpack.c.l.bf16 %v261
      %v390 = vunpack.c.l.bf16 %v262
      %v391 = vunpack.c.l.bf16 %v263
      %v392 = vunpack.c.l.bf16 %v264
      %v393 = vunpack.c.l.bf16 %v265
      %v394 = vunpack.c.l.bf16 %v266
      %v395 = vunpack.c.l.bf16 %v267
      %v396 = vunpack.c.l.bf16 %v268
      %v397 = vunpack.c.l.bf16 %v269
      %v398 = vunpack.c.l.bf16 %v270
      %v399 = vunpack.c.l.bf16 %v271
      %v400 = vunpack.c.l.bf16 %v272
      %v401 = vunpack.c.l.bf16 %v273
      %v402 = vunpack.c.l.bf16 %v274
      %v403 = vunpack.c.l.bf16 %v275
      %v404 = vunpack.c.l.bf16 %v276
      %v405 = vunpack.c.l.bf16 %v277
      %v406 = vunpack.c.l.bf16 %v278
      %v407 = vunpack.c.l.bf16 %v279
      %v408 = vunpack.c.l.bf16 %v280
      %v409 = vunpack.c.l.bf16 %v281
      %v410 = vunpack.c.l.bf16 %v282
      %v411 = vunpack.c.l.bf16 %v283
      %v412 = vunpack.c.l.bf16 %v284
      %v413 = vunpack.c.l.bf16 %v285
      %v414 = vunpack.c.l.bf16 %v286
      %v415 = vunpack.c.l.bf16 %v287
      %v416 = vunpack.c.l.bf16 %v288
      %v417 = vunpack.c.l.bf16 %v289
      %v418 = vunpack.c.l.bf16 %v290
      %v419 = vunpack.c.l.bf16 %v291
      %v420 = vunpack.c.l.bf16 %v292
      %v421 = vunpack.c.l.bf16 %v293
      %v422 = vunpack.c.l.bf16 %v294
      %v423 = vunpack.c.l.bf16 %v295
      %v424 = vunpack.c.l.bf16 %v296
      %v425 = vunpack.c.l.bf16 %v297
      %v426 = vunpack.c.l.bf16 %v298
      %v427 = vunpack.c.l.bf16 %v299
      %v428 = vunpack.c.l.bf16 %v300
      %v429 = vunpack.c.l.bf16 %v301
      %v430 = vld [vmem:[%s1] sm:$0x1]
      %v432 = vlaneseq
      %v433 = vshrl.u32 %v432, 7
      %v434 = vsub.s32 0, %v433
      %v435 = vrot.slane %v430, %v434
      %v437 = vmul.f32 %v302, %v435
      %v438 = vmul.f32 %v303, %v435
      %v439 = vmul.f32 %v304, %v435
      %v440 = vmul.f32 %v305, %v435
      %v441 = vmul.f32 %v306, %v435
      %v442 = vmul.f32 %v307, %v435
      %v443 = vmul.f32 %v308, %v435
      %v444 = vmul.f32 %v309, %v435
      %v445 = vmul.f32 %v310, %v435
      %v446 = vmul.f32 %v311, %v435
      %v447 = vmul.f32 %v312, %v435
      %v448 = vmul.f32 %v313, %v435
      %v449 = vmul.f32 %v314, %v435
      %v450 = vmul.f32 %v315, %v435
      %v451 = vmul.f32 %v316, %v435
      %v452 = vmul.f32 %v317, %v435
      %v453 = vmul.f32 %v318, %v435
      %v454 = vmul.f32 %v319, %v435
      %v455 = vmul.f32 %v320, %v435
      %v456 = vmul.f32 %v321, %v435
      %v457 = vmul.f32 %v322, %v435
      %v458 = vmul.f32 %v323, %v435
      %v459 = vmul.f32 %v324, %v435
      %v460 = vmul.f32 %v325, %v435
      %v461 = vmul.f32 %v326, %v435
      %v462 = vmul.f32 %v327, %v435
      %v463 = vmul.f32 %v328, %v435
      %v464 = vmul.f32 %v329, %v435
      %v465 = vmul.f32 %v330, %v435
      %v466 = vmul.f32 %v331, %v435
      %v467 = vmul.f32 %v332, %v435
      %v468 = vmul.f32 %v333, %v435
      %v469 = vmul.f32 %v334, %v435
      %v470 = vmul.f32 %v335, %v435
      %v471 = vmul.f32 %v336, %v435
      %v472 = vmul.f32 %v337, %v435
      %v473 = vmul.f32 %v338, %v435
      %v474 = vmul.f32 %v339, %v435
      %v475 = vmul.f32 %v340, %v435
      %v476 = vmul.f32 %v341, %v435
      %v477 = vmul.f32 %v342, %v435
      %v478 = vmul.f32 %v343, %v435
      %v479 = vmul.f32 %v344, %v435
      %v480 = vmul.f32 %v345, %v435
      %v481 = vmul.f32 %v346, %v435
      %v482 = vmul.f32 %v347, %v435
      %v483 = vmul.f32 %v348, %v435
      %v484 = vmul.f32 %v349, %v435
      %v485 = vmul.f32 %v350, %v435
      %v486 = vmul.f32 %v351, %v435
      %v487 = vmul.f32 %v352, %v435
      %v488 = vmul.f32 %v353, %v435
      %v489 = vmul.f32 %v354, %v435
      %v490 = vmul.f32 %v355, %v435
      %v491 = vmul.f32 %v356, %v435
      %v492 = vmul.f32 %v357, %v435
      %v493 = vmul.f32 %v358, %v435
      %v494 = vmul.f32 %v359, %v435
      %v495 = vmul.f32 %v360, %v435
      %v496 = vmul.f32 %v361, %v435
      %v497 = vmul.f32 %v362, %v435
      %v498 = vmul.f32 %v363, %v435
      %v499 = vmul.f32 %v364, %v435
      %v500 = vmul.f32 %v365, %v435
      %v501 = vmul.f32 %v366, %v435
      %v502 = vmul.f32 %v367, %v435
      %v503 = vmul.f32 %v368, %v435
      %v504 = vmul.f32 %v369, %v435
      %v505 = vmul.f32 %v370, %v435
      %v506 = vmul.f32 %v371, %v435
      %v507 = vmul.f32 %v372, %v435
      %v508 = vmul.f32 %v373, %v435
      %v509 = vmul.f32 %v374, %v435
      %v510 = vmul.f32 %v375, %v435
      %v511 = vmul.f32 %v376, %v435
      %v512 = vmul.f32 %v377, %v435
      %v513 = vmul.f32 %v378, %v435
      %v514 = vmul.f32 %v379, %v435
      %v515 = vmul.f32 %v380, %v435
      %v516 = vmul.f32 %v381, %v435
      %v517 = vmul.f32 %v382, %v435
      %v518 = vmul.f32 %v383, %v435
      %v519 = vmul.f32 %v384, %v435
      %v520 = vmul.f32 %v385, %v435
      %v521 = vmul.f32 %v386, %v435
      %v522 = vmul.f32 %v387, %v435
      %v523 = vmul.f32 %v388, %v435
      %v524 = vmul.f32 %v389, %v435
      %v525 = vmul.f32 %v390, %v435
      %v526 = vmul.f32 %v391, %v435
      %v527 = vmul.f32 %v392, %v435
      %v528 = vmul.f32 %v393, %v435
      %v529 = vmul.f32 %v394, %v435
      %v530 = vmul.f32 %v395, %v435
      %v531 = vmul.f32 %v396, %v435
      %v532 = vmul.f32 %v397, %v435
      %v533 = vmul.f32 %v398, %v435
      %v534 = vmul.f32 %v399, %v435
      %v535 = vmul.f32 %v400, %v435
      %v536 = vmul.f32 %v401, %v435
      %v537 = vmul.f32 %v402, %v435
      %v538 = vmul.f32 %v403, %v435
      %v539 = vmul.f32 %v404, %v435
      %v540 = vmul.f32 %v405, %v435
      %v541 = vmul.f32 %v406, %v435
      %v542 = vmul.f32 %v407, %v435
      %v543 = vmul.f32 %v408, %v435
      %v544 = vmul.f32 %v409, %v435
      %v545 = vmul.f32 %v410, %v435
      %v546 = vmul.f32 %v411, %v435
      %v547 = vmul.f32 %v412, %v435
      %v548 = vmul.f32 %v413, %v435
      %v549 = vmul.f32 %v414, %v435
      %v550 = vmul.f32 %v415, %v435
      %v551 = vmul.f32 %v416, %v435
      %v552 = vmul.f32 %v417, %v435
      %v553 = vmul.f32 %v418, %v435
      %v554 = vmul.f32 %v419, %v435
      %v555 = vmul.f32 %v420, %v435
      %v556 = vmul.f32 %v421, %v435
      %v557 = vmul.f32 %v422, %v435
      %v558 = vmul.f32 %v423, %v435
      %v559 = vmul.f32 %v424, %v435
      %v560 = vmul.f32 %v425, %v435
      %v561 = vmul.f32 %v426, %v435
      %v562 = vmul.f32 %v427, %v435
      %v563 = vmul.f32 %v428, %v435
      %v564 = vmul.f32 %v429, %v435
      %v565 = vld [vmem:[%s2] sm:$0x1]
      %v567 = vlaneseq
      %v568 = vshrl.u32 %v567, 7
      %v569 = vsub.s32 0, %v568
      %v570 = vrot.slane %v565, %v569
      %v572 = vadd.f32 %v437, %v570
      %v573 = vadd.f32 %v438, %v570
      %v574 = vadd.f32 %v439, %v570
      %v575 = vadd.f32 %v440, %v570
      %v576 = vadd.f32 %v441, %v570
      %v577 = vadd.f32 %v442, %v570
      %v578 = vadd.f32 %v443, %v570
      %v579 = vadd.f32 %v444, %v570
      %v580 = vadd.f32 %v445, %v570
      %v581 = vadd.f32 %v446, %v570
      %v582 = vadd.f32 %v447, %v570
      %v583 = vadd.f32 %v448, %v570
      %v584 = vadd.f32 %v449, %v570
      %v585 = vadd.f32 %v450, %v570
      %v586 = vadd.f32 %v451, %v570
      %v587 = vadd.f32 %v452, %v570
      %v588 = vadd.f32 %v453, %v570
      %v589 = vadd.f32 %v454, %v570
      %v590 = vadd.f32 %v455, %v570
      %v591 = vadd.f32 %v456, %v570
      %v592 = vadd.f32 %v457, %v570
      %v593 = vadd.f32 %v458, %v570
      %v594 = vadd.f32 %v459, %v570
      %v595 = vadd.f32 %v460, %v570
      %v596 = vadd.f32 %v461, %v570
      %v597 = vadd.f32 %v462, %v570
      %v598 = vadd.f32 %v463, %v570
      %v599 = vadd.f32 %v464, %v570
      %v600 = vadd.f32 %v465, %v570
      %v601 = vadd.f32 %v466, %v570
      %v602 = vadd.f32 %v467, %v570
      %v603 = vadd.f32 %v468, %v570
      %v604 = vadd.f32 %v469, %v570
      %v605 = vadd.f32 %v470, %v570
      %v606 = vadd.f32 %v471, %v570
      %v607 = vadd.f32 %v472, %v570
      %v608 = vadd.f32 %v473, %v570
      %v609 = vadd.f32 %v474, %v570
      %v610 = vadd.f32 %v475, %v570
      %v611 = vadd.f32 %v476, %v570
      %v612 = vadd.f32 %v477, %v570
      %v613 = vadd.f32 %v478, %v570
      %v614 = vadd.f32 %v479, %v570
      %v615 = vadd.f32 %v480, %v570
      %v616 = vadd.f32 %v481, %v570
      %v617 = vadd.f32 %v482, %v570
      %v618 = vadd.f32 %v483, %v570
      %v619 = vadd.f32 %v484, %v570
      %v620 = vadd.f32 %v485, %v570
      %v621 = vadd.f32 %v486, %v570
      %v622 = vadd.f32 %v487, %v570
      %v623 = vadd.f32 %v488, %v570
      %v624 = vadd.f32 %v489, %v570
      %v625 = vadd.f32 %v490, %v570
      %v626 = vadd.f32 %v491, %v570
      %v627 = vadd.f32 %v492, %v570
      %v628 = vadd.f32 %v493, %v570
      %v629 = vadd.f32 %v494, %v570
      %v630 = vadd.f32 %v495, %v570
      %v631 = vadd.f32 %v496, %v570
      %v632 = vadd.f32 %v497, %v570
      %v633 = vadd.f32 %v498, %v570
      %v634 = vadd.f32 %v499, %v570
      %v635 = vadd.f32 %v500, %v570
      %v636 = vadd.f32 %v501, %v570
      %v637 = vadd.f32 %v502, %v570
      %v638 = vadd.f32 %v503, %v570
      %v639 = vadd.f32 %v504, %v570
      %v640 = vadd.f32 %v505, %v570
      %v641 = vadd.f32 %v506, %v570
      %v642 = vadd.f32 %v507, %v570
      %v643 = vadd.f32 %v508, %v570
      %v644 = vadd.f32 %v509, %v570
      %v645 = vadd.f32 %v510, %v570
      %v646 = vadd.f32 %v511, %v570
      %v647 = vadd.f32 %v512, %v570
      %v648 = vadd.f32 %v513, %v570
      %v649 = vadd.f32 %v514, %v570
      %v650 = vadd.f32 %v515, %v570
      %v651 = vadd.f32 %v516, %v570
      %v652 = vadd.f32 %v517, %v570
      %v653 = vadd.f32 %v518, %v570
      %v654 = vadd.f32 %v519, %v570
      %v655 = vadd.f32 %v520, %v570
      %v656 = vadd.f32 %v521, %v570
      %v657 = vadd.f32 %v522, %v570
      %v658 = vadd.f32 %v523, %v570
      %v659 = vadd.f32 %v524, %v570
      %v660 = vadd.f32 %v525, %v570
      %v661 = vadd.f32 %v526, %v570
      %v662 = vadd.f32 %v527, %v570
      %v663 = vadd.f32 %v528, %v570
      %v664 = vadd.f32 %v529, %v570
      %v665 = vadd.f32 %v530, %v570
      %v666 = vadd.f32 %v531, %v570
      %v667 = vadd.f32 %v532, %v570
      %v668 = vadd.f32 %v533, %v570
      %v669 = vadd.f32 %v534, %v570
      %v670 = vadd.f32 %v535, %v570
      %v671 = vadd.f32 %v536, %v570
      %v672 = vadd.f32 %v537, %v570
      %v673 = vadd.f32 %v538, %v570
      %v674 = vadd.f32 %v539, %v570
      %v675 = vadd.f32 %v540, %v570
      %v676 = vadd.f32 %v541, %v570
      %v677 = vadd.f32 %v542, %v570
      %v678 = vadd.f32 %v543, %v570
      %v679 = vadd.f32 %v544, %v570
      %v680 = vadd.f32 %v545, %v570
      %v681 = vadd.f32 %v546, %v570
      %v682 = vadd.f32 %v547, %v570
      %v683 = vadd.f32 %v548, %v570
      %v684 = vadd.f32 %v549, %v570
      %v685 = vadd.f32 %v550, %v570
      %v686 = vadd.f32 %v551, %v570
      %v687 = vadd.f32 %v552, %v570
      %v688 = vadd.f32 %v553, %v570
      %v689 = vadd.f32 %v554, %v570
      %v690 = vadd.f32 %v555, %v570
      %v691 = vadd.f32 %v556, %v570
      %v692 = vadd.f32 %v557, %v570
      %v693 = vadd.f32 %v558, %v570
      %v694 = vadd.f32 %v559, %v570
      %v695 = vadd.f32 %v560, %v570
      %v696 = vadd.f32 %v561, %v570
      %v697 = vadd.f32 %v562, %v570
      %v698 = vadd.f32 %v563, %v570
      %v699 = vadd.f32 %v564, %v570
      %v700 = vmax.f32 %v572, 0.0
      %v701 = vmax.f32 %v573, 0.0
      %v702 = vmax.f32 %v574, 0.0
      %v703 = vmax.f32 %v575, 0.0
      %v704 = vmax.f32 %v576, 0.0
      %v705 = vmax.f32 %v577, 0.0
      %v706 = vmax.f32 %v578, 0.0
      %v707 = vmax.f32 %v579, 0.0
      %v708 = vmax.f32 %v580, 0.0
      %v709 = vmax.f32 %v581, 0.0
      %v710 = vmax.f32 %v582, 0.0
      %v711 = vmax.f32 %v583, 0.0
      %v712 = vmax.f32 %v584, 0.0
      %v713 = vmax.f32 %v585, 0.0
      %v714 = vmax.f32 %v586, 0.0
      %v715 = vmax.f32 %v587, 0.0
      %v716 = vmax.f32 %v588, 0.0
      %v717 = vmax.f32 %v589, 0.0
      %v718 = vmax.f32 %v590, 0.0
      %v719 = vmax.f32 %v591, 0.0
      %v720 = vmax.f32 %v592, 0.0
      %v721 = vmax.f32 %v593, 0.0
      %v722 = vmax.f32 %v594, 0.0
      %v723 = vmax.f32 %v595, 0.0
      %v724 = vmax.f32 %v596, 0.0
      %v725 = vmax.f32 %v597, 0.0
      %v726 = vmax.f32 %v598, 0.0
      %v727 = vmax.f32 %v599, 0.0
      %v728 = vmax.f32 %v600, 0.0
      %v729 = vmax.f32 %v601, 0.0
      %v730 = vmax.f32 %v602, 0.0
      %v731 = vmax.f32 %v603, 0.0
      %v732 = vmax.f32 %v604, 0.0
      %v733 = vmax.f32 %v605, 0.0
      %v734 = vmax.f32 %v606, 0.0
      %v735 = vmax.f32 %v607, 0.0
      %v736 = vmax.f32 %v608, 0.0
      %v737 = vmax.f32 %v609, 0.0
      %v738 = vmax.f32 %v610, 0.0
      %v739 = vmax.f32 %v611, 0.0
      %v740 = vmax.f32 %v612, 0.0
      %v741 = vmax.f32 %v613, 0.0
      %v742 = vmax.f32 %v614, 0.0
      %v743 = vmax.f32 %v615, 0.0
      %v744 = vmax.f32 %v616, 0.0
      %v745 = vmax.f32 %v617, 0.0
      %v746 = vmax.f32 %v618, 0.0
      %v747 = vmax.f32 %v619, 0.0
      %v748 = vmax.f32 %v620, 0.0
      %v749 = vmax.f32 %v621, 0.0
      %v750 = vmax.f32 %v622, 0.0
      %v751 = vmax.f32 %v623, 0.0
      %v752 = vmax.f32 %v624, 0.0
      %v753 = vmax.f32 %v625, 0.0
      %v754 = vmax.f32 %v626, 0.0
      %v755 = vmax.f32 %v627, 0.0
      %v756 = vmax.f32 %v628, 0.0
      %v757 = vmax.f32 %v629, 0.0
      %v758 = vmax.f32 %v630, 0.0
      %v759 = vmax.f32 %v631, 0.0
      %v760 = vmax.f32 %v632, 0.0
      %v761 = vmax.f32 %v633, 0.0
      %v762 = vmax.f32 %v634, 0.0
      %v763 = vmax.f32 %v635, 0.0
      %v764 = vmax.f32 %v636, 0.0
      %v765 = vmax.f32 %v637, 0.0
      %v766 = vmax.f32 %v638, 0.0
      %v767 = vmax.f32 %v639, 0.0
      %v768 = vmax.f32 %v640, 0.0
      %v769 = vmax.f32 %v641, 0.0
      %v770 = vmax.f32 %v642, 0.0
      %v771 = vmax.f32 %v643, 0.0
      %v772 = vmax.f32 %v644, 0.0
      %v773 = vmax.f32 %v645, 0.0
      %v774 = vmax.f32 %v646, 0.0
      %v775 = vmax.f32 %v647, 0.0
      %v776 = vmax.f32 %v648, 0.0
      %v777 = vmax.f32 %v649, 0.0
      %v778 = vmax.f32 %v650, 0.0
      %v779 = vmax.f32 %v651, 0.0
      %v780 = vmax.f32 %v652, 0.0
      %v781 = vmax.f32 %v653, 0.0
      %v782 = vmax.f32 %v654, 0.0
      %v783 = vmax.f32 %v655, 0.0
      %v784 = vmax.f32 %v656, 0.0
      %v785 = vmax.f32 %v657, 0.0
      %v786 = vmax.f32 %v658, 0.0
      %v787 = vmax.f32 %v659, 0.0
      %v788 = vmax.f32 %v660, 0.0
      %v789 = vmax.f32 %v661, 0.0
      %v790 = vmax.f32 %v662, 0.0
      %v791 = vmax.f32 %v663, 0.0
      %v792 = vmax.f32 %v664, 0.0
      %v793 = vmax.f32 %v665, 0.0
      %v794 = vmax.f32 %v666, 0.0
      %v795 = vmax.f32 %v667, 0.0
      %v796 = vmax.f32 %v668, 0.0
      %v797 = vmax.f32 %v669, 0.0
      %v798 = vmax.f32 %v670, 0.0
      %v799 = vmax.f32 %v671, 0.0
      %v800 = vmax.f32 %v672, 0.0
      %v801 = vmax.f32 %v673, 0.0
      %v802 = vmax.f32 %v674, 0.0
      %v803 = vmax.f32 %v675, 0.0
      %v804 = vmax.f32 %v676, 0.0
      %v805 = vmax.f32 %v677, 0.0
      %v806 = vmax.f32 %v678, 0.0
      %v807 = vmax.f32 %v679, 0.0
      %v808 = vmax.f32 %v680, 0.0
      %v809 = vmax.f32 %v681, 0.0
      %v810 = vmax.f32 %v682, 0.0
      %v811 = vmax.f32 %v683, 0.0
      %v812 = vmax.f32 %v684, 0.0
      %v813 = vmax.f32 %v685, 0.0
      %v814 = vmax.f32 %v686, 0.0
      %v815 = vmax.f32 %v687, 0.0
      %v816 = vmax.f32 %v688, 0.0
      %v817 = vmax.f32 %v689, 0.0
      %v818 = vmax.f32 %v690, 0.0
      %v819 = vmax.f32 %v691, 0.0
      %v820 = vmax.f32 %v692, 0.0
      %v821 = vmax.f32 %v693, 0.0
      %v822 = vmax.f32 %v694, 0.0
      %v823 = vmax.f32 %v695, 0.0
      %v824 = vmax.f32 %v696, 0.0
      %v825 = vmax.f32 %v697, 0.0
      %v826 = vmax.f32 %v698, 0.0
      %v827 = vmax.f32 %v699, 0.0
      %v828 = vpack.c.bf16 %v701, %v700
      %v829 = vpack.c.bf16 %v703, %v702
      %v830 = vpack.c.bf16 %v705, %v704
      %v831 = vpack.c.bf16 %v707, %v706
      %v832 = vpack.c.bf16 %v709, %v708
      %v833 = vpack.c.bf16 %v711, %v710
      %v834 = vpack.c.bf16 %v713, %v712
      %v835 = vpack.c.bf16 %v715, %v714
      %v836 = vpack.c.bf16 %v717, %v716
      %v837 = vpack.c.bf16 %v719, %v718
      %v838 = vpack.c.bf16 %v721, %v720
      %v839 = vpack.c.bf16 %v723, %v722
      %v840 = vpack.c.bf16 %v725, %v724
      %v841 = vpack.c.bf16 %v727, %v726
      %v842 = vpack.c.bf16 %v729, %v728
      %v843 = vpack.c.bf16 %v731, %v730
      %v844 = vpack.c.bf16 %v733, %v732
      %v845 = vpack.c.bf16 %v735, %v734
      %v846 = vpack.c.bf16 %v737, %v736
      %v847 = vpack.c.bf16 %v739, %v738
      %v848 = vpack.c.bf16 %v741, %v740
      %v849 = vpack.c.bf16 %v743, %v742
      %v850 = vpack.c.bf16 %v745, %v744
      %v851 = vpack.c.bf16 %v747, %v746
      %v852 = vpack.c.bf16 %v749, %v748
      %v853 = vpack.c.bf16 %v751, %v750
      %v854 = vpack.c.bf16 %v753, %v752
      %v855 = vpack.c.bf16 %v755, %v754
      %v856 = vpack.c.bf16 %v757, %v756
      %v857 = vpack.c.bf16 %v759, %v758
      %v858 = vpack.c.bf16 %v761, %v760
      %v859 = vpack.c.bf16 %v763, %v762
      %v860 = vpack.c.bf16 %v765, %v764
      %v861 = vpack.c.bf16 %v767, %v766
      %v862 = vpack.c.bf16 %v769, %v768
      %v863 = vpack.c.bf16 %v771, %v770
      %v864 = vpack.c.bf16 %v773, %v772
      %v865 = vpack.c.bf16 %v775, %v774
      %v866 = vpack.c.bf16 %v777, %v776
      %v867 = vpack.c.bf16 %v779, %v778
      %v868 = vpack.c.bf16 %v781, %v780
      %v869 = vpack.c.bf16 %v783, %v782
      %v870 = vpack.c.bf16 %v785, %v784
      %v871 = vpack.c.bf16 %v787, %v786
      %v872 = vpack.c.bf16 %v789, %v788
      %v873 = vpack.c.bf16 %v791, %v790
      %v874 = vpack.c.bf16 %v793, %v792
      %v875 = vpack.c.bf16 %v795, %v794
      %v876 = vpack.c.bf16 %v797, %v796
      %v877 = vpack.c.bf16 %v799, %v798
      %v878 = vpack.c.bf16 %v801, %v800
      %v879 = vpack.c.bf16 %v803, %v802
      %v880 = vpack.c.bf16 %v805, %v804
      %v881 = vpack.c.bf16 %v807, %v806
      %v882 = vpack.c.bf16 %v809, %v808
      %v883 = vpack.c.bf16 %v811, %v810
      %v884 = vpack.c.bf16 %v813, %v812
      %v885 = vpack.c.bf16 %v815, %v814
      %v886 = vpack.c.bf16 %v817, %v816
      %v887 = vpack.c.bf16 %v819, %v818
      %v888 = vpack.c.bf16 %v821, %v820
      %v889 = vpack.c.bf16 %v823, %v822
      %v890 = vpack.c.bf16 %v825, %v824
      %v891 = vpack.c.bf16 %v827, %v826
      %v956 = vunpack.c.l.b16 %v828
      %v957 = vunpack.c.h.b16 %v828
      %v958 = vunpack.c.l.b16 %v829
      %v959 = vunpack.c.h.b16 %v829
      %v960 = vunpack.c.l.b16 %v830
      %v961 = vunpack.c.h.b16 %v830
      %v962 = vunpack.c.l.b16 %v831
      %v963 = vunpack.c.h.b16 %v831
      %v964 = vunpack.c.l.b16 %v832
      %v965 = vunpack.c.h.b16 %v832
      %v966 = vunpack.c.l.b16 %v833
      %v967 = vunpack.c.h.b16 %v833
      %v968 = vunpack.c.l.b16 %v834
      %v969 = vunpack.c.h.b16 %v834
      %v970 = vunpack.c.l.b16 %v835
      %v971 = vunpack.c.h.b16 %v835
      %v972 = vunpack.c.l.b16 %v836
      %v973 = vunpack.c.h.b16 %v836
      %v974 = vunpack.c.l.b16 %v837
      %v975 = vunpack.c.h.b16 %v837
      %v976 = vunpack.c.l.b16 %v838
      %v977 = vunpack.c.h.b16 %v838
      %v978 = vunpack.c.l.b16 %v839
      %v979 = vunpack.c.h.b16 %v839
      %v980 = vunpack.c.l.b16 %v840
      %v981 = vunpack.c.h.b16 %v840
      %v982 = vunpack.c.l.b16 %v841
      %v983 = vunpack.c.h.b16 %v841
      %v984 = vunpack.c.l.b16 %v842
      %v985 = vunpack.c.h.b16 %v842
      %v986 = vunpack.c.l.b16 %v843
      %v987 = vunpack.c.h.b16 %v843
      %v988 = vunpack.c.l.b16 %v844
      %v989 = vunpack.c.h.b16 %v844
      %v990 = vunpack.c.l.b16 %v845
      %v991 = vunpack.c.h.b16 %v845
      %v992 = vunpack.c.l.b16 %v846
      %v993 = vunpack.c.h.b16 %v846
      %v994 = vunpack.c.l.b16 %v847
      %v995 = vunpack.c.h.b16 %v847
      %v996 = vunpack.c.l.b16 %v848
      %v997 = vunpack.c.h.b16 %v848
      %v998 = vunpack.c.l.b16 %v849
      %v999 = vunpack.c.h.b16 %v849
      %v1000 = vunpack.c.l.b16 %v850
      %v1001 = vunpack.c.h.b16 %v850
      %v1002 = vunpack.c.l.b16 %v851
      %v1003 = vunpack.c.h.b16 %v851
      %v1004 = vunpack.c.l.b16 %v852
      %v1005 = vunpack.c.h.b16 %v852
      %v1006 = vunpack.c.l.b16 %v853
      %v1007 = vunpack.c.h.b16 %v853
      %v1008 = vunpack.c.l.b16 %v854
      %v1009 = vunpack.c.h.b16 %v854
      %v1010 = vunpack.c.l.b16 %v855
      %v1011 = vunpack.c.h.b16 %v855
      %v1012 = vunpack.c.l.b16 %v856
      %v1013 = vunpack.c.h.b16 %v856
      %v1014 = vunpack.c.l.b16 %v857
      %v1015 = vunpack.c.h.b16 %v857
      %v1016 = vunpack.c.l.b16 %v858
      %v1017 = vunpack.c.h.b16 %v858
      %v1018 = vunpack.c.l.b16 %v859
      %v1019 = vunpack.c.h.b16 %v859
      %v1020 = vunpack.c.l.b16 %v860
      %v1021 = vunpack.c.h.b16 %v860
      %v1022 = vunpack.c.l.b16 %v861
      %v1023 = vunpack.c.h.b16 %v861
      %v1024 = vunpack.c.l.b16 %v862
      %v1025 = vunpack.c.h.b16 %v862
      %v1026 = vunpack.c.l.b16 %v863
      %v1027 = vunpack.c.h.b16 %v863
      %v1028 = vunpack.c.l.b16 %v864
      %v1029 = vunpack.c.h.b16 %v864
      %v1030 = vunpack.c.l.b16 %v865
      %v1031 = vunpack.c.h.b16 %v865
      %v1032 = vunpack.c.l.b16 %v866
      %v1033 = vunpack.c.h.b16 %v866
      %v1034 = vunpack.c.l.b16 %v867
      %v1035 = vunpack.c.h.b16 %v867
      %v1036 = vunpack.c.l.b16 %v868
      %v1037 = vunpack.c.h.b16 %v868
      %v1038 = vunpack.c.l.b16 %v869
      %v1039 = vunpack.c.h.b16 %v869
      %v1040 = vunpack.c.l.b16 %v870
      %v1041 = vunpack.c.h.b16 %v870
      %v1042 = vunpack.c.l.b16 %v871
      %v1043 = vunpack.c.h.b16 %v871
      %v1044 = vunpack.c.l.b16 %v872
      %v1045 = vunpack.c.h.b16 %v872
      %v1046 = vunpack.c.l.b16 %v873
      %v1047 = vunpack.c.h.b16 %v873
      %v1048 = vunpack.c.l.b16 %v874
      %v1049 = vunpack.c.h.b16 %v874
      %v1050 = vunpack.c.l.b16 %v875
      %v1051 = vunpack.c.h.b16 %v875
      %v1052 = vunpack.c.l.b16 %v876
      %v1053 = vunpack.c.h.b16 %v876
      %v1054 = vunpack.c.l.b16 %v877
      %v1055 = vunpack.c.h.b16 %v877
      %v1056 = vunpack.c.l.b16 %v878
      %v1057 = vunpack.c.h.b16 %v878
      %v1058 = vunpack.c.l.b16 %v879
      %v1059 = vunpack.c.h.b16 %v879
      %v1060 = vunpack.c.l.b16 %v880
      %v1061 = vunpack.c.h.b16 %v880
      %v1062 = vunpack.c.l.b16 %v881
      %v1063 = vunpack.c.h.b16 %v881
      %v1064 = vunpack.c.l.b16 %v882
      %v1065 = vunpack.c.h.b16 %v882
      %v1066 = vunpack.c.l.b16 %v883
      %v1067 = vunpack.c.h.b16 %v883
      %v1068 = vunpack.c.l.b16 %v884
      %v1069 = vunpack.c.h.b16 %v884
      %v1070 = vunpack.c.l.b16 %v885
      %v1071 = vunpack.c.h.b16 %v885
      %v1072 = vunpack.c.l.b16 %v886
      %v1073 = vunpack.c.h.b16 %v886
      %v1074 = vunpack.c.l.b16 %v887
      %v1075 = vunpack.c.h.b16 %v887
      %v1076 = vunpack.c.l.b16 %v888
      %v1077 = vunpack.c.h.b16 %v888
      %v1078 = vunpack.c.l.b16 %v889
      %v1079 = vunpack.c.h.b16 %v889
      %v1080 = vunpack.c.l.b16 %v890
      %v1081 = vunpack.c.h.b16 %v890
      %v1082 = vunpack.c.l.b16 %v891
      %v1083 = vunpack.c.h.b16 %v891
      %v1084 = vpack.c.b16 %v956, %v956
      %v1085 = vpack.c.b16 %v957, %v957
      %v1086 = vpack.c.b16 %v958, %v958
      %v1087 = vpack.c.b16 %v959, %v959
      %v1088 = vpack.c.b16 %v960, %v960
      %v1089 = vpack.c.b16 %v961, %v961
      %v1090 = vpack.c.b16 %v962, %v962
      %v1091 = vpack.c.b16 %v963, %v963
      %v1092 = vpack.c.b16 %v964, %v964
      %v1093 = vpack.c.b16 %v965, %v965
      %v1094 = vpack.c.b16 %v966, %v966
      %v1095 = vpack.c.b16 %v967, %v967
      %v1096 = vpack.c.b16 %v968, %v968
      %v1097 = vpack.c.b16 %v969, %v969
      %v1098 = vpack.c.b16 %v970, %v970
      %v1099 = vpack.c.b16 %v971, %v971
      %v1100 = vpack.c.b16 %v972, %v972
      %v1101 = vpack.c.b16 %v973, %v973
      %v1102 = vpack.c.b16 %v974, %v974
      %v1103 = vpack.c.b16 %v975, %v975
      %v1104 = vpack.c.b16 %v976, %v976
      %v1105 = vpack.c.b16 %v977, %v977
      %v1106 = vpack.c.b16 %v978, %v978
      %v1107 = vpack.c.b16 %v979, %v979
      %v1108 = vpack.c.b16 %v980, %v980
      %v1109 = vpack.c.b16 %v981, %v981
      %v1110 = vpack.c.b16 %v982, %v982
      %v1111 = vpack.c.b16 %v983, %v983
      %v1112 = vpack.c.b16 %v984, %v984
      %v1113 = vpack.c.b16 %v985, %v985
      %v1114 = vpack.c.b16 %v986, %v986
      %v1115 = vpack.c.b16 %v987, %v987
      %v1116 = vpack.c.b16 %v988, %v988
      %v1117 = vpack.c.b16 %v989, %v989
      %v1118 = vpack.c.b16 %v990, %v990
      %v1119 = vpack.c.b16 %v991, %v991
      %v1120 = vpack.c.b16 %v992, %v992
      %v1121 = vpack.c.b16 %v993, %v993
      %v1122 = vpack.c.b16 %v994, %v994
      %v1123 = vpack.c.b16 %v995, %v995
      %v1124 = vpack.c.b16 %v996, %v996
      %v1125 = vpack.c.b16 %v997, %v997
      %v1126 = vpack.c.b16 %v998, %v998
      %v1127 = vpack.c.b16 %v999, %v999
      %v1128 = vpack.c.b16 %v1000, %v1000
      %v1129 = vpack.c.b16 %v1001, %v1001
      %v1130 = vpack.c.b16 %v1002, %v1002
      %v1131 = vpack.c.b16 %v1003, %v1003
      %v1132 = vpack.c.b16 %v1004, %v1004
      %v1133 = vpack.c.b16 %v1005, %v1005
      %v1134 = vpack.c.b16 %v1006, %v1006
      %v1135 = vpack.c.b16 %v1007, %v1007
      %v1136 = vpack.c.b16 %v1008, %v1008
      %v1137 = vpack.c.b16 %v1009, %v1009
      %v1138 = vpack.c.b16 %v1010, %v1010
      %v1139 = vpack.c.b16 %v1011, %v1011
      %v1140 = vpack.c.b16 %v1012, %v1012
      %v1141 = vpack.c.b16 %v1013, %v1013
      %v1142 = vpack.c.b16 %v1014, %v1014
      %v1143 = vpack.c.b16 %v1015, %v1015
      %v1144 = vpack.c.b16 %v1016, %v1016
      %v1145 = vpack.c.b16 %v1017, %v1017
      %v1146 = vpack.c.b16 %v1018, %v1018
      %v1147 = vpack.c.b16 %v1019, %v1019
      %v1148 = vpack.c.b16 %v1020, %v1020
      %v1149 = vpack.c.b16 %v1021, %v1021
      %v1150 = vpack.c.b16 %v1022, %v1022
      %v1151 = vpack.c.b16 %v1023, %v1023
      %v1152 = vpack.c.b16 %v1024, %v1024
      %v1153 = vpack.c.b16 %v1025, %v1025
      %v1154 = vpack.c.b16 %v1026, %v1026
      %v1155 = vpack.c.b16 %v1027, %v1027
      %v1156 = vpack.c.b16 %v1028, %v1028
      %v1157 = vpack.c.b16 %v1029, %v1029
      %v1158 = vpack.c.b16 %v1030, %v1030
      %v1159 = vpack.c.b16 %v1031, %v1031
      %v1160 = vpack.c.b16 %v1032, %v1032
      %v1161 = vpack.c.b16 %v1033, %v1033
      %v1162 = vpack.c.b16 %v1034, %v1034
      %v1163 = vpack.c.b16 %v1035, %v1035
      %v1164 = vpack.c.b16 %v1036, %v1036
      %v1165 = vpack.c.b16 %v1037, %v1037
      %v1166 = vpack.c.b16 %v1038, %v1038
      %v1167 = vpack.c.b16 %v1039, %v1039
      %v1168 = vpack.c.b16 %v1040, %v1040
      %v1169 = vpack.c.b16 %v1041, %v1041
      %v1170 = vpack.c.b16 %v1042, %v1042
      %v1171 = vpack.c.b16 %v1043, %v1043
      %v1172 = vpack.c.b16 %v1044, %v1044
      %v1173 = vpack.c.b16 %v1045, %v1045
      %v1174 = vpack.c.b16 %v1046, %v1046
      %v1175 = vpack.c.b16 %v1047, %v1047
      %v1176 = vpack.c.b16 %v1048, %v1048
      %v1177 = vpack.c.b16 %v1049, %v1049
      %v1178 = vpack.c.b16 %v1050, %v1050
      %v1179 = vpack.c.b16 %v1051, %v1051
      %v1180 = vpack.c.b16 %v1052, %v1052
      %v1181 = vpack.c.b16 %v1053, %v1053
      %v1182 = vpack.c.b16 %v1054, %v1054
      %v1183 = vpack.c.b16 %v1055, %v1055
      %v1184 = vpack.c.b16 %v1056, %v1056
      %v1185 = vpack.c.b16 %v1057, %v1057
      %v1186 = vpack.c.b16 %v1058, %v1058
      %v1187 = vpack.c.b16 %v1059, %v1059
      %v1188 = vpack.c.b16 %v1060, %v1060
      %v1189 = vpack.c.b16 %v1061, %v1061
      %v1190 = vpack.c.b16 %v1062, %v1062
      %v1191 = vpack.c.b16 %v1063, %v1063
      %v1192 = vpack.c.b16 %v1064, %v1064
      %v1193 = vpack.c.b16 %v1065, %v1065
      %v1194 = vpack.c.b16 %v1066, %v1066
      %v1195 = vpack.c.b16 %v1067, %v1067
      %v1196 = vpack.c.b16 %v1068, %v1068
      %v1197 = vpack.c.b16 %v1069, %v1069
      %v1198 = vpack.c.b16 %v1070, %v1070
      %v1199 = vpack.c.b16 %v1071, %v1071
      %v1200 = vpack.c.b16 %v1072, %v1072
      %v1201 = vpack.c.b16 %v1073, %v1073
      %v1202 = vpack.c.b16 %v1074, %v1074
      %v1203 = vpack.c.b16 %v1075, %v1075
      %v1204 = vpack.c.b16 %v1076, %v1076
      %v1205 = vpack.c.b16 %v1077, %v1077
      %v1206 = vpack.c.b16 %v1078, %v1078
      %v1207 = vpack.c.b16 %v1079, %v1079
      %v1208 = vpack.c.b16 %v1080, %v1080
      %v1209 = vpack.c.b16 %v1081, %v1081
      %v1210 = vpack.c.b16 %v1082, %v1082
      %v1211 = vpack.c.b16 %v1083, %v1083
      %1340 = vst [vmem:[%s172] sm:$0xf] %v1084
      %1341 = vst [vmem:[%s172 + $0x4] sm:$0xf] %v1085
      %1342 = vst [vmem:[%s172 + $0x8] sm:$0xf] %v1086
      %1343 = vst [vmem:[%s172 + $0xc] sm:$0xf] %v1087
      %1344 = vst [vmem:[%s172 + $0x10] sm:$0xf] %v1088
      %1345 = vst [vmem:[%s172 + $0x14] sm:$0xf] %v1089
      %1346 = vst [vmem:[%s172 + $0x18] sm:$0xf] %v1090
      %1347 = vst [vmem:[%s172 + $0x1c] sm:$0xf] %v1091
      %1348 = vst [vmem:[%s172 + $0x20] sm:$0xf] %v1092
      %1349 = vst [vmem:[%s172 + $0x24] sm:$0xf] %v1093
      %1350 = vst [vmem:[%s172 + $0x28] sm:$0xf] %v1094
      %1351 = vst [vmem:[%s172 + $0x2c] sm:$0xf] %v1095
      %1352 = vst [vmem:[%s172 + $0x30] sm:$0xf] %v1096
      %1353 = vst [vmem:[%s172 + $0x34] sm:$0xf] %v1097
      %1354 = vst [vmem:[%s172 + $0x38] sm:$0xf] %v1098
      %1355 = vst [vmem:[%s172 + $0x3c] sm:$0xf] %v1099
      %1356 = vst [vmem:[%s172 + $0x40] sm:$0xf] %v1100
      %1357 = vst [vmem:[%s172 + $0x44] sm:$0xf] %v1101
      %1358 = vst [vmem:[%s172 + $0x48] sm:$0xf] %v1102
      %1359 = vst [vmem:[%s172 + $0x4c] sm:$0xf] %v1103
      %1360 = vst [vmem:[%s172 + $0x50] sm:$0xf] %v1104
      %1361 = vst [vmem:[%s172 + $0x54] sm:$0xf] %v1105
      %1362 = vst [vmem:[%s172 + $0x58] sm:$0xf] %v1106
      %1363 = vst [vmem:[%s172 + $0x5c] sm:$0xf] %v1107
      %1364 = vst [vmem:[%s172 + $0x60] sm:$0xf] %v1108
      %1365 = vst [vmem:[%s172 + $0x64] sm:$0xf] %v1109
      %1366 = vst [vmem:[%s172 + $0x68] sm:$0xf] %v1110
      %1367 = vst [vmem:[%s172 + $0x6c] sm:$0xf] %v1111
      %1368 = vst [vmem:[%s172 + $0x70] sm:$0xf] %v1112
      %1369 = vst [vmem:[%s172 + $0x74] sm:$0xf] %v1113
      %1370 = vst [vmem:[%s172 + $0x78] sm:$0xf] %v1114
      %1371 = vst [vmem:[%s172 + $0x7c] sm:$0xf] %v1115
      %1372 = vst [vmem:[%s172 + $0x80] sm:$0xf] %v1116
      %1373 = vst [vmem:[%s172 + $0x84] sm:$0xf] %v1117
      %1374 = vst [vmem:[%s172 + $0x88] sm:$0xf] %v1118
      %1375 = vst [vmem:[%s172 + $0x8c] sm:$0xf] %v1119
      %1376 = vst [vmem:[%s172 + $0x90] sm:$0xf] %v1120
      %1377 = vst [vmem:[%s172 + $0x94] sm:$0xf] %v1121
      %1378 = vst [vmem:[%s172 + $0x98] sm:$0xf] %v1122
      %1379 = vst [vmem:[%s172 + $0x9c] sm:$0xf] %v1123
      %1380 = vst [vmem:[%s172 + $0xa0] sm:$0xf] %v1124
      %1381 = vst [vmem:[%s172 + $0xa4] sm:$0xf] %v1125
      %1382 = vst [vmem:[%s172 + $0xa8] sm:$0xf] %v1126
      %1383 = vst [vmem:[%s172 + $0xac] sm:$0xf] %v1127
      %1384 = vst [vmem:[%s172 + $0xb0] sm:$0xf] %v1128
      %1385 = vst [vmem:[%s172 + $0xb4] sm:$0xf] %v1129
      %1386 = vst [vmem:[%s172 + $0xb8] sm:$0xf] %v1130
      %1387 = vst [vmem:[%s172 + $0xbc] sm:$0xf] %v1131
      %1388 = vst [vmem:[%s172 + $0xc0] sm:$0xf] %v1132
      %1389 = vst [vmem:[%s172 + $0xc4] sm:$0xf] %v1133
      %1390 = vst [vmem:[%s172 + $0xc8] sm:$0xf] %v1134
      %1391 = vst [vmem:[%s172 + $0xcc] sm:$0xf] %v1135
      %1392 = vst [vmem:[%s172 + $0xd0] sm:$0xf] %v1136
      %1393 = vst [vmem:[%s172 + $0xd4] sm:$0xf] %v1137
      %1394 = vst [vmem:[%s172 + $0xd8] sm:$0xf] %v1138
      %1395 = vst [vmem:[%s172 + $0xdc] sm:$0xf] %v1139
      %1396 = vst [vmem:[%s172 + $0xe0] sm:$0xf] %v1140
      %1397 = vst [vmem:[%s172 + $0xe4] sm:$0xf] %v1141
      %1398 = vst [vmem:[%s172 + $0xe8] sm:$0xf] %v1142
      %1399 = vst [vmem:[%s172 + $0xec] sm:$0xf] %v1143
      %1400 = vst [vmem:[%s172 + $0xf0] sm:$0xf] %v1144
      %1401 = vst [vmem:[%s172 + $0xf4] sm:$0xf] %v1145
      %1402 = vst [vmem:[%s172 + $0xf8] sm:$0xf] %v1146
      %1403 = vst [vmem:[%s172 + $0xfc] sm:$0xf] %v1147
      %1404 = vst [vmem:[%s172 + $0x100] sm:$0xf] %v1148
      %1405 = vst [vmem:[%s172 + $0x104] sm:$0xf] %v1149
      %1406 = vst [vmem:[%s172 + $0x108] sm:$0xf] %v1150
      %1407 = vst [vmem:[%s172 + $0x10c] sm:$0xf] %v1151
      %1408 = vst [vmem:[%s172 + $0x110] sm:$0xf] %v1152
      %1409 = vst [vmem:[%s172 + $0x114] sm:$0xf] %v1153
      %1410 = vst [vmem:[%s172 + $0x118] sm:$0xf] %v1154
      %1411 = vst [vmem:[%s172 + $0x11c] sm:$0xf] %v1155
      %1412 = vst [vmem:[%s172 + $0x120] sm:$0xf] %v1156
      %1413 = vst [vmem:[%s172 + $0x124] sm:$0xf] %v1157
      %1414 = vst [vmem:[%s172 + $0x128] sm:$0xf] %v1158
      %1415 = vst [vmem:[%s172 + $0x12c] sm:$0xf] %v1159
      %1416 = vst [vmem:[%s172 + $0x130] sm:$0xf] %v1160
      %1417 = vst [vmem:[%s172 + $0x134] sm:$0xf] %v1161
      %1418 = vst [vmem:[%s172 + $0x138] sm:$0xf] %v1162
      %1419 = vst [vmem:[%s172 + $0x13c] sm:$0xf] %v1163
      %1420 = vst [vmem:[%s172 + $0x140] sm:$0xf] %v1164
      %1421 = vst [vmem:[%s172 + $0x144] sm:$0xf] %v1165
      %1422 = vst [vmem:[%s172 + $0x148] sm:$0xf] %v1166
      %1423 = vst [vmem:[%s172 + $0x14c] sm:$0xf] %v1167
      %1424 = vst [vmem:[%s172 + $0x150] sm:$0xf] %v1168
      %1425 = vst [vmem:[%s172 + $0x154] sm:$0xf] %v1169
      %1426 = vst [vmem:[%s172 + $0x158] sm:$0xf] %v1170
      %1427 = vst [vmem:[%s172 + $0x15c] sm:$0xf] %v1171
      %1428 = vst [vmem:[%s172 + $0x160] sm:$0xf] %v1172
      %1429 = vst [vmem:[%s172 + $0x164] sm:$0xf] %v1173
      %1430 = vst [vmem:[%s172 + $0x168] sm:$0xf] %v1174
      %1431 = vst [vmem:[%s172 + $0x16c] sm:$0xf] %v1175
      %1432 = vst [vmem:[%s172 + $0x170] sm:$0xf] %v1176
      %1433 = vst [vmem:[%s172 + $0x174] sm:$0xf] %v1177
      %1434 = vst [vmem:[%s172 + $0x178] sm:$0xf] %v1178
      %1435 = vst [vmem:[%s172 + $0x17c] sm:$0xf] %v1179
      %1436 = vst [vmem:[%s172 + $0x180] sm:$0xf] %v1180
      %1437 = vst [vmem:[%s172 + $0x184] sm:$0xf] %v1181
      %1438 = vst [vmem:[%s172 + $0x188] sm:$0xf] %v1182
      %1439 = vst [vmem:[%s172 + $0x18c] sm:$0xf] %v1183
      %1440 = vst [vmem:[%s172 + $0x190] sm:$0xf] %v1184
      %1441 = vst [vmem:[%s172 + $0x194] sm:$0xf] %v1185
      %1442 = vst [vmem:[%s172 + $0x198] sm:$0xf] %v1186
      %1443 = vst [vmem:[%s172 + $0x19c] sm:$0xf] %v1187
      %1444 = vst [vmem:[%s172 + $0x1a0] sm:$0xf] %v1188
      %1445 = vst [vmem:[%s172 + $0x1a4] sm:$0xf] %v1189
      %1446 = vst [vmem:[%s172 + $0x1a8] sm:$0xf] %v1190
      %1447 = vst [vmem:[%s172 + $0x1ac] sm:$0xf] %v1191
      %1448 = vst [vmem:[%s172 + $0x1b0] sm:$0xf] %v1192
      %1449 = vst [vmem:[%s172 + $0x1b4] sm:$0xf] %v1193
      %1450 = vst [vmem:[%s172 + $0x1b8] sm:$0xf] %v1194
      %1451 = vst [vmem:[%s172 + $0x1bc] sm:$0xf] %v1195
      %1452 = vst [vmem:[%s172 + $0x1c0] sm:$0xf] %v1196
      %1453 = vst [vmem:[%s172 + $0x1c4] sm:$0xf] %v1197
      %1454 = vst [vmem:[%s172 + $0x1c8] sm:$0xf] %v1198
      %1455 = vst [vmem:[%s172 + $0x1cc] sm:$0xf] %v1199
      %1456 = vst [vmem:[%s172 + $0x1d0] sm:$0xf] %v1200
      %1457 = vst [vmem:[%s172 + $0x1d4] sm:$0xf] %v1201
      %1458 = vst [vmem:[%s172 + $0x1d8] sm:$0xf] %v1202
      %1459 = vst [vmem:[%s172 + $0x1dc] sm:$0xf] %v1203
      %1460 = vst [vmem:[%s172 + $0x1e0] sm:$0xf] %v1204
      %1461 = vst [vmem:[%s172 + $0x1e4] sm:$0xf] %v1205
      %1462 = vst [vmem:[%s172 + $0x1e8] sm:$0xf] %v1206
      %1463 = vst [vmem:[%s172 + $0x1ec] sm:$0xf] %v1207
      %1464 = vst [vmem:[%s172 + $0x1f0] sm:$0xf] %v1208
      %1465 = vst [vmem:[%s172 + $0x1f4] sm:$0xf] %v1209
      %1466 = vst [vmem:[%s172 + $0x1f8] sm:$0xf] %v1210
      %1467 = vst [vmem:[%s172 + $0x1fc] sm:$0xf] %v1211
      %s1468 = smul.u32 128, %s14
      %p1469 = scmp.lt.s32.totalorder %s1468, 255
      %s1470 = scalar_select %p1469, %s1468, 255
      %s1471 = smul.addr %s1470, 4
      %s1472 = scalar_lea.vmem %s3, %s1471
      // Predicated region
      $region33: #{_lambda_.16} parent=31 // pred_check
        %p1473 = pneg %p100
      $region34: #{_lambda_.16} parent=31 // pred_check_branch
        %1475 = sbr.rel (%p1473) target = $region36
      $region35: #{_lambda_.16} parent=31 // pred_region
        %s1476 = smul.u32 128, %s14
      $region36: #{_lambda_.16} parent=31 // pred_fallthru
        _
    $region32: #{_lambda_.16} parent=5 // pred_fallthru
      _
    %p1477 = scmp.le.s32.totalorder 2, %s9
    // Predicated region
    $region37: #{_lambda_.16} parent=5 // pred_check
      %p1478 = pneg %p1477
    $region38: #{_lambda_.16} parent=5 // pred_check_branch
      %1480 = sbr.rel (%p1478) target = $region40
    $region39: #{_lambda_.16} parent=5 // pred_region
      %s1481 = ssub.s32 %s9, 2
      // Predicated region
      $region41: #{_lambda_.16} parent=39 // pred_check
        %p1482 = pneg %p106
      $region42: #{_lambda_.16} parent=39 // pred_check_branch
        %1484 = sbr.rel (%p1482) target = $region44
      $region43: #{_lambda_.16} parent=39 // pred_region
        %s1485 = smul.u32 128, %s15
        %p1486 = scmp.lt.s32.totalorder %s1485, 255
        %s1487 = scalar_select %p1486, %s1485, 255
        %s1488 = smul.addr %s1487, 4
        %s1489 = scalar_lea.vmem %s3, %s1488
      $region44: #{_lambda_.16} parent=39 // pred_fallthru
        _
    $region40: #{_lambda_.16} parent=5 // pred_fallthru
      _
  $region6: #{_lambda_.16} parent=0 // loop_footer
    %s13 = sadd.s32 1, %s9
  $region7: #{_lambda_.16} parent=0 // loop_footer_branch
    %8 = sbr.rel target = $region3
  $region8: #{_lambda_.16} parent=0 // loop_exit
    _

// kernel: _lambda_.17
$region0: #{_lambda_.17}
  #allocation0 [shape = 'u32[]', space=smem, size = 0x4, offset = 0x4, fixed_abs, tag = 'smem constant byte address 0x4 - core index']
  #allocation1 [shape = 'u32[144,128]{1,0:T(1,128)}', space=vmem, size = 0x12000, scoped, tag = 'internal scratch']
  #allocation2 [shape = 'f32[256,128]{1,0:T(8,128)}', space=vmem, size = 0x20000, scoped, tag = 'scratch operand']
  %s0 = inlined_call_operand.vmem [shape: bf16[4,2048,512], index: 0, kind: input, shape index: {}]
  %s1 = inlined_call_operand.vmem [shape: bf16[4,512,128], index: 1, kind: input, shape index: {}]
  %s2 = inlined_call_operand.vmem [shape: f32[4,2048,128], index: 2, kind: output, shape index: {}]
  %s3 = sld [smem:[#allocation0]]
  $region49: #{_lambda_.17} parent=0
    _
  %s5 = ssub.s32 1, %s3
  %s6 = scalar_select 0, %s5, %s3
  loop: start=0, step=1, limit=34
  $region2: #{_lambda_.17} parent=0 // loop_pre_header
    _
  $region3: #{_lambda_.17} parent=0 // loop_header
    %s8 = sphi 0, %s12
    %p9 = scmp.ge.s32.totalorder %s8, 34
    %s15 = sphi 0, %s41
    %s16 = sphi 0, %s37
    %s17 = sphi 0, %s33
    %s18 = sphi 0, %s29
    %s19 = sphi 0, %s15
    %s20 = sphi 0, %s16
    %s21 = sphi 0, %s17
    %s22 = sphi 0, %s18
    %s23 = sphi 0, %s19
    %s24 = sphi 0, %s20
    %s25 = sphi 0, %s21
    %s26 = sphi 0, %s22
    %s48 = sphi 0, %s50
    %s51 = sphi 0, %s48
    %s52 = sphi 0, %s51
    %s68 = sphi 0, %s52
    %s78 = sphi 0, %s80
    %s81 = sphi 0, %s78
    %s82 = sphi 0, %s81
    %s98 = sphi 0, %s82
    %s108 = sphi 0, %s110
    %s111 = sphi 0, %s108
    %s112 = sphi 0, %s111
    %s128 = sphi 0, %s112
  $region4: #{_lambda_.17} parent=0 // loop_header_branch
    %11 = sbr.rel (%p9) target = $region8
  $region5: #{_lambda_.17} parent=0 // loop_body
    %s13 = ssub.s32 %s8, 1
    %s14 = ssub.s32 %s8, 2
    %s27 = sadd.s32 1, %s18
    %p28 = scmp.ge.s32.totalorder %s27, 1
    %s29 = scalar_select %p28, 0, %s27
    %s30 = sadd.s32 1, %s17
    %s31 = scalar_select %p28, %s30, %s17
    %p32 = scmp.ge.s32.totalorder %s31, 1
    %s33 = scalar_select %p32, 0, %s31
    %s34 = sadd.s32 1, %s16
    %s35 = scalar_select %p32, %s34, %s16
    %p36 = scmp.ge.s32.totalorder %s35, 8
    %s37 = scalar_select %p36, 0, %s35
    %s38 = sadd.s32 1, %s15
    %s39 = scalar_select %p36, %s38, %s15
    %p40 = scmp.ge.s32.totalorder %s39, 4
    %s41 = scalar_select %p40, 0, %s39
    %s42 = ssub.s32 %s15, %s41
    %s43 = ssub.s32 %s16, %s37
    %s44 = sor.u32 %s42, %s43
    %s45 = ssub.s32 %s18, %s29
    %s46 = sor.u32 %s44, %s45
    %p47 = scmp.eq.s32.totalorder %s46, 0
    %s49 = sadd.s32 %s48, 1
    %s50 = scalar_select %p47, %s48, %s49
    %p53 = pneg %p47
    %p54 = scmp.eq.s32.totalorder %s8, 31
    %p55 = por %p53, %p54
    %p56 = scmp.ne.s32.totalorder %s48, %s51
    %p57 = scmp.eq.s32.totalorder %s8, 0
    %p58 = por %p56, %p57
    %p59 = scmp.ne.s32.totalorder %s48, %s51
    %p60 = scmp.eq.s32.totalorder %s13, 31
    %p61 = por %p59, %p60
    %p62 = scmp.ne.s32.totalorder %s51, %s52
    %p63 = scmp.eq.s32.totalorder %s13, 0
    %p64 = por %p62, %p63
    %p65 = scmp.ne.s32.totalorder %s51, %s52
    %p66 = scmp.eq.s32.totalorder %s14, 31
    %p67 = por %p65, %p66
    %p69 = scmp.ne.s32.totalorder %s52, %s68
    %p70 = scmp.eq.s32.totalorder %s14, 0
    %p71 = por %p69, %p70
    %s72 = ssub.s32 %s15, %s41
    %s73 = ssub.s32 %s18, %s29
    %s74 = sor.u32 %s72, %s73
    %s75 = ssub.s32 %s17, %s33
    %s76 = sor.u32 %s74, %s75
    %p77 = scmp.eq.s32.totalorder %s76, 0
    %s79 = sadd.s32 %s78, 1
    %s80 = scalar_select %p77, %s78, %s79
    %p83 = pneg %p77
    %p84 = scmp.eq.s32.totalorder %s8, 31
    %p85 = por %p83, %p84
    %p86 = scmp.ne.s32.totalorder %s78, %s81
    %p87 = scmp.eq.s32.totalorder %s8, 0
    %p88 = por %p86, %p87
    %p89 = scmp.ne.s32.totalorder %s78, %s81
    %p90 = scmp.eq.s32.totalorder %s13, 31
    %p91 = por %p89, %p90
    %p92 = scmp.ne.s32.totalorder %s81, %s82
    %p93 = scmp.eq.s32.totalorder %s13, 0
    %p94 = por %p92, %p93
    %p95 = scmp.ne.s32.totalorder %s81, %s82
    %p96 = scmp.eq.s32.totalorder %s14, 31
    %p97 = por %p95, %p96
    %p99 = scmp.ne.s32.totalorder %s82, %s98
    %p100 = scmp.eq.s32.totalorder %s14, 0
    %p101 = por %p99, %p100
    %s102 = ssub.s32 %s15, %s41
    %s103 = ssub.s32 %s16, %s37
    %s104 = sor.u32 %s102, %s103
    %s105 = ssub.s32 %s17, %s33
    %s106 = sor.u32 %s104, %s105
    %p107 = scmp.eq.s32.totalorder %s106, 0
    %s109 = sadd.s32 %s108, 1
    %s110 = scalar_select %p107, %s108, %s109
    %p113 = pneg %p107
    %p114 = scmp.eq.s32.totalorder %s8, 31
    %p115 = por %p113, %p114
    %p116 = scmp.ne.s32.totalorder %s108, %s111
    %p117 = scmp.eq.s32.totalorder %s8, 0
    %p118 = por %p116, %p117
    %p119 = scmp.ne.s32.totalorder %s108, %s111
    %p120 = scmp.eq.s32.totalorder %s13, 31
    %p121 = por %p119, %p120
    %p122 = scmp.ne.s32.totalorder %s111, %s112
    %p123 = scmp.eq.s32.totalorder %s13, 0
    %p124 = por %p122, %p123
    %p125 = scmp.ne.s32.totalorder %s111, %s112
    %p126 = scmp.eq.s32.totalorder %s14, 31
    %p127 = por %p125, %p126
    %p129 = scmp.ne.s32.totalorder %s112, %s128
    %p130 = scmp.eq.s32.totalorder %s14, 0
    %p131 = por %p129, %p130
    %p132 = scmp.le.s32.totalorder 1, %s8
    %p133 = scmp.lt.s32.totalorder %s8, 33
    %p134 = pnand %p132, %p133
    %p135 = pneg %p134
    // Predicated region
    $region9: #{_lambda_.17} parent=5 // pred_check
      _
    $region10: #{_lambda_.17} parent=5 // pred_check_branch
      %137 = sbr.rel (%p134) target = $region12
    $region11: #{_lambda_.17} parent=5 // pred_region
      %s138 = ssub.s32 %s8, 1
    $region12: #{_lambda_.17} parent=5 // pred_fallthru
      _
    %p139 = scmp.lt.s32.totalorder %s8, 32
    // Predicated region
    $region13: #{_lambda_.17} parent=5 // pred_check
      %p140 = pneg %p139
    $region14: #{_lambda_.17} parent=5 // pred_check_branch
      %142 = sbr.rel (%p140) target = $region16
    $region15: #{_lambda_.17} parent=5 // pred_region
      // Predicated region
      $region17: #{_lambda_.17} parent=15 // pred_check
        %p143 = pneg %p58
      $region18: #{_lambda_.17} parent=15 // pred_check_branch
        %145 = sbr.rel (%p143) target = $region20
      $region19: #{_lambda_.17} parent=15 // pred_region
        %s146 = smul.u32 32, %s16
        %s147 = smul.u32 4, %s18
        %p148 = scmp.lt.s32.totalorder %s15, 3
        %s149 = scalar_select %p148, %s15, 3
        %p150 = scmp.lt.s32.totalorder %s146, 255
        %s151 = scalar_select %p150, %s146, 255
        %p152 = scmp.lt.s32.totalorder %s147, 3
        %s153 = scalar_select %p152, %s147, 3
        %s154 = smul.addr %s151, 4
        %s155 = sadd.s32 %s153, %s154
        %s156 = smul.addr %s149, 1024
        %s157 = sadd.s32 %s155, %s156
        %s158 = smul.addr %s157, 4
        %s159 = scalar_lea.vmem %s0, %s158
        %s160 = smul.u32 32, %s16
        %s161 = smul.u32 4, %s18
      $region20: #{_lambda_.17} parent=15 // pred_fallthru
        _
      // Predicated region
      $region21: #{_lambda_.17} parent=15 // pred_check
        %p162 = pneg %p88
      $region22: #{_lambda_.17} parent=15 // pred_check_branch
        %164 = sbr.rel (%p162) target = $region24
      $region23: #{_lambda_.17} parent=15 // pred_region
        %s165 = smul.u32 64, %s18
        %p166 = scmp.lt.s32.totalorder %s15, 3
        %s167 = scalar_select %p166, %s15, 3
        %p168 = scmp.lt.s32.totalorder %s165, 63
        %s169 = scalar_select %p168, %s165, 63
        %p170 = scmp.lt.s32.totalorder %s17, 0
        %s171 = scalar_select %p170, %s17, 0
        %s172 = sadd.s32 %s171, %s169
        %s173 = smul.addr %s167, 64
        %s174 = sadd.s32 %s172, %s173
        %s175 = smul.addr %s174, 4
        %s176 = scalar_lea.vmem %s1, %s175
        %s177 = smul.u32 64, %s18
      $region24: #{_lambda_.17} parent=15 // pred_fallthru
        _
    $region16: #{_lambda_.17} parent=5 // pred_fallthru
      _
    %p178 = scmp.le.s32.totalorder 1, %s8
    %p179 = scmp.lt.s32.totalorder %s8, 33
    %p180 = pnand %p178, %p179
    %p181 = pneg %p180
    // Predicated region
    $region25: #{_lambda_.17} parent=5 // pred_check
      _
    $region26: #{_lambda_.17} parent=5 // pred_check_branch
      %183 = sbr.rel (%p180) target = $region28
    $region27: #{_lambda_.17} parent=5 // pred_region
      %s184 = ssub.s32 %s8, 1
      %s185 = smul.u32 32, %s20
      %s186 = smul.u32 4, %s22
      %p187 = scmp.lt.s32.totalorder %s19, 3
      %s188 = scalar_select %p187, %s19, 3
      %p189 = scmp.lt.s32.totalorder %s185, 255
      %s190 = scalar_select %p189, %s185, 255
      %p191 = scmp.lt.s32.totalorder %s186, 3
      %s192 = scalar_select %p191, %s186, 3
      %s193 = smul.addr %s190, 4
      %s194 = sadd.s32 %s192, %s193
      %s195 = smul.addr %s188, 1024
      %s196 = sadd.s32 %s194, %s195
      %s197 = smul.addr %s196, 4
      %s198 = scalar_lea.vmem %s0, %s197
      %p199 = pneg %p64
      %p200 = pneg %p61
      %s201 = smul.u32 64, %s22
      %p202 = scmp.lt.s32.totalorder %s19, 3
      %s203 = scalar_select %p202, %s19, 3
      %p204 = scmp.lt.s32.totalorder %s201, 63
      %s205 = scalar_select %p204, %s201, 63
      %p206 = scmp.lt.s32.totalorder %s21, 0
      %s207 = scalar_select %p206, %s21, 0
      %s208 = sadd.s32 %s207, %s205
      %s209 = smul.addr %s203, 64
      %s210 = sadd.s32 %s208, %s209
      %s211 = smul.addr %s210, 4
      %s212 = scalar_lea.vmem %s1, %s211
      %p213 = pneg %p94
      %p214 = pneg %p91
      %p215 = pneg %p124
      %p216 = pneg %p121
      %s217 = smul.u32 32, %s20
      %p218 = scmp.lt.s32.totalorder %s19, 3
      %s219 = scalar_select %p218, %s19, 3
      %p220 = scmp.lt.s32.totalorder %s217, 255
      %s221 = scalar_select %p220, %s217, 255
      %p222 = scmp.lt.s32.totalorder %s21, 0
      %s223 = scalar_select %p222, %s21, 0
      %s224 = sadd.s32 %s223, %s221
      %s225 = smul.addr %s219, 256
      %s226 = sadd.s32 %s224, %s225
      %s227 = smul.addr %s226, 8
      %s228 = scalar_lea.vmem %s2, %s227
      %s229 = smul.u32 32, %s20
      %s230 = smul.u32 4, %s22
      %p231 = scmp.lt.s32.totalorder %s19, 3
      %s232 = scalar_select %p231, %s19, 3
      %p233 = scmp.lt.s32.totalorder %s229, 255
      %s234 = scalar_select %p233, %s229, 255
      %p235 = scmp.lt.s32.totalorder %s230, 3
      %s236 = scalar_select %p235, %s230, 3
      %s237 = smul.addr %s234, 4
      %s238 = sadd.s32 %s236, %s237
      %s239 = smul.addr %s232, 1024
      %s240 = sadd.s32 %s238, %s239
      %s241 = smul.addr %s240, 4
      %s242 = scalar_lea.vmem %s0, %s241
      %s243 = smul.u32 32, %s20
      %s244 = smul.u32 4, %s22
      %s245 = smul.u32 64, %s22
      %p246 = scmp.lt.s32.totalorder %s19, 3
      %s247 = scalar_select %p246, %s19, 3
      %p248 = scmp.lt.s32.totalorder %s245, 63
      %s249 = scalar_select %p248, %s245, 63
      %p250 = scmp.lt.s32.totalorder %s21, 0
      %s251 = scalar_select %p250, %s21, 0
      %s252 = sadd.s32 %s251, %s249
      %s253 = smul.addr %s247, 64
      %s254 = sadd.s32 %s252, %s253
      %s255 = smul.addr %s254, 4
      %s256 = scalar_lea.vmem %s1, %s255
      %s257 = smul.u32 64, %s22
      %s258 = smul.u32 32, %s20
      %p259 = scmp.lt.s32.totalorder %s19, 3
      %s260 = scalar_select %p259, %s19, 3
      %p261 = scmp.lt.s32.totalorder %s258, 255
      %s262 = scalar_select %p261, %s258, 255
      %p263 = scmp.lt.s32.totalorder %s21, 0
      %s264 = scalar_select %p263, %s21, 0
      %s265 = sadd.s32 %s264, %s262
      %s266 = smul.addr %s260, 256
      %s267 = sadd.s32 %s265, %s266
      %s268 = smul.addr %s267, 8
      %s269 = scalar_lea.vmem %s2, %s268
      %s270 = smul.u32 32, %s20
      %p272 = scmp.eq.s32.totalorder %s22, 0
      // Predicated region
      $region29: #{_lambda_.17} parent=27 // pred_check
        %p273 = pneg %p272
      $region30: #{_lambda_.17} parent=27 // pred_check_branch
        %275 = sbr.rel (%p273) target = $region32
      $region31: #{_lambda_.17} parent=27 // pred_region
        %276 = vst [vmem:[#allocation2] sm:$0xff] 0.0
        %277 = vst [vmem:[#allocation2 + $0x8] sm:$0xff] 0.0
        %278 = vst [vmem:[#allocation2 + $0x10] sm:$0xff] 0.0
        %279 = vst [vmem:[#allocation2 + $0x18] sm:$0xff] 0.0
        %280 = vst [vmem:[#allocation2 + $0x20] sm:$0xff] 0.0
        %281 = vst [vmem:[#allocation2 + $0x28] sm:$0xff] 0.0
        %282 = vst [vmem:[#allocation2 + $0x30] sm:$0xff] 0.0
        %283 = vst [vmem:[#allocation2 + $0x38] sm:$0xff] 0.0
        %284 = vst [vmem:[#allocation2 + $0x40] sm:$0xff] 0.0
        %285 = vst [vmem:[#allocation2 + $0x48] sm:$0xff] 0.0
        %286 = vst [vmem:[#allocation2 + $0x50] sm:$0xff] 0.0
        %287 = vst [vmem:[#allocation2 + $0x58] sm:$0xff] 0.0
        %288 = vst [vmem:[#allocation2 + $0x60] sm:$0xff] 0.0
        %289 = vst [vmem:[#allocation2 + $0x68] sm:$0xff] 0.0
        %290 = vst [vmem:[#allocation2 + $0x70] sm:$0xff] 0.0
        %291 = vst [vmem:[#allocation2 + $0x78] sm:$0xff] 0.0
        %292 = vst [vmem:[#allocation2 + $0x80] sm:$0xff] 0.0
        %293 = vst [vmem:[#allocation2 + $0x88] sm:$0xff] 0.0
        %294 = vst [vmem:[#allocation2 + $0x90] sm:$0xff] 0.0
        %295 = vst [vmem:[#allocation2 + $0x98] sm:$0xff] 0.0
        %296 = vst [vmem:[#allocation2 + $0xa0] sm:$0xff] 0.0
        %297 = vst [vmem:[#allocation2 + $0xa8] sm:$0xff] 0.0
        %298 = vst [vmem:[#allocation2 + $0xb0] sm:$0xff] 0.0
        %299 = vst [vmem:[#allocation2 + $0xb8] sm:$0xff] 0.0
        %300 = vst [vmem:[#allocation2 + $0xc0] sm:$0xff] 0.0
        %301 = vst [vmem:[#allocation2 + $0xc8] sm:$0xff] 0.0
        %302 = vst [vmem:[#allocation2 + $0xd0] sm:$0xff] 0.0
        %303 = vst [vmem:[#allocation2 + $0xd8] sm:$0xff] 0.0
        %304 = vst [vmem:[#allocation2 + $0xe0] sm:$0xff] 0.0
        %305 = vst [vmem:[#allocation2 + $0xe8] sm:$0xff] 0.0
        %306 = vst [vmem:[#allocation2 + $0xf0] sm:$0xff] 0.0
        %307 = vst [vmem:[#allocation2 + $0xf8] sm:$0xff] 0.0
      $region32: #{_lambda_.17} parent=27 // pred_fallthru
        _
      %v308 = vld [vmem:[#allocation2] sm:$0xff]
      %v309 = vld [vmem:[#allocation2 + $0x8] sm:$0xff]
      %v310 = vld [vmem:[#allocation2 + $0x10] sm:$0xff]
      %v311 = vld [vmem:[#allocation2 + $0x18] sm:$0xff]
      %v312 = vld [vmem:[#allocation2 + $0x20] sm:$0xff]
      %v313 = vld [vmem:[#allocation2 + $0x28] sm:$0xff]
      %v314 = vld [vmem:[#allocation2 + $0x30] sm:$0xff]
      %v315 = vld [vmem:[#allocation2 + $0x38] sm:$0xff]
      %v316 = vld [vmem:[#allocation2 + $0x40] sm:$0xff]
      %v317 = vld [vmem:[#allocation2 + $0x48] sm:$0xff]
      %v318 = vld [vmem:[#allocation2 + $0x50] sm:$0xff]
      %v319 = vld [vmem:[#allocation2 + $0x58] sm:$0xff]
      %v320 = vld [vmem:[#allocation2 + $0x60] sm:$0xff]
      %v321 = vld [vmem:[#allocation2 + $0x68] sm:$0xff]
      %v322 = vld [vmem:[#allocation2 + $0x70] sm:$0xff]
      %v323 = vld [vmem:[#allocation2 + $0x78] sm:$0xff]
      %v324 = vld [vmem:[#allocation2 + $0x80] sm:$0xff]
      %v325 = vld [vmem:[#allocation2 + $0x88] sm:$0xff]
      %v326 = vld [vmem:[#allocation2 + $0x90] sm:$0xff]
      %v327 = vld [vmem:[#allocation2 + $0x98] sm:$0xff]
      %v328 = vld [vmem:[#allocation2 + $0xa0] sm:$0xff]
      %v329 = vld [vmem:[#allocation2 + $0xa8] sm:$0xff]
      %v330 = vld [vmem:[#allocation2 + $0xb0] sm:$0xff]
      %v331 = vld [vmem:[#allocation2 + $0xb8] sm:$0xff]
      %v332 = vld [vmem:[#allocation2 + $0xc0] sm:$0xff]
      %v333 = vld [vmem:[#allocation2 + $0xc8] sm:$0xff]
      %v334 = vld [vmem:[#allocation2 + $0xd0] sm:$0xff]
      %v335 = vld [vmem:[#allocation2 + $0xd8] sm:$0xff]
      %v336 = vld [vmem:[#allocation2 + $0xe0] sm:$0xff]
      %v337 = vld [vmem:[#allocation2 + $0xe8] sm:$0xff]
      %v338 = vld [vmem:[#allocation2 + $0xf0] sm:$0xff]
      %v339 = vld [vmem:[#allocation2 + $0xf8] sm:$0xff]
      %v340 = vld [vmem:[%s242] sm:$0xff]
      %v341 = vld [vmem:[%s242 + $0x8] sm:$0xff]
      %v342 = vld [vmem:[%s242 + $0x10] sm:$0xff]
      %v343 = vld [vmem:[%s242 + $0x18] sm:$0xff]
      %v344 = vld [vmem:[%s242 + $0x20] sm:$0xff]
      %v345 = vld [vmem:[%s242 + $0x28] sm:$0xff]
      %v346 = vld [vmem:[%s242 + $0x30] sm:$0xff]
      %v347 = vld [vmem:[%s242 + $0x38] sm:$0xff]
      %v348 = vld [vmem:[%s242 + $0x40] sm:$0xff]
      %v349 = vld [vmem:[%s242 + $0x48] sm:$0xff]
      %v350 = vld [vmem:[%s242 + $0x50] sm:$0xff]
      %v351 = vld [vmem:[%s242 + $0x58] sm:$0xff]
      %v352 = vld [vmem:[%s242 + $0x60] sm:$0xff]
      %v353 = vld [vmem:[%s242 + $0x68] sm:$0xff]
      %v354 = vld [vmem:[%s242 + $0x70] sm:$0xff]
      %v355 = vld [vmem:[%s242 + $0x78] sm:$0xff]
      %v356 = vld [vmem:[%s242 + $0x80] sm:$0xff]
      %v357 = vld [vmem:[%s242 + $0x88] sm:$0xff]
      %v358 = vld [vmem:[%s242 + $0x90] sm:$0xff]
      %v359 = vld [vmem:[%s242 + $0x98] sm:$0xff]
      %v360 = vld [vmem:[%s242 + $0xa0] sm:$0xff]
      %v361 = vld [vmem:[%s242 + $0xa8] sm:$0xff]
      %v362 = vld [vmem:[%s242 + $0xb0] sm:$0xff]
      %v363 = vld [vmem:[%s242 + $0xb8] sm:$0xff]
      %v364 = vld [vmem:[%s242 + $0xc0] sm:$0xff]
      %v365 = vld [vmem:[%s242 + $0xc8] sm:$0xff]
      %v366 = vld [vmem:[%s242 + $0xd0] sm:$0xff]
      %v367 = vld [vmem:[%s242 + $0xd8] sm:$0xff]
      %v368 = vld [vmem:[%s242 + $0xe0] sm:$0xff]
      %v369 = vld [vmem:[%s242 + $0xe8] sm:$0xff]
      %v370 = vld [vmem:[%s242 + $0xf0] sm:$0xff]
      %v371 = vld [vmem:[%s242 + $0xf8] sm:$0xff]
      %v372 = vld [vmem:[%s242 + $0x100] sm:$0xff]
      %v373 = vld [vmem:[%s242 + $0x108] sm:$0xff]
      %v374 = vld [vmem:[%s242 + $0x110] sm:$0xff]
      %v375 = vld [vmem:[%s242 + $0x118] sm:$0xff]
      %v376 = vld [vmem:[%s242 + $0x120] sm:$0xff]
      %v377 = vld [vmem:[%s242 + $0x128] sm:$0xff]
      %v378 = vld [vmem:[%s242 + $0x130] sm:$0xff]
      %v379 = vld [vmem:[%s242 + $0x138] sm:$0xff]
      %v380 = vld [vmem:[%s242 + $0x140] sm:$0xff]
      %v381 = vld [vmem:[%s242 + $0x148] sm:$0xff]
      %v382 = vld [vmem:[%s242 + $0x150] sm:$0xff]
      %v383 = vld [vmem:[%s242 + $0x158] sm:$0xff]
      %v384 = vld [vmem:[%s242 + $0x160] sm:$0xff]
      %v385 = vld [vmem:[%s242 + $0x168] sm:$0xff]
      %v386 = vld [vmem:[%s242 + $0x170] sm:$0xff]
      %v387 = vld [vmem:[%s242 + $0x178] sm:$0xff]
      %v388 = vld [vmem:[%s242 + $0x180] sm:$0xff]
      %v389 = vld [vmem:[%s242 + $0x188] sm:$0xff]
      %v390 = vld [vmem:[%s242 + $0x190] sm:$0xff]
      %v391 = vld [vmem:[%s242 + $0x198] sm:$0xff]
      %v392 = vld [vmem:[%s242 + $0x1a0] sm:$0xff]
      %v393 = vld [vmem:[%s242 + $0x1a8] sm:$0xff]
      %v394 = vld [vmem:[%s242 + $0x1b0] sm:$0xff]
      %v395 = vld [vmem:[%s242 + $0x1b8] sm:$0xff]
      %v396 = vld [vmem:[%s242 + $0x1c0] sm:$0xff]
      %v397 = vld [vmem:[%s242 + $0x1c8] sm:$0xff]
      %v398 = vld [vmem:[%s242 + $0x1d0] sm:$0xff]
      %v399 = vld [vmem:[%s242 + $0x1d8] sm:$0xff]
      %v400 = vld [vmem:[%s242 + $0x1e0] sm:$0xff]
      %v401 = vld [vmem:[%s242 + $0x1e8] sm:$0xff]
      %v402 = vld [vmem:[%s242 + $0x1f0] sm:$0xff]
      %v403 = vld [vmem:[%s242 + $0x1f8] sm:$0xff]
      %v404 = vld [vmem:[%s256] sm:$0xf]
      %v405 = vld [vmem:[%s256 + $0x4] sm:$0xf]
      %v406 = vld [vmem:[%s256 + $0x8] sm:$0xf]
      %v407 = vld [vmem:[%s256 + $0xc] sm:$0xf]
      %v408 = vld [vmem:[%s256 + $0x10] sm:$0xf]
      %v409 = vld [vmem:[%s256 + $0x14] sm:$0xf]
      %v410 = vld [vmem:[%s256 + $0x18] sm:$0xf]
      %v411 = vld [vmem:[%s256 + $0x1c] sm:$0xf]
      %v412 = vld [vmem:[%s256 + $0x20] sm:$0xf]
      %v413 = vld [vmem:[%s256 + $0x24] sm:$0xf]
      %v414 = vld [vmem:[%s256 + $0x28] sm:$0xf]
      %v415 = vld [vmem:[%s256 + $0x2c] sm:$0xf]
      %v416 = vld [vmem:[%s256 + $0x30] sm:$0xf]
      %v417 = vld [vmem:[%s256 + $0x34] sm:$0xf]
      %v418 = vld [vmem:[%s256 + $0x38] sm:$0xf]
      %v419 = vld [vmem:[%s256 + $0x3c] sm:$0xf]
      %v420 = vld [vmem:[%s256 + $0x40] sm:$0xf]
      %v421 = vld [vmem:[%s256 + $0x44] sm:$0xf]
      %v422 = vld [vmem:[%s256 + $0x48] sm:$0xf]
      %v423 = vld [vmem:[%s256 + $0x4c] sm:$0xf]
      %v424 = vld [vmem:[%s256 + $0x50] sm:$0xf]
      %v425 = vld [vmem:[%s256 + $0x54] sm:$0xf]
      %v426 = vld [vmem:[%s256 + $0x58] sm:$0xf]
      %v427 = vld [vmem:[%s256 + $0x5c] sm:$0xf]
      %v428 = vld [vmem:[%s256 + $0x60] sm:$0xf]
      %v429 = vld [vmem:[%s256 + $0x64] sm:$0xf]
      %v430 = vld [vmem:[%s256 + $0x68] sm:$0xf]
      %v431 = vld [vmem:[%s256 + $0x6c] sm:$0xf]
      %v432 = vld [vmem:[%s256 + $0x70] sm:$0xf]
      %v433 = vld [vmem:[%s256 + $0x74] sm:$0xf]
      %v434 = vld [vmem:[%s256 + $0x78] sm:$0xf]
      %v435 = vld [vmem:[%s256 + $0x7c] sm:$0xf]
      %v436 = vld [vmem:[%s256 + $0x80] sm:$0xf]
      %v437 = vld [vmem:[%s256 + $0x84] sm:$0xf]
      %v438 = vld [vmem:[%s256 + $0x88] sm:$0xf]
      %v439 = vld [vmem:[%s256 + $0x8c] sm:$0xf]
      %v440 = vld [vmem:[%s256 + $0x90] sm:$0xf]
      %v441 = vld [vmem:[%s256 + $0x94] sm:$0xf]
      %v442 = vld [vmem:[%s256 + $0x98] sm:$0xf]
      %v443 = vld [vmem:[%s256 + $0x9c] sm:$0xf]
      %v444 = vld [vmem:[%s256 + $0xa0] sm:$0xf]
      %v445 = vld [vmem:[%s256 + $0xa4] sm:$0xf]
      %v446 = vld [vmem:[%s256 + $0xa8] sm:$0xf]
      %v447 = vld [vmem:[%s256 + $0xac] sm:$0xf]
      %v448 = vld [vmem:[%s256 + $0xb0] sm:$0xf]
      %v449 = vld [vmem:[%s256 + $0xb4] sm:$0xf]
      %v450 = vld [vmem:[%s256 + $0xb8] sm:$0xf]
      %v451 = vld [vmem:[%s256 + $0xbc] sm:$0xf]
      %v452 = vld [vmem:[%s256 + $0xc0] sm:$0xf]
      %v453 = vld [vmem:[%s256 + $0xc4] sm:$0xf]
      %v454 = vld [vmem:[%s256 + $0xc8] sm:$0xf]
      %v455 = vld [vmem:[%s256 + $0xcc] sm:$0xf]
      %v456 = vld [vmem:[%s256 + $0xd0] sm:$0xf]
      %v457 = vld [vmem:[%s256 + $0xd4] sm:$0xf]
      %v458 = vld [vmem:[%s256 + $0xd8] sm:$0xf]
      %v459 = vld [vmem:[%s256 + $0xdc] sm:$0xf]
      %v460 = vld [vmem:[%s256 + $0xe0] sm:$0xf]
      %v461 = vld [vmem:[%s256 + $0xe4] sm:$0xf]
      %v462 = vld [vmem:[%s256 + $0xe8] sm:$0xf]
      %v463 = vld [vmem:[%s256 + $0xec] sm:$0xf]
      %v464 = vld [vmem:[%s256 + $0xf0] sm:$0xf]
      %v465 = vld [vmem:[%s256 + $0xf4] sm:$0xf]
      %v466 = vld [vmem:[%s256 + $0xf8] sm:$0xf]
      %v467 = vld [vmem:[%s256 + $0xfc] sm:$0xf]
      %v532 = vunpack.c.l.b16 %v340
      %v533 = vunpack.c.h.b16 %v340
      %v534 = vunpack.c.l.b16 %v341
      %v535 = vunpack.c.h.b16 %v341
      %v536 = vunpack.c.l.b16 %v342
      %v537 = vunpack.c.h.b16 %v342
      %v538 = vunpack.c.l.b16 %v343
      %v539 = vunpack.c.h.b16 %v343
      %v540 = vunpack.c.l.b16 %v344
      %v541 = vunpack.c.h.b16 %v344
      %v542 = vunpack.c.l.b16 %v345
      %v543 = vunpack.c.h.b16 %v345
      %v544 = vunpack.c.l.b16 %v346
      %v545 = vunpack.c.h.b16 %v346
      %v546 = vunpack.c.l.b16 %v347
      %v547 = vunpack.c.h.b16 %v347
      %v548 = vunpack.c.l.b16 %v348
      %v549 = vunpack.c.h.b16 %v348
      %v550 = vunpack.c.l.b16 %v349
      %v551 = vunpack.c.h.b16 %v349
      %v552 = vunpack.c.l.b16 %v350
      %v553 = vunpack.c.h.b16 %v350
      %v554 = vunpack.c.l.b16 %v351
      %v555 = vunpack.c.h.b16 %v351
      %v556 = vunpack.c.l.b16 %v352
      %v557 = vunpack.c.h.b16 %v352
      %v558 = vunpack.c.l.b16 %v353
      %v559 = vunpack.c.h.b16 %v353
      %v560 = vunpack.c.l.b16 %v354
      %v561 = vunpack.c.h.b16 %v354
      %v562 = vunpack.c.l.b16 %v355
      %v563 = vunpack.c.h.b16 %v355
      %v564 = vunpack.c.l.b16 %v356
      %v565 = vunpack.c.h.b16 %v356
      %v566 = vunpack.c.l.b16 %v357
      %v567 = vunpack.c.h.b16 %v357
      %v568 = vunpack.c.l.b16 %v358
      %v569 = vunpack.c.h.b16 %v358
      %v570 = vunpack.c.l.b16 %v359
      %v571 = vunpack.c.h.b16 %v359
      %v572 = vunpack.c.l.b16 %v360
      %v573 = vunpack.c.h.b16 %v360
      %v574 = vunpack.c.l.b16 %v361
      %v575 = vunpack.c.h.b16 %v361
      %v576 = vunpack.c.l.b16 %v362
      %v577 = vunpack.c.h.b16 %v362
      %v578 = vunpack.c.l.b16 %v363
      %v579 = vunpack.c.h.b16 %v363
      %v580 = vunpack.c.l.b16 %v364
      %v581 = vunpack.c.h.b16 %v364
      %v582 = vunpack.c.l.b16 %v365
      %v583 = vunpack.c.h.b16 %v365
      %v584 = vunpack.c.l.b16 %v366
      %v585 = vunpack.c.h.b16 %v366
      %v586 = vunpack.c.l.b16 %v367
      %v587 = vunpack.c.h.b16 %v367
      %v588 = vunpack.c.l.b16 %v368
      %v589 = vunpack.c.h.b16 %v368
      %v590 = vunpack.c.l.b16 %v369
      %v591 = vunpack.c.h.b16 %v369
      %v592 = vunpack.c.l.b16 %v370
      %v593 = vunpack.c.h.b16 %v370
      %v594 = vunpack.c.l.b16 %v371
      %v595 = vunpack.c.h.b16 %v371
      %v596 = vunpack.c.l.b16 %v372
      %v597 = vunpack.c.h.b16 %v372
      %v598 = vunpack.c.l.b16 %v373
      %v599 = vunpack.c.h.b16 %v373
      %v600 = vunpack.c.l.b16 %v374
      %v601 = vunpack.c.h.b16 %v374
      %v602 = vunpack.c.l.b16 %v375
      %v603 = vunpack.c.h.b16 %v375
      %v604 = vunpack.c.l.b16 %v376
      %v605 = vunpack.c.h.b16 %v376
      %v606 = vunpack.c.l.b16 %v377
      %v607 = vunpack.c.h.b16 %v377
      %v608 = vunpack.c.l.b16 %v378
      %v609 = vunpack.c.h.b16 %v378
      %v610 = vunpack.c.l.b16 %v379
      %v611 = vunpack.c.h.b16 %v379
      %v612 = vunpack.c.l.b16 %v380
      %v613 = vunpack.c.h.b16 %v380
      %v614 = vunpack.c.l.b16 %v381
      %v615 = vunpack.c.h.b16 %v381
      %v616 = vunpack.c.l.b16 %v382
      %v617 = vunpack.c.h.b16 %v382
      %v618 = vunpack.c.l.b16 %v383
      %v619 = vunpack.c.h.b16 %v383
      %v620 = vunpack.c.l.b16 %v384
      %v621 = vunpack.c.h.b16 %v384
      %v622 = vunpack.c.l.b16 %v385
      %v623 = vunpack.c.h.b16 %v385
      %v624 = vunpack.c.l.b16 %v386
      %v625 = vunpack.c.h.b16 %v386
      %v626 = vunpack.c.l.b16 %v387
      %v627 = vunpack.c.h.b16 %v387
      %v628 = vunpack.c.l.b16 %v388
      %v629 = vunpack.c.h.b16 %v388
      %v630 = vunpack.c.l.b16 %v389
      %v631 = vunpack.c.h.b16 %v389
      %v632 = vunpack.c.l.b16 %v390
      %v633 = vunpack.c.h.b16 %v390
      %v634 = vunpack.c.l.b16 %v391
      %v635 = vunpack.c.h.b16 %v391
      %v636 = vunpack.c.l.b16 %v392
      %v637 = vunpack.c.h.b16 %v392
      %v638 = vunpack.c.l.b16 %v393
      %v639 = vunpack.c.h.b16 %v393
      %v640 = vunpack.c.l.b16 %v394
      %v641 = vunpack.c.h.b16 %v394
      %v642 = vunpack.c.l.b16 %v395
      %v643 = vunpack.c.h.b16 %v395
      %v644 = vunpack.c.l.b16 %v396
      %v645 = vunpack.c.h.b16 %v396
      %v646 = vunpack.c.l.b16 %v397
      %v647 = vunpack.c.h.b16 %v397
      %v648 = vunpack.c.l.b16 %v398
      %v649 = vunpack.c.h.b16 %v398
      %v650 = vunpack.c.l.b16 %v399
      %v651 = vunpack.c.h.b16 %v399
      %v652 = vunpack.c.l.b16 %v400
      %v653 = vunpack.c.h.b16 %v400
      %v654 = vunpack.c.l.b16 %v401
      %v655 = vunpack.c.h.b16 %v401
      %v656 = vunpack.c.l.b16 %v402
      %v657 = vunpack.c.h.b16 %v402
      %v658 = vunpack.c.l.b16 %v403
      %v659 = vunpack.c.h.b16 %v403
      %v660 = vpack.c.b16 %v536, %v532
      %v661 = vpack.c.b16 %v537, %v533
      %v662 = vpack.c.b16 %v538, %v534
      %v663 = vpack.c.b16 %v539, %v535
      %v664 = vpack.c.b16 %v544, %v540
      %v665 = vpack.c.b16 %v545, %v541
      %v666 = vpack.c.b16 %v546, %v542
      %v667 = vpack.c.b16 %v547, %v543
      %v668 = vpack.c.b16 %v552, %v548
      %v669 = vpack.c.b16 %v553, %v549
      %v670 = vpack.c.b16 %v554, %v550
      %v671 = vpack.c.b16 %v555, %v551
      %v672 = vpack.c.b16 %v560, %v556
      %v673 = vpack.c.b16 %v561, %v557
      %v674 = vpack.c.b16 %v562, %v558
      %v675 = vpack.c.b16 %v563, %v559
      %v676 = vpack.c.b16 %v568, %v564
      %v677 = vpack.c.b16 %v569, %v565
      %v678 = vpack.c.b16 %v570, %v566
      %v679 = vpack.c.b16 %v571, %v567
      %v680 = vpack.c.b16 %v576, %v572
      %v681 = vpack.c.b16 %v577, %v573
      %v682 = vpack.c.b16 %v578, %v574
      %v683 = vpack.c.b16 %v579, %v575
      %v684 = vpack.c.b16 %v584, %v580
      %v685 = vpack.c.b16 %v585, %v581
      %v686 = vpack.c.b16 %v586, %v582
      %v687 = vpack.c.b16 %v587, %v583
      %v688 = vpack.c.b16 %v592, %v588
      %v689 = vpack.c.b16 %v593, %v589
      %v690 = vpack.c.b16 %v594, %v590
      %v691 = vpack.c.b16 %v595, %v591
      %v692 = vpack.c.b16 %v600, %v596
      %v693 = vpack.c.b16 %v601, %v597
      %v694 = vpack.c.b16 %v602, %v598
      %v695 = vpack.c.b16 %v603, %v599
      %v696 = vpack.c.b16 %v608, %v604
      %v697 = vpack.c.b16 %v609, %v605
      %v698 = vpack.c.b16 %v610, %v606
      %v699 = vpack.c.b16 %v611, %v607
      %v700 = vpack.c.b16 %v616, %v612
      %v701 = vpack.c.b16 %v617, %v613
      %v702 = vpack.c.b16 %v618, %v614
      %v703 = vpack.c.b16 %v619, %v615
      %v704 = vpack.c.b16 %v624, %v620
      %v705 = vpack.c.b16 %v625, %v621
      %v706 = vpack.c.b16 %v626, %v622
      %v707 = vpack.c.b16 %v627, %v623
      %v708 = vpack.c.b16 %v632, %v628
      %v709 = vpack.c.b16 %v633, %v629
      %v710 = vpack.c.b16 %v634, %v630
      %v711 = vpack.c.b16 %v635, %v631
      %v712 = vpack.c.b16 %v640, %v636
      %v713 = vpack.c.b16 %v641, %v637
      %v714 = vpack.c.b16 %v642, %v638
      %v715 = vpack.c.b16 %v643, %v639
      %v716 = vpack.c.b16 %v648, %v644
      %v717 = vpack.c.b16 %v649, %v645
      %v718 = vpack.c.b16 %v650, %v646
      %v719 = vpack.c.b16 %v651, %v647
      %v720 = vpack.c.b16 %v656, %v652
      %v721 = vpack.c.b16 %v657, %v653
      %v722 = vpack.c.b16 %v658, %v654
      %v723 = vpack.c.b16 %v659, %v655
      %v852 = vunpack.c.l.b16 %v404
      %v853 = vunpack.c.l.b16 %v405
      %v854 = vunpack.c.l.b16 %v406
      %v855 = vunpack.c.l.b16 %v407
      %v856 = vunpack.c.l.b16 %v408
      %v857 = vunpack.c.l.b16 %v409
      %v858 = vunpack.c.l.b16 %v410
      %v859 = vunpack.c.l.b16 %v411
      %v860 = vunpack.c.l.b16 %v412
      %v861 = vunpack.c.l.b16 %v413
      %v862 = vunpack.c.l.b16 %v414
      %v863 = vunpack.c.l.b16 %v415
      %v864 = vunpack.c.l.b16 %v416
      %v865 = vunpack.c.l.b16 %v417
      %v866 = vunpack.c.l.b16 %v418
      %v867 = vunpack.c.l.b16 %v419
      %v868 = vunpack.c.l.b16 %v420
      %v869 = vunpack.c.l.b16 %v421
      %v870 = vunpack.c.l.b16 %v422
      %v871 = vunpack.c.l.b16 %v423
      %v872 = vunpack.c.l.b16 %v424
      %v873 = vunpack.c.l.b16 %v425
      %v874 = vunpack.c.l.b16 %v426
      %v875 = vunpack.c.l.b16 %v427
      %v876 = vunpack.c.l.b16 %v428
      %v877 = vunpack.c.l.b16 %v429
      %v878 = vunpack.c.l.b16 %v430
      %v879 = vunpack.c.l.b16 %v431
      %v880 = vunpack.c.l.b16 %v432
      %v881 = vunpack.c.l.b16 %v433
      %v882 = vunpack.c.l.b16 %v434
      %v883 = vunpack.c.l.b16 %v435
      %v884 = vunpack.c.l.b16 %v436
      %v885 = vunpack.c.l.b16 %v437
      %v886 = vunpack.c.l.b16 %v438
      %v887 = vunpack.c.l.b16 %v439
      %v888 = vunpack.c.l.b16 %v440
      %v889 = vunpack.c.l.b16 %v441
      %v890 = vunpack.c.l.b16 %v442
      %v891 = vunpack.c.l.b16 %v443
      %v892 = vunpack.c.l.b16 %v444
      %v893 = vunpack.c.l.b16 %v445
      %v894 = vunpack.c.l.b16 %v446
      %v895 = vunpack.c.l.b16 %v447
      %v896 = vunpack.c.l.b16 %v448
      %v897 = vunpack.c.l.b16 %v449
      %v898 = vunpack.c.l.b16 %v450
      %v899 = vunpack.c.l.b16 %v451
      %v900 = vunpack.c.l.b16 %v452
      %v901 = vunpack.c.l.b16 %v453
      %v902 = vunpack.c.l.b16 %v454
      %v903 = vunpack.c.l.b16 %v455
      %v904 = vunpack.c.l.b16 %v456
      %v905 = vunpack.c.l.b16 %v457
      %v906 = vunpack.c.l.b16 %v458
      %v907 = vunpack.c.l.b16 %v459
      %v908 = vunpack.c.l.b16 %v460
      %v909 = vunpack.c.l.b16 %v461
      %v910 = vunpack.c.l.b16 %v462
      %v911 = vunpack.c.l.b16 %v463
      %v912 = vunpack.c.l.b16 %v464
      %v913 = vunpack.c.l.b16 %v465
      %v914 = vunpack.c.l.b16 %v466
      %v915 = vunpack.c.l.b16 %v467
      %v916 = vpack.c.b16 %v853, %v852
      %v917 = vpack.c.b16 %v855, %v854
      %v918 = vpack.c.b16 %v857, %v856
      %v919 = vpack.c.b16 %v859, %v858
      %v920 = vpack.c.b16 %v861, %v860
      %v921 = vpack.c.b16 %v863, %v862
      %v922 = vpack.c.b16 %v865, %v864
      %v923 = vpack.c.b16 %v867, %v866
      %v924 = vpack.c.b16 %v869, %v868
      %v925 = vpack.c.b16 %v871, %v870
      %v926 = vpack.c.b16 %v873, %v872
      %v927 = vpack.c.b16 %v875, %v874
      %v928 = vpack.c.b16 %v877, %v876
      %v929 = vpack.c.b16 %v879, %v878
      %v930 = vpack.c.b16 %v881, %v880
      %v931 = vpack.c.b16 %v883, %v882
      %v932 = vpack.c.b16 %v885, %v884
      %v933 = vpack.c.b16 %v887, %v886
      %v934 = vpack.c.b16 %v889, %v888
      %v935 = vpack.c.b16 %v891, %v890
      %v936 = vpack.c.b16 %v893, %v892
      %v937 = vpack.c.b16 %v895, %v894
      %v938 = vpack.c.b16 %v897, %v896
      %v939 = vpack.c.b16 %v899, %v898
      %v940 = vpack.c.b16 %v901, %v900
      %v941 = vpack.c.b16 %v903, %v902
      %v942 = vpack.c.b16 %v905, %v904
      %v943 = vpack.c.b16 %v907, %v906
      %v944 = vpack.c.b16 %v909, %v908
      %v945 = vpack.c.b16 %v911, %v910
      %v946 = vpack.c.b16 %v913, %v912
      %v947 = vpack.c.b16 %v915, %v914
      %980 = vmatprep.subr.bf16.mxu0 0
      %981 = vmatpush1.bf16.msra.mxu0 %v923
      %982 = vmatprep.subr.bf16.mxu0 0
      %983 = vmatpush1.bf16.msra.mxu0 %v922
      %984 = vmatprep.subr.bf16.mxu0 0
      %985 = vmatpush1.bf16.msra.mxu0 %v921
      %986 = vmatprep.subr.bf16.mxu0 0
      %987 = vmatpush1.bf16.msra.mxu0 %v920
      %988 = vmatprep.subr.bf16.mxu0 0
      %989 = vmatpush1.bf16.msra.mxu0 %v919
      %990 = vmatprep.subr.bf16.mxu0 0
      %991 = vmatpush1.bf16.msra.mxu0 %v918
      %992 = vmatprep.subr.bf16.mxu0 0
      %993 = vmatpush1.bf16.msra.mxu0 %v917
      %994 = vmatprep.subr.bf16.mxu0 0
      %995 = vmatpush1.bf16.msra.mxu0 %v916
      %996 = vmatprep.subr.bf16.mxu0 0
      %997 = vmatpush2.bf16.msra.mxu0 %v931
      %998 = vmatprep.subr.bf16.mxu0 0
      %999 = vmatpush2.bf16.msra.mxu0 %v930
      %1000 = vmatprep.subr.bf16.mxu0 0
      %1001 = vmatpush2.bf16.msra.mxu0 %v929
      %1002 = vmatprep.subr.bf16.mxu0 0
      %1003 = vmatpush2.bf16.msra.mxu0 %v928
      %1004 = vmatprep.subr.bf16.mxu0 0
      %1005 = vmatpush2.bf16.msra.mxu0 %v927
      %1006 = vmatprep.subr.bf16.mxu0 0
      %1007 = vmatpush2.bf16.msra.mxu0 %v926
      %1008 = vmatprep.subr.bf16.mxu0 0
      %1009 = vmatpush2.bf16.msra.mxu0 %v925
      %1010 = vmatprep.subr.bf16.mxu0 0
      %1011 = vmatpush2.bf16.msra.mxu0 %v924
      %1012 = vmatprep.mubr.bf16.mxu0 %v661
      %1013 = vmatmul.mubr.bf16.gmra.mxu0 %v660
      %v1014 = vpop.f32.mrf.mxu0
      %v1015 = vadd.f32 0.0, %v1014
      %v1016 = vpop.f32.mrf.mxu0
      %v1017 = vpop.f32.mrf.mxu0
      %v1018 = vadd.f32 0.0, %v1017
      %v1019 = vpop.f32.mrf.mxu0
      %1020 = vmatprep.mubr.bf16.mxu0 %v665
      %1021 = vmatmul.mubr.bf16.gmra.mxu0 %v664
      %v1022 = vpop.f32.mrf.mxu0
      %v1023 = vadd.f32 0.0, %v1022
      %v1024 = vpop.f32.mrf.mxu0
      %v1025 = vpop.f32.mrf.mxu0
      %v1026 = vadd.f32 0.0, %v1025
      %v1027 = vpop.f32.mrf.mxu0
      %1028 = vmatprep.mubr.bf16.mxu0 %v669
      %1029 = vmatmul.mubr.bf16.gmra.mxu0 %v668
      %v1030 = vpop.f32.mrf.mxu0
      %v1031 = vadd.f32 0.0, %v1030
      %v1032 = vpop.f32.mrf.mxu0
      %v1033 = vpop.f32.mrf.mxu0
      %v1034 = vadd.f32 0.0, %v1033
      %v1035 = vpop.f32.mrf.mxu0
      %1036 = vmatprep.mubr.bf16.mxu0 %v673
      %1037 = vmatmul.mubr.bf16.gmra.mxu0 %v672
      %v1038 = vpop.f32.mrf.mxu0
      %v1039 = vadd.f32 0.0, %v1038
      %v1040 = vpop.f32.mrf.mxu0
      %v1041 = vpop.f32.mrf.mxu0
      %v1042 = vadd.f32 0.0, %v1041
      %v1043 = vpop.f32.mrf.mxu0
      %1044 = vmatprep.mubr.bf16.mxu0 %v677
      %1045 = vmatmul.mubr.bf16.gmra.mxu0 %v676
      %v1046 = vpop.f32.mrf.mxu0
      %v1047 = vadd.f32 0.0, %v1046
      %v1048 = vpop.f32.mrf.mxu0
      %v1049 = vpop.f32.mrf.mxu0
      %v1050 = vadd.f32 0.0, %v1049
      %v1051 = vpop.f32.mrf.mxu0
      %1052 = vmatprep.mubr.bf16.mxu0 %v681
      %1053 = vmatmul.mubr.bf16.gmra.mxu0 %v680
      %v1054 = vpop.f32.mrf.mxu0
      %v1055 = vadd.f32 0.0, %v1054
      %v1056 = vpop.f32.mrf.mxu0
      %v1057 = vpop.f32.mrf.mxu0
      %v1058 = vadd.f32 0.0, %v1057
      %v1059 = vpop.f32.mrf.mxu0
      %1060 = vmatprep.mubr.bf16.mxu0 %v685
      %1061 = vmatmul.mubr.bf16.gmra.mxu0 %v684
      %v1062 = vpop.f32.mrf.mxu0
      %v1063 = vadd.f32 0.0, %v1062
      %v1064 = vpop.f32.mrf.mxu0
      %v1065 = vpop.f32.mrf.mxu0
      %v1066 = vadd.f32 0.0, %v1065
      %v1067 = vpop.f32.mrf.mxu0
      %1068 = vmatprep.mubr.bf16.mxu0 %v689
      %1069 = vmatmul.mubr.bf16.gmra.mxu0 %v688
      %v1070 = vpop.f32.mrf.mxu0
      %v1071 = vadd.f32 0.0, %v1070
      %v1072 = vpop.f32.mrf.mxu0
      %v1073 = vpop.f32.mrf.mxu0
      %v1074 = vadd.f32 0.0, %v1073
      %v1075 = vpop.f32.mrf.mxu0
      %1076 = vmatprep.mubr.bf16.mxu0 %v693
      %1077 = vmatmul.mubr.bf16.gmra.mxu0 %v692
      %v1078 = vpop.f32.mrf.mxu0
      %v1079 = vadd.f32 0.0, %v1078
      %v1080 = vpop.f32.mrf.mxu0
      %v1081 = vpop.f32.mrf.mxu0
      %v1082 = vadd.f32 0.0, %v1081
      %v1083 = vpop.f32.mrf.mxu0
      %1084 = vmatprep.mubr.bf16.mxu0 %v697
      %1085 = vmatmul.mubr.bf16.gmra.mxu0 %v696
      %v1086 = vpop.f32.mrf.mxu0
      %v1087 = vadd.f32 0.0, %v1086
      %v1088 = vpop.f32.mrf.mxu0
      %v1089 = vpop.f32.mrf.mxu0
      %v1090 = vadd.f32 0.0, %v1089
      %v1091 = vpop.f32.mrf.mxu0
      %1092 = vmatprep.mubr.bf16.mxu0 %v701
      %1093 = vmatmul.mubr.bf16.gmra.mxu0 %v700
      %v1094 = vpop.f32.mrf.mxu0
      %v1095 = vadd.f32 0.0, %v1094
      %v1096 = vpop.f32.mrf.mxu0
      %v1097 = vpop.f32.mrf.mxu0
      %v1098 = vadd.f32 0.0, %v1097
      %v1099 = vpop.f32.mrf.mxu0
      %1100 = vmatprep.mubr.bf16.mxu0 %v705
      %1101 = vmatmul.mubr.bf16.gmra.mxu0 %v704
      %v1102 = vpop.f32.mrf.mxu0
      %v1103 = vadd.f32 0.0, %v1102
      %v1104 = vpop.f32.mrf.mxu0
      %v1105 = vpop.f32.mrf.mxu0
      %v1106 = vadd.f32 0.0, %v1105
      %v1107 = vpop.f32.mrf.mxu0
      %1108 = vmatprep.mubr.bf16.mxu0 %v709
      %1109 = vmatmul.mubr.bf16.gmra.mxu0 %v708
      %v1110 = vpop.f32.mrf.mxu0
      %v1111 = vadd.f32 0.0, %v1110
      %v1112 = vpop.f32.mrf.mxu0
      %v1113 = vpop.f32.mrf.mxu0
      %v1114 = vadd.f32 0.0, %v1113
      %v1115 = vpop.f32.mrf.mxu0
      %1116 = vmatprep.mubr.bf16.mxu0 %v713
      %1117 = vmatmul.mubr.bf16.gmra.mxu0 %v712
      %v1118 = vpop.f32.mrf.mxu0
      %v1119 = vadd.f32 0.0, %v1118
      %v1120 = vpop.f32.mrf.mxu0
      %v1121 = vpop.f32.mrf.mxu0
      %v1122 = vadd.f32 0.0, %v1121
      %v1123 = vpop.f32.mrf.mxu0
      %1124 = vmatprep.mubr.bf16.mxu0 %v717
      %1125 = vmatmul.mubr.bf16.gmra.mxu0 %v716
      %v1126 = vpop.f32.mrf.mxu0
      %v1127 = vadd.f32 0.0, %v1126
      %v1128 = vpop.f32.mrf.mxu0
      %v1129 = vpop.f32.mrf.mxu0
      %v1130 = vadd.f32 0.0, %v1129
      %v1131 = vpop.f32.mrf.mxu0
      %1132 = vmatprep.mubr.bf16.mxu0 %v721
      %1133 = vmatmul.mubr.bf16.gmra.mxu0 %v720
      %v1134 = vpop.f32.mrf.mxu0
      %v1135 = vadd.f32 0.0, %v1134
      %v1136 = vpop.f32.mrf.mxu0
      %v1137 = vpop.f32.mrf.mxu0
      %v1138 = vadd.f32 0.0, %v1137
      %v1139 = vpop.f32.mrf.mxu0
      %1140 = vdwg.mxu0
      %1141 = vmatprep.subr.bf16.mxu0 0
      %1142 = vmatpush1.bf16.msra.mxu0 %v939
      %1143 = vmatprep.subr.bf16.mxu0 0
      %1144 = vmatpush1.bf16.msra.mxu0 %v938
      %1145 = vmatprep.subr.bf16.mxu0 0
      %1146 = vmatpush1.bf16.msra.mxu0 %v937
      %1147 = vmatprep.subr.bf16.mxu0 0
      %1148 = vmatpush1.bf16.msra.mxu0 %v936
      %1149 = vmatprep.subr.bf16.mxu0 0
      %1150 = vmatpush1.bf16.msra.mxu0 %v935
      %1151 = vmatprep.subr.bf16.mxu0 0
      %1152 = vmatpush1.bf16.msra.mxu0 %v934
      %1153 = vmatprep.subr.bf16.mxu0 0
      %1154 = vmatpush1.bf16.msra.mxu0 %v933
      %1155 = vmatprep.subr.bf16.mxu0 0
      %1156 = vmatpush1.bf16.msra.mxu0 %v932
      %1157 = vmatprep.subr.bf16.mxu0 0
      %1158 = vmatpush2.bf16.msra.mxu0 %v947
      %1159 = vmatprep.subr.bf16.mxu0 0
      %1160 = vmatpush2.bf16.msra.mxu0 %v946
      %1161 = vmatprep.subr.bf16.mxu0 0
      %1162 = vmatpush2.bf16.msra.mxu0 %v945
      %1163 = vmatprep.subr.bf16.mxu0 0
      %1164 = vmatpush2.bf16.msra.mxu0 %v944
      %1165 = vmatprep.subr.bf16.mxu0 0
      %1166 = vmatpush2.bf16.msra.mxu0 %v943
      %1167 = vmatprep.subr.bf16.mxu0 0
      %1168 = vmatpush2.bf16.msra.mxu0 %v942
      %1169 = vmatprep.subr.bf16.mxu0 0
      %1170 = vmatpush2.bf16.msra.mxu0 %v941
      %1171 = vmatprep.subr.bf16.mxu0 0
      %1172 = vmatpush2.bf16.msra.mxu0 %v940
      %1173 = vmatprep.mubr.bf16.mxu0 %v663
      %1174 = vmatmul.mubr.bf16.gmra.mxu0 %v662
      %v1175 = vpop.f32.mrf.mxu0
      %v1176 = vadd.f32 %v1015, %v1175
      %v1177 = vpop.f32.mrf.mxu0
      %v1178 = vpop.f32.mrf.mxu0
      %v1179 = vadd.f32 %v1018, %v1178
      %v1180 = vpop.f32.mrf.mxu0
      %1181 = vmatprep.mubr.bf16.mxu0 %v667
      %1182 = vmatmul.mubr.bf16.gmra.mxu0 %v666
      %v1183 = vpop.f32.mrf.mxu0
      %v1184 = vadd.f32 %v1023, %v1183
      %v1185 = vpop.f32.mrf.mxu0
      %v1186 = vpop.f32.mrf.mxu0
      %v1187 = vadd.f32 %v1026, %v1186
      %v1188 = vpop.f32.mrf.mxu0
      %1189 = vmatprep.mubr.bf16.mxu0 %v671
      %1190 = vmatmul.mubr.bf16.gmra.mxu0 %v670
      %v1191 = vpop.f32.mrf.mxu0
      %v1192 = vadd.f32 %v1031, %v1191
      %v1193 = vpop.f32.mrf.mxu0
      %v1194 = vpop.f32.mrf.mxu0
      %v1195 = vadd.f32 %v1034, %v1194
      %v1196 = vpop.f32.mrf.mxu0
      %1197 = vmatprep.mubr.bf16.mxu0 %v675
      %1198 = vmatmul.mubr.bf16.gmra.mxu0 %v674
      %v1199 = vpop.f32.mrf.mxu0
      %v1200 = vadd.f32 %v1039, %v1199
      %v1201 = vpop.f32.mrf.mxu0
      %v1202 = vpop.f32.mrf.mxu0
      %v1203 = vadd.f32 %v1042, %v1202
      %v1204 = vpop.f32.mrf.mxu0
      %1205 = vmatprep.mubr.bf16.mxu0 %v679
      %1206 = vmatmul.mubr.bf16.gmra.mxu0 %v678
      %v1207 = vpop.f32.mrf.mxu0
      %v1208 = vadd.f32 %v1047, %v1207
      %v1209 = vpop.f32.mrf.mxu0
      %v1210 = vpop.f32.mrf.mxu0
      %v1211 = vadd.f32 %v1050, %v1210
      %v1212 = vpop.f32.mrf.mxu0
      %1213 = vmatprep.mubr.bf16.mxu0 %v683
      %1214 = vmatmul.mubr.bf16.gmra.mxu0 %v682
      %v1215 = vpop.f32.mrf.mxu0
      %v1216 = vadd.f32 %v1055, %v1215
      %v1217 = vpop.f32.mrf.mxu0
      %v1218 = vpop.f32.mrf.mxu0
      %v1219 = vadd.f32 %v1058, %v1218
      %v1220 = vpop.f32.mrf.mxu0
      %1221 = vmatprep.mubr.bf16.mxu0 %v687
      %1222 = vmatmul.mubr.bf16.gmra.mxu0 %v686
      %v1223 = vpop.f32.mrf.mxu0
      %v1224 = vadd.f32 %v1063, %v1223
      %v1225 = vpop.f32.mrf.mxu0
      %v1226 = vpop.f32.mrf.mxu0
      %v1227 = vadd.f32 %v1066, %v1226
      %v1228 = vpop.f32.mrf.mxu0
      %1229 = vmatprep.mubr.bf16.mxu0 %v691
      %1230 = vmatmul.mubr.bf16.gmra.mxu0 %v690
      %v1231 = vpop.f32.mrf.mxu0
      %v1232 = vadd.f32 %v1071, %v1231
      %v1233 = vpop.f32.mrf.mxu0
      %v1234 = vpop.f32.mrf.mxu0
      %v1235 = vadd.f32 %v1074, %v1234
      %v1236 = vpop.f32.mrf.mxu0
      %1237 = vmatprep.mubr.bf16.mxu0 %v695
      %1238 = vmatmul.mubr.bf16.gmra.mxu0 %v694
      %v1239 = vpop.f32.mrf.mxu0
      %v1240 = vadd.f32 %v1079, %v1239
      %v1241 = vpop.f32.mrf.mxu0
      %v1242 = vpop.f32.mrf.mxu0
      %v1243 = vadd.f32 %v1082, %v1242
      %v1244 = vpop.f32.mrf.mxu0
      %1245 = vmatprep.mubr.bf16.mxu0 %v699
      %1246 = vmatmul.mubr.bf16.gmra.mxu0 %v698
      %v1247 = vpop.f32.mrf.mxu0
      %v1248 = vadd.f32 %v1087, %v1247
      %v1249 = vpop.f32.mrf.mxu0
      %v1250 = vpop.f32.mrf.mxu0
      %v1251 = vadd.f32 %v1090, %v1250
      %v1252 = vpop.f32.mrf.mxu0
      %1253 = vmatprep.mubr.bf16.mxu0 %v703
      %1254 = vmatmul.mubr.bf16.gmra.mxu0 %v702
      %v1255 = vpop.f32.mrf.mxu0
      %v1256 = vadd.f32 %v1095, %v1255
      %v1257 = vpop.f32.mrf.mxu0
      %v1258 = vpop.f32.mrf.mxu0
      %v1259 = vadd.f32 %v1098, %v1258
      %v1260 = vpop.f32.mrf.mxu0
      %1261 = vmatprep.mubr.bf16.mxu0 %v707
      %1262 = vmatmul.mubr.bf16.gmra.mxu0 %v706
      %v1263 = vpop.f32.mrf.mxu0
      %v1264 = vadd.f32 %v1103, %v1263
      %v1265 = vpop.f32.mrf.mxu0
      %v1266 = vpop.f32.mrf.mxu0
      %v1267 = vadd.f32 %v1106, %v1266
      %v1268 = vpop.f32.mrf.mxu0
      %1269 = vmatprep.mubr.bf16.mxu0 %v711
      %1270 = vmatmul.mubr.bf16.gmra.mxu0 %v710
      %v1271 = vpop.f32.mrf.mxu0
      %v1272 = vadd.f32 %v1111, %v1271
      %v1273 = vpop.f32.mrf.mxu0
      %v1274 = vpop.f32.mrf.mxu0
      %v1275 = vadd.f32 %v1114, %v1274
      %v1276 = vpop.f32.mrf.mxu0
      %1277 = vmatprep.mubr.bf16.mxu0 %v715
      %1278 = vmatmul.mubr.bf16.gmra.mxu0 %v714
      %v1279 = vpop.f32.mrf.mxu0
      %v1280 = vadd.f32 %v1119, %v1279
      %v1281 = vpop.f32.mrf.mxu0
      %v1282 = vpop.f32.mrf.mxu0
      %v1283 = vadd.f32 %v1122, %v1282
      %v1284 = vpop.f32.mrf.mxu0
      %1285 = vmatprep.mubr.bf16.mxu0 %v719
      %1286 = vmatmul.mubr.bf16.gmra.mxu0 %v718
      %v1287 = vpop.f32.mrf.mxu0
      %v1288 = vadd.f32 %v1127, %v1287
      %v1289 = vpop.f32.mrf.mxu0
      %v1290 = vpop.f32.mrf.mxu0
      %v1291 = vadd.f32 %v1130, %v1290
      %v1292 = vpop.f32.mrf.mxu0
      %1293 = vmatprep.mubr.bf16.mxu0 %v723
      %1294 = vmatmul.mubr.bf16.gmra.mxu0 %v722
      %v1295 = vpop.f32.mrf.mxu0
      %v1296 = vadd.f32 %v1135, %v1295
      %v1297 = vpop.f32.mrf.mxu0
      %v1298 = vpop.f32.mrf.mxu0
      %v1299 = vadd.f32 %v1138, %v1298
      %v1300 = vpop.f32.mrf.mxu0
      %1301 = vdwg.mxu0
      %v1302 = vadd.f32 %v308, %v1176
      %v1303 = vadd.f32 %v309, %v1179
      %v1304 = vadd.f32 %v310, %v1184
      %v1305 = vadd.f32 %v311, %v1187
      %v1306 = vadd.f32 %v312, %v1192
      %v1307 = vadd.f32 %v313, %v1195
      %v1308 = vadd.f32 %v314, %v1200
      %v1309 = vadd.f32 %v315, %v1203
      %v1310 = vadd.f32 %v316, %v1208
      %v1311 = vadd.f32 %v317, %v1211
      %v1312 = vadd.f32 %v318, %v1216
      %v1313 = vadd.f32 %v319, %v1219
      %v1314 = vadd.f32 %v320, %v1224
      %v1315 = vadd.f32 %v321, %v1227
      %v1316 = vadd.f32 %v322, %v1232
      %v1317 = vadd.f32 %v323, %v1235
      %v1318 = vadd.f32 %v324, %v1240
      %v1319 = vadd.f32 %v325, %v1243
      %v1320 = vadd.f32 %v326, %v1248
      %v1321 = vadd.f32 %v327, %v1251
      %v1322 = vadd.f32 %v328, %v1256
      %v1323 = vadd.f32 %v329, %v1259
      %v1324 = vadd.f32 %v330, %v1264
      %v1325 = vadd.f32 %v331, %v1267
      %v1326 = vadd.f32 %v332, %v1272
      %v1327 = vadd.f32 %v333, %v1275
      %v1328 = vadd.f32 %v334, %v1280
      %v1329 = vadd.f32 %v335, %v1283
      %v1330 = vadd.f32 %v336, %v1288
      %v1331 = vadd.f32 %v337, %v1291
      %v1332 = vadd.f32 %v338, %v1296
      %v1333 = vadd.f32 %v339, %v1299
      %1334 = vst [vmem:[#allocation2] sm:$0xff] %v1302
      %1335 = vst [vmem:[#allocation2 + $0x8] sm:$0xff] %v1303
      %1336 = vst [vmem:[#allocation2 + $0x10] sm:$0xff] %v1304
      %1337 = vst [vmem:[#allocation2 + $0x18] sm:$0xff] %v1305
      %1338 = vst [vmem:[#allocation2 + $0x20] sm:$0xff] %v1306
      %1339 = vst [vmem:[#allocation2 + $0x28] sm:$0xff] %v1307
      %1340 = vst [vmem:[#allocation2 + $0x30] sm:$0xff] %v1308
      %1341 = vst [vmem:[#allocation2 + $0x38] sm:$0xff] %v1309
      %1342 = vst [vmem:[#allocation2 + $0x40] sm:$0xff] %v1310
      %1343 = vst [vmem:[#allocation2 + $0x48] sm:$0xff] %v1311
      %1344 = vst [vmem:[#allocation2 + $0x50] sm:$0xff] %v1312
      %1345 = vst [vmem:[#allocation2 + $0x58] sm:$0xff] %v1313
      %1346 = vst [vmem:[#allocation2 + $0x60] sm:$0xff] %v1314
      %1347 = vst [vmem:[#allocation2 + $0x68] sm:$0xff] %v1315
      %1348 = vst [vmem:[#allocation2 + $0x70] sm:$0xff] %v1316
      %1349 = vst [vmem:[#allocation2 + $0x78] sm:$0xff] %v1317
      %1350 = vst [vmem:[#allocation2 + $0x80] sm:$0xff] %v1318
      %1351 = vst [vmem:[#allocation2 + $0x88] sm:$0xff] %v1319
      %1352 = vst [vmem:[#allocation2 + $0x90] sm:$0xff] %v1320
      %1353 = vst [vmem:[#allocation2 + $0x98] sm:$0xff] %v1321
      %1354 = vst [vmem:[#allocation2 + $0xa0] sm:$0xff] %v1322
      %1355 = vst [vmem:[#allocation2 + $0xa8] sm:$0xff] %v1323
      %1356 = vst [vmem:[#allocation2 + $0xb0] sm:$0xff] %v1324
      %1357 = vst [vmem:[#allocation2 + $0xb8] sm:$0xff] %v1325
      %1358 = vst [vmem:[#allocation2 + $0xc0] sm:$0xff] %v1326
      %1359 = vst [vmem:[#allocation2 + $0xc8] sm:$0xff] %v1327
      %1360 = vst [vmem:[#allocation2 + $0xd0] sm:$0xff] %v1328
      %1361 = vst [vmem:[#allocation2 + $0xd8] sm:$0xff] %v1329
      %1362 = vst [vmem:[#allocation2 + $0xe0] sm:$0xff] %v1330
      %1363 = vst [vmem:[#allocation2 + $0xe8] sm:$0xff] %v1331
      %1364 = vst [vmem:[#allocation2 + $0xf0] sm:$0xff] %v1332
      %1365 = vst [vmem:[#allocation2 + $0xf8] sm:$0xff] %v1333
      // Predicated region
      $region33: #{_lambda_.17} parent=27 // pred_check
        %p1366 = pneg %p272
      $region34: #{_lambda_.17} parent=27 // pred_check_branch
        %1368 = sbr.rel (%p1366) target = $region36
      $region35: #{_lambda_.17} parent=27 // pred_region
        %v1369 = vld [vmem:[#allocation2] sm:$0xff]
        %v1370 = vld [vmem:[#allocation2 + $0x8] sm:$0xff]
        %v1371 = vld [vmem:[#allocation2 + $0x10] sm:$0xff]
        %v1372 = vld [vmem:[#allocation2 + $0x18] sm:$0xff]
        %v1373 = vld [vmem:[#allocation2 + $0x20] sm:$0xff]
        %v1374 = vld [vmem:[#allocation2 + $0x28] sm:$0xff]
        %v1375 = vld [vmem:[#allocation2 + $0x30] sm:$0xff]
        %v1376 = vld [vmem:[#allocation2 + $0x38] sm:$0xff]
        %v1377 = vld [vmem:[#allocation2 + $0x40] sm:$0xff]
        %v1378 = vld [vmem:[#allocation2 + $0x48] sm:$0xff]
        %v1379 = vld [vmem:[#allocation2 + $0x50] sm:$0xff]
        %v1380 = vld [vmem:[#allocation2 + $0x58] sm:$0xff]
        %v1381 = vld [vmem:[#allocation2 + $0x60] sm:$0xff]
        %v1382 = vld [vmem:[#allocation2 + $0x68] sm:$0xff]
        %v1383 = vld [vmem:[#allocation2 + $0x70] sm:$0xff]
        %v1384 = vld [vmem:[#allocation2 + $0x78] sm:$0xff]
        %v1385 = vld [vmem:[#allocation2 + $0x80] sm:$0xff]
        %v1386 = vld [vmem:[#allocation2 + $0x88] sm:$0xff]
        %v1387 = vld [vmem:[#allocation2 + $0x90] sm:$0xff]
        %v1388 = vld [vmem:[#allocation2 + $0x98] sm:$0xff]
        %v1389 = vld [vmem:[#allocation2 + $0xa0] sm:$0xff]
        %v1390 = vld [vmem:[#allocation2 + $0xa8] sm:$0xff]
        %v1391 = vld [vmem:[#allocation2 + $0xb0] sm:$0xff]
        %v1392 = vld [vmem:[#allocation2 + $0xb8] sm:$0xff]
        %v1393 = vld [vmem:[#allocation2 + $0xc0] sm:$0xff]
        %v1394 = vld [vmem:[#allocation2 + $0xc8] sm:$0xff]
        %v1395 = vld [vmem:[#allocation2 + $0xd0] sm:$0xff]
        %v1396 = vld [vmem:[#allocation2 + $0xd8] sm:$0xff]
        %v1397 = vld [vmem:[#allocation2 + $0xe0] sm:$0xff]
        %v1398 = vld [vmem:[#allocation2 + $0xe8] sm:$0xff]
        %v1399 = vld [vmem:[#allocation2 + $0xf0] sm:$0xff]
        %v1400 = vld [vmem:[#allocation2 + $0xf8] sm:$0xff]
        %v1401 = vtanh.pop %v1369
        %v1402 = vtanh.pop %v1370
        %v1403 = vtanh.pop %v1371
        %v1404 = vtanh.pop %v1372
        %v1405 = vtanh.pop %v1373
        %v1406 = vtanh.pop %v1374
        %v1407 = vtanh.pop %v1375
        %v1408 = vtanh.pop %v1376
        %v1409 = vtanh.pop %v1377
        %v1410 = vtanh.pop %v1378
        %v1411 = vtanh.pop %v1379
        %v1412 = vtanh.pop %v1380
        %v1413 = vtanh.pop %v1381
        %v1414 = vtanh.pop %v1382
        %v1415 = vtanh.pop %v1383
        %v1416 = vtanh.pop %v1384
        %v1417 = vtanh.pop %v1385
        %v1418 = vtanh.pop %v1386
        %v1419 = vtanh.pop %v1387
        %v1420 = vtanh.pop %v1388
        %v1421 = vtanh.pop %v1389
        %v1422 = vtanh.pop %v1390
        %v1423 = vtanh.pop %v1391
        %v1424 = vtanh.pop %v1392
        %v1425 = vtanh.pop %v1393
        %v1426 = vtanh.pop %v1394
        %v1427 = vtanh.pop %v1395
        %v1428 = vtanh.pop %v1396
        %v1429 = vtanh.pop %v1397
        %v1430 = vtanh.pop %v1398
        %v1431 = vtanh.pop %v1399
        %v1432 = vtanh.pop %v1400
        %1433 = vst [vmem:[%s269] sm:$0xff] %v1401
        %1434 = vst [vmem:[%s269 + $0x8] sm:$0xff] %v1402
        %1435 = vst [vmem:[%s269 + $0x10] sm:$0xff] %v1403
        %1436 = vst [vmem:[%s269 + $0x18] sm:$0xff] %v1404
        %1437 = vst [vmem:[%s269 + $0x20] sm:$0xff] %v1405
        %1438 = vst [vmem:[%s269 + $0x28] sm:$0xff] %v1406
        %1439 = vst [vmem:[%s269 + $0x30] sm:$0xff] %v1407
        %1440 = vst [vmem:[%s269 + $0x38] sm:$0xff] %v1408
        %1441 = vst [vmem:[%s269 + $0x40] sm:$0xff] %v1409
        %1442 = vst [vmem:[%s269 + $0x48] sm:$0xff] %v1410
        %1443 = vst [vmem:[%s269 + $0x50] sm:$0xff] %v1411
        %1444 = vst [vmem:[%s269 + $0x58] sm:$0xff] %v1412
        %1445 = vst [vmem:[%s269 + $0x60] sm:$0xff] %v1413
        %1446 = vst [vmem:[%s269 + $0x68] sm:$0xff] %v1414
        %1447 = vst [vmem:[%s269 + $0x70] sm:$0xff] %v1415
        %1448 = vst [vmem:[%s269 + $0x78] sm:$0xff] %v1416
        %1449 = vst [vmem:[%s269 + $0x80] sm:$0xff] %v1417
        %1450 = vst [vmem:[%s269 + $0x88] sm:$0xff] %v1418
        %1451 = vst [vmem:[%s269 + $0x90] sm:$0xff] %v1419
        %1452 = vst [vmem:[%s269 + $0x98] sm:$0xff] %v1420
        %1453 = vst [vmem:[%s269 + $0xa0] sm:$0xff] %v1421
        %1454 = vst [vmem:[%s269 + $0xa8] sm:$0xff] %v1422
        %1455 = vst [vmem:[%s269 + $0xb0] sm:$0xff] %v1423
        %1456 = vst [vmem:[%s269 + $0xb8] sm:$0xff] %v1424
        %1457 = vst [vmem:[%s269 + $0xc0] sm:$0xff] %v1425
        %1458 = vst [vmem:[%s269 + $0xc8] sm:$0xff] %v1426
        %1459 = vst [vmem:[%s269 + $0xd0] sm:$0xff] %v1427
        %1460 = vst [vmem:[%s269 + $0xd8] sm:$0xff] %v1428
        %1461 = vst [vmem:[%s269 + $0xe0] sm:$0xff] %v1429
        %1462 = vst [vmem:[%s269 + $0xe8] sm:$0xff] %v1430
        %1463 = vst [vmem:[%s269 + $0xf0] sm:$0xff] %v1431
        %1464 = vst [vmem:[%s269 + $0xf8] sm:$0xff] %v1432
      $region36: #{_lambda_.17} parent=27 // pred_fallthru
        _
      %s1465 = smul.u32 32, %s20
      %p1466 = scmp.lt.s32.totalorder %s19, 3
      %s1467 = scalar_select %p1466, %s19, 3
      %p1468 = scmp.lt.s32.totalorder %s1465, 255
      %s1469 = scalar_select %p1468, %s1465, 255
      %p1470 = scmp.lt.s32.totalorder %s21, 0
      %s1471 = scalar_select %p1470, %s21, 0
      %s1472 = sadd.s32 %s1471, %s1469
      %s1473 = smul.addr %s1467, 256
      %s1474 = sadd.s32 %s1472, %s1473
      %s1475 = smul.addr %s1474, 8
      %s1476 = scalar_lea.vmem %s2, %s1475
      // Predicated region
      $region37: #{_lambda_.17} parent=27 // pred_check
        %p1477 = pneg %p121
      $region38: #{_lambda_.17} parent=27 // pred_check_branch
        %1479 = sbr.rel (%p1477) target = $region40
      $region39: #{_lambda_.17} parent=27 // pred_region
        %s1480 = smul.u32 32, %s20
      $region40: #{_lambda_.17} parent=27 // pred_fallthru
        _
    $region28: #{_lambda_.17} parent=5 // pred_fallthru
      _
    %p1481 = scmp.le.s32.totalorder 2, %s8
    // Predicated region
    $region41: #{_lambda_.17} parent=5 // pred_check
      %p1482 = pneg %p1481
    $region42: #{_lambda_.17} parent=5 // pred_check_branch
      %1484 = sbr.rel (%p1482) target = $region44
    $region43: #{_lambda_.17} parent=5 // pred_region
      %s1485 = ssub.s32 %s8, 2
      // Predicated region
      $region45: #{_lambda_.17} parent=43 // pred_check
        %p1486 = pneg %p127
      $region46: #{_lambda_.17} parent=43 // pred_check_branch
        %1488 = sbr.rel (%p1486) target = $region48
      $region47: #{_lambda_.17} parent=43 // pred_region
        %s1489 = smul.u32 32, %s24
        %p1490 = scmp.lt.s32.totalorder %s23, 3
        %s1491 = scalar_select %p1490, %s23, 3
        %p1492 = scmp.lt.s32.totalorder %s1489, 255
        %s1493 = scalar_select %p1492, %s1489, 255
        %p1494 = scmp.lt.s32.totalorder %s25, 0
        %s1495 = scalar_select %p1494, %s25, 0
        %s1496 = sadd.s32 %s1495, %s1493
        %s1497 = smul.addr %s1491, 256
        %s1498 = sadd.s32 %s1496, %s1497
        %s1499 = smul.addr %s1498, 8
        %s1500 = scalar_lea.vmem %s2, %s1499
      $region48: #{_lambda_.17} parent=43 // pred_fallthru
        _
    $region44: #{_lambda_.17} parent=5 // pred_fallthru
      _
  $region6: #{_lambda_.17} parent=0 // loop_footer
    %s12 = sadd.s32 1, %s8
  $region7: #{_lambda_.17} parent=0 // loop_footer_branch
    %7 = sbr.rel target = $region3
  $region8: #{_lambda_.17} parent=0 // loop_exit
    _

</llo_original>
